<compile_context>
chip_gen: v7x
topology: tpu7x:2x2x1
jax: 0.10.0
libtpu: 0.0.40
codegen_flags: <defaults>
</compile_context>

<pallas_src>
import functools

import numpy as np

import jax
import jax.numpy as jnp
from jax.experimental import pallas as pl
from jax.experimental.pallas import tpu as pltpu

LRELU_SLOPE = 0.03
BN_EPS = 1e-5


# ----------------------------------------------------------------------------
# Host-side geometry helpers (trace-time constants)
# ----------------------------------------------------------------------------
def _build_subsample(S, pad_out=True):
    """0/1 matrix mapping the stride-1 conv outputs on the (S+2)x(S+2) padded
    grid (flattened) to the stride-2 outputs, laid out either as the next
    layer's zero-bordered padded grid or as a bare (S/2)^2 block."""
    Wp = S + 2
    So = S // 2
    if pad_out:
        Wop = So + 2
        out_len = Wop * Wop
    else:
        Wop = So
        out_len = So * So
    m = np.zeros((Wp * Wp, out_len), np.float32)
    for ho in range(So):
        for wo in range(So):
            in_idx = (2 * ho + 1) * Wp + (2 * wo + 1)   # input pixel (2ho, 2wo)
            if pad_out:
                out_idx = (ho + 1) * Wop + (wo + 1)
            else:
                out_idx = ho * So + wo
            m[in_idx, out_idx] = 1.0
    return m


def _interior_mask(H, W, N):
    """[1, N*(H+2)*(W+2)] mask: 1 on real pixels, 0 on each sample's zero ring."""
    m = np.zeros((1, N, H + 2, W + 2), np.float32)
    m[:, :, 1:H + 1, 1:W + 1] = 1.0
    return m.reshape(1, N * (H + 2) * (W + 2))


def _full_spec(a):
    """Whole-array block, resident across the grid."""
    nd = a.ndim
    return pl.BlockSpec(a.shape, lambda *_, _nd=nd: (0,) * _nd)


def _bn_fold(gamma, beta, mean, var):
    s = gamma / jnp.sqrt(var + BN_EPS)
    return s, beta - mean * s


# ----------------------------------------------------------------------------
# Kernel 1: fused ModalityEncoder (4x conv/s2 + BN + LReLU, fc + BN1d + LReLU,
#           fused mu/logvar head, reparameterization).  One grid step / sample.
# ----------------------------------------------------------------------------
def _modality_kernel(x_ref,
                     w1_ref, b1_ref, s1_ref, w2_ref, b2_ref, s2_ref,
                     w3_ref, b3_ref, s3_ref, w4_ref, b4_ref, s4_ref,
                     fcw_ref, fcb_ref, hw_ref, hb_ref, eps_ref,
                     z_ref, mu_ref, lv_ref,
                     scr2, scr3, scr4, *, geoms):
    scratches = (scr2, scr3, scr4)
    # Zero only the read margins (interiors are fully overwritten each step).
    # Done every step so it stays correct when the batch axis is sharded
    # across cores (megacore) - it is a handful of tiny vector stores.
    for scr, (_, lp, m) in zip(scratches, geoms[1:]):
        scr[:, pl.ds(0, m)] = jnp.zeros((scr.shape[0], m), scr.dtype)
        scr[:, pl.ds(m + lp, m)] = jnp.zeros((scr.shape[0], m), scr.dtype)

    def conv_block(read, w_ref, b_ref, s_ref, wp, lp, m):
        cout = w_ref.shape[1]
        acc = jnp.zeros((cout, lp), jnp.float32)
        for dy in range(3):                       # 9 uniform-shift tap matmuls
            for dx in range(3):
                t = dy * 3 + dx
                off = (dy - 1) * wp + (dx - 1)
                acc = acc + jnp.dot(w_ref[t], read(m + off, lp),
                                    preferred_element_type=jnp.float32)
        y = acc + b_ref[...]                      # BN scale/shift folded in
        a = jnp.where(y >= 0, y, LRELU_SLOPE * y)  # LeakyReLU(0.03)
        # stride-2 subsample + re-pad into the next layer's zero-bordered layout
        return jnp.dot(a.astype(jnp.bfloat16), s_ref[...],
                       preferred_element_type=jnp.float32)

    layers = ((w1_ref, b1_ref, s1_ref), (w2_ref, b2_ref, s2_ref),
              (w3_ref, b3_ref, s3_ref), (w4_ref, b4_ref, s4_ref))

    wp, lp, m = geoms[0]
    h = conv_block(lambda s, n: x_ref[0, :, pl.ds(s, n)], *layers[0], wp, lp, m)
    for k in range(1, 4):
        scr = scratches[k - 1]
        wp, lp, m = geoms[k]
        scr[:, pl.ds(m, lp)] = h.astype(scr.dtype)
        h = conv_block(lambda s, n, _r=scr: _r[:, pl.ds(s, n)],
                       *layers[k], wp, lp, m)
    # spatial collapsed to 1x1 -> h is [128, 1]

    h16 = h.astype(jnp.bfloat16)
    yfc = jnp.dot(fcw_ref[...], h16,
                  preferred_element_type=jnp.float32) + fcb_ref[...]
    h5 = jnp.where(yfc >= 0, yfc, LRELU_SLOPE * yfc).astype(jnp.bfloat16)
    hd = jnp.dot(hw_ref[...], h5,
                 preferred_element_type=jnp.float32) + hb_ref[...]   # [2Z, 1]
    zlen = mu_ref.shape[1]
    mu = hd[:zlen]
    lv = hd[zlen:]
    z = mu + eps_ref[0] * jnp.exp(0.5 * lv)
    z_ref[0] = z
    mu_ref[0] = mu
    lv_ref[0] = lv


def modality_encoder_pallas(params, x_nchw, eps):
    N, C, H, W = x_nchw.shape
    Z = params["mu_w"].shape[1]
    assert H == W and H == 16, "ModalityEncoder kernel assumes target_size=16"

    sizes = [H, H // 2, H // 4, H // 8]              # conv input spatial sizes
    geoms = []
    for s in sizes:
        wp = s + 2
        geoms.append((wp, wp * wp, wp + 1))          # (row stride, padded len, margin)

    # host layout prep: per-sample zero ring + read margins, channels-first
    Wp1, Lp1, M1 = geoms[0]
    xp = jnp.pad(x_nchw, ((0, 0), (0, 0), (1, 1), (1, 1))).reshape(N, C, Lp1)
    xp = jnp.pad(xp, ((0, 0), (0, 0), (M1, M1))).astype(jnp.bfloat16)

    # exact 0/1 "stride-2 subsample + re-pad" matrices (per-sample, tiny)
    s_mats = [jnp.asarray(_build_subsample(sizes[i], pad_out=(i < 3)),
                          dtype=jnp.bfloat16) for i in range(4)]

    # fold eval-mode BN (actual running stats) into conv / fc weights
    ws, bs = [], []
    for i in range(4):
        sc, sh = _bn_fold(params[f"m_g{i}"], params[f"m_be{i}"],
                          params[f"m_rm{i}"], params[f"m_rv{i}"])
        w = params[f"m_w{i}"] * sc                   # HWIO, scale over cout
        cin = w.shape[2]
        ws.append(jnp.transpose(w.reshape(9, cin, -1), (0, 2, 1)).astype(jnp.bfloat16))
        bs.append(sh[:, None].astype(jnp.float32))
    sc, sh = _bn_fold(params["fc_g"], params["fc_be"],
                      params["fc_rm"], params["fc_rv"])
    fcw = (params["fc_w"] * sc[None, :]).T.astype(jnp.bfloat16)          # [32, 128]
    fcb = (params["fc_b"] * sc + sh)[:, None].astype(jnp.float32)
    headw = jnp.concatenate([params["mu_w"].T, params["lv_w"].T],
                            axis=0).astype(jnp.bfloat16)                 # [2Z, 32]
    headb = jnp.concatenate([params["mu_b"], params["lv_b"]])[:, None].astype(jnp.float32)

    eps3 = eps.reshape(N, Z, 1).astype(jnp.float32)

    args = [xp,
            ws[0], bs[0], s_mats[0], ws[1], bs[1], s_mats[1],
            ws[2], bs[2], s_mats[2], ws[3], bs[3], s_mats[3],
            fcw, fcb, headw, headb, eps3]
    in_specs = ([pl.BlockSpec((1, C, xp.shape[2]), lambda n: (n, 0, 0))]
                + [_full_spec(a) for a in args[1:-1]]
                + [pl.BlockSpec((1, Z, 1), lambda n: (n, 0, 0))])

    scr_shapes = [pltpu.VMEM((int(ws[i].shape[1]),
                              geoms[i + 1][1] + 2 * geoms[i + 1][2]),
                             jnp.bfloat16) for i in range(3)]

    kern = functools.partial(_modality_kernel, geoms=tuple(geoms))
    z, mu, lv = pl.pallas_call(
        kern,
        grid=(N,),
        out_shape=tuple(jax.ShapeDtypeStruct((N, Z, 1), jnp.float32) for _ in range(3)),
        in_specs=in_specs,
        out_specs=tuple(pl.BlockSpec((1, Z, 1), lambda n: (n, 0, 0)) for _ in range(3)),
        scratch_shapes=scr_shapes,
        compiler_params=pltpu.CompilerParams(
            dimension_semantics=("parallel",),       # megacore over batch on v7x
            vmem_limit_bytes=32 * 1024 * 1024),
    )(*args)
    return z[..., 0], mu[..., 0], lv[..., 0]


# ----------------------------------------------------------------------------
# Kernel 2: fused AnatomyEncoder(+tanh) + Segmentor + Decoder (stand-ins),
#           batch folded into the lane dim, one grid step for the whole batch.
# ----------------------------------------------------------------------------
def _anat_seg_dec_kernel(x_ref, zpl_ref, imask_ref, wa_ref, ba_ref,
                         wsd_ref, bsd_ref, out_ref, buf, *, Wp, L, M, Ca):
    # zero the read margins of the staging buffer (single grid step)
    buf[:, pl.ds(0, M)] = jnp.zeros((buf.shape[0], M), buf.dtype)
    buf[:, pl.ds(M + L, M)] = jnp.zeros((buf.shape[0], M), buf.dtype)

    # --- AnatomyEncoder: TODO(synk): UTNet internals not in the provided
    #     source; single 3x3 conv stand-in, tanh fused here -------------------
    ca = wa_ref.shape[1]
    acc_a = jnp.zeros((ca, L), jnp.float32)
    for dy in range(3):
        for dx in range(3):
            t = dy * 3 + dx
            off = (dy - 1) * Wp + (dx - 1)
            acc_a = acc_a + jnp.dot(wa_ref[t], x_ref[:, pl.ds(M + off, L)],
                                    preferred_element_type=jnp.float32)
    # one interior-mask multiply restores zero-padding at each sample's border
    a = jnp.tanh(acc_a + ba_ref[...]) * imask_ref[...]

    # stage concat(a, z_map) once; seg + dec convs share this buffer
    zlen = buf.shape[0] - Ca
    buf[pl.ds(0, Ca), pl.ds(M, L)] = a.astype(buf.dtype)
    buf[pl.ds(Ca, zlen), pl.ds(M, L)] = zpl_ref[...]

    # --- Segmentor + Decoder fused: ONE stacked matmul per tap ---------------
    # TODO(synk): Segmentor / Decoder internals not in source; single-conv stand-ins.
    csd = wsd_ref.shape[1]
    acc = jnp.zeros((csd, L), jnp.float32)
    for dy in range(3):
        for dx in range(3):
            t = dy * 3 + dx
            off = (dy - 1) * Wp + (dx - 1)
            acc = acc + jnp.dot(wsd_ref[t], buf[:, pl.ds(M + off, L)],
                                preferred_element_type=jnp.float32)
    out_ref[...] = acc + bsd_ref[...]


def anat_seg_dec_pallas(params, x_nchw, z):
    N, C, H, W = x_nchw.shape
    Z = z.shape[1]
    Hp, Wp = H + 2, W + 2
    Lp = Hp * Wp
    L = N * Lp
    M = 128                                          # lane-aligned margin (>= Wp+1)
    assert M >= Wp + 1
    Ca = params["a_w"].shape[3]
    Cs = params["s_w"].shape[3]
    Cr = params["d_w"].shape[3]

    # host layout prep (pure XLA): channels-first, batch in lanes,
    # per-sample zero ring + global margins
    xcf = jnp.transpose(x_nchw, (1, 0, 2, 3))
    xpad = jnp.pad(xcf, ((0, 0), (0, 0), (1, 1), (1, 1))).reshape(C, L)
    xpad = jnp.pad(xpad, ((0, 0), (M, M))).astype(jnp.bfloat16)

    # z broadcast to a zero-bordered spatial plane (decoder concat input)
    zpl = jnp.broadcast_to(z.astype(jnp.float32).T[:, :, None, None], (Z, N, H, W))
    zpl = jnp.pad(zpl, ((0, 0), (0, 0), (1, 1), (1, 1))).reshape(Z, L).astype(jnp.bfloat16)

    imask = jnp.asarray(_interior_mask(H, W, N), dtype=jnp.float32)      # [1, L]

    def tmT(w):                                      # HWIO [3,3,ci,co] -> [9, co, ci]
        ci, co = w.shape[2], w.shape[3]
        return jnp.transpose(w.reshape(9, ci, co), (0, 2, 1))

    wa = tmT(params["a_w"]).astype(jnp.bfloat16)                          # [9, Ca, C]
    ba = params["a_b"][:, None].astype(jnp.float32)
    ws9 = jnp.pad(tmT(params["s_w"]), ((0, 0), (0, 0), (0, Z)))           # [9, Cs, Ca+Z]
    wd9 = tmT(params["d_w"])                                              # [9, Cr, Ca+Z]
    wsd = jnp.concatenate([ws9, wd9], axis=1).astype(jnp.bfloat16)        # [9, Cs+Cr, Ca+Z]
    bsd = jnp.concatenate([params["s_b"], params["d_b"]])[:, None].astype(jnp.float32)

    args = [xpad, zpl, imask, wa, ba, wsd, bsd]
    kern = functools.partial(_anat_seg_dec_kernel, Wp=Wp, L=L, M=M, Ca=Ca)
    out = pl.pallas_call(
        kern,
        grid=(1,),
        out_shape=jax.ShapeDtypeStruct((Cs + Cr, L), jnp.float32),
        in_specs=[_full_spec(a) for a in args],
        out_specs=pl.BlockSpec((Cs + Cr, L), lambda i: (0, 0)),
        scratch_shapes=[pltpu.VMEM((Ca + Z, L + 2 * M), jnp.bfloat16)],
        compiler_params=pltpu.CompilerParams(
            dimension_semantics=("arbitrary",),
            vmem_limit_bytes=32 * 1024 * 1024),
    )(*args)

    out = out.reshape(Cs + Cr, N, Hp, Wp)[:, :, 1:H + 1, 1:W + 1]
    seg = jnp.transpose(out[:Cs], (1, 0, 2, 3))
    reco = jnp.transpose(out[Cs:], (1, 0, 2, 3))
    return seg, reco


# ----------------------------------------------------------------------------
# Parameters (deterministic init; BN carries gamma/beta + running stats)
# ----------------------------------------------------------------------------
def init_params(key, in_channels=3, z_length=8, anatomy_out=8, num_classes=1):
    ks = list(jax.random.split(key, 16))

    def nrm(k, shape, s=0.1):
        return (s * jax.random.normal(k, shape)).astype(jnp.float32)

    p = {}
    chans = [in_channels, 16, 32, 64, 128]
    for i in range(4):
        cin, cout = chans[i], chans[i + 1]
        p[f"m_w{i}"] = nrm(ks[i], (3, 3, cin, cout))
        p[f"m_g{i}"] = jnp.ones((cout,), jnp.float32)
        p[f"m_be{i}"] = jnp.zeros((cout,), jnp.float32)
        p[f"m_rm{i}"] = jnp.zeros((cout,), jnp.float32)
        p[f"m_rv{i}"] = jnp.ones((cout,), jnp.float32)
    p["fc_w"] = nrm(ks[4], (128, 32))
    p["fc_b"] = nrm(ks[5], (32,))
    p["fc_g"] = jnp.ones((32,), jnp.float32)
    p["fc_be"] = jnp.zeros((32,), jnp.float32)
    p["fc_rm"] = jnp.zeros((32,), jnp.float32)
    p["fc_rv"] = jnp.ones((32,), jnp.float32)
    p["mu_w"] = nrm(ks[6], (32, z_length))
    p["mu_b"] = nrm(ks[7], (z_length,))
    p["lv_w"] = nrm(ks[8], (32, z_length))
    p["lv_b"] = nrm(ks[9], (z_length,))
    # TODO(synk): UTNet internals not provided; stand-in = single 3x3 conv.
    p["a_w"] = nrm(ks[10], (3, 3, in_channels, anatomy_out))
    p["a_b"] = nrm(ks[11], (anatomy_out,))
    # TODO(synk): Segmentor internals not provided; stand-in = single 3x3 conv.
    p["s_w"] = nrm(ks[12], (3, 3, anatomy_out, num_classes))
    p["s_b"] = nrm(ks[13], (num_classes,))
    # TODO(synk): Decoder internals not provided; stand-in = conv over concat(a, z_map).
    p["d_w"] = nrm(ks[14], (3, 3, anatomy_out + z_length, in_channels))
    p["d_b"] = nrm(ks[15], (in_channels,))
    return p


# ----------------------------------------------------------------------------
# SD_UTNet forward (eval mode)
# ----------------------------------------------------------------------------
def sd_utnet_forward(params, x_nchw, eps):
    z, mu, logvar = modality_encoder_pallas(params, x_nchw, eps)
    seg_pred, reco = anat_seg_dec_pallas(params, x_nchw, z)
    z_tilde = z                                      # eval mode: z_out_tilde = z_out
    return seg_pred, reco, z, z_tilde, mu, logvar, x_nchw


# ----------------------------------------------------------------------------
# Pure-JAX reference (loose numerical sanity check vs the bf16 kernels)
# ----------------------------------------------------------------------------
def _conv_ref(x_nhwc, w_hwio, stride, pad):
    return jax.lax.conv_general_dilated(
        x_nhwc, w_hwio, window_strides=(stride, stride),
        padding=((pad, pad), (pad, pad)),
        dimension_numbers=("NHWC", "HWIO", "NHWC"))


def sd_utnet_reference(params, x_nchw, eps):
    x = jnp.transpose(x_nchw, (0, 2, 3, 1))
    a = jnp.tanh(_conv_ref(x, params["a_w"], 1, 1) + params["a_b"])
    seg = _conv_ref(a, params["s_w"], 1, 1) + params["s_b"]
    h = x
    for i in range(4):
        sc, sh = _bn_fold(params[f"m_g{i}"], params[f"m_be{i}"],
                          params[f"m_rm{i}"], params[f"m_rv{i}"])
        y = _conv_ref(h, params[f"m_w{i}"], 2, 1) * sc + sh
        h = jnp.where(y >= 0, y, LRELU_SLOPE * y)
    h = h.reshape(h.shape[0], -1)
    sc, sh = _bn_fold(params["fc_g"], params["fc_be"],
                      params["fc_rm"], params["fc_rv"])
    y = (h @ params["fc_w"] + params["fc_b"]) * sc + sh
    h = jnp.where(y >= 0, y, LRELU_SLOPE * y)
    mu = h @ params["mu_w"] + params["mu_b"]
    lv = h @ params["lv_w"] + params["lv_b"]
    z = mu + eps * jnp.exp(0.5 * lv)
    N, Hh, Ww, _ = a.shape
    zmap = jnp.broadcast_to(z[:, None, None, :], (N, Hh, Ww, z.shape[1]))
    reco = _conv_ref(jnp.concatenate([a, zmap], axis=-1),
                     params["d_w"], 1, 1) + params["d_b"]
    return (jnp.transpose(seg, (0, 3, 1, 2)), jnp.transpose(reco, (0, 3, 1, 2)),
            z, mu, lv)


# ----------------------------------------------------------------------------
if __name__ == "__main__":
    key = jax.random.PRNGKey(0)
    k_par, k_x, k_eps = jax.random.split(key, 3)

    B, C, H, W = 2, 3, 16, 16            # target_size = H = 16
    z_length = 8
    params = init_params(k_par, in_channels=C, z_length=z_length,
                         anatomy_out=8, num_classes=1)

    x = jax.random.normal(k_x, (B, C, H, W), dtype=jnp.float32)
    eps = jax.random.normal(k_eps, (B, z_length), dtype=jnp.float32)  # reparam noise

    fwd = jax.jit(sd_utnet_forward)
    outs = jax.block_until_ready(fwd(params, x, eps))
    seg_pred, reco, z_out, z_tilde, mu, logvar, x_out = outs

    assert seg_pred.shape == (B, 1, H, W)
    assert reco.shape == (B, C, H, W)
    assert z_out.shape == (B, z_length) and mu.shape == (B, z_length)
    assert logvar.shape == (B, z_length) and x_out.shape == (B, C, H, W)

    # Loose tolerance: kernels run bf16 matmul operands with f32 accumulation.
    rseg, rreco, rz, rmu, rlv = sd_utnet_reference(params, x, eps)
    for got, want in ((seg_pred, rseg), (reco, rreco), (z_out, rz),
                      (mu, rmu), (logvar, rlv)):
        np.testing.assert_allclose(np.asarray(got), np.asarray(want),
                                   rtol=0.1, atol=0.1)

    print("KERNEL_OK")
</pallas_src>

<mosaic_0001>
module attributes {stable_mosaic.version = 11 : i64} {
  func.func @_modality_kernel(%arg0: i32, %arg1: memref<1x3x362xbf16, #tpu.memory_space<vmem>>, %arg2: memref<9x16x3xbf16, #tpu.memory_space<vmem>>, %arg3: memref<16x1xf32, #tpu.memory_space<vmem>>, %arg4: memref<324x100xbf16, #tpu.memory_space<vmem>>, %arg5: memref<9x32x16xbf16, #tpu.memory_space<vmem>>, %arg6: memref<32x1xf32, #tpu.memory_space<vmem>>, %arg7: memref<100x36xbf16, #tpu.memory_space<vmem>>, %arg8: memref<9x64x32xbf16, #tpu.memory_space<vmem>>, %arg9: memref<64x1xf32, #tpu.memory_space<vmem>>, %arg10: memref<36x16xbf16, #tpu.memory_space<vmem>>, %arg11: memref<9x128x64xbf16, #tpu.memory_space<vmem>>, %arg12: memref<128x1xf32, #tpu.memory_space<vmem>>, %arg13: memref<16x1xbf16, #tpu.memory_space<vmem>>, %arg14: memref<32x128xbf16, #tpu.memory_space<vmem>>, %arg15: memref<32x1xf32, #tpu.memory_space<vmem>>, %arg16: memref<16x32xbf16, #tpu.memory_space<vmem>>, %arg17: memref<16x1xf32, #tpu.memory_space<vmem>>, %arg18: memref<1x8x1xf32, #tpu.memory_space<vmem>>, %arg19: memref<1x8x1xf32, #tpu.memory_space<vmem>>, %arg20: memref<1x8x1xf32, #tpu.memory_space<vmem>>, %arg21: memref<1x8x1xf32, #tpu.memory_space<vmem>>, %arg22: memref<16x122xbf16, #tpu.memory_space<vmem>>, %arg23: memref<32x50xbf16, #tpu.memory_space<vmem>>, %arg24: memref<64x26xbf16, #tpu.memory_space<vmem>>) attributes {dimension_semantics = [#tpu.dimension_semantics<parallel>], iteration_bounds = array<i64: 2>, scalar_prefetch = 0 : i64, scratch_operands = 3 : i64, tpu.core_type = #tpu.core_type<tc>, window_params = [{transform_indices = @transform_0, window_bounds = array<i64: 1, 3, 362>}, {pipeline_mode = #tpu.pipeline_mode<synchronous>, transform_indices = @transform_1, window_bounds = array<i64: 9, 16, 3>}, {pipeline_mode = #tpu.pipeline_mode<synchronous>, transform_indices = @transform_2, window_bounds = array<i64: 16, 1>}, {pipeline_mode = #tpu.pipeline_mode<synchronous>, transform_indices = @transform_3, window_bounds = array<i64: 324, 100>}, {pipeline_mode = #tpu.pipeline_mode<synchronous>, transform_indices = @transform_4, window_bounds = array<i64: 9, 32, 16>}, {pipeline_mode = #tpu.pipeline_mode<synchronous>, transform_indices = @transform_5, window_bounds = array<i64: 32, 1>}, {pipeline_mode = #tpu.pipeline_mode<synchronous>, transform_indices = @transform_6, window_bounds = array<i64: 100, 36>}, {pipeline_mode = #tpu.pipeline_mode<synchronous>, transform_indices = @transform_7, window_bounds = array<i64: 9, 64, 32>}, {pipeline_mode = #tpu.pipeline_mode<synchronous>, transform_indices = @transform_8, window_bounds = array<i64: 64, 1>}, {pipeline_mode = #tpu.pipeline_mode<synchronous>, transform_indices = @transform_9, window_bounds = array<i64: 36, 16>}, {pipeline_mode = #tpu.pipeline_mode<synchronous>, transform_indices = @transform_10, window_bounds = array<i64: 9, 128, 64>}, {pipeline_mode = #tpu.pipeline_mode<synchronous>, transform_indices = @transform_11, window_bounds = array<i64: 128, 1>}, {pipeline_mode = #tpu.pipeline_mode<synchronous>, transform_indices = @transform_12, window_bounds = array<i64: 16, 1>}, {pipeline_mode = #tpu.pipeline_mode<synchronous>, transform_indices = @transform_13, window_bounds = array<i64: 32, 128>}, {pipeline_mode = #tpu.pipeline_mode<synchronous>, transform_indices = @transform_14, window_bounds = array<i64: 32, 1>}, {pipeline_mode = #tpu.pipeline_mode<synchronous>, transform_indices = @transform_15, window_bounds = array<i64: 16, 32>}, {pipeline_mode = #tpu.pipeline_mode<synchronous>, transform_indices = @transform_16, window_bounds = array<i64: 16, 1>}, {transform_indices = @transform_17, window_bounds = array<i64: 1, 8, 1>}, {transform_indices = @transform_18, window_bounds = array<i64: 1, 8, 1>}, {transform_indices = @transform_19, window_bounds = array<i64: 1, 8, 1>}, {transform_indices = @transform_20, window_bounds = array<i64: 1, 8, 1>}]} {
    %cst = arith.constant 0.000000e+00 : bf16
    %0 = vector.broadcast %cst : bf16 to vector<16x11xbf16>
    %c0 = arith.constant 0 : index
    %c0_0 = arith.constant 0 : index
    %1 = vector.load %arg22[%c0, %c0_0] : memref<16x122xbf16, #tpu.memory_space<vmem>>, vector<16x11xbf16>
    tpu.vector_store %arg22[%c0, %c0_0], %0 {strides = array<i32>} : memref<16x122xbf16, #tpu.memory_space<vmem>>, vector<16x11xbf16>,
    %cst_1 = arith.constant 0.000000e+00 : bf16
    %2 = vector.broadcast %cst_1 : bf16 to vector<16x11xbf16>
    %c0_2 = arith.constant 0 : index
    %c111 = arith.constant 111 : index
    %3 = vector.load %arg22[%c0_2, %c111] : memref<16x122xbf16, #tpu.memory_space<vmem>>, vector<16x11xbf16>
    tpu.vector_store %arg22[%c0_2, %c111], %2 {strides = array<i32>} : memref<16x122xbf16, #tpu.memory_space<vmem>>, vector<16x11xbf16>,
    %cst_3 = arith.constant 0.000000e+00 : bf16
    %4 = vector.broadcast %cst_3 : bf16 to vector<32x7xbf16>
    %c0_4 = arith.constant 0 : index
    %c0_5 = arith.constant 0 : index
    %5 = vector.load %arg23[%c0_4, %c0_5] : memref<32x50xbf16, #tpu.memory_space<vmem>>, vector<32x7xbf16>
    tpu.vector_store %arg23[%c0_4, %c0_5], %4 {strides = array<i32>} : memref<32x50xbf16, #tpu.memory_space<vmem>>, vector<32x7xbf16>,
    %cst_6 = arith.constant 0.000000e+00 : bf16
    %6 = vector.broadcast %cst_6 : bf16 to vector<32x7xbf16>
    %c0_7 = arith.constant 0 : index
    %c43 = arith.constant 43 : index
    %7 = vector.load %arg23[%c0_7, %c43] : memref<32x50xbf16, #tpu.memory_space<vmem>>, vector<32x7xbf16>
    tpu.vector_store %arg23[%c0_7, %c43], %6 {strides = array<i32>} : memref<32x50xbf16, #tpu.memory_space<vmem>>, vector<32x7xbf16>,
    %cst_8 = arith.constant 0.000000e+00 : bf16
    %8 = vector.broadcast %cst_8 : bf16 to vector<64x5xbf16>
    %c0_9 = arith.constant 0 : index
    %c0_10 = arith.constant 0 : index
    %9 = vector.load %arg24[%c0_9, %c0_10] : memref<64x26xbf16, #tpu.memory_space<vmem>>, vector<64x5xbf16>
    tpu.vector_store %arg24[%c0_9, %c0_10], %8 {strides = array<i32>} : memref<64x26xbf16, #tpu.memory_space<vmem>>, vector<64x5xbf16>,
    %cst_11 = arith.constant 0.000000e+00 : bf16
    %10 = vector.broadcast %cst_11 : bf16 to vector<64x5xbf16>
    %c0_12 = arith.constant 0 : index
    %c21 = arith.constant 21 : index
    %11 = vector.load %arg24[%c0_12, %c21] : memref<64x26xbf16, #tpu.memory_space<vmem>>, vector<64x5xbf16>
    tpu.vector_store %arg24[%c0_12, %c21], %10 {strides = array<i32>} : memref<64x26xbf16, #tpu.memory_space<vmem>>, vector<64x5xbf16>,
    %cst_13 = arith.constant 0.000000e+00 : f32
    %12 = vector.broadcast %cst_13 : f32 to vector<16x324xf32>
    %c0_14 = arith.constant 0 : index
    %c0_15 = arith.constant 0 : index
    %c0_16 = arith.constant 0 : index
    %13 = vector.load %arg2[%c0_14, %c0_15, %c0_16] : memref<9x16x3xbf16, #tpu.memory_space<vmem>>, vector<1x16x3xbf16>
    %14 = vector.shape_cast %13 : vector<1x16x3xbf16> to vector<16x3xbf16>
    %c0_17 = arith.constant 0 : index
    %c0_18 = arith.constant 0 : index
    %c0_19 = arith.constant 0 : index
    %15 = vector.load %arg1[%c0_17, %c0_18, %c0_19] : memref<1x3x362xbf16, #tpu.memory_space<vmem>>, vector<1x3x324xbf16>
    %16 = vector.shape_cast %15 : vector<1x3x324xbf16> to vector<3x324xbf16>
    %cst_20 = arith.constant dense<0.000000e+00> : vector<16x324xf32>
    %17 = tpu.matmul %14, %16, %cst_20 {dimension_numbers = #tpu.dot_dimension_numbers<[1], [0], [0], [1], [0, 0, 1, 1], [], []>} : vector<16x3xbf16>, vector<3x324xbf16>, vector<16x324xf32> -> vector<16x324xf32>
    %18 = arith.addf %12, %17 : vector<16x324xf32>
    %c1 = arith.constant 1 : index
    %c0_21 = arith.constant 0 : index
    %c0_22 = arith.constant 0 : index
    %19 = vector.load %arg2[%c1, %c0_21, %c0_22] : memref<9x16x3xbf16, #tpu.memory_space<vmem>>, vector<1x16x3xbf16>
    %20 = vector.shape_cast %19 : vector<1x16x3xbf16> to vector<16x3xbf16>
    %c0_23 = arith.constant 0 : index
    %c0_24 = arith.constant 0 : index
    %c1_25 = arith.constant 1 : index
    %21 = vector.load %arg1[%c0_23, %c0_24, %c1_25] : memref<1x3x362xbf16, #tpu.memory_space<vmem>>, vector<1x3x324xbf16>
    %22 = vector.shape_cast %21 : vector<1x3x324xbf16> to vector<3x324xbf16>
    %cst_26 = arith.constant dense<0.000000e+00> : vector<16x324xf32>
    %23 = tpu.matmul %20, %22, %cst_26 {dimension_numbers = #tpu.dot_dimension_numbers<[1], [0], [0], [1], [0, 0, 1, 1], [], []>} : vector<16x3xbf16>, vector<3x324xbf16>, vector<16x324xf32> -> vector<16x324xf32>
    %24 = arith.addf %18, %23 : vector<16x324xf32>
    %c2 = arith.constant 2 : index
    %c0_27 = arith.constant 0 : index
    %c0_28 = arith.constant 0 : index
    %25 = vector.load %arg2[%c2, %c0_27, %c0_28] : memref<9x16x3xbf16, #tpu.memory_space<vmem>>, vector<1x16x3xbf16>
    %26 = vector.shape_cast %25 : vector<1x16x3xbf16> to vector<16x3xbf16>
    %c0_29 = arith.constant 0 : index
    %c0_30 = arith.constant 0 : index
    %c2_31 = arith.constant 2 : index
    %27 = vector.load %arg1[%c0_29, %c0_30, %c2_31] : memref<1x3x362xbf16, #tpu.memory_space<vmem>>, vector<1x3x324xbf16>
    %28 = vector.shape_cast %27 : vector<1x3x324xbf16> to vector<3x324xbf16>
    %cst_32 = arith.constant dense<0.000000e+00> : vector<16x324xf32>
    %29 = tpu.matmul %26, %28, %cst_32 {dimension_numbers = #tpu.dot_dimension_numbers<[1], [0], [0], [1], [0, 0, 1, 1], [], []>} : vector<16x3xbf16>, vector<3x324xbf16>, vector<16x324xf32> -> vector<16x324xf32>
    %30 = arith.addf %24, %29 : vector<16x324xf32>
    %c3 = arith.constant 3 : index
    %c0_33 = arith.constant 0 : index
    %c0_34 = arith.constant 0 : index
    %31 = vector.load %arg2[%c3, %c0_33, %c0_34] : memref<9x16x3xbf16, #tpu.memory_space<vmem>>, vector<1x16x3xbf16>
    %32 = vector.shape_cast %31 : vector<1x16x3xbf16> to vector<16x3xbf16>
    %c0_35 = arith.constant 0 : index
    %c0_36 = arith.constant 0 : index
    %c18 = arith.constant 18 : index
    %33 = vector.load %arg1[%c0_35, %c0_36, %c18] : memref<1x3x362xbf16, #tpu.memory_space<vmem>>, vector<1x3x324xbf16>
    %34 = vector.shape_cast %33 : vector<1x3x324xbf16> to vector<3x324xbf16>
    %cst_37 = arith.constant dense<0.000000e+00> : vector<16x324xf32>
    %35 = tpu.matmul %32, %34, %cst_37 {dimension_numbers = #tpu.dot_dimension_numbers<[1], [0], [0], [1], [0, 0, 1, 1], [], []>} : vector<16x3xbf16>, vector<3x324xbf16>, vector<16x324xf32> -> vector<16x324xf32>
    %36 = arith.addf %30, %35 : vector<16x324xf32>
    %c4 = arith.constant 4 : index
    %c0_38 = arith.constant 0 : index
    %c0_39 = arith.constant 0 : index
    %37 = vector.load %arg2[%c4, %c0_38, %c0_39] : memref<9x16x3xbf16, #tpu.memory_space<vmem>>, vector<1x16x3xbf16>
    %38 = vector.shape_cast %37 : vector<1x16x3xbf16> to vector<16x3xbf16>
    %c0_40 = arith.constant 0 : index
    %c0_41 = arith.constant 0 : index
    %c19 = arith.constant 19 : index
    %39 = vector.load %arg1[%c0_40, %c0_41, %c19] : memref<1x3x362xbf16, #tpu.memory_space<vmem>>, vector<1x3x324xbf16>
    %40 = vector.shape_cast %39 : vector<1x3x324xbf16> to vector<3x324xbf16>
    %cst_42 = arith.constant dense<0.000000e+00> : vector<16x324xf32>
    %41 = tpu.matmul %38, %40, %cst_42 {dimension_numbers = #tpu.dot_dimension_numbers<[1], [0], [0], [1], [0, 0, 1, 1], [], []>} : vector<16x3xbf16>, vector<3x324xbf16>, vector<16x324xf32> -> vector<16x324xf32>
    %42 = arith.addf %36, %41 : vector<16x324xf32>
    %c5 = arith.constant 5 : index
    %c0_43 = arith.constant 0 : index
    %c0_44 = arith.constant 0 : index
    %43 = vector.load %arg2[%c5, %c0_43, %c0_44] : memref<9x16x3xbf16, #tpu.memory_space<vmem>>, vector<1x16x3xbf16>
    %44 = vector.shape_cast %43 : vector<1x16x3xbf16> to vector<16x3xbf16>
    %c0_45 = arith.constant 0 : index
    %c0_46 = arith.constant 0 : index
    %c20 = arith.constant 20 : index
    %45 = vector.load %arg1[%c0_45, %c0_46, %c20] : memref<1x3x362xbf16, #tpu.memory_space<vmem>>, vector<1x3x324xbf16>
    %46 = vector.shape_cast %45 : vector<1x3x324xbf16> to vector<3x324xbf16>
    %cst_47 = arith.constant dense<0.000000e+00> : vector<16x324xf32>
    %47 = tpu.matmul %44, %46, %cst_47 {dimension_numbers = #tpu.dot_dimension_numbers<[1], [0], [0], [1], [0, 0, 1, 1], [], []>} : vector<16x3xbf16>, vector<3x324xbf16>, vector<16x324xf32> -> vector<16x324xf32>
    %48 = arith.addf %42, %47 : vector<16x324xf32>
    %c6 = arith.constant 6 : index
    %c0_48 = arith.constant 0 : index
    %c0_49 = arith.constant 0 : index
    %49 = vector.load %arg2[%c6, %c0_48, %c0_49] : memref<9x16x3xbf16, #tpu.memory_space<vmem>>, vector<1x16x3xbf16>
    %50 = vector.shape_cast %49 : vector<1x16x3xbf16> to vector<16x3xbf16>
    %c0_50 = arith.constant 0 : index
    %c0_51 = arith.constant 0 : index
    %c36 = arith.constant 36 : index
    %51 = vector.load %arg1[%c0_50, %c0_51, %c36] : memref<1x3x362xbf16, #tpu.memory_space<vmem>>, vector<1x3x324xbf16>
    %52 = vector.shape_cast %51 : vector<1x3x324xbf16> to vector<3x324xbf16>
    %cst_52 = arith.constant dense<0.000000e+00> : vector<16x324xf32>
    %53 = tpu.matmul %50, %52, %cst_52 {dimension_numbers = #tpu.dot_dimension_numbers<[1], [0], [0], [1], [0, 0, 1, 1], [], []>} : vector<16x3xbf16>, vector<3x324xbf16>, vector<16x324xf32> -> vector<16x324xf32>
    %54 = arith.addf %48, %53 : vector<16x324xf32>
    %c7 = arith.constant 7 : index
    %c0_53 = arith.constant 0 : index
    %c0_54 = arith.constant 0 : index
    %55 = vector.load %arg2[%c7, %c0_53, %c0_54] : memref<9x16x3xbf16, #tpu.memory_space<vmem>>, vector<1x16x3xbf16>
    %56 = vector.shape_cast %55 : vector<1x16x3xbf16> to vector<16x3xbf16>
    %c0_55 = arith.constant 0 : index
    %c0_56 = arith.constant 0 : index
    %c37 = arith.constant 37 : index
    %57 = vector.load %arg1[%c0_55, %c0_56, %c37] : memref<1x3x362xbf16, #tpu.memory_space<vmem>>, vector<1x3x324xbf16>
    %58 = vector.shape_cast %57 : vector<1x3x324xbf16> to vector<3x324xbf16>
    %cst_57 = arith.constant dense<0.000000e+00> : vector<16x324xf32>
    %59 = tpu.matmul %56, %58, %cst_57 {dimension_numbers = #tpu.dot_dimension_numbers<[1], [0], [0], [1], [0, 0, 1, 1], [], []>} : vector<16x3xbf16>, vector<3x324xbf16>, vector<16x324xf32> -> vector<16x324xf32>
    %60 = arith.addf %54, %59 : vector<16x324xf32>
    %c8 = arith.constant 8 : index
    %c0_58 = arith.constant 0 : index
    %c0_59 = arith.constant 0 : index
    %61 = vector.load %arg2[%c8, %c0_58, %c0_59] : memref<9x16x3xbf16, #tpu.memory_space<vmem>>, vector<1x16x3xbf16>
    %62 = vector.shape_cast %61 : vector<1x16x3xbf16> to vector<16x3xbf16>
    %c0_60 = arith.constant 0 : index
    %c0_61 = arith.constant 0 : index
    %c38 = arith.constant 38 : index
    %63 = vector.load %arg1[%c0_60, %c0_61, %c38] : memref<1x3x362xbf16, #tpu.memory_space<vmem>>, vector<1x3x324xbf16>
    %64 = vector.shape_cast %63 : vector<1x3x324xbf16> to vector<3x324xbf16>
    %cst_62 = arith.constant dense<0.000000e+00> : vector<16x324xf32>
    %65 = tpu.matmul %62, %64, %cst_62 {dimension_numbers = #tpu.dot_dimension_numbers<[1], [0], [0], [1], [0, 0, 1, 1], [], []>} : vector<16x3xbf16>, vector<3x324xbf16>, vector<16x324xf32> -> vector<16x324xf32>
    %66 = arith.addf %60, %65 : vector<16x324xf32>
    %c0_63 = arith.constant 0 : index
    %c0_64 = arith.constant 0 : index
    %67 = vector.load %arg3[%c0_63, %c0_64] : memref<16x1xf32, #tpu.memory_space<vmem>>, vector<16x1xf32>
    %68 = vector.broadcast %67 : vector<16x1xf32> to vector<16x324xf32>
    %69 = arith.addf %66, %68 : vector<16x324xf32>
    %cst_65 = arith.constant 0.000000e+00 : f32
    %70 = vector.broadcast %cst_65 : f32 to vector<16x324xf32>
    %71 = arith.cmpf oge, %69, %70 : vector<16x324xf32>
    %cst_66 = arith.constant 3.000000e-02 : f32
    %72 = vector.broadcast %cst_66 : f32 to vector<16x324xf32>
    %73 = arith.mulf %72, %69 : vector<16x324xf32>
    %74 = arith.select %71, %69, %73 : vector<16x324xi1>, vector<16x324xf32>
    %75 = arith.truncf %74 : vector<16x324xf32> to vector<16x324xbf16>
    %c0_67 = arith.constant 0 : index
    %c0_68 = arith.constant 0 : index
    %76 = vector.load %arg4[%c0_67, %c0_68] : memref<324x100xbf16, #tpu.memory_space<vmem>>, vector<324x100xbf16>
    %cst_69 = arith.constant dense<0.000000e+00> : vector<16x100xf32>
    %77 = tpu.matmul %75, %76, %cst_69 {dimension_numbers = #tpu.dot_dimension_numbers<[1], [0], [0], [1], [0, 0, 1, 1], [], []>} : vector<16x324xbf16>, vector<324x100xbf16>, vector<16x100xf32> -> vector<16x100xf32>
    %78 = arith.truncf %77 : vector<16x100xf32> to vector<16x100xbf16>
    %c0_70 = arith.constant 0 : index
    %c11 = arith.constant 11 : index
    %79 = vector.load %arg22[%c0_70, %c11] : memref<16x122xbf16, #tpu.memory_space<vmem>>, vector<16x100xbf16>
    tpu.vector_store %arg22[%c0_70, %c11], %78 {strides = array<i32>} : memref<16x122xbf16, #tpu.memory_space<vmem>>, vector<16x100xbf16>,
    %cst_71 = arith.constant 0.000000e+00 : f32
    %80 = vector.broadcast %cst_71 : f32 to vector<32x100xf32>
    %c0_72 = arith.constant 0 : index
    %c0_73 = arith.constant 0 : index
    %c0_74 = arith.constant 0 : index
    %81 = vector.load %arg5[%c0_72, %c0_73, %c0_74] : memref<9x32x16xbf16, #tpu.memory_space<vmem>>, vector<1x32x16xbf16>
    %82 = vector.shape_cast %81 : vector<1x32x16xbf16> to vector<32x16xbf16>
    %c0_75 = arith.constant 0 : index
    %c0_76 = arith.constant 0 : index
    %83 = vector.load %arg22[%c0_75, %c0_76] : memref<16x122xbf16, #tpu.memory_space<vmem>>, vector<16x100xbf16>
    %cst_77 = arith.constant dense<0.000000e+00> : vector<32x100xf32>
    %84 = tpu.matmul %82, %83, %cst_77 {dimension_numbers = #tpu.dot_dimension_numbers<[1], [0], [0], [1], [0, 0, 1, 1], [], []>} : vector<32x16xbf16>, vector<16x100xbf16>, vector<32x100xf32> -> vector<32x100xf32>
    %85 = arith.addf %80, %84 : vector<32x100xf32>
    %c1_78 = arith.constant 1 : index
    %c0_79 = arith.constant 0 : index
    %c0_80 = arith.constant 0 : index
    %86 = vector.load %arg5[%c1_78, %c0_79, %c0_80] : memref<9x32x16xbf16, #tpu.memory_space<vmem>>, vector<1x32x16xbf16>
    %87 = vector.shape_cast %86 : vector<1x32x16xbf16> to vector<32x16xbf16>
    %c0_81 = arith.constant 0 : index
    %c1_82 = arith.constant 1 : index
    %88 = vector.load %arg22[%c0_81, %c1_82] : memref<16x122xbf16, #tpu.memory_space<vmem>>, vector<16x100xbf16>
    %cst_83 = arith.constant dense<0.000000e+00> : vector<32x100xf32>
    %89 = tpu.matmul %87, %88, %cst_83 {dimension_numbers = #tpu.dot_dimension_numbers<[1], [0], [0], [1], [0, 0, 1, 1], [], []>} : vector<32x16xbf16>, vector<16x100xbf16>, vector<32x100xf32> -> vector<32x100xf32>
    %90 = arith.addf %85, %89 : vector<32x100xf32>
    %c2_84 = arith.constant 2 : index
    %c0_85 = arith.constant 0 : index
    %c0_86 = arith.constant 0 : index
    %91 = vector.load %arg5[%c2_84, %c0_85, %c0_86] : memref<9x32x16xbf16, #tpu.memory_space<vmem>>, vector<1x32x16xbf16>
    %92 = vector.shape_cast %91 : vector<1x32x16xbf16> to vector<32x16xbf16>
    %c0_87 = arith.constant 0 : index
    %c2_88 = arith.constant 2 : index
    %93 = vector.load %arg22[%c0_87, %c2_88] : memref<16x122xbf16, #tpu.memory_space<vmem>>, vector<16x100xbf16>
    %cst_89 = arith.constant dense<0.000000e+00> : vector<32x100xf32>
    %94 = tpu.matmul %92, %93, %cst_89 {dimension_numbers = #tpu.dot_dimension_numbers<[1], [0], [0], [1], [0, 0, 1, 1], [], []>} : vector<32x16xbf16>, vector<16x100xbf16>, vector<32x100xf32> -> vector<32x100xf32>
    %95 = arith.addf %90, %94 : vector<32x100xf32>
    %c3_90 = arith.constant 3 : index
    %c0_91 = arith.constant 0 : index
    %c0_92 = arith.constant 0 : index
    %96 = vector.load %arg5[%c3_90, %c0_91, %c0_92] : memref<9x32x16xbf16, #tpu.memory_space<vmem>>, vector<1x32x16xbf16>
    %97 = vector.shape_cast %96 : vector<1x32x16xbf16> to vector<32x16xbf16>
    %c0_93 = arith.constant 0 : index
    %c10 = arith.constant 10 : index
    %98 = vector.load %arg22[%c0_93, %c10] : memref<16x122xbf16, #tpu.memory_space<vmem>>, vector<16x100xbf16>
    %cst_94 = arith.constant dense<0.000000e+00> : vector<32x100xf32>
    %99 = tpu.matmul %97, %98, %cst_94 {dimension_numbers = #tpu.dot_dimension_numbers<[1], [0], [0], [1], [0, 0, 1, 1], [], []>} : vector<32x16xbf16>, vector<16x100xbf16>, vector<32x100xf32> -> vector<32x100xf32>
    %100 = arith.addf %95, %99 : vector<32x100xf32>
    %c4_95 = arith.constant 4 : index
    %c0_96 = arith.constant 0 : index
    %c0_97 = arith.constant 0 : index
    %101 = vector.load %arg5[%c4_95, %c0_96, %c0_97] : memref<9x32x16xbf16, #tpu.memory_space<vmem>>, vector<1x32x16xbf16>
    %102 = vector.shape_cast %101 : vector<1x32x16xbf16> to vector<32x16xbf16>
    %c0_98 = arith.constant 0 : index
    %c11_99 = arith.constant 11 : index
    %103 = vector.load %arg22[%c0_98, %c11_99] : memref<16x122xbf16, #tpu.memory_space<vmem>>, vector<16x100xbf16>
    %cst_100 = arith.constant dense<0.000000e+00> : vector<32x100xf32>
    %104 = tpu.matmul %102, %103, %cst_100 {dimension_numbers = #tpu.dot_dimension_numbers<[1], [0], [0], [1], [0, 0, 1, 1], [], []>} : vector<32x16xbf16>, vector<16x100xbf16>, vector<32x100xf32> -> vector<32x100xf32>
    %105 = arith.addf %100, %104 : vector<32x100xf32>
    %c5_101 = arith.constant 5 : index
    %c0_102 = arith.constant 0 : index
    %c0_103 = arith.constant 0 : index
    %106 = vector.load %arg5[%c5_101, %c0_102, %c0_103] : memref<9x32x16xbf16, #tpu.memory_space<vmem>>, vector<1x32x16xbf16>
    %107 = vector.shape_cast %106 : vector<1x32x16xbf16> to vector<32x16xbf16>
    %c0_104 = arith.constant 0 : index
    %c12 = arith.constant 12 : index
    %108 = vector.load %arg22[%c0_104, %c12] : memref<16x122xbf16, #tpu.memory_space<vmem>>, vector<16x100xbf16>
    %cst_105 = arith.constant dense<0.000000e+00> : vector<32x100xf32>
    %109 = tpu.matmul %107, %108, %cst_105 {dimension_numbers = #tpu.dot_dimension_numbers<[1], [0], [0], [1], [0, 0, 1, 1], [], []>} : vector<32x16xbf16>, vector<16x100xbf16>, vector<32x100xf32> -> vector<32x100xf32>
    %110 = arith.addf %105, %109 : vector<32x100xf32>
    %c6_106 = arith.constant 6 : index
    %c0_107 = arith.constant 0 : index
    %c0_108 = arith.constant 0 : index
    %111 = vector.load %arg5[%c6_106, %c0_107, %c0_108] : memref<9x32x16xbf16, #tpu.memory_space<vmem>>, vector<1x32x16xbf16>
    %112 = vector.shape_cast %111 : vector<1x32x16xbf16> to vector<32x16xbf16>
    %c0_109 = arith.constant 0 : index
    %c20_110 = arith.constant 20 : index
    %113 = vector.load %arg22[%c0_109, %c20_110] : memref<16x122xbf16, #tpu.memory_space<vmem>>, vector<16x100xbf16>
    %cst_111 = arith.constant dense<0.000000e+00> : vector<32x100xf32>
    %114 = tpu.matmul %112, %113, %cst_111 {dimension_numbers = #tpu.dot_dimension_numbers<[1], [0], [0], [1], [0, 0, 1, 1], [], []>} : vector<32x16xbf16>, vector<16x100xbf16>, vector<32x100xf32> -> vector<32x100xf32>
    %115 = arith.addf %110, %114 : vector<32x100xf32>
    %c7_112 = arith.constant 7 : index
    %c0_113 = arith.constant 0 : index
    %c0_114 = arith.constant 0 : index
    %116 = vector.load %arg5[%c7_112, %c0_113, %c0_114] : memref<9x32x16xbf16, #tpu.memory_space<vmem>>, vector<1x32x16xbf16>
    %117 = vector.shape_cast %116 : vector<1x32x16xbf16> to vector<32x16xbf16>
    %c0_115 = arith.constant 0 : index
    %c21_116 = arith.constant 21 : index
    %118 = vector.load %arg22[%c0_115, %c21_116] : memref<16x122xbf16, #tpu.memory_space<vmem>>, vector<16x100xbf16>
    %cst_117 = arith.constant dense<0.000000e+00> : vector<32x100xf32>
    %119 = tpu.matmul %117, %118, %cst_117 {dimension_numbers = #tpu.dot_dimension_numbers<[1], [0], [0], [1], [0, 0, 1, 1], [], []>} : vector<32x16xbf16>, vector<16x100xbf16>, vector<32x100xf32> -> vector<32x100xf32>
    %120 = arith.addf %115, %119 : vector<32x100xf32>
    %c8_118 = arith.constant 8 : index
    %c0_119 = arith.constant 0 : index
    %c0_120 = arith.constant 0 : index
    %121 = vector.load %arg5[%c8_118, %c0_119, %c0_120] : memref<9x32x16xbf16, #tpu.memory_space<vmem>>, vector<1x32x16xbf16>
    %122 = vector.shape_cast %121 : vector<1x32x16xbf16> to vector<32x16xbf16>
    %c0_121 = arith.constant 0 : index
    %c22 = arith.constant 22 : index
    %123 = vector.load %arg22[%c0_121, %c22] : memref<16x122xbf16, #tpu.memory_space<vmem>>, vector<16x100xbf16>
    %cst_122 = arith.constant dense<0.000000e+00> : vector<32x100xf32>
    %124 = tpu.matmul %122, %123, %cst_122 {dimension_numbers = #tpu.dot_dimension_numbers<[1], [0], [0], [1], [0, 0, 1, 1], [], []>} : vector<32x16xbf16>, vector<16x100xbf16>, vector<32x100xf32> -> vector<32x100xf32>
    %125 = arith.addf %120, %124 : vector<32x100xf32>
    %c0_123 = arith.constant 0 : index
    %c0_124 = arith.constant 0 : index
    %126 = vector.load %arg6[%c0_123, %c0_124] : memref<32x1xf32, #tpu.memory_space<vmem>>, vector<32x1xf32>
    %127 = vector.broadcast %126 : vector<32x1xf32> to vector<32x100xf32>
    %128 = arith.addf %125, %127 : vector<32x100xf32>
    %cst_125 = arith.constant 0.000000e+00 : f32
    %129 = vector.broadcast %cst_125 : f32 to vector<32x100xf32>
    %130 = arith.cmpf oge, %128, %129 : vector<32x100xf32>
    %cst_126 = arith.constant 3.000000e-02 : f32
    %131 = vector.broadcast %cst_126 : f32 to vector<32x100xf32>
    %132 = arith.mulf %131, %128 : vector<32x100xf32>
    %133 = arith.select %130, %128, %132 : vector<32x100xi1>, vector<32x100xf32>
    %134 = arith.truncf %133 : vector<32x100xf32> to vector<32x100xbf16>
    %c0_127 = arith.constant 0 : index
    %c0_128 = arith.constant 0 : index
    %135 = vector.load %arg7[%c0_127, %c0_128] : memref<100x36xbf16, #tpu.memory_space<vmem>>, vector<100x36xbf16>
    %cst_129 = arith.constant dense<0.000000e+00> : vector<32x36xf32>
    %136 = tpu.matmul %134, %135, %cst_129 {dimension_numbers = #tpu.dot_dimension_numbers<[1], [0], [0], [1], [0, 0, 1, 1], [], []>} : vector<32x100xbf16>, vector<100x36xbf16>, vector<32x36xf32> -> vector<32x36xf32>
    %137 = arith.truncf %136 : vector<32x36xf32> to vector<32x36xbf16>
    %c0_130 = arith.constant 0 : index
    %c7_131 = arith.constant 7 : index
    %138 = vector.load %arg23[%c0_130, %c7_131] : memref<32x50xbf16, #tpu.memory_space<vmem>>, vector<32x36xbf16>
    tpu.vector_store %arg23[%c0_130, %c7_131], %137 {strides = array<i32>} : memref<32x50xbf16, #tpu.memory_space<vmem>>, vector<32x36xbf16>,
    %cst_132 = arith.constant 0.000000e+00 : f32
    %139 = vector.broadcast %cst_132 : f32 to vector<64x36xf32>
    %c0_133 = arith.constant 0 : index
    %c0_134 = arith.constant 0 : index
    %c0_135 = arith.constant 0 : index
    %140 = vector.load %arg8[%c0_133, %c0_134, %c0_135] : memref<9x64x32xbf16, #tpu.memory_space<vmem>>, vector<1x64x32xbf16>
    %141 = vector.shape_cast %140 : vector<1x64x32xbf16> to vector<64x32xbf16>
    %c0_136 = arith.constant 0 : index
    %c0_137 = arith.constant 0 : index
    %142 = vector.load %arg23[%c0_136, %c0_137] : memref<32x50xbf16, #tpu.memory_space<vmem>>, vector<32x36xbf16>
    %cst_138 = arith.constant dense<0.000000e+00> : vector<64x36xf32>
    %143 = tpu.matmul %141, %142, %cst_138 {dimension_numbers = #tpu.dot_dimension_numbers<[1], [0], [0], [1], [0, 0, 1, 1], [], []>} : vector<64x32xbf16>, vector<32x36xbf16>, vector<64x36xf32> -> vector<64x36xf32>
    %144 = arith.addf %139, %143 : vector<64x36xf32>
    %c1_139 = arith.constant 1 : index
    %c0_140 = arith.constant 0 : index
    %c0_141 = arith.constant 0 : index
    %145 = vector.load %arg8[%c1_139, %c0_140, %c0_141] : memref<9x64x32xbf16, #tpu.memory_space<vmem>>, vector<1x64x32xbf16>
    %146 = vector.shape_cast %145 : vector<1x64x32xbf16> to vector<64x32xbf16>
    %c0_142 = arith.constant 0 : index
    %c1_143 = arith.constant 1 : index
    %147 = vector.load %arg23[%c0_142, %c1_143] : memref<32x50xbf16, #tpu.memory_space<vmem>>, vector<32x36xbf16>
    %cst_144 = arith.constant dense<0.000000e+00> : vector<64x36xf32>
    %148 = tpu.matmul %146, %147, %cst_144 {dimension_numbers = #tpu.dot_dimension_numbers<[1], [0], [0], [1], [0, 0, 1, 1], [], []>} : vector<64x32xbf16>, vector<32x36xbf16>, vector<64x36xf32> -> vector<64x36xf32>
    %149 = arith.addf %144, %148 : vector<64x36xf32>
    %c2_145 = arith.constant 2 : index
    %c0_146 = arith.constant 0 : index
    %c0_147 = arith.constant 0 : index
    %150 = vector.load %arg8[%c2_145, %c0_146, %c0_147] : memref<9x64x32xbf16, #tpu.memory_space<vmem>>, vector<1x64x32xbf16>
    %151 = vector.shape_cast %150 : vector<1x64x32xbf16> to vector<64x32xbf16>
    %c0_148 = arith.constant 0 : index
    %c2_149 = arith.constant 2 : index
    %152 = vector.load %arg23[%c0_148, %c2_149] : memref<32x50xbf16, #tpu.memory_space<vmem>>, vector<32x36xbf16>
    %cst_150 = arith.constant dense<0.000000e+00> : vector<64x36xf32>
    %153 = tpu.matmul %151, %152, %cst_150 {dimension_numbers = #tpu.dot_dimension_numbers<[1], [0], [0], [1], [0, 0, 1, 1], [], []>} : vector<64x32xbf16>, vector<32x36xbf16>, vector<64x36xf32> -> vector<64x36xf32>
    %154 = arith.addf %149, %153 : vector<64x36xf32>
    %c3_151 = arith.constant 3 : index
    %c0_152 = arith.constant 0 : index
    %c0_153 = arith.constant 0 : index
    %155 = vector.load %arg8[%c3_151, %c0_152, %c0_153] : memref<9x64x32xbf16, #tpu.memory_space<vmem>>, vector<1x64x32xbf16>
    %156 = vector.shape_cast %155 : vector<1x64x32xbf16> to vector<64x32xbf16>
    %c0_154 = arith.constant 0 : index
    %c6_155 = arith.constant 6 : index
    %157 = vector.load %arg23[%c0_154, %c6_155] : memref<32x50xbf16, #tpu.memory_space<vmem>>, vector<32x36xbf16>
    %cst_156 = arith.constant dense<0.000000e+00> : vector<64x36xf32>
    %158 = tpu.matmul %156, %157, %cst_156 {dimension_numbers = #tpu.dot_dimension_numbers<[1], [0], [0], [1], [0, 0, 1, 1], [], []>} : vector<64x32xbf16>, vector<32x36xbf16>, vector<64x36xf32> -> vector<64x36xf32>
    %159 = arith.addf %154, %158 : vector<64x36xf32>
    %c4_157 = arith.constant 4 : index
    %c0_158 = arith.constant 0 : index
    %c0_159 = arith.constant 0 : index
    %160 = vector.load %arg8[%c4_157, %c0_158, %c0_159] : memref<9x64x32xbf16, #tpu.memory_space<vmem>>, vector<1x64x32xbf16>
    %161 = vector.shape_cast %160 : vector<1x64x32xbf16> to vector<64x32xbf16>
    %c0_160 = arith.constant 0 : index
    %c7_161 = arith.constant 7 : index
    %162 = vector.load %arg23[%c0_160, %c7_161] : memref<32x50xbf16, #tpu.memory_space<vmem>>, vector<32x36xbf16>
    %cst_162 = arith.constant dense<0.000000e+00> : vector<64x36xf32>
    %163 = tpu.matmul %161, %162, %cst_162 {dimension_numbers = #tpu.dot_dimension_numbers<[1], [0], [0], [1], [0, 0, 1, 1], [], []>} : vector<64x32xbf16>, vector<32x36xbf16>, vector<64x36xf32> -> vector<64x36xf32>
    %164 = arith.addf %159, %163 : vector<64x36xf32>
    %c5_163 = arith.constant 5 : index
    %c0_164 = arith.constant 0 : index
    %c0_165 = arith.constant 0 : index
    %165 = vector.load %arg8[%c5_163, %c0_164, %c0_165] : memref<9x64x32xbf16, #tpu.memory_space<vmem>>, vector<1x64x32xbf16>
    %166 = vector.shape_cast %165 : vector<1x64x32xbf16> to vector<64x32xbf16>
    %c0_166 = arith.constant 0 : index
    %c8_167 = arith.constant 8 : index
    %167 = vector.load %arg23[%c0_166, %c8_167] : memref<32x50xbf16, #tpu.memory_space<vmem>>, vector<32x36xbf16>
    %cst_168 = arith.constant dense<0.000000e+00> : vector<64x36xf32>
    %168 = tpu.matmul %166, %167, %cst_168 {dimension_numbers = #tpu.dot_dimension_numbers<[1], [0], [0], [1], [0, 0, 1, 1], [], []>} : vector<64x32xbf16>, vector<32x36xbf16>, vector<64x36xf32> -> vector<64x36xf32>
    %169 = arith.addf %164, %168 : vector<64x36xf32>
    %c6_169 = arith.constant 6 : index
    %c0_170 = arith.constant 0 : index
    %c0_171 = arith.constant 0 : index
    %170 = vector.load %arg8[%c6_169, %c0_170, %c0_171] : memref<9x64x32xbf16, #tpu.memory_space<vmem>>, vector<1x64x32xbf16>
    %171 = vector.shape_cast %170 : vector<1x64x32xbf16> to vector<64x32xbf16>
    %c0_172 = arith.constant 0 : index
    %c12_173 = arith.constant 12 : index
    %172 = vector.load %arg23[%c0_172, %c12_173] : memref<32x50xbf16, #tpu.memory_space<vmem>>, vector<32x36xbf16>
    %cst_174 = arith.constant dense<0.000000e+00> : vector<64x36xf32>
    %173 = tpu.matmul %171, %172, %cst_174 {dimension_numbers = #tpu.dot_dimension_numbers<[1], [0], [0], [1], [0, 0, 1, 1], [], []>} : vector<64x32xbf16>, vector<32x36xbf16>, vector<64x36xf32> -> vector<64x36xf32>
    %174 = arith.addf %169, %173 : vector<64x36xf32>
    %c7_175 = arith.constant 7 : index
    %c0_176 = arith.constant 0 : index
    %c0_177 = arith.constant 0 : index
    %175 = vector.load %arg8[%c7_175, %c0_176, %c0_177] : memref<9x64x32xbf16, #tpu.memory_space<vmem>>, vector<1x64x32xbf16>
    %176 = vector.shape_cast %175 : vector<1x64x32xbf16> to vector<64x32xbf16>
    %c0_178 = arith.constant 0 : index
    %c13 = arith.constant 13 : index
    %177 = vector.load %arg23[%c0_178, %c13] : memref<32x50xbf16, #tpu.memory_space<vmem>>, vector<32x36xbf16>
    %cst_179 = arith.constant dense<0.000000e+00> : vector<64x36xf32>
    %178 = tpu.matmul %176, %177, %cst_179 {dimension_numbers = #tpu.dot_dimension_numbers<[1], [0], [0], [1], [0, 0, 1, 1], [], []>} : vector<64x32xbf16>, vector<32x36xbf16>, vector<64x36xf32> -> vector<64x36xf32>
    %179 = arith.addf %174, %178 : vector<64x36xf32>
    %c8_180 = arith.constant 8 : index
    %c0_181 = arith.constant 0 : index
    %c0_182 = arith.constant 0 : index
    %180 = vector.load %arg8[%c8_180, %c0_181, %c0_182] : memref<9x64x32xbf16, #tpu.memory_space<vmem>>, vector<1x64x32xbf16>
    %181 = vector.shape_cast %180 : vector<1x64x32xbf16> to vector<64x32xbf16>
    %c0_183 = arith.constant 0 : index
    %c14 = arith.constant 14 : index
    %182 = vector.load %arg23[%c0_183, %c14] : memref<32x50xbf16, #tpu.memory_space<vmem>>, vector<32x36xbf16>
    %cst_184 = arith.constant dense<0.000000e+00> : vector<64x36xf32>
    %183 = tpu.matmul %181, %182, %cst_184 {dimension_numbers = #tpu.dot_dimension_numbers<[1], [0], [0], [1], [0, 0, 1, 1], [], []>} : vector<64x32xbf16>, vector<32x36xbf16>, vector<64x36xf32> -> vector<64x36xf32>
    %184 = arith.addf %179, %183 : vector<64x36xf32>
    %c0_185 = arith.constant 0 : index
    %c0_186 = arith.constant 0 : index
    %185 = vector.load %arg9[%c0_185, %c0_186] : memref<64x1xf32, #tpu.memory_space<vmem>>, vector<64x1xf32>
    %186 = vector.broadcast %185 : vector<64x1xf32> to vector<64x36xf32>
    %187 = arith.addf %184, %186 : vector<64x36xf32>
    %cst_187 = arith.constant 0.000000e+00 : f32
    %188 = vector.broadcast %cst_187 : f32 to vector<64x36xf32>
    %189 = arith.cmpf oge, %187, %188 : vector<64x36xf32>
    %cst_188 = arith.constant 3.000000e-02 : f32
    %190 = vector.broadcast %cst_188 : f32 to vector<64x36xf32>
    %191 = arith.mulf %190, %187 : vector<64x36xf32>
    %192 = arith.select %189, %187, %191 : vector<64x36xi1>, vector<64x36xf32>
    %193 = arith.truncf %192 : vector<64x36xf32> to vector<64x36xbf16>
    %c0_189 = arith.constant 0 : index
    %c0_190 = arith.constant 0 : index
    %194 = vector.load %arg10[%c0_189, %c0_190] : memref<36x16xbf16, #tpu.memory_space<vmem>>, vector<36x16xbf16>
    %cst_191 = arith.constant dense<0.000000e+00> : vector<64x16xf32>
    %195 = tpu.matmul %193, %194, %cst_191 {dimension_numbers = #tpu.dot_dimension_numbers<[1], [0], [0], [1], [0, 0, 1, 1], [], []>} : vector<64x36xbf16>, vector<36x16xbf16>, vector<64x16xf32> -> vector<64x16xf32>
    %196 = arith.truncf %195 : vector<64x16xf32> to vector<64x16xbf16>
    %c0_192 = arith.constant 0 : index
    %c5_193 = arith.constant 5 : index
    %197 = vector.load %arg24[%c0_192, %c5_193] : memref<64x26xbf16, #tpu.memory_space<vmem>>, vector<64x16xbf16>
    tpu.vector_store %arg24[%c0_192, %c5_193], %196 {strides = array<i32>} : memref<64x26xbf16, #tpu.memory_space<vmem>>, vector<64x16xbf16>,
    %cst_194 = arith.constant 0.000000e+00 : f32
    %198 = vector.broadcast %cst_194 : f32 to vector<128x16xf32>
    %c0_195 = arith.constant 0 : index
    %c0_196 = arith.constant 0 : index
    %c0_197 = arith.constant 0 : index
    %199 = vector.load %arg11[%c0_195, %c0_196, %c0_197] : memref<9x128x64xbf16, #tpu.memory_space<vmem>>, vector<1x128x64xbf16>
    %200 = vector.shape_cast %199 : vector<1x128x64xbf16> to vector<128x64xbf16>
    %c0_198 = arith.constant 0 : index
    %c0_199 = arith.constant 0 : index
    %201 = vector.load %arg24[%c0_198, %c0_199] : memref<64x26xbf16, #tpu.memory_space<vmem>>, vector<64x16xbf16>
    %cst_200 = arith.constant dense<0.000000e+00> : vector<128x16xf32>
    %202 = tpu.matmul %200, %201, %cst_200 {dimension_numbers = #tpu.dot_dimension_numbers<[1], [0], [0], [1], [0, 0, 1, 1], [], []>} : vector<128x64xbf16>, vector<64x16xbf16>, vector<128x16xf32> -> vector<128x16xf32>
    %203 = arith.addf %198, %202 : vector<128x16xf32>
    %c1_201 = arith.constant 1 : index
    %c0_202 = arith.constant 0 : index
    %c0_203 = arith.constant 0 : index
    %204 = vector.load %arg11[%c1_201, %c0_202, %c0_203] : memref<9x128x64xbf16, #tpu.memory_space<vmem>>, vector<1x128x64xbf16>
    %205 = vector.shape_cast %204 : vector<1x128x64xbf16> to vector<128x64xbf16>
    %c0_204 = arith.constant 0 : index
    %c1_205 = arith.constant 1 : index
    %206 = vector.load %arg24[%c0_204, %c1_205] : memref<64x26xbf16, #tpu.memory_space<vmem>>, vector<64x16xbf16>
    %cst_206 = arith.constant dense<0.000000e+00> : vector<128x16xf32>
    %207 = tpu.matmul %205, %206, %cst_206 {dimension_numbers = #tpu.dot_dimension_numbers<[1], [0], [0], [1], [0, 0, 1, 1], [], []>} : vector<128x64xbf16>, vector<64x16xbf16>, vector<128x16xf32> -> vector<128x16xf32>
    %208 = arith.addf %203, %207 : vector<128x16xf32>
    %c2_207 = arith.constant 2 : index
    %c0_208 = arith.constant 0 : index
    %c0_209 = arith.constant 0 : index
    %209 = vector.load %arg11[%c2_207, %c0_208, %c0_209] : memref<9x128x64xbf16, #tpu.memory_space<vmem>>, vector<1x128x64xbf16>
    %210 = vector.shape_cast %209 : vector<1x128x64xbf16> to vector<128x64xbf16>
    %c0_210 = arith.constant 0 : index
    %c2_211 = arith.constant 2 : index
    %211 = vector.load %arg24[%c0_210, %c2_211] : memref<64x26xbf16, #tpu.memory_space<vmem>>, vector<64x16xbf16>
    %cst_212 = arith.constant dense<0.000000e+00> : vector<128x16xf32>
    %212 = tpu.matmul %210, %211, %cst_212 {dimension_numbers = #tpu.dot_dimension_numbers<[1], [0], [0], [1], [0, 0, 1, 1], [], []>} : vector<128x64xbf16>, vector<64x16xbf16>, vector<128x16xf32> -> vector<128x16xf32>
    %213 = arith.addf %208, %212 : vector<128x16xf32>
    %c3_213 = arith.constant 3 : index
    %c0_214 = arith.constant 0 : index
    %c0_215 = arith.constant 0 : index
    %214 = vector.load %arg11[%c3_213, %c0_214, %c0_215] : memref<9x128x64xbf16, #tpu.memory_space<vmem>>, vector<1x128x64xbf16>
    %215 = vector.shape_cast %214 : vector<1x128x64xbf16> to vector<128x64xbf16>
    %c0_216 = arith.constant 0 : index
    %c4_217 = arith.constant 4 : index
    %216 = vector.load %arg24[%c0_216, %c4_217] : memref<64x26xbf16, #tpu.memory_space<vmem>>, vector<64x16xbf16>
    %cst_218 = arith.constant dense<0.000000e+00> : vector<128x16xf32>
    %217 = tpu.matmul %215, %216, %cst_218 {dimension_numbers = #tpu.dot_dimension_numbers<[1], [0], [0], [1], [0, 0, 1, 1], [], []>} : vector<128x64xbf16>, vector<64x16xbf16>, vector<128x16xf32> -> vector<128x16xf32>
    %218 = arith.addf %213, %217 : vector<128x16xf32>
    %c4_219 = arith.constant 4 : index
    %c0_220 = arith.constant 0 : index
    %c0_221 = arith.constant 0 : index
    %219 = vector.load %arg11[%c4_219, %c0_220, %c0_221] : memref<9x128x64xbf16, #tpu.memory_space<vmem>>, vector<1x128x64xbf16>
    %220 = vector.shape_cast %219 : vector<1x128x64xbf16> to vector<128x64xbf16>
    %c0_222 = arith.constant 0 : index
    %c5_223 = arith.constant 5 : index
    %221 = vector.load %arg24[%c0_222, %c5_223] : memref<64x26xbf16, #tpu.memory_space<vmem>>, vector<64x16xbf16>
    %cst_224 = arith.constant dense<0.000000e+00> : vector<128x16xf32>
    %222 = tpu.matmul %220, %221, %cst_224 {dimension_numbers = #tpu.dot_dimension_numbers<[1], [0], [0], [1], [0, 0, 1, 1], [], []>} : vector<128x64xbf16>, vector<64x16xbf16>, vector<128x16xf32> -> vector<128x16xf32>
    %223 = arith.addf %218, %222 : vector<128x16xf32>
    %c5_225 = arith.constant 5 : index
    %c0_226 = arith.constant 0 : index
    %c0_227 = arith.constant 0 : index
    %224 = vector.load %arg11[%c5_225, %c0_226, %c0_227] : memref<9x128x64xbf16, #tpu.memory_space<vmem>>, vector<1x128x64xbf16>
    %225 = vector.shape_cast %224 : vector<1x128x64xbf16> to vector<128x64xbf16>
    %c0_228 = arith.constant 0 : index
    %c6_229 = arith.constant 6 : index
    %226 = vector.load %arg24[%c0_228, %c6_229] : memref<64x26xbf16, #tpu.memory_space<vmem>>, vector<64x16xbf16>
    %cst_230 = arith.constant dense<0.000000e+00> : vector<128x16xf32>
    %227 = tpu.matmul %225, %226, %cst_230 {dimension_numbers = #tpu.dot_dimension_numbers<[1], [0], [0], [1], [0, 0, 1, 1], [], []>} : vector<128x64xbf16>, vector<64x16xbf16>, vector<128x16xf32> -> vector<128x16xf32>
    %228 = arith.addf %223, %227 : vector<128x16xf32>
    %c6_231 = arith.constant 6 : index
    %c0_232 = arith.constant 0 : index
    %c0_233 = arith.constant 0 : index
    %229 = vector.load %arg11[%c6_231, %c0_232, %c0_233] : memref<9x128x64xbf16, #tpu.memory_space<vmem>>, vector<1x128x64xbf16>
    %230 = vector.shape_cast %229 : vector<1x128x64xbf16> to vector<128x64xbf16>
    %c0_234 = arith.constant 0 : index
    %c8_235 = arith.constant 8 : index
    %231 = vector.load %arg24[%c0_234, %c8_235] : memref<64x26xbf16, #tpu.memory_space<vmem>>, vector<64x16xbf16>
    %cst_236 = arith.constant dense<0.000000e+00> : vector<128x16xf32>
    %232 = tpu.matmul %230, %231, %cst_236 {dimension_numbers = #tpu.dot_dimension_numbers<[1], [0], [0], [1], [0, 0, 1, 1], [], []>} : vector<128x64xbf16>, vector<64x16xbf16>, vector<128x16xf32> -> vector<128x16xf32>
    %233 = arith.addf %228, %232 : vector<128x16xf32>
    %c7_237 = arith.constant 7 : index
    %c0_238 = arith.constant 0 : index
    %c0_239 = arith.constant 0 : index
    %234 = vector.load %arg11[%c7_237, %c0_238, %c0_239] : memref<9x128x64xbf16, #tpu.memory_space<vmem>>, vector<1x128x64xbf16>
    %235 = vector.shape_cast %234 : vector<1x128x64xbf16> to vector<128x64xbf16>
    %c0_240 = arith.constant 0 : index
    %c9 = arith.constant 9 : index
    %236 = vector.load %arg24[%c0_240, %c9] : memref<64x26xbf16, #tpu.memory_space<vmem>>, vector<64x16xbf16>
    %cst_241 = arith.constant dense<0.000000e+00> : vector<128x16xf32>
    %237 = tpu.matmul %235, %236, %cst_241 {dimension_numbers = #tpu.dot_dimension_numbers<[1], [0], [0], [1], [0, 0, 1, 1], [], []>} : vector<128x64xbf16>, vector<64x16xbf16>, vector<128x16xf32> -> vector<128x16xf32>
    %238 = arith.addf %233, %237 : vector<128x16xf32>
    %c8_242 = arith.constant 8 : index
    %c0_243 = arith.constant 0 : index
    %c0_244 = arith.constant 0 : index
    %239 = vector.load %arg11[%c8_242, %c0_243, %c0_244] : memref<9x128x64xbf16, #tpu.memory_space<vmem>>, vector<1x128x64xbf16>
    %240 = vector.shape_cast %239 : vector<1x128x64xbf16> to vector<128x64xbf16>
    %c0_245 = arith.constant 0 : index
    %c10_246 = arith.constant 10 : index
    %241 = vector.load %arg24[%c0_245, %c10_246] : memref<64x26xbf16, #tpu.memory_space<vmem>>, vector<64x16xbf16>
    %cst_247 = arith.constant dense<0.000000e+00> : vector<128x16xf32>
    %242 = tpu.matmul %240, %241, %cst_247 {dimension_numbers = #tpu.dot_dimension_numbers<[1], [0], [0], [1], [0, 0, 1, 1], [], []>} : vector<128x64xbf16>, vector<64x16xbf16>, vector<128x16xf32> -> vector<128x16xf32>
    %243 = arith.addf %238, %242 : vector<128x16xf32>
    %c0_248 = arith.constant 0 : index
    %c0_249 = arith.constant 0 : index
    %244 = vector.load %arg12[%c0_248, %c0_249] : memref<128x1xf32, #tpu.memory_space<vmem>>, vector<128x1xf32>
    %245 = vector.broadcast %244 : vector<128x1xf32> to vector<128x16xf32>
    %246 = arith.addf %243, %245 : vector<128x16xf32>
    %cst_250 = arith.constant 0.000000e+00 : f32
    %247 = vector.broadcast %cst_250 : f32 to vector<128x16xf32>
    %248 = arith.cmpf oge, %246, %247 : vector<128x16xf32>
    %cst_251 = arith.constant 3.000000e-02 : f32
    %249 = vector.broadcast %cst_251 : f32 to vector<128x16xf32>
    %250 = arith.mulf %249, %246 : vector<128x16xf32>
    %251 = arith.select %248, %246, %250 : vector<128x16xi1>, vector<128x16xf32>
    %252 = arith.truncf %251 : vector<128x16xf32> to vector<128x16xbf16>
    %c0_252 = arith.constant 0 : index
    %c0_253 = arith.constant 0 : index
    %253 = vector.load %arg13[%c0_252, %c0_253] : memref<16x1xbf16, #tpu.memory_space<vmem>>, vector<16x1xbf16>
    %cst_254 = arith.constant dense<0.000000e+00> : vector<128x1xf32>
    %254 = tpu.matmul %252, %253, %cst_254 {dimension_numbers = #tpu.dot_dimension_numbers<[1], [0], [0], [1], [0, 0, 1, 1], [], []>} : vector<128x16xbf16>, vector<16x1xbf16>, vector<128x1xf32> -> vector<128x1xf32>
    %255 = arith.truncf %254 : vector<128x1xf32> to vector<128x1xbf16>
    %c0_255 = arith.constant 0 : index
    %c0_256 = arith.constant 0 : index
    %256 = vector.load %arg14[%c0_255, %c0_256] : memref<32x128xbf16, #tpu.memory_space<vmem>>, vector<32x128xbf16>
    %cst_257 = arith.constant dense<0.000000e+00> : vector<32x1xf32>
    %257 = tpu.matmul %256, %255, %cst_257 {dimension_numbers = #tpu.dot_dimension_numbers<[1], [0], [0], [1], [0, 0, 1, 1], [], []>} : vector<32x128xbf16>, vector<128x1xbf16>, vector<32x1xf32> -> vector<32x1xf32>
    %c0_258 = arith.constant 0 : index
    %c0_259 = arith.constant 0 : index
    %258 = vector.load %arg15[%c0_258, %c0_259] : memref<32x1xf32, #tpu.memory_space<vmem>>, vector<32x1xf32>
    %259 = arith.addf %257, %258 : vector<32x1xf32>
    %cst_260 = arith.constant 0.000000e+00 : f32
    %260 = vector.broadcast %cst_260 : f32 to vector<32x1xf32>
    %261 = arith.cmpf oge, %259, %260 : vector<32x1xf32>
    %cst_261 = arith.constant 3.000000e-02 : f32
    %262 = vector.broadcast %cst_261 : f32 to vector<32x1xf32>
    %263 = arith.mulf %262, %259 : vector<32x1xf32>
    %264 = arith.select %261, %259, %263 : vector<32x1xi1>, vector<32x1xf32>
    %265 = arith.truncf %264 : vector<32x1xf32> to vector<32x1xbf16>
    %c0_262 = arith.constant 0 : index
    %c0_263 = arith.constant 0 : index
    %266 = vector.load %arg16[%c0_262, %c0_263] : memref<16x32xbf16, #tpu.memory_space<vmem>>, vector<16x32xbf16>
    %cst_264 = arith.constant dense<0.000000e+00> : vector<16x1xf32>
    %267 = tpu.matmul %266, %265, %cst_264 {dimension_numbers = #tpu.dot_dimension_numbers<[1], [0], [0], [1], [0, 0, 1, 1], [], []>} : vector<16x32xbf16>, vector<32x1xbf16>, vector<16x1xf32> -> vector<16x1xf32>
    %c0_265 = arith.constant 0 : index
    %c0_266 = arith.constant 0 : index
    %268 = vector.load %arg17[%c0_265, %c0_266] : memref<16x1xf32, #tpu.memory_space<vmem>>, vector<16x1xf32>
    %269 = arith.addf %267, %268 : vector<16x1xf32>
    %270 = vector.extract_strided_slice %269 {offsets = [0, 0], sizes = [8, 1], strides = [1, 1]} : vector<16x1xf32> to vector<8x1xf32>
    %271 = vector.extract_strided_slice %269 {offsets = [8, 0], sizes = [8, 1], strides = [1, 1]} : vector<16x1xf32> to vector<8x1xf32>
    %c0_267 = arith.constant 0 : index
    %c0_268 = arith.constant 0 : index
    %c0_269 = arith.constant 0 : index
    %272 = vector.load %arg18[%c0_267, %c0_268, %c0_269] : memref<1x8x1xf32, #tpu.memory_space<vmem>>, vector<1x8x1xf32>
    %273 = vector.shape_cast %272 : vector<1x8x1xf32> to vector<8x1xf32>
    %cst_270 = arith.constant 5.000000e-01 : f32
    %274 = vector.broadcast %cst_270 : f32 to vector<8x1xf32>
    %275 = arith.mulf %274, %271 : vector<8x1xf32>
    %276 = math.exp %275 : vector<8x1xf32>
    %277 = arith.mulf %273, %276 : vector<8x1xf32>
    %278 = arith.addf %270, %277 : vector<8x1xf32>
    %c0_271 = arith.constant 0 : index
    %c0_272 = arith.constant 0 : index
    %c0_273 = arith.constant 0 : index
    %279 = vector.load %arg19[%c0_271, %c0_272, %c0_273] : memref<1x8x1xf32, #tpu.memory_space<vmem>>, vector<1x8x1xf32>
    %280 = vector.shape_cast %279 : vector<1x8x1xf32> to vector<8x1xf32>
    %281 = vector.shape_cast %278 : vector<8x1xf32> to vector<1x8x1xf32>
    tpu.vector_store %arg19[%c0_271, %c0_272, %c0_273], %281 {strides = array<i32>} : memref<1x8x1xf32, #tpu.memory_space<vmem>>, vector<1x8x1xf32>,
    %c0_274 = arith.constant 0 : index
    %c0_275 = arith.constant 0 : index
    %c0_276 = arith.constant 0 : index
    %282 = vector.load %arg20[%c0_274, %c0_275, %c0_276] : memref<1x8x1xf32, #tpu.memory_space<vmem>>, vector<1x8x1xf32>
    %283 = vector.shape_cast %282 : vector<1x8x1xf32> to vector<8x1xf32>
    %284 = vector.shape_cast %270 : vector<8x1xf32> to vector<1x8x1xf32>
    tpu.vector_store %arg20[%c0_274, %c0_275, %c0_276], %284 {strides = array<i32>} : memref<1x8x1xf32, #tpu.memory_space<vmem>>, vector<1x8x1xf32>,
    %c0_277 = arith.constant 0 : index
    %c0_278 = arith.constant 0 : index
    %c0_279 = arith.constant 0 : index
    %285 = vector.load %arg21[%c0_277, %c0_278, %c0_279] : memref<1x8x1xf32, #tpu.memory_space<vmem>>, vector<1x8x1xf32>
    %286 = vector.shape_cast %285 : vector<1x8x1xf32> to vector<8x1xf32>
    %287 = vector.shape_cast %271 : vector<8x1xf32> to vector<1x8x1xf32>
    tpu.vector_store %arg21[%c0_277, %c0_278, %c0_279], %287 {strides = array<i32>} : memref<1x8x1xf32, #tpu.memory_space<vmem>>, vector<1x8x1xf32>,
    return
  }
  func.func @transform_0(%arg0: i32) -> (i32, i32, i32) {
    %c0_i32 = arith.constant 0 : i32
    %c0_i32_0 = arith.constant 0 : i32
    %c0_i32_1 = arith.constant 0 : i32
    return %arg0, %c0_i32, %c0_i32_0 : i32, i32, i32
  }
  func.func @transform_1(%arg0: i32) -> (i32, i32, i32) {
    %c0_i32 = arith.constant 0 : i32
    %c0_i32_0 = arith.constant 0 : i32
    %c0_i32_1 = arith.constant 0 : i32
    %c0_i32_2 = arith.constant 0 : i32
    return %c0_i32, %c0_i32_0, %c0_i32_1 : i32, i32, i32
  }
  func.func @transform_2(%arg0: i32) -> (i32, i32) {
    %c0_i32 = arith.constant 0 : i32
    %c0_i32_0 = arith.constant 0 : i32
    %c0_i32_1 = arith.constant 0 : i32
    return %c0_i32, %c0_i32_0 : i32, i32
  }
  func.func @transform_3(%arg0: i32) -> (i32, i32) {
    %c0_i32 = arith.constant 0 : i32
    %c0_i32_0 = arith.constant 0 : i32
    %c0_i32_1 = arith.constant 0 : i32
    return %c0_i32, %c0_i32_0 : i32, i32
  }
  func.func @transform_4(%arg0: i32) -> (i32, i32, i32) {
    %c0_i32 = arith.constant 0 : i32
    %c0_i32_0 = arith.constant 0 : i32
    %c0_i32_1 = arith.constant 0 : i32
    %c0_i32_2 = arith.constant 0 : i32
    return %c0_i32, %c0_i32_0, %c0_i32_1 : i32, i32, i32
  }
  func.func @transform_5(%arg0: i32) -> (i32, i32) {
    %c0_i32 = arith.constant 0 : i32
    %c0_i32_0 = arith.constant 0 : i32
    %c0_i32_1 = arith.constant 0 : i32
    return %c0_i32, %c0_i32_0 : i32, i32
  }
  func.func @transform_6(%arg0: i32) -> (i32, i32) {
    %c0_i32 = arith.constant 0 : i32
    %c0_i32_0 = arith.constant 0 : i32
    %c0_i32_1 = arith.constant 0 : i32
    return %c0_i32, %c0_i32_0 : i32, i32
  }
  func.func @transform_7(%arg0: i32) -> (i32, i32, i32) {
    %c0_i32 = arith.constant 0 : i32
    %c0_i32_0 = arith.constant 0 : i32
    %c0_i32_1 = arith.constant 0 : i32
    %c0_i32_2 = arith.constant 0 : i32
    return %c0_i32, %c0_i32_0, %c0_i32_1 : i32, i32, i32
  }
  func.func @transform_8(%arg0: i32) -> (i32, i32) {
    %c0_i32 = arith.constant 0 : i32
    %c0_i32_0 = arith.constant 0 : i32
    %c0_i32_1 = arith.constant 0 : i32
    return %c0_i32, %c0_i32_0 : i32, i32
  }
  func.func @transform_9(%arg0: i32) -> (i32, i32) {
    %c0_i32 = arith.constant 0 : i32
    %c0_i32_0 = arith.constant 0 : i32
    %c0_i32_1 = arith.constant 0 : i32
    return %c0_i32, %c0_i32_0 : i32, i32
  }
  func.func @transform_10(%arg0: i32) -> (i32, i32, i32) {
    %c0_i32 = arith.constant 0 : i32
    %c0_i32_0 = arith.constant 0 : i32
    %c0_i32_1 = arith.constant 0 : i32
    %c0_i32_2 = arith.constant 0 : i32
    return %c0_i32, %c0_i32_0, %c0_i32_1 : i32, i32, i32
  }
  func.func @transform_11(%arg0: i32) -> (i32, i32) {
    %c0_i32 = arith.constant 0 : i32
    %c0_i32_0 = arith.constant 0 : i32
    %c0_i32_1 = arith.constant 0 : i32
    return %c0_i32, %c0_i32_0 : i32, i32
  }
  func.func @transform_12(%arg0: i32) -> (i32, i32) {
    %c0_i32 = arith.constant 0 : i32
    %c0_i32_0 = arith.constant 0 : i32
    %c0_i32_1 = arith.constant 0 : i32
    return %c0_i32, %c0_i32_0 : i32, i32
  }
  func.func @transform_13(%arg0: i32) -> (i32, i32) {
    %c0_i32 = arith.constant 0 : i32
    %c0_i32_0 = arith.constant 0 : i32
    %c0_i32_1 = arith.constant 0 : i32
    return %c0_i32, %c0_i32_0 : i32, i32
  }
  func.func @transform_14(%arg0: i32) -> (i32, i32) {
    %c0_i32 = arith.constant 0 : i32
    %c0_i32_0 = arith.constant 0 : i32
    %c0_i32_1 = arith.constant 0 : i32
    return %c0_i32, %c0_i32_0 : i32, i32
  }
  func.func @transform_15(%arg0: i32) -> (i32, i32) {
    %c0_i32 = arith.constant 0 : i32
    %c0_i32_0 = arith.constant 0 : i32
    %c0_i32_1 = arith.constant 0 : i32
    return %c0_i32, %c0_i32_0 : i32, i32
  }
  func.func @transform_16(%arg0: i32) -> (i32, i32) {
    %c0_i32 = arith.constant 0 : i32
    %c0_i32_0 = arith.constant 0 : i32
    %c0_i32_1 = arith.constant 0 : i32
    return %c0_i32, %c0_i32_0 : i32, i32
  }
  func.func @transform_17(%arg0: i32) -> (i32, i32, i32) {
    %c0_i32 = arith.constant 0 : i32
    %c0_i32_0 = arith.constant 0 : i32
    %c0_i32_1 = arith.constant 0 : i32
    return %arg0, %c0_i32, %c0_i32_0 : i32, i32, i32
  }
  func.func @transform_18(%arg0: i32) -> (i32, i32, i32) {
    %c0_i32 = arith.constant 0 : i32
    %c0_i32_0 = arith.constant 0 : i32
    %c0_i32_1 = arith.constant 0 : i32
    return %arg0, %c0_i32, %c0_i32_0 : i32, i32, i32
  }
  func.func @transform_19(%arg0: i32) -> (i32, i32, i32) {
    %c0_i32 = arith.constant 0 : i32
    %c0_i32_0 = arith.constant 0 : i32
    %c0_i32_1 = arith.constant 0 : i32
    return %arg0, %c0_i32, %c0_i32_0 : i32, i32, i32
  }
  func.func @transform_20(%arg0: i32) -> (i32, i32, i32) {
    %c0_i32 = arith.constant 0 : i32
    %c0_i32_0 = arith.constant 0 : i32
    %c0_i32_1 = arith.constant 0 : i32
    return %arg0, %c0_i32, %c0_i32_0 : i32, i32, i32
  }
}

module attributes {stable_mosaic.version = 11 : i64} {
  func.func @_anat_seg_dec_kernel(%arg0: i32, %arg1: memref<3x904xbf16, #tpu.memory_space<vmem>>, %arg2: memref<8x648xbf16, #tpu.memory_space<vmem>>, %arg3: memref<1x648xf32, #tpu.memory_space<vmem>>, %arg4: memref<9x8x3xbf16, #tpu.memory_space<vmem>>, %arg5: memref<8x1xf32, #tpu.memory_space<vmem>>, %arg6: memref<9x4x16xbf16, #tpu.memory_space<vmem>>, %arg7: memref<4x1xf32, #tpu.memory_space<vmem>>, %arg8: memref<4x648xf32, #tpu.memory_space<vmem>>, %arg9: memref<16x904xbf16, #tpu.memory_space<vmem>>) attributes {dimension_semantics = [#tpu.dimension_semantics<arbitrary>], iteration_bounds = array<i64: 1>, scalar_prefetch = 0 : i64, scratch_operands = 1 : i64, tpu.core_type = #tpu.core_type<tc>, window_params = [{pipeline_mode = #tpu.pipeline_mode<synchronous>, transform_indices = @transform_0, window_bounds = array<i64: 3, 904>}, {pipeline_mode = #tpu.pipeline_mode<synchronous>, transform_indices = @transform_1, window_bounds = array<i64: 8, 648>}, {pipeline_mode = #tpu.pipeline_mode<synchronous>, transform_indices = @transform_2, window_bounds = array<i64: 1, 648>}, {pipeline_mode = #tpu.pipeline_mode<synchronous>, transform_indices = @transform_3, window_bounds = array<i64: 9, 8, 3>}, {pipeline_mode = #tpu.pipeline_mode<synchronous>, transform_indices = @transform_4, window_bounds = array<i64: 8, 1>}, {pipeline_mode = #tpu.pipeline_mode<synchronous>, transform_indices = @transform_5, window_bounds = array<i64: 9, 4, 16>}, {pipeline_mode = #tpu.pipeline_mode<synchronous>, transform_indices = @transform_6, window_bounds = array<i64: 4, 1>}, {pipeline_mode = #tpu.pipeline_mode<synchronous>, transform_indices = @transform_7, window_bounds = array<i64: 4, 648>}]} {
    %cst = arith.constant 0.000000e+00 : bf16
    %0 = vector.broadcast %cst : bf16 to vector<16x128xbf16>
    %c0 = arith.constant 0 : index
    %c0_0 = arith.constant 0 : index
    %1 = vector.load %arg9[%c0, %c0_0] : memref<16x904xbf16, #tpu.memory_space<vmem>>, vector<16x128xbf16>
    tpu.vector_store %arg9[%c0, %c0_0], %0 {strides = array<i32>} : memref<16x904xbf16, #tpu.memory_space<vmem>>, vector<16x128xbf16>,
    %cst_1 = arith.constant 0.000000e+00 : bf16
    %2 = vector.broadcast %cst_1 : bf16 to vector<16x128xbf16>
    %c0_2 = arith.constant 0 : index
    %c776 = arith.constant 776 : index
    %3 = vector.load %arg9[%c0_2, %c776] : memref<16x904xbf16, #tpu.memory_space<vmem>>, vector<16x128xbf16>
    tpu.vector_store %arg9[%c0_2, %c776], %2 {strides = array<i32>} : memref<16x904xbf16, #tpu.memory_space<vmem>>, vector<16x128xbf16>,
    %cst_3 = arith.constant 0.000000e+00 : f32
    %4 = vector.broadcast %cst_3 : f32 to vector<8x648xf32>
    %c0_4 = arith.constant 0 : index
    %c0_5 = arith.constant 0 : index
    %c0_6 = arith.constant 0 : index
    %5 = vector.load %arg4[%c0_4, %c0_5, %c0_6] : memref<9x8x3xbf16, #tpu.memory_space<vmem>>, vector<1x8x3xbf16>
    %6 = vector.shape_cast %5 : vector<1x8x3xbf16> to vector<8x3xbf16>
    %c0_7 = arith.constant 0 : index
    %c109 = arith.constant 109 : index
    %7 = vector.load %arg1[%c0_7, %c109] : memref<3x904xbf16, #tpu.memory_space<vmem>>, vector<3x648xbf16>
    %cst_8 = arith.constant dense<0.000000e+00> : vector<8x648xf32>
    %8 = tpu.matmul %6, %7, %cst_8 {dimension_numbers = #tpu.dot_dimension_numbers<[1], [0], [0], [1], [0, 0, 1, 1], [], []>} : vector<8x3xbf16>, vector<3x648xbf16>, vector<8x648xf32> -> vector<8x648xf32>
    %9 = arith.addf %4, %8 : vector<8x648xf32>
    %c1 = arith.constant 1 : index
    %c0_9 = arith.constant 0 : index
    %c0_10 = arith.constant 0 : index
    %10 = vector.load %arg4[%c1, %c0_9, %c0_10] : memref<9x8x3xbf16, #tpu.memory_space<vmem>>, vector<1x8x3xbf16>
    %11 = vector.shape_cast %10 : vector<1x8x3xbf16> to vector<8x3xbf16>
    %c0_11 = arith.constant 0 : index
    %c110 = arith.constant 110 : index
    %12 = vector.load %arg1[%c0_11, %c110] : memref<3x904xbf16, #tpu.memory_space<vmem>>, vector<3x648xbf16>
    %cst_12 = arith.constant dense<0.000000e+00> : vector<8x648xf32>
    %13 = tpu.matmul %11, %12, %cst_12 {dimension_numbers = #tpu.dot_dimension_numbers<[1], [0], [0], [1], [0, 0, 1, 1], [], []>} : vector<8x3xbf16>, vector<3x648xbf16>, vector<8x648xf32> -> vector<8x648xf32>
    %14 = arith.addf %9, %13 : vector<8x648xf32>
    %c2 = arith.constant 2 : index
    %c0_13 = arith.constant 0 : index
    %c0_14 = arith.constant 0 : index
    %15 = vector.load %arg4[%c2, %c0_13, %c0_14] : memref<9x8x3xbf16, #tpu.memory_space<vmem>>, vector<1x8x3xbf16>
    %16 = vector.shape_cast %15 : vector<1x8x3xbf16> to vector<8x3xbf16>
    %c0_15 = arith.constant 0 : index
    %c111 = arith.constant 111 : index
    %17 = vector.load %arg1[%c0_15, %c111] : memref<3x904xbf16, #tpu.memory_space<vmem>>, vector<3x648xbf16>
    %cst_16 = arith.constant dense<0.000000e+00> : vector<8x648xf32>
    %18 = tpu.matmul %16, %17, %cst_16 {dimension_numbers = #tpu.dot_dimension_numbers<[1], [0], [0], [1], [0, 0, 1, 1], [], []>} : vector<8x3xbf16>, vector<3x648xbf16>, vector<8x648xf32> -> vector<8x648xf32>
    %19 = arith.addf %14, %18 : vector<8x648xf32>
    %c3 = arith.constant 3 : index
    %c0_17 = arith.constant 0 : index
    %c0_18 = arith.constant 0 : index
    %20 = vector.load %arg4[%c3, %c0_17, %c0_18] : memref<9x8x3xbf16, #tpu.memory_space<vmem>>, vector<1x8x3xbf16>
    %21 = vector.shape_cast %20 : vector<1x8x3xbf16> to vector<8x3xbf16>
    %c0_19 = arith.constant 0 : index
    %c127 = arith.constant 127 : index
    %22 = vector.load %arg1[%c0_19, %c127] : memref<3x904xbf16, #tpu.memory_space<vmem>>, vector<3x648xbf16>
    %cst_20 = arith.constant dense<0.000000e+00> : vector<8x648xf32>
    %23 = tpu.matmul %21, %22, %cst_20 {dimension_numbers = #tpu.dot_dimension_numbers<[1], [0], [0], [1], [0, 0, 1, 1], [], []>} : vector<8x3xbf16>, vector<3x648xbf16>, vector<8x648xf32> -> vector<8x648xf32>
    %24 = arith.addf %19, %23 : vector<8x648xf32>
    %c4 = arith.constant 4 : index
    %c0_21 = arith.constant 0 : index
    %c0_22 = arith.constant 0 : index
    %25 = vector.load %arg4[%c4, %c0_21, %c0_22] : memref<9x8x3xbf16, #tpu.memory_space<vmem>>, vector<1x8x3xbf16>
    %26 = vector.shape_cast %25 : vector<1x8x3xbf16> to vector<8x3xbf16>
    %c0_23 = arith.constant 0 : index
    %c128 = arith.constant 128 : index
    %27 = vector.load %arg1[%c0_23, %c128] : memref<3x904xbf16, #tpu.memory_space<vmem>>, vector<3x648xbf16>
    %cst_24 = arith.constant dense<0.000000e+00> : vector<8x648xf32>
    %28 = tpu.matmul %26, %27, %cst_24 {dimension_numbers = #tpu.dot_dimension_numbers<[1], [0], [0], [1], [0, 0, 1, 1], [], []>} : vector<8x3xbf16>, vector<3x648xbf16>, vector<8x648xf32> -> vector<8x648xf32>
    %29 = arith.addf %24, %28 : vector<8x648xf32>
    %c5 = arith.constant 5 : index
    %c0_25 = arith.constant 0 : index
    %c0_26 = arith.constant 0 : index
    %30 = vector.load %arg4[%c5, %c0_25, %c0_26] : memref<9x8x3xbf16, #tpu.memory_space<vmem>>, vector<1x8x3xbf16>
    %31 = vector.shape_cast %30 : vector<1x8x3xbf16> to vector<8x3xbf16>
    %c0_27 = arith.constant 0 : index
    %c129 = arith.constant 129 : index
    %32 = vector.load %arg1[%c0_27, %c129] : memref<3x904xbf16, #tpu.memory_space<vmem>>, vector<3x648xbf16>
    %cst_28 = arith.constant dense<0.000000e+00> : vector<8x648xf32>
    %33 = tpu.matmul %31, %32, %cst_28 {dimension_numbers = #tpu.dot_dimension_numbers<[1], [0], [0], [1], [0, 0, 1, 1], [], []>} : vector<8x3xbf16>, vector<3x648xbf16>, vector<8x648xf32> -> vector<8x648xf32>
    %34 = arith.addf %29, %33 : vector<8x648xf32>
    %c6 = arith.constant 6 : index
    %c0_29 = arith.constant 0 : index
    %c0_30 = arith.constant 0 : index
    %35 = vector.load %arg4[%c6, %c0_29, %c0_30] : memref<9x8x3xbf16, #tpu.memory_space<vmem>>, vector<1x8x3xbf16>
    %36 = vector.shape_cast %35 : vector<1x8x3xbf16> to vector<8x3xbf16>
    %c0_31 = arith.constant 0 : index
    %c145 = arith.constant 145 : index
    %37 = vector.load %arg1[%c0_31, %c145] : memref<3x904xbf16, #tpu.memory_space<vmem>>, vector<3x648xbf16>
    %cst_32 = arith.constant dense<0.000000e+00> : vector<8x648xf32>
    %38 = tpu.matmul %36, %37, %cst_32 {dimension_numbers = #tpu.dot_dimension_numbers<[1], [0], [0], [1], [0, 0, 1, 1], [], []>} : vector<8x3xbf16>, vector<3x648xbf16>, vector<8x648xf32> -> vector<8x648xf32>
    %39 = arith.addf %34, %38 : vector<8x648xf32>
    %c7 = arith.constant 7 : index
    %c0_33 = arith.constant 0 : index
    %c0_34 = arith.constant 0 : index
    %40 = vector.load %arg4[%c7, %c0_33, %c0_34] : memref<9x8x3xbf16, #tpu.memory_space<vmem>>, vector<1x8x3xbf16>
    %41 = vector.shape_cast %40 : vector<1x8x3xbf16> to vector<8x3xbf16>
    %c0_35 = arith.constant 0 : index
    %c146 = arith.constant 146 : index
    %42 = vector.load %arg1[%c0_35, %c146] : memref<3x904xbf16, #tpu.memory_space<vmem>>, vector<3x648xbf16>
    %cst_36 = arith.constant dense<0.000000e+00> : vector<8x648xf32>
    %43 = tpu.matmul %41, %42, %cst_36 {dimension_numbers = #tpu.dot_dimension_numbers<[1], [0], [0], [1], [0, 0, 1, 1], [], []>} : vector<8x3xbf16>, vector<3x648xbf16>, vector<8x648xf32> -> vector<8x648xf32>
    %44 = arith.addf %39, %43 : vector<8x648xf32>
    %c8 = arith.constant 8 : index
    %c0_37 = arith.constant 0 : index
    %c0_38 = arith.constant 0 : index
    %45 = vector.load %arg4[%c8, %c0_37, %c0_38] : memref<9x8x3xbf16, #tpu.memory_space<vmem>>, vector<1x8x3xbf16>
    %46 = vector.shape_cast %45 : vector<1x8x3xbf16> to vector<8x3xbf16>
    %c0_39 = arith.constant 0 : index
    %c147 = arith.constant 147 : index
    %47 = vector.load %arg1[%c0_39, %c147] : memref<3x904xbf16, #tpu.memory_space<vmem>>, vector<3x648xbf16>
    %cst_40 = arith.constant dense<0.000000e+00> : vector<8x648xf32>
    %48 = tpu.matmul %46, %47, %cst_40 {dimension_numbers = #tpu.dot_dimension_numbers<[1], [0], [0], [1], [0, 0, 1, 1], [], []>} : vector<8x3xbf16>, vector<3x648xbf16>, vector<8x648xf32> -> vector<8x648xf32>
    %49 = arith.addf %44, %48 : vector<8x648xf32>
    %c0_41 = arith.constant 0 : index
    %c0_42 = arith.constant 0 : index
    %50 = vector.load %arg5[%c0_41, %c0_42] : memref<8x1xf32, #tpu.memory_space<vmem>>, vector<8x1xf32>
    %51 = vector.broadcast %50 : vector<8x1xf32> to vector<8x648xf32>
    %52 = arith.addf %49, %51 : vector<8x648xf32>
    %53 = math.tanh %52 : vector<8x648xf32>
    %c0_43 = arith.constant 0 : index
    %c0_44 = arith.constant 0 : index
    %54 = vector.load %arg3[%c0_43, %c0_44] : memref<1x648xf32, #tpu.memory_space<vmem>>, vector<1x648xf32>
    %55 = vector.broadcast %54 : vector<1x648xf32> to vector<8x648xf32>
    %56 = arith.mulf %53, %55 : vector<8x648xf32>
    %57 = arith.truncf %56 : vector<8x648xf32> to vector<8x648xbf16>
    %c0_45 = arith.constant 0 : index
    %c128_46 = arith.constant 128 : index
    %58 = vector.load %arg9[%c0_45, %c128_46] : memref<16x904xbf16, #tpu.memory_space<vmem>>, vector<8x648xbf16>
    tpu.vector_store %arg9[%c0_45, %c128_46], %57 {strides = array<i32>} : memref<16x904xbf16, #tpu.memory_space<vmem>>, vector<8x648xbf16>,
    %c0_47 = arith.constant 0 : index
    %c0_48 = arith.constant 0 : index
    %59 = vector.load %arg2[%c0_47, %c0_48] : memref<8x648xbf16, #tpu.memory_space<vmem>>, vector<8x648xbf16>
    %c8_49 = arith.constant 8 : index
    %c128_50 = arith.constant 128 : index
    %60 = vector.load %arg9[%c8_49, %c128_50] : memref<16x904xbf16, #tpu.memory_space<vmem>>, vector<8x648xbf16>
    tpu.vector_store %arg9[%c8_49, %c128_50], %59 {strides = array<i32>} : memref<16x904xbf16, #tpu.memory_space<vmem>>, vector<8x648xbf16>,
    %cst_51 = arith.constant 0.000000e+00 : f32
    %61 = vector.broadcast %cst_51 : f32 to vector<4x648xf32>
    %c0_52 = arith.constant 0 : index
    %c0_53 = arith.constant 0 : index
    %c0_54 = arith.constant 0 : index
    %62 = vector.load %arg6[%c0_52, %c0_53, %c0_54] : memref<9x4x16xbf16, #tpu.memory_space<vmem>>, vector<1x4x16xbf16>
    %63 = vector.shape_cast %62 : vector<1x4x16xbf16> to vector<4x16xbf16>
    %c0_55 = arith.constant 0 : index
    %c109_56 = arith.constant 109 : index
    %64 = vector.load %arg9[%c0_55, %c109_56] : memref<16x904xbf16, #tpu.memory_space<vmem>>, vector<16x648xbf16>
    %cst_57 = arith.constant dense<0.000000e+00> : vector<4x648xf32>
    %65 = tpu.matmul %63, %64, %cst_57 {dimension_numbers = #tpu.dot_dimension_numbers<[1], [0], [0], [1], [0, 0, 1, 1], [], []>} : vector<4x16xbf16>, vector<16x648xbf16>, vector<4x648xf32> -> vector<4x648xf32>
    %66 = arith.addf %61, %65 : vector<4x648xf32>
    %c1_58 = arith.constant 1 : index
    %c0_59 = arith.constant 0 : index
    %c0_60 = arith.constant 0 : index
    %67 = vector.load %arg6[%c1_58, %c0_59, %c0_60] : memref<9x4x16xbf16, #tpu.memory_space<vmem>>, vector<1x4x16xbf16>
    %68 = vector.shape_cast %67 : vector<1x4x16xbf16> to vector<4x16xbf16>
    %c0_61 = arith.constant 0 : index
    %c110_62 = arith.constant 110 : index
    %69 = vector.load %arg9[%c0_61, %c110_62] : memref<16x904xbf16, #tpu.memory_space<vmem>>, vector<16x648xbf16>
    %cst_63 = arith.constant dense<0.000000e+00> : vector<4x648xf32>
    %70 = tpu.matmul %68, %69, %cst_63 {dimension_numbers = #tpu.dot_dimension_numbers<[1], [0], [0], [1], [0, 0, 1, 1], [], []>} : vector<4x16xbf16>, vector<16x648xbf16>, vector<4x648xf32> -> vector<4x648xf32>
    %71 = arith.addf %66, %70 : vector<4x648xf32>
    %c2_64 = arith.constant 2 : index
    %c0_65 = arith.constant 0 : index
    %c0_66 = arith.constant 0 : index
    %72 = vector.load %arg6[%c2_64, %c0_65, %c0_66] : memref<9x4x16xbf16, #tpu.memory_space<vmem>>, vector<1x4x16xbf16>
    %73 = vector.shape_cast %72 : vector<1x4x16xbf16> to vector<4x16xbf16>
    %c0_67 = arith.constant 0 : index
    %c111_68 = arith.constant 111 : index
    %74 = vector.load %arg9[%c0_67, %c111_68] : memref<16x904xbf16, #tpu.memory_space<vmem>>, vector<16x648xbf16>
    %cst_69 = arith.constant dense<0.000000e+00> : vector<4x648xf32>
    %75 = tpu.matmul %73, %74, %cst_69 {dimension_numbers = #tpu.dot_dimension_numbers<[1], [0], [0], [1], [0, 0, 1, 1], [], []>} : vector<4x16xbf16>, vector<16x648xbf16>, vector<4x648xf32> -> vector<4x648xf32>
    %76 = arith.addf %71, %75 : vector<4x648xf32>
    %c3_70 = arith.constant 3 : index
    %c0_71 = arith.constant 0 : index
    %c0_72 = arith.constant 0 : index
    %77 = vector.load %arg6[%c3_70, %c0_71, %c0_72] : memref<9x4x16xbf16, #tpu.memory_space<vmem>>, vector<1x4x16xbf16>
    %78 = vector.shape_cast %77 : vector<1x4x16xbf16> to vector<4x16xbf16>
    %c0_73 = arith.constant 0 : index
    %c127_74 = arith.constant 127 : index
    %79 = vector.load %arg9[%c0_73, %c127_74] : memref<16x904xbf16, #tpu.memory_space<vmem>>, vector<16x648xbf16>
    %cst_75 = arith.constant dense<0.000000e+00> : vector<4x648xf32>
    %80 = tpu.matmul %78, %79, %cst_75 {dimension_numbers = #tpu.dot_dimension_numbers<[1], [0], [0], [1], [0, 0, 1, 1], [], []>} : vector<4x16xbf16>, vector<16x648xbf16>, vector<4x648xf32> -> vector<4x648xf32>
    %81 = arith.addf %76, %80 : vector<4x648xf32>
    %c4_76 = arith.constant 4 : index
    %c0_77 = arith.constant 0 : index
    %c0_78 = arith.constant 0 : index
    %82 = vector.load %arg6[%c4_76, %c0_77, %c0_78] : memref<9x4x16xbf16, #tpu.memory_space<vmem>>, vector<1x4x16xbf16>
    %83 = vector.shape_cast %82 : vector<1x4x16xbf16> to vector<4x16xbf16>
    %c0_79 = arith.constant 0 : index
    %c128_80 = arith.constant 128 : index
    %84 = vector.load %arg9[%c0_79, %c128_80] : memref<16x904xbf16, #tpu.memory_space<vmem>>, vector<16x648xbf16>
    %cst_81 = arith.constant dense<0.000000e+00> : vector<4x648xf32>
    %85 = tpu.matmul %83, %84, %cst_81 {dimension_numbers = #tpu.dot_dimension_numbers<[1], [0], [0], [1], [0, 0, 1, 1], [], []>} : vector<4x16xbf16>, vector<16x648xbf16>, vector<4x648xf32> -> vector<4x648xf32>
    %86 = arith.addf %81, %85 : vector<4x648xf32>
    %c5_82 = arith.constant 5 : index
    %c0_83 = arith.constant 0 : index
    %c0_84 = arith.constant 0 : index
    %87 = vector.load %arg6[%c5_82, %c0_83, %c0_84] : memref<9x4x16xbf16, #tpu.memory_space<vmem>>, vector<1x4x16xbf16>
    %88 = vector.shape_cast %87 : vector<1x4x16xbf16> to vector<4x16xbf16>
    %c0_85 = arith.constant 0 : index
    %c129_86 = arith.constant 129 : index
    %89 = vector.load %arg9[%c0_85, %c129_86] : memref<16x904xbf16, #tpu.memory_space<vmem>>, vector<16x648xbf16>
    %cst_87 = arith.constant dense<0.000000e+00> : vector<4x648xf32>
    %90 = tpu.matmul %88, %89, %cst_87 {dimension_numbers = #tpu.dot_dimension_numbers<[1], [0], [0], [1], [0, 0, 1, 1], [], []>} : vector<4x16xbf16>, vector<16x648xbf16>, vector<4x648xf32> -> vector<4x648xf32>
    %91 = arith.addf %86, %90 : vector<4x648xf32>
    %c6_88 = arith.constant 6 : index
    %c0_89 = arith.constant 0 : index
    %c0_90 = arith.constant 0 : index
    %92 = vector.load %arg6[%c6_88, %c0_89, %c0_90] : memref<9x4x16xbf16, #tpu.memory_space<vmem>>, vector<1x4x16xbf16>
    %93 = vector.shape_cast %92 : vector<1x4x16xbf16> to vector<4x16xbf16>
    %c0_91 = arith.constant 0 : index
    %c145_92 = arith.constant 145 : index
    %94 = vector.load %arg9[%c0_91, %c145_92] : memref<16x904xbf16, #tpu.memory_space<vmem>>, vector<16x648xbf16>
    %cst_93 = arith.constant dense<0.000000e+00> : vector<4x648xf32>
    %95 = tpu.matmul %93, %94, %cst_93 {dimension_numbers = #tpu.dot_dimension_numbers<[1], [0], [0], [1], [0, 0, 1, 1], [], []>} : vector<4x16xbf16>, vector<16x648xbf16>, vector<4x648xf32> -> vector<4x648xf32>
    %96 = arith.addf %91, %95 : vector<4x648xf32>
    %c7_94 = arith.constant 7 : index
    %c0_95 = arith.constant 0 : index
    %c0_96 = arith.constant 0 : index
    %97 = vector.load %arg6[%c7_94, %c0_95, %c0_96] : memref<9x4x16xbf16, #tpu.memory_space<vmem>>, vector<1x4x16xbf16>
    %98 = vector.shape_cast %97 : vector<1x4x16xbf16> to vector<4x16xbf16>
    %c0_97 = arith.constant 0 : index
    %c146_98 = arith.constant 146 : index
    %99 = vector.load %arg9[%c0_97, %c146_98] : memref<16x904xbf16, #tpu.memory_space<vmem>>, vector<16x648xbf16>
    %cst_99 = arith.constant dense<0.000000e+00> : vector<4x648xf32>
    %100 = tpu.matmul %98, %99, %cst_99 {dimension_numbers = #tpu.dot_dimension_numbers<[1], [0], [0], [1], [0, 0, 1, 1], [], []>} : vector<4x16xbf16>, vector<16x648xbf16>, vector<4x648xf32> -> vector<4x648xf32>
    %101 = arith.addf %96, %100 : vector<4x648xf32>
    %c8_100 = arith.constant 8 : index
    %c0_101 = arith.constant 0 : index
    %c0_102 = arith.constant 0 : index
    %102 = vector.load %arg6[%c8_100, %c0_101, %c0_102] : memref<9x4x16xbf16, #tpu.memory_space<vmem>>, vector<1x4x16xbf16>
    %103 = vector.shape_cast %102 : vector<1x4x16xbf16> to vector<4x16xbf16>
    %c0_103 = arith.constant 0 : index
    %c147_104 = arith.constant 147 : index
    %104 = vector.load %arg9[%c0_103, %c147_104] : memref<16x904xbf16, #tpu.memory_space<vmem>>, vector<16x648xbf16>
    %cst_105 = arith.constant dense<0.000000e+00> : vector<4x648xf32>
    %105 = tpu.matmul %103, %104, %cst_105 {dimension_numbers = #tpu.dot_dimension_numbers<[1], [0], [0], [1], [0, 0, 1, 1], [], []>} : vector<4x16xbf16>, vector<16x648xbf16>, vector<4x648xf32> -> vector<4x648xf32>
    %106 = arith.addf %101, %105 : vector<4x648xf32>
    %c0_106 = arith.constant 0 : index
    %c0_107 = arith.constant 0 : index
    %107 = vector.load %arg7[%c0_106, %c0_107] : memref<4x1xf32, #tpu.memory_space<vmem>>, vector<4x1xf32>
    %108 = vector.broadcast %107 : vector<4x1xf32> to vector<4x648xf32>
    %109 = arith.addf %106, %108 : vector<4x648xf32>
    %c0_108 = arith.constant 0 : index
    %c0_109 = arith.constant 0 : index
    %110 = vector.load %arg8[%c0_108, %c0_109] : memref<4x648xf32, #tpu.memory_space<vmem>>, vector<4x648xf32>
    tpu.vector_store %arg8[%c0_108, %c0_109], %109 {strides = array<i32>} : memref<4x648xf32, #tpu.memory_space<vmem>>, vector<4x648xf32>,
    return
  }
  func.func @transform_0(%arg0: i32) -> (i32, i32) {
    %c0_i32 = arith.constant 0 : i32
    %c0_i32_0 = arith.constant 0 : i32
    %c0_i32_1 = arith.constant 0 : i32
    return %c0_i32, %c0_i32_0 : i32, i32
  }
  func.func @transform_1(%arg0: i32) -> (i32, i32) {
    %c0_i32 = arith.constant 0 : i32
    %c0_i32_0 = arith.constant 0 : i32
    %c0_i32_1 = arith.constant 0 : i32
    return %c0_i32, %c0_i32_0 : i32, i32
  }
  func.func @transform_2(%arg0: i32) -> (i32, i32) {
    %c0_i32 = arith.constant 0 : i32
    %c0_i32_0 = arith.constant 0 : i32
    %c0_i32_1 = arith.constant 0 : i32
    return %c0_i32, %c0_i32_0 : i32, i32
  }
  func.func @transform_3(%arg0: i32) -> (i32, i32, i32) {
    %c0_i32 = arith.constant 0 : i32
    %c0_i32_0 = arith.constant 0 : i32
    %c0_i32_1 = arith.constant 0 : i32
    %c0_i32_2 = arith.constant 0 : i32
    return %c0_i32, %c0_i32_0, %c0_i32_1 : i32, i32, i32
  }
  func.func @transform_4(%arg0: i32) -> (i32, i32) {
    %c0_i32 = arith.constant 0 : i32
    %c0_i32_0 = arith.constant 0 : i32
    %c0_i32_1 = arith.constant 0 : i32
    return %c0_i32, %c0_i32_0 : i32, i32
  }
  func.func @transform_5(%arg0: i32) -> (i32, i32, i32) {
    %c0_i32 = arith.constant 0 : i32
    %c0_i32_0 = arith.constant 0 : i32
    %c0_i32_1 = arith.constant 0 : i32
    %c0_i32_2 = arith.constant 0 : i32
    return %c0_i32, %c0_i32_0, %c0_i32_1 : i32, i32, i32
  }
  func.func @transform_6(%arg0: i32) -> (i32, i32) {
    %c0_i32 = arith.constant 0 : i32
    %c0_i32_0 = arith.constant 0 : i32
    %c0_i32_1 = arith.constant 0 : i32
    return %c0_i32, %c0_i32_0 : i32, i32
  }
  func.func @transform_7(%arg0: i32) -> (i32, i32) {
    %c0_i32 = arith.constant 0 : i32
    %c0_i32_0 = arith.constant 0 : i32
    %c0_i32_1 = arith.constant 0 : i32
    return %c0_i32, %c0_i32_0 : i32, i32
  }
}

</mosaic_0001>

<llo_original>
// kernel: sd_utnet_forward.3
$region0: #{sd_utnet_forward.3}
  #allocation0 [shape = 'u32[]', space=smem, size = 0x4, offset = 0x4, fixed_abs, tag = 'smem constant byte address 0x4 - core index']
  #allocation1 [shape = 'u32[144,128]{1,0:T(1,128)}', space=vmem, size = 0x12000, scoped, tag = 'internal scratch']
  #allocation2 [shape = 'bf16[16,904]{1,0:T(16,128)(2,1)}', space=vmem, size = 0x8000, scoped, tag = 'scratch operand']
  %s0 = inlined_call_operand.vmem [shape: bf16[3,904], index: 0, kind: input, shape index: {}]
  %s1 = inlined_call_operand.vmem [shape: bf16[8,648], index: 1, kind: input, shape index: {}]
  %s2 = inlined_call_operand.vmem [shape: f32[1,648], index: 2, kind: input, shape index: {}]
  %s3 = inlined_call_operand.vmem [shape: bf16[9,8,3], index: 3, kind: input, shape index: {}]
  %s4 = inlined_call_operand.vmem [shape: f32[8,1], index: 4, kind: input, shape index: {}]
  %s5 = inlined_call_operand.vmem [shape: bf16[9,4,16], index: 5, kind: input, shape index: {}]
  %s6 = inlined_call_operand.vmem [shape: f32[4,1], index: 6, kind: input, shape index: {}]
  %s7 = inlined_call_operand.vmem [shape: f32[4,648], index: 7, kind: output, shape index: {}]
  %s8 = sld [smem:[#allocation0]]
  $region38: #{sd_utnet_forward.3} parent=0
    _
  %s10 = ssub.s32 1, %s8
  %s11 = scalar_select 0, %s10, %s8
  // Predicated region
  $region2: #{sd_utnet_forward.3} parent=0 // pred_check
    _
  $region3: #{sd_utnet_forward.3} parent=0 // pred_check_branch
    %13 = sbr.rel (0) target = $region5
  $region4: #{sd_utnet_forward.3} parent=0 // pred_region
    _
  $region5: #{sd_utnet_forward.3} parent=0 // pred_fallthru
    _
  // Predicated region
  $region6: #{sd_utnet_forward.3} parent=0 // pred_check
    _
  $region7: #{sd_utnet_forward.3} parent=0 // pred_check_branch
    %15 = sbr.rel (0) target = $region9
  $region8: #{sd_utnet_forward.3} parent=0 // pred_region
    _
  $region9: #{sd_utnet_forward.3} parent=0 // pred_fallthru
    _
  // Predicated region
  $region10: #{sd_utnet_forward.3} parent=0 // pred_check
    _
  $region11: #{sd_utnet_forward.3} parent=0 // pred_check_branch
    %17 = sbr.rel (0) target = $region13
  $region12: #{sd_utnet_forward.3} parent=0 // pred_region
    _
  $region13: #{sd_utnet_forward.3} parent=0 // pred_fallthru
    _
  // Predicated region
  $region14: #{sd_utnet_forward.3} parent=0 // pred_check
    _
  $region15: #{sd_utnet_forward.3} parent=0 // pred_check_branch
    %19 = sbr.rel (0) target = $region17
  $region16: #{sd_utnet_forward.3} parent=0 // pred_region
    _
  $region17: #{sd_utnet_forward.3} parent=0 // pred_fallthru
    _
  // Predicated region
  $region18: #{sd_utnet_forward.3} parent=0 // pred_check
    _
  $region19: #{sd_utnet_forward.3} parent=0 // pred_check_branch
    %21 = sbr.rel (0) target = $region21
  $region20: #{sd_utnet_forward.3} parent=0 // pred_region
    _
  $region21: #{sd_utnet_forward.3} parent=0 // pred_fallthru
    _
  // Predicated region
  $region22: #{sd_utnet_forward.3} parent=0 // pred_check
    _
  $region23: #{sd_utnet_forward.3} parent=0 // pred_check_branch
    %23 = sbr.rel (0) target = $region25
  $region24: #{sd_utnet_forward.3} parent=0 // pred_region
    _
  $region25: #{sd_utnet_forward.3} parent=0 // pred_fallthru
    _
  // Predicated region
  $region26: #{sd_utnet_forward.3} parent=0 // pred_check
    _
  $region27: #{sd_utnet_forward.3} parent=0 // pred_check_branch
    %25 = sbr.rel (0) target = $region29
  $region28: #{sd_utnet_forward.3} parent=0 // pred_region
    _
  $region29: #{sd_utnet_forward.3} parent=0 // pred_fallthru
    _
  %27 = vst [vmem:[#allocation2] sm:$0xff] 0
  %vm28 = vcmask 1047616
  %29 = vst.msk [vmem:[#allocation2 + $0x30] sm:$0xff] %vm28, 0
  %vm30 = vcmask 64512
  %31 = vst.msk [vmem:[#allocation2 + $0x38] sm:$0xff] %vm30, 0
  %v32 = vld [vmem:[%s3] sm:$0xf]
  %v33 = vld [vmem:[%s0] sm:$0xff]
  %v34 = vld [vmem:[%s0 + $0x8] sm:$0xf]
  %s35 = scalar_lea.vmem %s3, 4
  %v36 = vld [vmem:[%s35] sm:$0xf]
  %v39 = vcombine.high %v33, %v33
  %v41 = vunpack.c.l.s4 1983009808
  %v42 = vunpack.c.0.s8 %v41
  %v43 = vlaneseq
  %v44 = vshrl.u32 %v43, 7
  %v45 = vsub.s32 %v42, %v44
  %v46 = vrot.slane %v33, %v45
  %v48 = vunpack.c.l.s4 1983009808
  %v49 = vunpack.c.0.s8 %v48
  %v50 = vlaneseq
  %v51 = vshrl.u32 %v50, 7
  %v52 = vsub.s32 %v49, %v51
  %v53 = vrot.slane %v39, %v52
  %v54 = vcombine.high %v46, %v46
  %v55 = vcombine.high %v53, %v53
  %v57 = vunpack.c.l.s4 1983009808
  %v58 = vunpack.c.0.s8 %v57
  %v59 = vlaneseq
  %v60 = vshrl.u32 %v59, 7
  %v61 = vsub.s32 %v58, %v60
  %v62 = vrot.slane %v34, %v61
  %v63 = vcombine.high %v62, %v62
  %64 = vrot.lane.b32.xlu0 %v46, 18
  %v65 = vpop.permute.xlu0 %64
  %66 = vrot.lane.b32.xlu0 %v54, 18
  %v67 = vpop.permute.xlu0 %66
  %68 = vrot.lane.b32.xlu0 %v53, 18
  %v69 = vpop.permute.xlu0 %68
  %70 = vrot.lane.b32.xlu0 %v55, 18
  %v71 = vpop.permute.xlu0 %70
  %72 = vrot.lane.b32.xlu0 %v62, 18
  %v73 = vpop.permute.xlu0 %72
  %74 = vrot.lane.b32.xlu0 %v63, 18
  %v75 = vpop.permute.xlu0 %74
  %vm76 = vcmask 146432
  %v77 = vsel %vm76, %v65, %v67
  %v78 = vsel %vm76, %v67, %v69
  %v79 = vsel %vm76, %v69, %v71
  %v80 = vsel %vm76, %v71, %v73
  %v81 = vsel %vm76, %v73, %v75
  %vm82 = vcmask 23552
  %v84 = vsel %vm82, %v36, 0
  %vm86 = vcmask 1040384
  %vm87 = vcmask 1041408
  %v88 = vsel %vm86, 4294967295, 65535
  %v89 = vsel %vm87, %v88, 0
  %v91 = vand.u32 %v77, %v89
  %v94 = vand.u32 %v78, %v89
  %v97 = vand.u32 %v79, %v89
  %v100 = vand.u32 %v80, %v89
  %v103 = vand.u32 %v81, %v89
  %v106 = vand.u32 %v75, %v89
  %108 = vmatprep.subr.bf16.mxu0 %v94
  %109 = vmatpush1.bf16.msra.mxu0 %v91
  %110 = vmatprep.subr.bf16.mxu0 0
  %111 = vmatpush1.bf16.msra.mxu0 0
  %112 = vmatprep.subr.bf16.mxu0 0
  %113 = vmatpush1.bf16.msra.mxu0 0
  %114 = vmatprep.subr.bf16.mxu0 0
  %115 = vmatpush1.bf16.msra.mxu0 0
  %116 = vmatprep.subr.bf16.mxu0 0
  %117 = vmatpush1.bf16.msra.mxu0 0
  %118 = vmatprep.subr.bf16.mxu0 0
  %119 = vmatpush1.bf16.msra.mxu0 0
  %120 = vmatprep.subr.bf16.mxu0 0
  %121 = vmatpush1.bf16.msra.mxu0 0
  %122 = vmatprep.subr.bf16.mxu0 0
  %123 = vmatpush1.bf16.msra.mxu0 0
  %124 = vmatprep.subr.bf16.mxu0 0
  %125 = vmatpush1.bf16.msra.mxu0 0
  %126 = vmatprep.subr.bf16.mxu0 0
  %127 = vmatpush1.bf16.msra.mxu0 0
  %128 = vmatprep.subr.bf16.mxu0 0
  %129 = vmatpush1.bf16.msra.mxu0 0
  %130 = vmatprep.subr.bf16.mxu0 0
  %131 = vmatpush1.bf16.msra.mxu0 0
  %132 = vmatprep.subr.bf16.mxu0 0
  %133 = vmatpush1.bf16.msra.mxu0 0
  %134 = vmatprep.subr.bf16.mxu0 0
  %135 = vmatpush1.bf16.msra.mxu0 0
  %136 = vmatprep.subr.bf16.mxu0 0
  %137 = vmatpush1.bf16.msra.mxu0 0
  %138 = vmatprep.subr.bf16.mxu0 0
  %139 = vmatpush1.bf16.msra.mxu0 0
  %140 = vmatprep.mubr.bf16.mxu0 0
  %141 = vmatmul.mubr.bf16.gmra.mrb[0].mxu0 %v84
  %v142 = vpop.f32.mrb[0].mxu0
  %v143 = vadd.f32 0.0, %v142
  %v144 = vpop.f32.mrb[0].mxu0
  %v145 = vadd.f32 0.0, %v144
  %v146 = vpop.f32.mrb[0].mxu0
  %v147 = vpop.f32.mrb[0].mxu0
  %148 = vdwg.mxu0
  %149 = vmatprep.subr.bf16.mxu0 %v100
  %150 = vmatpush1.bf16.msra.mxu0 %v97
  %151 = vmatprep.subr.bf16.mxu0 0
  %152 = vmatpush1.bf16.msra.mxu0 0
  %153 = vmatprep.subr.bf16.mxu0 0
  %154 = vmatpush1.bf16.msra.mxu0 0
  %155 = vmatprep.subr.bf16.mxu0 0
  %156 = vmatpush1.bf16.msra.mxu0 0
  %157 = vmatprep.subr.bf16.mxu0 0
  %158 = vmatpush1.bf16.msra.mxu0 0
  %159 = vmatprep.subr.bf16.mxu0 0
  %160 = vmatpush1.bf16.msra.mxu0 0
  %161 = vmatprep.subr.bf16.mxu0 0
  %162 = vmatpush1.bf16.msra.mxu0 0
  %163 = vmatprep.subr.bf16.mxu0 0
  %164 = vmatpush1.bf16.msra.mxu0 0
  %165 = vmatprep.subr.bf16.mxu0 0
  %166 = vmatpush1.bf16.msra.mxu0 0
  %167 = vmatprep.subr.bf16.mxu0 0
  %168 = vmatpush1.bf16.msra.mxu0 0
  %169 = vmatprep.subr.bf16.mxu0 0
  %170 = vmatpush1.bf16.msra.mxu0 0
  %171 = vmatprep.subr.bf16.mxu0 0
  %172 = vmatpush1.bf16.msra.mxu0 0
  %173 = vmatprep.subr.bf16.mxu0 0
  %174 = vmatpush1.bf16.msra.mxu0 0
  %175 = vmatprep.subr.bf16.mxu0 0
  %176 = vmatpush1.bf16.msra.mxu0 0
  %177 = vmatprep.subr.bf16.mxu0 0
  %178 = vmatpush1.bf16.msra.mxu0 0
  %179 = vmatprep.subr.bf16.mxu0 0
  %180 = vmatpush1.bf16.msra.mxu0 0
  %181 = vmatprep.mubr.bf16.mxu0 0
  %182 = vmatmul.mubr.bf16.gmra.mrb[0].mxu0 %v84
  %v183 = vpop.f32.mrb[0].mxu0
  %v184 = vadd.f32 0.0, %v183
  %v185 = vpop.f32.mrb[0].mxu0
  %v186 = vadd.f32 0.0, %v185
  %v187 = vpop.f32.mrb[0].mxu0
  %v188 = vpop.f32.mrb[0].mxu0
  %189 = vdwg.mxu0
  %190 = vmatprep.subr.bf16.mxu0 %v106
  %191 = vmatpush1.bf16.msra.mxu0 %v103
  %192 = vmatprep.subr.bf16.mxu0 0
  %193 = vmatpush1.bf16.msra.mxu0 0
  %194 = vmatprep.subr.bf16.mxu0 0
  %195 = vmatpush1.bf16.msra.mxu0 0
  %196 = vmatprep.subr.bf16.mxu0 0
  %197 = vmatpush1.bf16.msra.mxu0 0
  %198 = vmatprep.subr.bf16.mxu0 0
  %199 = vmatpush1.bf16.msra.mxu0 0
  %200 = vmatprep.subr.bf16.mxu0 0
  %201 = vmatpush1.bf16.msra.mxu0 0
  %202 = vmatprep.subr.bf16.mxu0 0
  %203 = vmatpush1.bf16.msra.mxu0 0
  %204 = vmatprep.subr.bf16.mxu0 0
  %205 = vmatpush1.bf16.msra.mxu0 0
  %206 = vmatprep.subr.bf16.mxu0 0
  %207 = vmatpush1.bf16.msra.mxu0 0
  %208 = vmatprep.subr.bf16.mxu0 0
  %209 = vmatpush1.bf16.msra.mxu0 0
  %210 = vmatprep.subr.bf16.mxu0 0
  %211 = vmatpush1.bf16.msra.mxu0 0
  %212 = vmatprep.subr.bf16.mxu0 0
  %213 = vmatpush1.bf16.msra.mxu0 0
  %214 = vmatprep.subr.bf16.mxu0 0
  %215 = vmatpush1.bf16.msra.mxu0 0
  %216 = vmatprep.subr.bf16.mxu0 0
  %217 = vmatpush1.bf16.msra.mxu0 0
  %218 = vmatprep.subr.bf16.mxu0 0
  %219 = vmatpush1.bf16.msra.mxu0 0
  %220 = vmatprep.subr.bf16.mxu0 0
  %221 = vmatpush1.bf16.msra.mxu0 0
  %222 = vmatprep.mubr.bf16.mxu0 0
  %223 = vmatmul.mubr.bf16.gmra.mrb[0].mxu0 %v84
  %v224 = vpop.f32.mrb[0].mxu0
  %v225 = vadd.f32 0.0, %v224
  %v226 = vpop.f32.mrb[0].mxu0
  %v227 = vadd.f32 0.0, %v226
  %v228 = vpop.f32.mrb[0].mxu0
  %v229 = vpop.f32.mrb[0].mxu0
  %230 = vdwg.mxu0
  %231 = vrot.lane.b32.xlu0 %v46, 19
  %v232 = vpop.permute.xlu0 %231
  %233 = vrot.lane.b32.xlu0 %v54, 19
  %v234 = vpop.permute.xlu0 %233
  %235 = vrot.lane.b32.xlu0 %v53, 19
  %v236 = vpop.permute.xlu0 %235
  %237 = vrot.lane.b32.xlu0 %v55, 19
  %v238 = vpop.permute.xlu0 %237
  %239 = vrot.lane.b32.xlu0 %v62, 19
  %v240 = vpop.permute.xlu0 %239
  %241 = vrot.lane.b32.xlu0 %v63, 19
  %v242 = vpop.permute.xlu0 %241
  %vm243 = vcmask 154624
  %v244 = vsel %vm243, %v232, %v234
  %v245 = vsel %vm243, %v234, %v236
  %v246 = vsel %vm243, %v236, %v238
  %v247 = vsel %vm243, %v238, %v240
  %v248 = vsel %vm243, %v240, %v242
  %v250 = vsel %vm82, %v32, 0
  %v253 = vand.u32 %v244, %v89
  %v256 = vand.u32 %v245, %v89
  %v259 = vand.u32 %v246, %v89
  %v262 = vand.u32 %v247, %v89
  %v265 = vand.u32 %v248, %v89
  %v268 = vand.u32 %v242, %v89
  %270 = vmatprep.subr.bf16.mxu0 %v256
  %271 = vmatpush1.bf16.msra.mxu0 %v253
  %272 = vmatprep.subr.bf16.mxu0 0
  %273 = vmatpush1.bf16.msra.mxu0 0
  %274 = vmatprep.subr.bf16.mxu0 0
  %275 = vmatpush1.bf16.msra.mxu0 0
  %276 = vmatprep.subr.bf16.mxu0 0
  %277 = vmatpush1.bf16.msra.mxu0 0
  %278 = vmatprep.subr.bf16.mxu0 0
  %279 = vmatpush1.bf16.msra.mxu0 0
  %280 = vmatprep.subr.bf16.mxu0 0
  %281 = vmatpush1.bf16.msra.mxu0 0
  %282 = vmatprep.subr.bf16.mxu0 0
  %283 = vmatpush1.bf16.msra.mxu0 0
  %284 = vmatprep.subr.bf16.mxu0 0
  %285 = vmatpush1.bf16.msra.mxu0 0
  %286 = vmatprep.subr.bf16.mxu0 0
  %287 = vmatpush1.bf16.msra.mxu0 0
  %288 = vmatprep.subr.bf16.mxu0 0
  %289 = vmatpush1.bf16.msra.mxu0 0
  %290 = vmatprep.subr.bf16.mxu0 0
  %291 = vmatpush1.bf16.msra.mxu0 0
  %292 = vmatprep.subr.bf16.mxu0 0
  %293 = vmatpush1.bf16.msra.mxu0 0
  %294 = vmatprep.subr.bf16.mxu0 0
  %295 = vmatpush1.bf16.msra.mxu0 0
  %296 = vmatprep.subr.bf16.mxu0 0
  %297 = vmatpush1.bf16.msra.mxu0 0
  %298 = vmatprep.subr.bf16.mxu0 0
  %299 = vmatpush1.bf16.msra.mxu0 0
  %300 = vmatprep.subr.bf16.mxu0 0
  %301 = vmatpush1.bf16.msra.mxu0 0
  %302 = vmatprep.mubr.bf16.mxu0 0
  %303 = vmatmul.mubr.bf16.gmra.mrb[0].mxu0 %v250
  %v304 = vpop.f32.mrb[0].mxu0
  %v305 = vadd.f32 %v143, %v304
  %v306 = vpop.f32.mrb[0].mxu0
  %v307 = vadd.f32 %v145, %v306
  %v308 = vpop.f32.mrb[0].mxu0
  %v309 = vpop.f32.mrb[0].mxu0
  %310 = vdwg.mxu0
  %311 = vmatprep.subr.bf16.mxu0 %v262
  %312 = vmatpush1.bf16.msra.mxu0 %v259
  %313 = vmatprep.subr.bf16.mxu0 0
  %314 = vmatpush1.bf16.msra.mxu0 0
  %315 = vmatprep.subr.bf16.mxu0 0
  %316 = vmatpush1.bf16.msra.mxu0 0
  %317 = vmatprep.subr.bf16.mxu0 0
  %318 = vmatpush1.bf16.msra.mxu0 0
  %319 = vmatprep.subr.bf16.mxu0 0
  %320 = vmatpush1.bf16.msra.mxu0 0
  %321 = vmatprep.subr.bf16.mxu0 0
  %322 = vmatpush1.bf16.msra.mxu0 0
  %323 = vmatprep.subr.bf16.mxu0 0
  %324 = vmatpush1.bf16.msra.mxu0 0
  %325 = vmatprep.subr.bf16.mxu0 0
  %326 = vmatpush1.bf16.msra.mxu0 0
  %327 = vmatprep.subr.bf16.mxu0 0
  %328 = vmatpush1.bf16.msra.mxu0 0
  %329 = vmatprep.subr.bf16.mxu0 0
  %330 = vmatpush1.bf16.msra.mxu0 0
  %331 = vmatprep.subr.bf16.mxu0 0
  %332 = vmatpush1.bf16.msra.mxu0 0
  %333 = vmatprep.subr.bf16.mxu0 0
  %334 = vmatpush1.bf16.msra.mxu0 0
  %335 = vmatprep.subr.bf16.mxu0 0
  %336 = vmatpush1.bf16.msra.mxu0 0
  %337 = vmatprep.subr.bf16.mxu0 0
  %338 = vmatpush1.bf16.msra.mxu0 0
  %339 = vmatprep.subr.bf16.mxu0 0
  %340 = vmatpush1.bf16.msra.mxu0 0
  %341 = vmatprep.subr.bf16.mxu0 0
  %342 = vmatpush1.bf16.msra.mxu0 0
  %343 = vmatprep.mubr.bf16.mxu0 0
  %344 = vmatmul.mubr.bf16.gmra.mrb[0].mxu0 %v250
  %v345 = vpop.f32.mrb[0].mxu0
  %v346 = vadd.f32 %v184, %v345
  %v347 = vpop.f32.mrb[0].mxu0
  %v348 = vadd.f32 %v186, %v347
  %v349 = vpop.f32.mrb[0].mxu0
  %v350 = vpop.f32.mrb[0].mxu0
  %351 = vdwg.mxu0
  %352 = vmatprep.subr.bf16.mxu0 %v268
  %353 = vmatpush1.bf16.msra.mxu0 %v265
  %354 = vmatprep.subr.bf16.mxu0 0
  %355 = vmatpush1.bf16.msra.mxu0 0
  %356 = vmatprep.subr.bf16.mxu0 0
  %357 = vmatpush1.bf16.msra.mxu0 0
  %358 = vmatprep.subr.bf16.mxu0 0
  %359 = vmatpush1.bf16.msra.mxu0 0
  %360 = vmatprep.subr.bf16.mxu0 0
  %361 = vmatpush1.bf16.msra.mxu0 0
  %362 = vmatprep.subr.bf16.mxu0 0
  %363 = vmatpush1.bf16.msra.mxu0 0
  %364 = vmatprep.subr.bf16.mxu0 0
  %365 = vmatpush1.bf16.msra.mxu0 0
  %366 = vmatprep.subr.bf16.mxu0 0
  %367 = vmatpush1.bf16.msra.mxu0 0
  %368 = vmatprep.subr.bf16.mxu0 0
  %369 = vmatpush1.bf16.msra.mxu0 0
  %370 = vmatprep.subr.bf16.mxu0 0
  %371 = vmatpush1.bf16.msra.mxu0 0
  %372 = vmatprep.subr.bf16.mxu0 0
  %373 = vmatpush1.bf16.msra.mxu0 0
  %374 = vmatprep.subr.bf16.mxu0 0
  %375 = vmatpush1.bf16.msra.mxu0 0
  %376 = vmatprep.subr.bf16.mxu0 0
  %377 = vmatpush1.bf16.msra.mxu0 0
  %378 = vmatprep.subr.bf16.mxu0 0
  %379 = vmatpush1.bf16.msra.mxu0 0
  %380 = vmatprep.subr.bf16.mxu0 0
  %381 = vmatpush1.bf16.msra.mxu0 0
  %382 = vmatprep.subr.bf16.mxu0 0
  %383 = vmatpush1.bf16.msra.mxu0 0
  %384 = vmatprep.mubr.bf16.mxu0 0
  %385 = vmatmul.mubr.bf16.gmra.mrb[0].mxu0 %v250
  %v386 = vpop.f32.mrb[0].mxu0
  %v387 = vadd.f32 %v225, %v386
  %v388 = vpop.f32.mrb[0].mxu0
  %v389 = vadd.f32 %v227, %v388
  %v390 = vpop.f32.mrb[0].mxu0
  %v391 = vpop.f32.mrb[0].mxu0
  %392 = vdwg.mxu0
  %s393 = scalar_lea.vmem %s3, 8
  %v394 = vld [vmem:[%s393] sm:$0xf]
  %v395 = vld [vmem:[%s0] sm:$0xff]
  %v396 = vld [vmem:[%s0 + $0x8] sm:$0xf]
  %v399 = vcombine.high %v395, %v395
  %v401 = vunpack.c.l.s4 1983009808
  %v402 = vunpack.c.0.s8 %v401
  %v403 = vlaneseq
  %v404 = vshrl.u32 %v403, 7
  %v405 = vsub.s32 %v402, %v404
  %v406 = vrot.slane %v395, %v405
  %v408 = vunpack.c.l.s4 1983009808
  %v409 = vunpack.c.0.s8 %v408
  %v410 = vlaneseq
  %v411 = vshrl.u32 %v410, 7
  %v412 = vsub.s32 %v409, %v411
  %v413 = vrot.slane %v399, %v412
  %v414 = vcombine.high %v406, %v406
  %v415 = vcombine.high %v413, %v413
  %v417 = vunpack.c.l.s4 1983009808
  %v418 = vunpack.c.0.s8 %v417
  %v419 = vlaneseq
  %v420 = vshrl.u32 %v419, 7
  %v421 = vsub.s32 %v418, %v420
  %v422 = vrot.slane %v396, %v421
  %v423 = vcombine.high %v422, %v422
  %424 = vrot.lane.b32.xlu0 %v406, 17
  %v425 = vpop.permute.xlu0 %424
  %426 = vrot.lane.b32.xlu0 %v414, 17
  %v427 = vpop.permute.xlu0 %426
  %428 = vrot.lane.b32.xlu0 %v413, 17
  %v429 = vpop.permute.xlu0 %428
  %430 = vrot.lane.b32.xlu0 %v415, 17
  %v431 = vpop.permute.xlu0 %430
  %432 = vrot.lane.b32.xlu0 %v422, 17
  %v433 = vpop.permute.xlu0 %432
  %434 = vrot.lane.b32.xlu0 %v423, 17
  %v435 = vpop.permute.xlu0 %434
  %vm436 = vcmask 138240
  %v437 = vsel %vm436, %v425, %v427
  %v438 = vsel %vm436, %v427, %v429
  %v439 = vsel %vm436, %v429, %v431
  %v440 = vsel %vm436, %v431, %v433
  %v441 = vsel %vm436, %v433, %v435
  %v443 = vsel %vm82, %v394, 0
  %v446 = vand.u32 %v437, %v89
  %v449 = vand.u32 %v438, %v89
  %v452 = vand.u32 %v439, %v89
  %v455 = vand.u32 %v440, %v89
  %v458 = vand.u32 %v441, %v89
  %v461 = vand.u32 %v435, %v89
  %463 = vmatprep.subr.bf16.mxu0 %v449
  %464 = vmatpush1.bf16.msra.mxu0 %v446
  %465 = vmatprep.subr.bf16.mxu0 0
  %466 = vmatpush1.bf16.msra.mxu0 0
  %467 = vmatprep.subr.bf16.mxu0 0
  %468 = vmatpush1.bf16.msra.mxu0 0
  %469 = vmatprep.subr.bf16.mxu0 0
  %470 = vmatpush1.bf16.msra.mxu0 0
  %471 = vmatprep.subr.bf16.mxu0 0
  %472 = vmatpush1.bf16.msra.mxu0 0
  %473 = vmatprep.subr.bf16.mxu0 0
  %474 = vmatpush1.bf16.msra.mxu0 0
  %475 = vmatprep.subr.bf16.mxu0 0
  %476 = vmatpush1.bf16.msra.mxu0 0
  %477 = vmatprep.subr.bf16.mxu0 0
  %478 = vmatpush1.bf16.msra.mxu0 0
  %479 = vmatprep.subr.bf16.mxu0 0
  %480 = vmatpush1.bf16.msra.mxu0 0
  %481 = vmatprep.subr.bf16.mxu0 0
  %482 = vmatpush1.bf16.msra.mxu0 0
  %483 = vmatprep.subr.bf16.mxu0 0
  %484 = vmatpush1.bf16.msra.mxu0 0
  %485 = vmatprep.subr.bf16.mxu0 0
  %486 = vmatpush1.bf16.msra.mxu0 0
  %487 = vmatprep.subr.bf16.mxu0 0
  %488 = vmatpush1.bf16.msra.mxu0 0
  %489 = vmatprep.subr.bf16.mxu0 0
  %490 = vmatpush1.bf16.msra.mxu0 0
  %491 = vmatprep.subr.bf16.mxu0 0
  %492 = vmatpush1.bf16.msra.mxu0 0
  %493 = vmatprep.subr.bf16.mxu0 0
  %494 = vmatpush1.bf16.msra.mxu0 0
  %495 = vmatprep.mubr.bf16.mxu0 0
  %496 = vmatmul.mubr.bf16.gmra.mrb[0].mxu0 %v443
  %v497 = vpop.f32.mrb[0].mxu0
  %v498 = vadd.f32 0.0, %v497
  %v499 = vpop.f32.mrb[0].mxu0
  %v500 = vadd.f32 0.0, %v499
  %v501 = vpop.f32.mrb[0].mxu0
  %v502 = vpop.f32.mrb[0].mxu0
  %503 = vdwg.mxu0
  %504 = vmatprep.subr.bf16.mxu0 %v455
  %505 = vmatpush1.bf16.msra.mxu0 %v452
  %506 = vmatprep.subr.bf16.mxu0 0
  %507 = vmatpush1.bf16.msra.mxu0 0
  %508 = vmatprep.subr.bf16.mxu0 0
  %509 = vmatpush1.bf16.msra.mxu0 0
  %510 = vmatprep.subr.bf16.mxu0 0
  %511 = vmatpush1.bf16.msra.mxu0 0
  %512 = vmatprep.subr.bf16.mxu0 0
  %513 = vmatpush1.bf16.msra.mxu0 0
  %514 = vmatprep.subr.bf16.mxu0 0
  %515 = vmatpush1.bf16.msra.mxu0 0
  %516 = vmatprep.subr.bf16.mxu0 0
  %517 = vmatpush1.bf16.msra.mxu0 0
  %518 = vmatprep.subr.bf16.mxu0 0
  %519 = vmatpush1.bf16.msra.mxu0 0
  %520 = vmatprep.subr.bf16.mxu0 0
  %521 = vmatpush1.bf16.msra.mxu0 0
  %522 = vmatprep.subr.bf16.mxu0 0
  %523 = vmatpush1.bf16.msra.mxu0 0
  %524 = vmatprep.subr.bf16.mxu0 0
  %525 = vmatpush1.bf16.msra.mxu0 0
  %526 = vmatprep.subr.bf16.mxu0 0
  %527 = vmatpush1.bf16.msra.mxu0 0
  %528 = vmatprep.subr.bf16.mxu0 0
  %529 = vmatpush1.bf16.msra.mxu0 0
  %530 = vmatprep.subr.bf16.mxu0 0
  %531 = vmatpush1.bf16.msra.mxu0 0
  %532 = vmatprep.subr.bf16.mxu0 0
  %533 = vmatpush1.bf16.msra.mxu0 0
  %534 = vmatprep.subr.bf16.mxu0 0
  %535 = vmatpush1.bf16.msra.mxu0 0
  %536 = vmatprep.mubr.bf16.mxu0 0
  %537 = vmatmul.mubr.bf16.gmra.mrb[0].mxu0 %v443
  %v538 = vpop.f32.mrb[0].mxu0
  %v539 = vadd.f32 0.0, %v538
  %v540 = vpop.f32.mrb[0].mxu0
  %v541 = vadd.f32 0.0, %v540
  %v542 = vpop.f32.mrb[0].mxu0
  %v543 = vpop.f32.mrb[0].mxu0
  %544 = vdwg.mxu0
  %545 = vmatprep.subr.bf16.mxu0 %v461
  %546 = vmatpush1.bf16.msra.mxu0 %v458
  %547 = vmatprep.subr.bf16.mxu0 0
  %548 = vmatpush1.bf16.msra.mxu0 0
  %549 = vmatprep.subr.bf16.mxu0 0
  %550 = vmatpush1.bf16.msra.mxu0 0
  %551 = vmatprep.subr.bf16.mxu0 0
  %552 = vmatpush1.bf16.msra.mxu0 0
  %553 = vmatprep.subr.bf16.mxu0 0
  %554 = vmatpush1.bf16.msra.mxu0 0
  %555 = vmatprep.subr.bf16.mxu0 0
  %556 = vmatpush1.bf16.msra.mxu0 0
  %557 = vmatprep.subr.bf16.mxu0 0
  %558 = vmatpush1.bf16.msra.mxu0 0
  %559 = vmatprep.subr.bf16.mxu0 0
  %560 = vmatpush1.bf16.msra.mxu0 0
  %561 = vmatprep.subr.bf16.mxu0 0
  %562 = vmatpush1.bf16.msra.mxu0 0
  %563 = vmatprep.subr.bf16.mxu0 0
  %564 = vmatpush1.bf16.msra.mxu0 0
  %565 = vmatprep.subr.bf16.mxu0 0
  %566 = vmatpush1.bf16.msra.mxu0 0
  %567 = vmatprep.subr.bf16.mxu0 0
  %568 = vmatpush1.bf16.msra.mxu0 0
  %569 = vmatprep.subr.bf16.mxu0 0
  %570 = vmatpush1.bf16.msra.mxu0 0
  %571 = vmatprep.subr.bf16.mxu0 0
  %572 = vmatpush1.bf16.msra.mxu0 0
  %573 = vmatprep.subr.bf16.mxu0 0
  %574 = vmatpush1.bf16.msra.mxu0 0
  %575 = vmatprep.subr.bf16.mxu0 0
  %576 = vmatpush1.bf16.msra.mxu0 0
  %577 = vmatprep.mubr.bf16.mxu0 0
  %578 = vmatmul.mubr.bf16.gmra.mrb[0].mxu0 %v443
  %v579 = vpop.f32.mrb[0].mxu0
  %v580 = vadd.f32 0.0, %v579
  %v581 = vpop.f32.mrb[0].mxu0
  %v582 = vadd.f32 0.0, %v581
  %v583 = vpop.f32.mrb[0].mxu0
  %v584 = vpop.f32.mrb[0].mxu0
  %585 = vdwg.mxu0
  %v586 = vadd.f32 %v305, %v498
  %v587 = vadd.f32 %v307, %v500
  %v588 = vadd.f32 %v346, %v539
  %v589 = vadd.f32 %v348, %v541
  %v590 = vadd.f32 %v387, %v580
  %v591 = vadd.f32 %v389, %v582
  %s592 = scalar_lea.vmem %s3, 12
  %v593 = vld [vmem:[%s592] sm:$0xf]
  %v594 = vld [vmem:[%s0] sm:$0xff]
  %v595 = vld [vmem:[%s0 + $0x8] sm:$0x3f]
  %v598 = vcombine.high %v594, %v594
  %v600 = vunpack.c.l.s4 1983009808
  %v601 = vunpack.c.0.s8 %v600
  %v602 = vlaneseq
  %v603 = vshrl.u32 %v602, 7
  %v604 = vsub.s32 %v601, %v603
  %v605 = vrot.slane %v594, %v604
  %v607 = vunpack.c.l.s4 1983009808
  %v608 = vunpack.c.0.s8 %v607
  %v609 = vlaneseq
  %v610 = vshrl.u32 %v609, 7
  %v611 = vsub.s32 %v608, %v610
  %v612 = vrot.slane %v598, %v611
  %v613 = vcombine.high %v605, %v605
  %v614 = vcombine.high %v612, %v612
  %v615 = vcombine.high %v595, %v595
  %v617 = vunpack.c.l.s4 1983009808
  %v618 = vunpack.c.0.s8 %v617
  %v619 = vlaneseq
  %v620 = vshrl.u32 %v619, 7
  %v621 = vsub.s32 %v618, %v620
  %v622 = vrot.slane %v595, %v621
  %v624 = vunpack.c.l.s4 1983009808
  %v625 = vunpack.c.0.s8 %v624
  %v626 = vlaneseq
  %v627 = vshrl.u32 %v626, 7
  %v628 = vsub.s32 %v625, %v627
  %v629 = vrot.slane %v615, %v628
  %v630 = vcombine.high %v622, %v622
  %631 = vrot.lane.b32.xlu0 %v605, 1
  %v632 = vpop.permute.xlu0 %631
  %633 = vrot.lane.b32.xlu0 %v613, 1
  %v634 = vpop.permute.xlu0 %633
  %635 = vrot.lane.b32.xlu0 %v612, 1
  %v636 = vpop.permute.xlu0 %635
  %637 = vrot.lane.b32.xlu0 %v614, 1
  %v638 = vpop.permute.xlu0 %637
  %639 = vrot.lane.b32.xlu0 %v622, 1
  %v640 = vpop.permute.xlu0 %639
  %641 = vrot.lane.b32.xlu0 %v630, 1
  %v642 = vpop.permute.xlu0 %641
  %643 = vrot.lane.b32.xlu0 %v629, 1
  %v644 = vpop.permute.xlu0 %643
  %vm645 = vcmask 7168
  %v646 = vsel %vm645, %v632, %v634
  %v647 = vsel %vm645, %v634, %v636
  %v648 = vsel %vm645, %v636, %v638
  %v649 = vsel %vm645, %v638, %v640
  %v650 = vsel %vm645, %v640, %v642
  %v651 = vsel %vm645, %v642, %v644
  %v653 = vsel %vm82, %v593, 0
  %v656 = vand.u32 %v646, %v89
  %v659 = vand.u32 %v647, %v89
  %v662 = vand.u32 %v648, %v89
  %v665 = vand.u32 %v649, %v89
  %v668 = vand.u32 %v650, %v89
  %v671 = vand.u32 %v651, %v89
  %673 = vmatprep.subr.bf16.mxu0 %v659
  %674 = vmatpush1.bf16.msra.mxu0 %v656
  %675 = vmatprep.subr.bf16.mxu0 0
  %676 = vmatpush1.bf16.msra.mxu0 0
  %677 = vmatprep.subr.bf16.mxu0 0
  %678 = vmatpush1.bf16.msra.mxu0 0
  %679 = vmatprep.subr.bf16.mxu0 0
  %680 = vmatpush1.bf16.msra.mxu0 0
  %681 = vmatprep.subr.bf16.mxu0 0
  %682 = vmatpush1.bf16.msra.mxu0 0
  %683 = vmatprep.subr.bf16.mxu0 0
  %684 = vmatpush1.bf16.msra.mxu0 0
  %685 = vmatprep.subr.bf16.mxu0 0
  %686 = vmatpush1.bf16.msra.mxu0 0
  %687 = vmatprep.subr.bf16.mxu0 0
  %688 = vmatpush1.bf16.msra.mxu0 0
  %689 = vmatprep.subr.bf16.mxu0 0
  %690 = vmatpush1.bf16.msra.mxu0 0
  %691 = vmatprep.subr.bf16.mxu0 0
  %692 = vmatpush1.bf16.msra.mxu0 0
  %693 = vmatprep.subr.bf16.mxu0 0
  %694 = vmatpush1.bf16.msra.mxu0 0
  %695 = vmatprep.subr.bf16.mxu0 0
  %696 = vmatpush1.bf16.msra.mxu0 0
  %697 = vmatprep.subr.bf16.mxu0 0
  %698 = vmatpush1.bf16.msra.mxu0 0
  %699 = vmatprep.subr.bf16.mxu0 0
  %700 = vmatpush1.bf16.msra.mxu0 0
  %701 = vmatprep.subr.bf16.mxu0 0
  %702 = vmatpush1.bf16.msra.mxu0 0
  %703 = vmatprep.subr.bf16.mxu0 0
  %704 = vmatpush1.bf16.msra.mxu0 0
  %705 = vmatprep.mubr.bf16.mxu0 0
  %706 = vmatmul.mubr.bf16.gmra.mrb[0].mxu0 %v653
  %v707 = vpop.f32.mrb[0].mxu0
  %v708 = vadd.f32 0.0, %v707
  %v709 = vpop.f32.mrb[0].mxu0
  %v710 = vadd.f32 0.0, %v709
  %v711 = vpop.f32.mrb[0].mxu0
  %v712 = vpop.f32.mrb[0].mxu0
  %713 = vdwg.mxu0
  %714 = vmatprep.subr.bf16.mxu0 %v665
  %715 = vmatpush1.bf16.msra.mxu0 %v662
  %716 = vmatprep.subr.bf16.mxu0 0
  %717 = vmatpush1.bf16.msra.mxu0 0
  %718 = vmatprep.subr.bf16.mxu0 0
  %719 = vmatpush1.bf16.msra.mxu0 0
  %720 = vmatprep.subr.bf16.mxu0 0
  %721 = vmatpush1.bf16.msra.mxu0 0
  %722 = vmatprep.subr.bf16.mxu0 0
  %723 = vmatpush1.bf16.msra.mxu0 0
  %724 = vmatprep.subr.bf16.mxu0 0
  %725 = vmatpush1.bf16.msra.mxu0 0
  %726 = vmatprep.subr.bf16.mxu0 0
  %727 = vmatpush1.bf16.msra.mxu0 0
  %728 = vmatprep.subr.bf16.mxu0 0
  %729 = vmatpush1.bf16.msra.mxu0 0
  %730 = vmatprep.subr.bf16.mxu0 0
  %731 = vmatpush1.bf16.msra.mxu0 0
  %732 = vmatprep.subr.bf16.mxu0 0
  %733 = vmatpush1.bf16.msra.mxu0 0
  %734 = vmatprep.subr.bf16.mxu0 0
  %735 = vmatpush1.bf16.msra.mxu0 0
  %736 = vmatprep.subr.bf16.mxu0 0
  %737 = vmatpush1.bf16.msra.mxu0 0
  %738 = vmatprep.subr.bf16.mxu0 0
  %739 = vmatpush1.bf16.msra.mxu0 0
  %740 = vmatprep.subr.bf16.mxu0 0
  %741 = vmatpush1.bf16.msra.mxu0 0
  %742 = vmatprep.subr.bf16.mxu0 0
  %743 = vmatpush1.bf16.msra.mxu0 0
  %744 = vmatprep.subr.bf16.mxu0 0
  %745 = vmatpush1.bf16.msra.mxu0 0
  %746 = vmatprep.mubr.bf16.mxu0 0
  %747 = vmatmul.mubr.bf16.gmra.mrb[0].mxu0 %v653
  %v748 = vpop.f32.mrb[0].mxu0
  %v749 = vadd.f32 0.0, %v748
  %v750 = vpop.f32.mrb[0].mxu0
  %v751 = vadd.f32 0.0, %v750
  %v752 = vpop.f32.mrb[0].mxu0
  %v753 = vpop.f32.mrb[0].mxu0
  %754 = vdwg.mxu0
  %755 = vmatprep.subr.bf16.mxu0 %v671
  %756 = vmatpush1.bf16.msra.mxu0 %v668
  %757 = vmatprep.subr.bf16.mxu0 0
  %758 = vmatpush1.bf16.msra.mxu0 0
  %759 = vmatprep.subr.bf16.mxu0 0
  %760 = vmatpush1.bf16.msra.mxu0 0
  %761 = vmatprep.subr.bf16.mxu0 0
  %762 = vmatpush1.bf16.msra.mxu0 0
  %763 = vmatprep.subr.bf16.mxu0 0
  %764 = vmatpush1.bf16.msra.mxu0 0
  %765 = vmatprep.subr.bf16.mxu0 0
  %766 = vmatpush1.bf16.msra.mxu0 0
  %767 = vmatprep.subr.bf16.mxu0 0
  %768 = vmatpush1.bf16.msra.mxu0 0
  %769 = vmatprep.subr.bf16.mxu0 0
  %770 = vmatpush1.bf16.msra.mxu0 0
  %771 = vmatprep.subr.bf16.mxu0 0
  %772 = vmatpush1.bf16.msra.mxu0 0
  %773 = vmatprep.subr.bf16.mxu0 0
  %774 = vmatpush1.bf16.msra.mxu0 0
  %775 = vmatprep.subr.bf16.mxu0 0
  %776 = vmatpush1.bf16.msra.mxu0 0
  %777 = vmatprep.subr.bf16.mxu0 0
  %778 = vmatpush1.bf16.msra.mxu0 0
  %779 = vmatprep.subr.bf16.mxu0 0
  %780 = vmatpush1.bf16.msra.mxu0 0
  %781 = vmatprep.subr.bf16.mxu0 0
  %782 = vmatpush1.bf16.msra.mxu0 0
  %783 = vmatprep.subr.bf16.mxu0 0
  %784 = vmatpush1.bf16.msra.mxu0 0
  %785 = vmatprep.subr.bf16.mxu0 0
  %786 = vmatpush1.bf16.msra.mxu0 0
  %787 = vmatprep.mubr.bf16.mxu0 0
  %788 = vmatmul.mubr.bf16.gmra.mrb[0].mxu0 %v653
  %v789 = vpop.f32.mrb[0].mxu0
  %v790 = vadd.f32 0.0, %v789
  %v791 = vpop.f32.mrb[0].mxu0
  %v792 = vadd.f32 0.0, %v791
  %v793 = vpop.f32.mrb[0].mxu0
  %v794 = vpop.f32.mrb[0].mxu0
  %795 = vdwg.mxu0
  %v796 = vadd.f32 %v586, %v708
  %v797 = vadd.f32 %v587, %v710
  %v798 = vadd.f32 %v588, %v749
  %v799 = vadd.f32 %v589, %v751
  %v800 = vadd.f32 %v590, %v790
  %v801 = vadd.f32 %v591, %v792
  %s802 = scalar_lea.vmem %s3, 16
  %v803 = vld [vmem:[%s802] sm:$0xf]
  %v804 = vld [vmem:[%s0 + $0x2] sm:$0xff]
  %v805 = vld [vmem:[%s0 + $0xa] sm:$0xf]
  %v808 = vcombine.high %v804, %v804
  %v810 = vunpack.c.l.s4 1983009808
  %v811 = vunpack.c.0.s8 %v810
  %v812 = vlaneseq
  %v813 = vshrl.u32 %v812, 7
  %v814 = vsub.s32 %v811, %v813
  %v815 = vrot.slane %v804, %v814
  %v817 = vunpack.c.l.s4 1983009808
  %v818 = vunpack.c.0.s8 %v817
  %v819 = vlaneseq
  %v820 = vshrl.u32 %v819, 7
  %v821 = vsub.s32 %v818, %v820
  %v822 = vrot.slane %v808, %v821
  %v823 = vcombine.high %v815, %v815
  %v824 = vcombine.high %v822, %v822
  %v826 = vunpack.c.l.s4 1983009808
  %v827 = vunpack.c.0.s8 %v826
  %v828 = vlaneseq
  %v829 = vshrl.u32 %v828, 7
  %v830 = vsub.s32 %v827, %v829
  %v831 = vrot.slane %v805, %v830
  %v832 = vcombine.high %v831, %v831
  %v834 = vsel %vm82, %v803, 0
  %v837 = vand.u32 %v815, %v89
  %v840 = vand.u32 %v823, %v89
  %v843 = vand.u32 %v822, %v89
  %v846 = vand.u32 %v824, %v89
  %v849 = vand.u32 %v831, %v89
  %v852 = vand.u32 %v832, %v89
  %854 = vmatprep.subr.bf16.mxu0 %v840
  %855 = vmatpush1.bf16.msra.mxu0 %v837
  %856 = vmatprep.subr.bf16.mxu0 0
  %857 = vmatpush1.bf16.msra.mxu0 0
  %858 = vmatprep.subr.bf16.mxu0 0
  %859 = vmatpush1.bf16.msra.mxu0 0
  %860 = vmatprep.subr.bf16.mxu0 0
  %861 = vmatpush1.bf16.msra.mxu0 0
  %862 = vmatprep.subr.bf16.mxu0 0
  %863 = vmatpush1.bf16.msra.mxu0 0
  %864 = vmatprep.subr.bf16.mxu0 0
  %865 = vmatpush1.bf16.msra.mxu0 0
  %866 = vmatprep.subr.bf16.mxu0 0
  %867 = vmatpush1.bf16.msra.mxu0 0
  %868 = vmatprep.subr.bf16.mxu0 0
  %869 = vmatpush1.bf16.msra.mxu0 0
  %870 = vmatprep.subr.bf16.mxu0 0
  %871 = vmatpush1.bf16.msra.mxu0 0
  %872 = vmatprep.subr.bf16.mxu0 0
  %873 = vmatpush1.bf16.msra.mxu0 0
  %874 = vmatprep.subr.bf16.mxu0 0
  %875 = vmatpush1.bf16.msra.mxu0 0
  %876 = vmatprep.subr.bf16.mxu0 0
  %877 = vmatpush1.bf16.msra.mxu0 0
  %878 = vmatprep.subr.bf16.mxu0 0
  %879 = vmatpush1.bf16.msra.mxu0 0
  %880 = vmatprep.subr.bf16.mxu0 0
  %881 = vmatpush1.bf16.msra.mxu0 0
  %882 = vmatprep.subr.bf16.mxu0 0
  %883 = vmatpush1.bf16.msra.mxu0 0
  %884 = vmatprep.subr.bf16.mxu0 0
  %885 = vmatpush1.bf16.msra.mxu0 0
  %886 = vmatprep.mubr.bf16.mxu0 0
  %887 = vmatmul.mubr.bf16.gmra.mrb[0].mxu0 %v834
  %v888 = vpop.f32.mrb[0].mxu0
  %v889 = vadd.f32 0.0, %v888
  %v890 = vpop.f32.mrb[0].mxu0
  %v891 = vadd.f32 0.0, %v890
  %v892 = vpop.f32.mrb[0].mxu0
  %v893 = vpop.f32.mrb[0].mxu0
  %894 = vdwg.mxu0
  %895 = vmatprep.subr.bf16.mxu0 %v846
  %896 = vmatpush1.bf16.msra.mxu0 %v843
  %897 = vmatprep.subr.bf16.mxu0 0
  %898 = vmatpush1.bf16.msra.mxu0 0
  %899 = vmatprep.subr.bf16.mxu0 0
  %900 = vmatpush1.bf16.msra.mxu0 0
  %901 = vmatprep.subr.bf16.mxu0 0
  %902 = vmatpush1.bf16.msra.mxu0 0
  %903 = vmatprep.subr.bf16.mxu0 0
  %904 = vmatpush1.bf16.msra.mxu0 0
  %905 = vmatprep.subr.bf16.mxu0 0
  %906 = vmatpush1.bf16.msra.mxu0 0
  %907 = vmatprep.subr.bf16.mxu0 0
  %908 = vmatpush1.bf16.msra.mxu0 0
  %909 = vmatprep.subr.bf16.mxu0 0
  %910 = vmatpush1.bf16.msra.mxu0 0
  %911 = vmatprep.subr.bf16.mxu0 0
  %912 = vmatpush1.bf16.msra.mxu0 0
  %913 = vmatprep.subr.bf16.mxu0 0
  %914 = vmatpush1.bf16.msra.mxu0 0
  %915 = vmatprep.subr.bf16.mxu0 0
  %916 = vmatpush1.bf16.msra.mxu0 0
  %917 = vmatprep.subr.bf16.mxu0 0
  %918 = vmatpush1.bf16.msra.mxu0 0
  %919 = vmatprep.subr.bf16.mxu0 0
  %920 = vmatpush1.bf16.msra.mxu0 0
  %921 = vmatprep.subr.bf16.mxu0 0
  %922 = vmatpush1.bf16.msra.mxu0 0
  %923 = vmatprep.subr.bf16.mxu0 0
  %924 = vmatpush1.bf16.msra.mxu0 0
  %925 = vmatprep.subr.bf16.mxu0 0
  %926 = vmatpush1.bf16.msra.mxu0 0
  %927 = vmatprep.mubr.bf16.mxu0 0
  %928 = vmatmul.mubr.bf16.gmra.mrb[0].mxu0 %v834
  %v929 = vpop.f32.mrb[0].mxu0
  %v930 = vadd.f32 0.0, %v929
  %v931 = vpop.f32.mrb[0].mxu0
  %v932 = vadd.f32 0.0, %v931
  %v933 = vpop.f32.mrb[0].mxu0
  %v934 = vpop.f32.mrb[0].mxu0
  %935 = vdwg.mxu0
  %936 = vmatprep.subr.bf16.mxu0 %v852
  %937 = vmatpush1.bf16.msra.mxu0 %v849
  %938 = vmatprep.subr.bf16.mxu0 0
  %939 = vmatpush1.bf16.msra.mxu0 0
  %940 = vmatprep.subr.bf16.mxu0 0
  %941 = vmatpush1.bf16.msra.mxu0 0
  %942 = vmatprep.subr.bf16.mxu0 0
  %943 = vmatpush1.bf16.msra.mxu0 0
  %944 = vmatprep.subr.bf16.mxu0 0
  %945 = vmatpush1.bf16.msra.mxu0 0
  %946 = vmatprep.subr.bf16.mxu0 0
  %947 = vmatpush1.bf16.msra.mxu0 0
  %948 = vmatprep.subr.bf16.mxu0 0
  %949 = vmatpush1.bf16.msra.mxu0 0
  %950 = vmatprep.subr.bf16.mxu0 0
  %951 = vmatpush1.bf16.msra.mxu0 0
  %952 = vmatprep.subr.bf16.mxu0 0
  %953 = vmatpush1.bf16.msra.mxu0 0
  %954 = vmatprep.subr.bf16.mxu0 0
  %955 = vmatpush1.bf16.msra.mxu0 0
  %956 = vmatprep.subr.bf16.mxu0 0
  %957 = vmatpush1.bf16.msra.mxu0 0
  %958 = vmatprep.subr.bf16.mxu0 0
  %959 = vmatpush1.bf16.msra.mxu0 0
  %960 = vmatprep.subr.bf16.mxu0 0
  %961 = vmatpush1.bf16.msra.mxu0 0
  %962 = vmatprep.subr.bf16.mxu0 0
  %963 = vmatpush1.bf16.msra.mxu0 0
  %964 = vmatprep.subr.bf16.mxu0 0
  %965 = vmatpush1.bf16.msra.mxu0 0
  %966 = vmatprep.subr.bf16.mxu0 0
  %967 = vmatpush1.bf16.msra.mxu0 0
  %968 = vmatprep.mubr.bf16.mxu0 0
  %969 = vmatmul.mubr.bf16.gmra.mrb[0].mxu0 %v834
  %v970 = vpop.f32.mrb[0].mxu0
  %v971 = vadd.f32 0.0, %v970
  %v972 = vpop.f32.mrb[0].mxu0
  %v973 = vadd.f32 0.0, %v972
  %v974 = vpop.f32.mrb[0].mxu0
  %v975 = vpop.f32.mrb[0].mxu0
  %976 = vdwg.mxu0
  %v977 = vadd.f32 %v796, %v889
  %v978 = vadd.f32 %v797, %v891
  %v979 = vadd.f32 %v798, %v930
  %v980 = vadd.f32 %v799, %v932
  %v981 = vadd.f32 %v800, %v971
  %v982 = vadd.f32 %v801, %v973
  %s983 = scalar_lea.vmem %s3, 20
  %v984 = vld [vmem:[%s983] sm:$0xf]
  %v985 = vld [vmem:[%s0 + $0x2] sm:$0xff]
  %v986 = vld [vmem:[%s0 + $0xa] sm:$0xf]
  %v989 = vcombine.high %v985, %v985
  %v991 = vunpack.c.l.s4 1983009808
  %v992 = vunpack.c.0.s8 %v991
  %v993 = vlaneseq
  %v994 = vshrl.u32 %v993, 7
  %v995 = vsub.s32 %v992, %v994
  %v996 = vrot.slane %v985, %v995
  %v998 = vunpack.c.l.s4 1983009808
  %v999 = vunpack.c.0.s8 %v998
  %v1000 = vlaneseq
  %v1001 = vshrl.u32 %v1000, 7
  %v1002 = vsub.s32 %v999, %v1001
  %v1003 = vrot.slane %v989, %v1002
  %v1004 = vcombine.high %v996, %v996
  %v1005 = vcombine.high %v1003, %v1003
  %v1007 = vunpack.c.l.s4 1983009808
  %v1008 = vunpack.c.0.s8 %v1007
  %v1009 = vlaneseq
  %v1010 = vshrl.u32 %v1009, 7
  %v1011 = vsub.s32 %v1008, %v1010
  %v1012 = vrot.slane %v986, %v1011
  %v1013 = vcombine.high %v1012, %v1012
  %1014 = vrot.lane.b32.xlu0 %v996, 127
  %v1015 = vpop.permute.xlu0 %1014
  %1016 = vrot.lane.b32.xlu0 %v1004, 127
  %v1017 = vpop.permute.xlu0 %1016
  %1018 = vrot.lane.b32.xlu0 %v1003, 127
  %v1019 = vpop.permute.xlu0 %1018
  %1020 = vrot.lane.b32.xlu0 %v1005, 127
  %v1021 = vpop.permute.xlu0 %1020
  %1022 = vrot.lane.b32.xlu0 %v1012, 127
  %v1023 = vpop.permute.xlu0 %1022
  %1024 = vrot.lane.b32.xlu0 %v1013, 127
  %v1025 = vpop.permute.xlu0 %1024
  %vm1026 = vcmask 1039360
  %v1027 = vsel %vm1026, %v1015, %v1017
  %v1028 = vsel %vm1026, %v1017, %v1019
  %v1029 = vsel %vm1026, %v1019, %v1021
  %v1030 = vsel %vm1026, %v1021, %v1023
  %v1031 = vsel %vm1026, %v1023, %v1025
  %v1033 = vsel %vm82, %v984, 0
  %v1036 = vand.u32 %v1027, %v89
  %v1039 = vand.u32 %v1028, %v89
  %v1042 = vand.u32 %v1029, %v89
  %v1045 = vand.u32 %v1030, %v89
  %v1048 = vand.u32 %v1031, %v89
  %v1051 = vand.u32 %v1025, %v89
  %1053 = vmatprep.subr.bf16.mxu0 %v1039
  %1054 = vmatpush1.bf16.msra.mxu0 %v1036
  %1055 = vmatprep.subr.bf16.mxu0 0
  %1056 = vmatpush1.bf16.msra.mxu0 0
  %1057 = vmatprep.subr.bf16.mxu0 0
  %1058 = vmatpush1.bf16.msra.mxu0 0
  %1059 = vmatprep.subr.bf16.mxu0 0
  %1060 = vmatpush1.bf16.msra.mxu0 0
  %1061 = vmatprep.subr.bf16.mxu0 0
  %1062 = vmatpush1.bf16.msra.mxu0 0
  %1063 = vmatprep.subr.bf16.mxu0 0
  %1064 = vmatpush1.bf16.msra.mxu0 0
  %1065 = vmatprep.subr.bf16.mxu0 0
  %1066 = vmatpush1.bf16.msra.mxu0 0
  %1067 = vmatprep.subr.bf16.mxu0 0
  %1068 = vmatpush1.bf16.msra.mxu0 0
  %1069 = vmatprep.subr.bf16.mxu0 0
  %1070 = vmatpush1.bf16.msra.mxu0 0
  %1071 = vmatprep.subr.bf16.mxu0 0
  %1072 = vmatpush1.bf16.msra.mxu0 0
  %1073 = vmatprep.subr.bf16.mxu0 0
  %1074 = vmatpush1.bf16.msra.mxu0 0
  %1075 = vmatprep.subr.bf16.mxu0 0
  %1076 = vmatpush1.bf16.msra.mxu0 0
  %1077 = vmatprep.subr.bf16.mxu0 0
  %1078 = vmatpush1.bf16.msra.mxu0 0
  %1079 = vmatprep.subr.bf16.mxu0 0
  %1080 = vmatpush1.bf16.msra.mxu0 0
  %1081 = vmatprep.subr.bf16.mxu0 0
  %1082 = vmatpush1.bf16.msra.mxu0 0
  %1083 = vmatprep.subr.bf16.mxu0 0
  %1084 = vmatpush1.bf16.msra.mxu0 0
  %1085 = vmatprep.mubr.bf16.mxu0 0
  %1086 = vmatmul.mubr.bf16.gmra.mrb[0].mxu0 %v1033
  %v1087 = vpop.f32.mrb[0].mxu0
  %v1088 = vadd.f32 0.0, %v1087
  %v1089 = vpop.f32.mrb[0].mxu0
  %v1090 = vadd.f32 0.0, %v1089
  %v1091 = vpop.f32.mrb[0].mxu0
  %v1092 = vpop.f32.mrb[0].mxu0
  %1093 = vdwg.mxu0
  %1094 = vmatprep.subr.bf16.mxu0 %v1045
  %1095 = vmatpush1.bf16.msra.mxu0 %v1042
  %1096 = vmatprep.subr.bf16.mxu0 0
  %1097 = vmatpush1.bf16.msra.mxu0 0
  %1098 = vmatprep.subr.bf16.mxu0 0
  %1099 = vmatpush1.bf16.msra.mxu0 0
  %1100 = vmatprep.subr.bf16.mxu0 0
  %1101 = vmatpush1.bf16.msra.mxu0 0
  %1102 = vmatprep.subr.bf16.mxu0 0
  %1103 = vmatpush1.bf16.msra.mxu0 0
  %1104 = vmatprep.subr.bf16.mxu0 0
  %1105 = vmatpush1.bf16.msra.mxu0 0
  %1106 = vmatprep.subr.bf16.mxu0 0
  %1107 = vmatpush1.bf16.msra.mxu0 0
  %1108 = vmatprep.subr.bf16.mxu0 0
  %1109 = vmatpush1.bf16.msra.mxu0 0
  %1110 = vmatprep.subr.bf16.mxu0 0
  %1111 = vmatpush1.bf16.msra.mxu0 0
  %1112 = vmatprep.subr.bf16.mxu0 0
  %1113 = vmatpush1.bf16.msra.mxu0 0
  %1114 = vmatprep.subr.bf16.mxu0 0
  %1115 = vmatpush1.bf16.msra.mxu0 0
  %1116 = vmatprep.subr.bf16.mxu0 0
  %1117 = vmatpush1.bf16.msra.mxu0 0
  %1118 = vmatprep.subr.bf16.mxu0 0
  %1119 = vmatpush1.bf16.msra.mxu0 0
  %1120 = vmatprep.subr.bf16.mxu0 0
  %1121 = vmatpush1.bf16.msra.mxu0 0
  %1122 = vmatprep.subr.bf16.mxu0 0
  %1123 = vmatpush1.bf16.msra.mxu0 0
  %1124 = vmatprep.subr.bf16.mxu0 0
  %1125 = vmatpush1.bf16.msra.mxu0 0
  %1126 = vmatprep.mubr.bf16.mxu0 0
  %1127 = vmatmul.mubr.bf16.gmra.mrb[0].mxu0 %v1033
  %v1128 = vpop.f32.mrb[0].mxu0
  %v1129 = vadd.f32 0.0, %v1128
  %v1130 = vpop.f32.mrb[0].mxu0
  %v1131 = vadd.f32 0.0, %v1130
  %v1132 = vpop.f32.mrb[0].mxu0
  %v1133 = vpop.f32.mrb[0].mxu0
  %1134 = vdwg.mxu0
  %1135 = vmatprep.subr.bf16.mxu0 %v1051
  %1136 = vmatpush1.bf16.msra.mxu0 %v1048
  %1137 = vmatprep.subr.bf16.mxu0 0
  %1138 = vmatpush1.bf16.msra.mxu0 0
  %1139 = vmatprep.subr.bf16.mxu0 0
  %1140 = vmatpush1.bf16.msra.mxu0 0
  %1141 = vmatprep.subr.bf16.mxu0 0
  %1142 = vmatpush1.bf16.msra.mxu0 0
  %1143 = vmatprep.subr.bf16.mxu0 0
  %1144 = vmatpush1.bf16.msra.mxu0 0
  %1145 = vmatprep.subr.bf16.mxu0 0
  %1146 = vmatpush1.bf16.msra.mxu0 0
  %1147 = vmatprep.subr.bf16.mxu0 0
  %1148 = vmatpush1.bf16.msra.mxu0 0
  %1149 = vmatprep.subr.bf16.mxu0 0
  %1150 = vmatpush1.bf16.msra.mxu0 0
  %1151 = vmatprep.subr.bf16.mxu0 0
  %1152 = vmatpush1.bf16.msra.mxu0 0
  %1153 = vmatprep.subr.bf16.mxu0 0
  %1154 = vmatpush1.bf16.msra.mxu0 0
  %1155 = vmatprep.subr.bf16.mxu0 0
  %1156 = vmatpush1.bf16.msra.mxu0 0
  %1157 = vmatprep.subr.bf16.mxu0 0
  %1158 = vmatpush1.bf16.msra.mxu0 0
  %1159 = vmatprep.subr.bf16.mxu0 0
  %1160 = vmatpush1.bf16.msra.mxu0 0
  %1161 = vmatprep.subr.bf16.mxu0 0
  %1162 = vmatpush1.bf16.msra.mxu0 0
  %1163 = vmatprep.subr.bf16.mxu0 0
  %1164 = vmatpush1.bf16.msra.mxu0 0
  %1165 = vmatprep.subr.bf16.mxu0 0
  %1166 = vmatpush1.bf16.msra.mxu0 0
  %1167 = vmatprep.mubr.bf16.mxu0 0
  %1168 = vmatmul.mubr.bf16.gmra.mrb[0].mxu0 %v1033
  %v1169 = vpop.f32.mrb[0].mxu0
  %v1170 = vadd.f32 0.0, %v1169
  %v1171 = vpop.f32.mrb[0].mxu0
  %v1172 = vadd.f32 0.0, %v1171
  %v1173 = vpop.f32.mrb[0].mxu0
  %v1174 = vpop.f32.mrb[0].mxu0
  %1175 = vdwg.mxu0
  %v1176 = vadd.f32 %v977, %v1088
  %v1177 = vadd.f32 %v978, %v1090
  %v1178 = vadd.f32 %v979, %v1129
  %v1179 = vadd.f32 %v980, %v1131
  %v1180 = vadd.f32 %v981, %v1170
  %v1181 = vadd.f32 %v982, %v1172
  %s1182 = scalar_lea.vmem %s3, 24
  %v1183 = vld [vmem:[%s1182] sm:$0xf]
  %v1184 = vld [vmem:[%s0 + $0x2] sm:$0xff]
  %v1185 = vld [vmem:[%s0 + $0xa] sm:$0xf]
  %v1188 = vcombine.high %v1184, %v1184
  %v1190 = vunpack.c.l.s4 1983009808
  %v1191 = vunpack.c.0.s8 %v1190
  %v1192 = vlaneseq
  %v1193 = vshrl.u32 %v1192, 7
  %v1194 = vsub.s32 %v1191, %v1193
  %v1195 = vrot.slane %v1184, %v1194
  %v1197 = vunpack.c.l.s4 1983009808
  %v1198 = vunpack.c.0.s8 %v1197
  %v1199 = vlaneseq
  %v1200 = vshrl.u32 %v1199, 7
  %v1201 = vsub.s32 %v1198, %v1200
  %v1202 = vrot.slane %v1188, %v1201
  %v1203 = vcombine.high %v1195, %v1195
  %v1204 = vcombine.high %v1202, %v1202
  %v1206 = vunpack.c.l.s4 1983009808
  %v1207 = vunpack.c.0.s8 %v1206
  %v1208 = vlaneseq
  %v1209 = vshrl.u32 %v1208, 7
  %v1210 = vsub.s32 %v1207, %v1209
  %v1211 = vrot.slane %v1185, %v1210
  %v1212 = vcombine.high %v1211, %v1211
  %1213 = vrot.lane.b32.xlu0 %v1195, 111
  %v1214 = vpop.permute.xlu0 %1213
  %1215 = vrot.lane.b32.xlu0 %v1203, 111
  %v1216 = vpop.permute.xlu0 %1215
  %1217 = vrot.lane.b32.xlu0 %v1202, 111
  %v1218 = vpop.permute.xlu0 %1217
  %1219 = vrot.lane.b32.xlu0 %v1204, 111
  %v1220 = vpop.permute.xlu0 %1219
  %1221 = vrot.lane.b32.xlu0 %v1211, 111
  %v1222 = vpop.permute.xlu0 %1221
  %1223 = vrot.lane.b32.xlu0 %v1212, 111
  %v1224 = vpop.permute.xlu0 %1223
  %vm1225 = vcmask 908288
  %v1226 = vsel %vm1225, %v1214, %v1216
  %v1227 = vsel %vm1225, %v1216, %v1218
  %v1228 = vsel %vm1225, %v1218, %v1220
  %v1229 = vsel %vm1225, %v1220, %v1222
  %v1230 = vsel %vm1225, %v1222, %v1224
  %v1232 = vsel %vm82, %v1183, 0
  %v1235 = vand.u32 %v1226, %v89
  %v1238 = vand.u32 %v1227, %v89
  %v1241 = vand.u32 %v1228, %v89
  %v1244 = vand.u32 %v1229, %v89
  %v1247 = vand.u32 %v1230, %v89
  %v1250 = vand.u32 %v1224, %v89
  %1252 = vmatprep.subr.bf16.mxu0 %v1238
  %1253 = vmatpush1.bf16.msra.mxu0 %v1235
  %1254 = vmatprep.subr.bf16.mxu0 0
  %1255 = vmatpush1.bf16.msra.mxu0 0
  %1256 = vmatprep.subr.bf16.mxu0 0
  %1257 = vmatpush1.bf16.msra.mxu0 0
  %1258 = vmatprep.subr.bf16.mxu0 0
  %1259 = vmatpush1.bf16.msra.mxu0 0
  %1260 = vmatprep.subr.bf16.mxu0 0
  %1261 = vmatpush1.bf16.msra.mxu0 0
  %1262 = vmatprep.subr.bf16.mxu0 0
  %1263 = vmatpush1.bf16.msra.mxu0 0
  %1264 = vmatprep.subr.bf16.mxu0 0
  %1265 = vmatpush1.bf16.msra.mxu0 0
  %1266 = vmatprep.subr.bf16.mxu0 0
  %1267 = vmatpush1.bf16.msra.mxu0 0
  %1268 = vmatprep.subr.bf16.mxu0 0
  %1269 = vmatpush1.bf16.msra.mxu0 0
  %1270 = vmatprep.subr.bf16.mxu0 0
  %1271 = vmatpush1.bf16.msra.mxu0 0
  %1272 = vmatprep.subr.bf16.mxu0 0
  %1273 = vmatpush1.bf16.msra.mxu0 0
  %1274 = vmatprep.subr.bf16.mxu0 0
  %1275 = vmatpush1.bf16.msra.mxu0 0
  %1276 = vmatprep.subr.bf16.mxu0 0
  %1277 = vmatpush1.bf16.msra.mxu0 0
  %1278 = vmatprep.subr.bf16.mxu0 0
  %1279 = vmatpush1.bf16.msra.mxu0 0
  %1280 = vmatprep.subr.bf16.mxu0 0
  %1281 = vmatpush1.bf16.msra.mxu0 0
  %1282 = vmatprep.subr.bf16.mxu0 0
  %1283 = vmatpush1.bf16.msra.mxu0 0
  %1284 = vmatprep.mubr.bf16.mxu0 0
  %1285 = vmatmul.mubr.bf16.gmra.mrb[0].mxu0 %v1232
  %v1286 = vpop.f32.mrb[0].mxu0
  %v1287 = vadd.f32 0.0, %v1286
  %v1288 = vpop.f32.mrb[0].mxu0
  %v1289 = vadd.f32 0.0, %v1288
  %v1290 = vpop.f32.mrb[0].mxu0
  %v1291 = vpop.f32.mrb[0].mxu0
  %1292 = vdwg.mxu0
  %1293 = vmatprep.subr.bf16.mxu0 %v1244
  %1294 = vmatpush1.bf16.msra.mxu0 %v1241
  %1295 = vmatprep.subr.bf16.mxu0 0
  %1296 = vmatpush1.bf16.msra.mxu0 0
  %1297 = vmatprep.subr.bf16.mxu0 0
  %1298 = vmatpush1.bf16.msra.mxu0 0
  %1299 = vmatprep.subr.bf16.mxu0 0
  %1300 = vmatpush1.bf16.msra.mxu0 0
  %1301 = vmatprep.subr.bf16.mxu0 0
  %1302 = vmatpush1.bf16.msra.mxu0 0
  %1303 = vmatprep.subr.bf16.mxu0 0
  %1304 = vmatpush1.bf16.msra.mxu0 0
  %1305 = vmatprep.subr.bf16.mxu0 0
  %1306 = vmatpush1.bf16.msra.mxu0 0
  %1307 = vmatprep.subr.bf16.mxu0 0
  %1308 = vmatpush1.bf16.msra.mxu0 0
  %1309 = vmatprep.subr.bf16.mxu0 0
  %1310 = vmatpush1.bf16.msra.mxu0 0
  %1311 = vmatprep.subr.bf16.mxu0 0
  %1312 = vmatpush1.bf16.msra.mxu0 0
  %1313 = vmatprep.subr.bf16.mxu0 0
  %1314 = vmatpush1.bf16.msra.mxu0 0
  %1315 = vmatprep.subr.bf16.mxu0 0
  %1316 = vmatpush1.bf16.msra.mxu0 0
  %1317 = vmatprep.subr.bf16.mxu0 0
  %1318 = vmatpush1.bf16.msra.mxu0 0
  %1319 = vmatprep.subr.bf16.mxu0 0
  %1320 = vmatpush1.bf16.msra.mxu0 0
  %1321 = vmatprep.subr.bf16.mxu0 0
  %1322 = vmatpush1.bf16.msra.mxu0 0
  %1323 = vmatprep.subr.bf16.mxu0 0
  %1324 = vmatpush1.bf16.msra.mxu0 0
  %1325 = vmatprep.mubr.bf16.mxu0 0
  %1326 = vmatmul.mubr.bf16.gmra.mrb[0].mxu0 %v1232
  %v1327 = vpop.f32.mrb[0].mxu0
  %v1328 = vadd.f32 0.0, %v1327
  %v1329 = vpop.f32.mrb[0].mxu0
  %v1330 = vadd.f32 0.0, %v1329
  %v1331 = vpop.f32.mrb[0].mxu0
  %v1332 = vpop.f32.mrb[0].mxu0
  %1333 = vdwg.mxu0
  %1334 = vmatprep.subr.bf16.mxu0 %v1250
  %1335 = vmatpush1.bf16.msra.mxu0 %v1247
  %1336 = vmatprep.subr.bf16.mxu0 0
  %1337 = vmatpush1.bf16.msra.mxu0 0
  %1338 = vmatprep.subr.bf16.mxu0 0
  %1339 = vmatpush1.bf16.msra.mxu0 0
  %1340 = vmatprep.subr.bf16.mxu0 0
  %1341 = vmatpush1.bf16.msra.mxu0 0
  %1342 = vmatprep.subr.bf16.mxu0 0
  %1343 = vmatpush1.bf16.msra.mxu0 0
  %1344 = vmatprep.subr.bf16.mxu0 0
  %1345 = vmatpush1.bf16.msra.mxu0 0
  %1346 = vmatprep.subr.bf16.mxu0 0
  %1347 = vmatpush1.bf16.msra.mxu0 0
  %1348 = vmatprep.subr.bf16.mxu0 0
  %1349 = vmatpush1.bf16.msra.mxu0 0
  %1350 = vmatprep.subr.bf16.mxu0 0
  %1351 = vmatpush1.bf16.msra.mxu0 0
  %1352 = vmatprep.subr.bf16.mxu0 0
  %1353 = vmatpush1.bf16.msra.mxu0 0
  %1354 = vmatprep.subr.bf16.mxu0 0
  %1355 = vmatpush1.bf16.msra.mxu0 0
  %1356 = vmatprep.subr.bf16.mxu0 0
  %1357 = vmatpush1.bf16.msra.mxu0 0
  %1358 = vmatprep.subr.bf16.mxu0 0
  %1359 = vmatpush1.bf16.msra.mxu0 0
  %1360 = vmatprep.subr.bf16.mxu0 0
  %1361 = vmatpush1.bf16.msra.mxu0 0
  %1362 = vmatprep.subr.bf16.mxu0 0
  %1363 = vmatpush1.bf16.msra.mxu0 0
  %1364 = vmatprep.subr.bf16.mxu0 0
  %1365 = vmatpush1.bf16.msra.mxu0 0
  %1366 = vmatprep.mubr.bf16.mxu0 0
  %1367 = vmatmul.mubr.bf16.gmra.mrb[0].mxu0 %v1232
  %v1368 = vpop.f32.mrb[0].mxu0
  %v1369 = vadd.f32 0.0, %v1368
  %v1370 = vpop.f32.mrb[0].mxu0
  %v1371 = vadd.f32 0.0, %v1370
  %v1372 = vpop.f32.mrb[0].mxu0
  %v1373 = vpop.f32.mrb[0].mxu0
  %1374 = vdwg.mxu0
  %v1375 = vadd.f32 %v1176, %v1287
  %v1376 = vadd.f32 %v1177, %v1289
  %v1377 = vadd.f32 %v1178, %v1328
  %v1378 = vadd.f32 %v1179, %v1330
  %v1379 = vadd.f32 %v1180, %v1369
  %v1380 = vadd.f32 %v1181, %v1371
  %s1381 = scalar_lea.vmem %s3, 28
  %v1382 = vld [vmem:[%s1381] sm:$0xf]
  %v1383 = vld [vmem:[%s0 + $0x2] sm:$0xff]
  %v1384 = vld [vmem:[%s0 + $0xa] sm:$0xf]
  %v1387 = vcombine.high %v1383, %v1383
  %v1389 = vunpack.c.l.s4 1983009808
  %v1390 = vunpack.c.0.s8 %v1389
  %v1391 = vlaneseq
  %v1392 = vshrl.u32 %v1391, 7
  %v1393 = vsub.s32 %v1390, %v1392
  %v1394 = vrot.slane %v1383, %v1393
  %v1396 = vunpack.c.l.s4 1983009808
  %v1397 = vunpack.c.0.s8 %v1396
  %v1398 = vlaneseq
  %v1399 = vshrl.u32 %v1398, 7
  %v1400 = vsub.s32 %v1397, %v1399
  %v1401 = vrot.slane %v1387, %v1400
  %v1402 = vcombine.high %v1394, %v1394
  %v1403 = vcombine.high %v1401, %v1401
  %v1405 = vunpack.c.l.s4 1983009808
  %v1406 = vunpack.c.0.s8 %v1405
  %v1407 = vlaneseq
  %v1408 = vshrl.u32 %v1407, 7
  %v1409 = vsub.s32 %v1406, %v1408
  %v1410 = vrot.slane %v1384, %v1409
  %v1411 = vcombine.high %v1410, %v1410
  %1412 = vrot.lane.b32.xlu0 %v1394, 110
  %v1413 = vpop.permute.xlu0 %1412
  %1414 = vrot.lane.b32.xlu0 %v1402, 110
  %v1415 = vpop.permute.xlu0 %1414
  %1416 = vrot.lane.b32.xlu0 %v1401, 110
  %v1417 = vpop.permute.xlu0 %1416
  %1418 = vrot.lane.b32.xlu0 %v1403, 110
  %v1419 = vpop.permute.xlu0 %1418
  %1420 = vrot.lane.b32.xlu0 %v1410, 110
  %v1421 = vpop.permute.xlu0 %1420
  %1422 = vrot.lane.b32.xlu0 %v1411, 110
  %v1423 = vpop.permute.xlu0 %1422
  %vm1424 = vcmask 900096
  %v1425 = vsel %vm1424, %v1413, %v1415
  %v1426 = vsel %vm1424, %v1415, %v1417
  %v1427 = vsel %vm1424, %v1417, %v1419
  %v1428 = vsel %vm1424, %v1419, %v1421
  %v1429 = vsel %vm1424, %v1421, %v1423
  %v1431 = vsel %vm82, %v1382, 0
  %v1434 = vand.u32 %v1425, %v89
  %v1437 = vand.u32 %v1426, %v89
  %v1440 = vand.u32 %v1427, %v89
  %v1443 = vand.u32 %v1428, %v89
  %v1446 = vand.u32 %v1429, %v89
  %v1449 = vand.u32 %v1423, %v89
  %1451 = vmatprep.subr.bf16.mxu0 %v1437
  %1452 = vmatpush1.bf16.msra.mxu0 %v1434
  %1453 = vmatprep.subr.bf16.mxu0 0
  %1454 = vmatpush1.bf16.msra.mxu0 0
  %1455 = vmatprep.subr.bf16.mxu0 0
  %1456 = vmatpush1.bf16.msra.mxu0 0
  %1457 = vmatprep.subr.bf16.mxu0 0
  %1458 = vmatpush1.bf16.msra.mxu0 0
  %1459 = vmatprep.subr.bf16.mxu0 0
  %1460 = vmatpush1.bf16.msra.mxu0 0
  %1461 = vmatprep.subr.bf16.mxu0 0
  %1462 = vmatpush1.bf16.msra.mxu0 0
  %1463 = vmatprep.subr.bf16.mxu0 0
  %1464 = vmatpush1.bf16.msra.mxu0 0
  %1465 = vmatprep.subr.bf16.mxu0 0
  %1466 = vmatpush1.bf16.msra.mxu0 0
  %1467 = vmatprep.subr.bf16.mxu0 0
  %1468 = vmatpush1.bf16.msra.mxu0 0
  %1469 = vmatprep.subr.bf16.mxu0 0
  %1470 = vmatpush1.bf16.msra.mxu0 0
  %1471 = vmatprep.subr.bf16.mxu0 0
  %1472 = vmatpush1.bf16.msra.mxu0 0
  %1473 = vmatprep.subr.bf16.mxu0 0
  %1474 = vmatpush1.bf16.msra.mxu0 0
  %1475 = vmatprep.subr.bf16.mxu0 0
  %1476 = vmatpush1.bf16.msra.mxu0 0
  %1477 = vmatprep.subr.bf16.mxu0 0
  %1478 = vmatpush1.bf16.msra.mxu0 0
  %1479 = vmatprep.subr.bf16.mxu0 0
  %1480 = vmatpush1.bf16.msra.mxu0 0
  %1481 = vmatprep.subr.bf16.mxu0 0
  %1482 = vmatpush1.bf16.msra.mxu0 0
  %1483 = vmatprep.mubr.bf16.mxu0 0
  %1484 = vmatmul.mubr.bf16.gmra.mrb[0].mxu0 %v1431
  %v1485 = vpop.f32.mrb[0].mxu0
  %v1486 = vadd.f32 0.0, %v1485
  %v1487 = vpop.f32.mrb[0].mxu0
  %v1488 = vadd.f32 0.0, %v1487
  %v1489 = vpop.f32.mrb[0].mxu0
  %v1490 = vpop.f32.mrb[0].mxu0
  %1491 = vdwg.mxu0
  %1492 = vmatprep.subr.bf16.mxu0 %v1443
  %1493 = vmatpush1.bf16.msra.mxu0 %v1440
  %1494 = vmatprep.subr.bf16.mxu0 0
  %1495 = vmatpush1.bf16.msra.mxu0 0
  %1496 = vmatprep.subr.bf16.mxu0 0
  %1497 = vmatpush1.bf16.msra.mxu0 0
  %1498 = vmatprep.subr.bf16.mxu0 0
  %1499 = vmatpush1.bf16.msra.mxu0 0
  %1500 = vmatprep.subr.bf16.mxu0 0
  %1501 = vmatpush1.bf16.msra.mxu0 0
  %1502 = vmatprep.subr.bf16.mxu0 0
  %1503 = vmatpush1.bf16.msra.mxu0 0
  %1504 = vmatprep.subr.bf16.mxu0 0
  %1505 = vmatpush1.bf16.msra.mxu0 0
  %1506 = vmatprep.subr.bf16.mxu0 0
  %1507 = vmatpush1.bf16.msra.mxu0 0
  %1508 = vmatprep.subr.bf16.mxu0 0
  %1509 = vmatpush1.bf16.msra.mxu0 0
  %1510 = vmatprep.subr.bf16.mxu0 0
  %1511 = vmatpush1.bf16.msra.mxu0 0
  %1512 = vmatprep.subr.bf16.mxu0 0
  %1513 = vmatpush1.bf16.msra.mxu0 0
  %1514 = vmatprep.subr.bf16.mxu0 0
  %1515 = vmatpush1.bf16.msra.mxu0 0
  %1516 = vmatprep.subr.bf16.mxu0 0
  %1517 = vmatpush1.bf16.msra.mxu0 0
  %1518 = vmatprep.subr.bf16.mxu0 0
  %1519 = vmatpush1.bf16.msra.mxu0 0
  %1520 = vmatprep.subr.bf16.mxu0 0
  %1521 = vmatpush1.bf16.msra.mxu0 0
  %1522 = vmatprep.subr.bf16.mxu0 0
  %1523 = vmatpush1.bf16.msra.mxu0 0
  %1524 = vmatprep.mubr.bf16.mxu0 0
  %1525 = vmatmul.mubr.bf16.gmra.mrb[0].mxu0 %v1431
  %v1526 = vpop.f32.mrb[0].mxu0
  %v1527 = vadd.f32 0.0, %v1526
  %v1528 = vpop.f32.mrb[0].mxu0
  %v1529 = vadd.f32 0.0, %v1528
  %v1530 = vpop.f32.mrb[0].mxu0
  %v1531 = vpop.f32.mrb[0].mxu0
  %1532 = vdwg.mxu0
  %1533 = vmatprep.subr.bf16.mxu0 %v1449
  %1534 = vmatpush1.bf16.msra.mxu0 %v1446
  %1535 = vmatprep.subr.bf16.mxu0 0
  %1536 = vmatpush1.bf16.msra.mxu0 0
  %1537 = vmatprep.subr.bf16.mxu0 0
  %1538 = vmatpush1.bf16.msra.mxu0 0
  %1539 = vmatprep.subr.bf16.mxu0 0
  %1540 = vmatpush1.bf16.msra.mxu0 0
  %1541 = vmatprep.subr.bf16.mxu0 0
  %1542 = vmatpush1.bf16.msra.mxu0 0
  %1543 = vmatprep.subr.bf16.mxu0 0
  %1544 = vmatpush1.bf16.msra.mxu0 0
  %1545 = vmatprep.subr.bf16.mxu0 0
  %1546 = vmatpush1.bf16.msra.mxu0 0
  %1547 = vmatprep.subr.bf16.mxu0 0
  %1548 = vmatpush1.bf16.msra.mxu0 0
  %1549 = vmatprep.subr.bf16.mxu0 0
  %1550 = vmatpush1.bf16.msra.mxu0 0
  %1551 = vmatprep.subr.bf16.mxu0 0
  %1552 = vmatpush1.bf16.msra.mxu0 0
  %1553 = vmatprep.subr.bf16.mxu0 0
  %1554 = vmatpush1.bf16.msra.mxu0 0
  %1555 = vmatprep.subr.bf16.mxu0 0
  %1556 = vmatpush1.bf16.msra.mxu0 0
  %1557 = vmatprep.subr.bf16.mxu0 0
  %1558 = vmatpush1.bf16.msra.mxu0 0
  %1559 = vmatprep.subr.bf16.mxu0 0
  %1560 = vmatpush1.bf16.msra.mxu0 0
  %1561 = vmatprep.subr.bf16.mxu0 0
  %1562 = vmatpush1.bf16.msra.mxu0 0
  %1563 = vmatprep.subr.bf16.mxu0 0
  %1564 = vmatpush1.bf16.msra.mxu0 0
  %1565 = vmatprep.mubr.bf16.mxu0 0
  %1566 = vmatmul.mubr.bf16.gmra.mrb[0].mxu0 %v1431
  %v1567 = vpop.f32.mrb[0].mxu0
  %v1568 = vadd.f32 0.0, %v1567
  %v1569 = vpop.f32.mrb[0].mxu0
  %v1570 = vadd.f32 0.0, %v1569
  %v1571 = vpop.f32.mrb[0].mxu0
  %v1572 = vpop.f32.mrb[0].mxu0
  %1573 = vdwg.mxu0
  %v1574 = vadd.f32 %v1375, %v1486
  %v1575 = vadd.f32 %v1376, %v1488
  %v1576 = vadd.f32 %v1377, %v1527
  %v1577 = vadd.f32 %v1378, %v1529
  %v1578 = vadd.f32 %v1379, %v1568
  %v1579 = vadd.f32 %v1380, %v1570
  %s1580 = scalar_lea.vmem %s3, 32
  %v1581 = vld [vmem:[%s1580] sm:$0xf]
  %v1582 = vld [vmem:[%s0 + $0x2] sm:$0xff]
  %v1583 = vld [vmem:[%s0 + $0xa] sm:$0xf]
  %v1586 = vcombine.high %v1582, %v1582
  %v1588 = vunpack.c.l.s4 1983009808
  %v1589 = vunpack.c.0.s8 %v1588
  %v1590 = vlaneseq
  %v1591 = vshrl.u32 %v1590, 7
  %v1592 = vsub.s32 %v1589, %v1591
  %v1593 = vrot.slane %v1582, %v1592
  %v1595 = vunpack.c.l.s4 1983009808
  %v1596 = vunpack.c.0.s8 %v1595
  %v1597 = vlaneseq
  %v1598 = vshrl.u32 %v1597, 7
  %v1599 = vsub.s32 %v1596, %v1598
  %v1600 = vrot.slane %v1586, %v1599
  %v1601 = vcombine.high %v1593, %v1593
  %v1602 = vcombine.high %v1600, %v1600
  %v1604 = vunpack.c.l.s4 1983009808
  %v1605 = vunpack.c.0.s8 %v1604
  %v1606 = vlaneseq
  %v1607 = vshrl.u32 %v1606, 7
  %v1608 = vsub.s32 %v1605, %v1607
  %v1609 = vrot.slane %v1583, %v1608
  %v1610 = vcombine.high %v1609, %v1609
  %1611 = vrot.lane.b32.xlu0 %v1593, 109
  %v1612 = vpop.permute.xlu0 %1611
  %1613 = vrot.lane.b32.xlu0 %v1601, 109
  %v1614 = vpop.permute.xlu0 %1613
  %1615 = vrot.lane.b32.xlu0 %v1600, 109
  %v1616 = vpop.permute.xlu0 %1615
  %1617 = vrot.lane.b32.xlu0 %v1602, 109
  %v1618 = vpop.permute.xlu0 %1617
  %1619 = vrot.lane.b32.xlu0 %v1609, 109
  %v1620 = vpop.permute.xlu0 %1619
  %1621 = vrot.lane.b32.xlu0 %v1610, 109
  %v1622 = vpop.permute.xlu0 %1621
  %vm1623 = vcmask 891904
  %v1624 = vsel %vm1623, %v1612, %v1614
  %v1625 = vsel %vm1623, %v1614, %v1616
  %v1626 = vsel %vm1623, %v1616, %v1618
  %v1627 = vsel %vm1623, %v1618, %v1620
  %v1628 = vsel %vm1623, %v1620, %v1622
  %v1630 = vsel %vm82, %v1581, 0
  %v1633 = vand.u32 %v1624, %v89
  %v1636 = vand.u32 %v1625, %v89
  %v1639 = vand.u32 %v1626, %v89
  %v1642 = vand.u32 %v1627, %v89
  %v1645 = vand.u32 %v1628, %v89
  %v1648 = vand.u32 %v1622, %v89
  %1650 = vmatprep.subr.bf16.mxu0 %v1636
  %1651 = vmatpush1.bf16.msra.mxu0 %v1633
  %1652 = vmatprep.subr.bf16.mxu0 0
  %1653 = vmatpush1.bf16.msra.mxu0 0
  %1654 = vmatprep.subr.bf16.mxu0 0
  %1655 = vmatpush1.bf16.msra.mxu0 0
  %1656 = vmatprep.subr.bf16.mxu0 0
  %1657 = vmatpush1.bf16.msra.mxu0 0
  %1658 = vmatprep.subr.bf16.mxu0 0
  %1659 = vmatpush1.bf16.msra.mxu0 0
  %1660 = vmatprep.subr.bf16.mxu0 0
  %1661 = vmatpush1.bf16.msra.mxu0 0
  %1662 = vmatprep.subr.bf16.mxu0 0
  %1663 = vmatpush1.bf16.msra.mxu0 0
  %1664 = vmatprep.subr.bf16.mxu0 0
  %1665 = vmatpush1.bf16.msra.mxu0 0
  %1666 = vmatprep.subr.bf16.mxu0 0
  %1667 = vmatpush1.bf16.msra.mxu0 0
  %1668 = vmatprep.subr.bf16.mxu0 0
  %1669 = vmatpush1.bf16.msra.mxu0 0
  %1670 = vmatprep.subr.bf16.mxu0 0
  %1671 = vmatpush1.bf16.msra.mxu0 0
  %1672 = vmatprep.subr.bf16.mxu0 0
  %1673 = vmatpush1.bf16.msra.mxu0 0
  %1674 = vmatprep.subr.bf16.mxu0 0
  %1675 = vmatpush1.bf16.msra.mxu0 0
  %1676 = vmatprep.subr.bf16.mxu0 0
  %1677 = vmatpush1.bf16.msra.mxu0 0
  %1678 = vmatprep.subr.bf16.mxu0 0
  %1679 = vmatpush1.bf16.msra.mxu0 0
  %1680 = vmatprep.subr.bf16.mxu0 0
  %1681 = vmatpush1.bf16.msra.mxu0 0
  %1682 = vmatprep.mubr.bf16.mxu0 0
  %1683 = vmatmul.mubr.bf16.gmra.mrb[0].mxu0 %v1630
  %v1684 = vpop.f32.mrb[0].mxu0
  %v1685 = vadd.f32 0.0, %v1684
  %v1686 = vpop.f32.mrb[0].mxu0
  %v1687 = vadd.f32 0.0, %v1686
  %v1688 = vpop.f32.mrb[0].mxu0
  %v1689 = vpop.f32.mrb[0].mxu0
  %1690 = vdwg.mxu0
  %1691 = vmatprep.subr.bf16.mxu0 %v1642
  %1692 = vmatpush1.bf16.msra.mxu0 %v1639
  %1693 = vmatprep.subr.bf16.mxu0 0
  %1694 = vmatpush1.bf16.msra.mxu0 0
  %1695 = vmatprep.subr.bf16.mxu0 0
  %1696 = vmatpush1.bf16.msra.mxu0 0
  %1697 = vmatprep.subr.bf16.mxu0 0
  %1698 = vmatpush1.bf16.msra.mxu0 0
  %1699 = vmatprep.subr.bf16.mxu0 0
  %1700 = vmatpush1.bf16.msra.mxu0 0
  %1701 = vmatprep.subr.bf16.mxu0 0
  %1702 = vmatpush1.bf16.msra.mxu0 0
  %1703 = vmatprep.subr.bf16.mxu0 0
  %1704 = vmatpush1.bf16.msra.mxu0 0
  %1705 = vmatprep.subr.bf16.mxu0 0
  %1706 = vmatpush1.bf16.msra.mxu0 0
  %1707 = vmatprep.subr.bf16.mxu0 0
  %1708 = vmatpush1.bf16.msra.mxu0 0
  %1709 = vmatprep.subr.bf16.mxu0 0
  %1710 = vmatpush1.bf16.msra.mxu0 0
  %1711 = vmatprep.subr.bf16.mxu0 0
  %1712 = vmatpush1.bf16.msra.mxu0 0
  %1713 = vmatprep.subr.bf16.mxu0 0
  %1714 = vmatpush1.bf16.msra.mxu0 0
  %1715 = vmatprep.subr.bf16.mxu0 0
  %1716 = vmatpush1.bf16.msra.mxu0 0
  %1717 = vmatprep.subr.bf16.mxu0 0
  %1718 = vmatpush1.bf16.msra.mxu0 0
  %1719 = vmatprep.subr.bf16.mxu0 0
  %1720 = vmatpush1.bf16.msra.mxu0 0
  %1721 = vmatprep.subr.bf16.mxu0 0
  %1722 = vmatpush1.bf16.msra.mxu0 0
  %1723 = vmatprep.mubr.bf16.mxu0 0
  %1724 = vmatmul.mubr.bf16.gmra.mrb[0].mxu0 %v1630
  %v1725 = vpop.f32.mrb[0].mxu0
  %v1726 = vadd.f32 0.0, %v1725
  %v1727 = vpop.f32.mrb[0].mxu0
  %v1728 = vadd.f32 0.0, %v1727
  %v1729 = vpop.f32.mrb[0].mxu0
  %v1730 = vpop.f32.mrb[0].mxu0
  %1731 = vdwg.mxu0
  %1732 = vmatprep.subr.bf16.mxu0 %v1648
  %1733 = vmatpush1.bf16.msra.mxu0 %v1645
  %1734 = vmatprep.subr.bf16.mxu0 0
  %1735 = vmatpush1.bf16.msra.mxu0 0
  %1736 = vmatprep.subr.bf16.mxu0 0
  %1737 = vmatpush1.bf16.msra.mxu0 0
  %1738 = vmatprep.subr.bf16.mxu0 0
  %1739 = vmatpush1.bf16.msra.mxu0 0
  %1740 = vmatprep.subr.bf16.mxu0 0
  %1741 = vmatpush1.bf16.msra.mxu0 0
  %1742 = vmatprep.subr.bf16.mxu0 0
  %1743 = vmatpush1.bf16.msra.mxu0 0
  %1744 = vmatprep.subr.bf16.mxu0 0
  %1745 = vmatpush1.bf16.msra.mxu0 0
  %1746 = vmatprep.subr.bf16.mxu0 0
  %1747 = vmatpush1.bf16.msra.mxu0 0
  %1748 = vmatprep.subr.bf16.mxu0 0
  %1749 = vmatpush1.bf16.msra.mxu0 0
  %1750 = vmatprep.subr.bf16.mxu0 0
  %1751 = vmatpush1.bf16.msra.mxu0 0
  %1752 = vmatprep.subr.bf16.mxu0 0
  %1753 = vmatpush1.bf16.msra.mxu0 0
  %1754 = vmatprep.subr.bf16.mxu0 0
  %1755 = vmatpush1.bf16.msra.mxu0 0
  %1756 = vmatprep.subr.bf16.mxu0 0
  %1757 = vmatpush1.bf16.msra.mxu0 0
  %1758 = vmatprep.subr.bf16.mxu0 0
  %1759 = vmatpush1.bf16.msra.mxu0 0
  %1760 = vmatprep.subr.bf16.mxu0 0
  %1761 = vmatpush1.bf16.msra.mxu0 0
  %1762 = vmatprep.subr.bf16.mxu0 0
  %1763 = vmatpush1.bf16.msra.mxu0 0
  %1764 = vmatprep.mubr.bf16.mxu0 0
  %1765 = vmatmul.mubr.bf16.gmra.mrb[0].mxu0 %v1630
  %v1766 = vpop.f32.mrb[0].mxu0
  %v1767 = vadd.f32 0.0, %v1766
  %v1768 = vpop.f32.mrb[0].mxu0
  %v1769 = vadd.f32 0.0, %v1768
  %v1770 = vpop.f32.mrb[0].mxu0
  %v1771 = vpop.f32.mrb[0].mxu0
  %1772 = vdwg.mxu0
  %v1773 = vadd.f32 %v1574, %v1685
  %v1774 = vadd.f32 %v1575, %v1687
  %v1775 = vadd.f32 %v1576, %v1726
  %v1776 = vadd.f32 %v1577, %v1728
  %v1777 = vadd.f32 %v1578, %v1767
  %v1778 = vadd.f32 %v1579, %v1769
  %v1779 = vld [vmem:[%s4] sm:$0xff]
  %1781 = vset.pattern.permute.xlu0 0
  %1782 = vperm.xlu0 %1781, %v1779
  %v1783 = vpop.permute.xlu0 %1782
  %v1785 = vadd.f32 %v1773, %v1783
  %v1786 = vadd.f32 %v1774, %v1783
  %v1787 = vadd.f32 %v1775, %v1783
  %v1788 = vadd.f32 %v1776, %v1783
  %v1789 = vadd.f32 %v1777, %v1783
  %v1790 = vadd.f32 %v1778, %v1783
  %v1791 = vtanh.pop %v1785
  %v1792 = vtanh.pop %v1786
  %v1793 = vtanh.pop %v1787
  %v1794 = vtanh.pop %v1788
  %v1795 = vtanh.pop %v1789
  %v1796 = vtanh.pop %v1790
  %v1797 = vld [vmem:[%s2] sm:$0x3f]
  %v1799 = vlaneseq
  %v1800 = vshrl.u32 %v1799, 7
  %v1801 = vsub.s32 0, %v1800
  %v1802 = vrot.slane %v1797, %v1801
  %v1803 = vlaneseq
  %v1804 = vshrl.u32 %v1803, 7
  %v1805 = vsub.s32 1, %v1804
  %v1806 = vrot.slane %v1797, %v1805
  %v1807 = vlaneseq
  %v1808 = vshrl.u32 %v1807, 7
  %v1809 = vsub.s32 2, %v1808
  %v1810 = vrot.slane %v1797, %v1809
  %v1811 = vlaneseq
  %v1812 = vshrl.u32 %v1811, 7
  %v1813 = vsub.s32 3, %v1812
  %v1814 = vrot.slane %v1797, %v1813
  %v1815 = vlaneseq
  %v1816 = vshrl.u32 %v1815, 7
  %v1817 = vsub.s32 4, %v1816
  %v1818 = vrot.slane %v1797, %v1817
  %v1819 = vlaneseq
  %v1820 = vshrl.u32 %v1819, 7
  %v1821 = vsub.s32 5, %v1820
  %v1822 = vrot.slane %v1797, %v1821
  %v1829 = vmul.f32 %v1791, %v1802
  %v1830 = vmul.f32 %v1792, %v1806
  %v1831 = vmul.f32 %v1793, %v1810
  %v1832 = vmul.f32 %v1794, %v1814
  %v1833 = vmul.f32 %v1795, %v1818
  %v1834 = vmul.f32 %v1796, %v1822
  %v1835 = vpack.c.bf16 %v1829, %v1829
  %v1836 = vpack.c.bf16 %v1830, %v1830
  %v1837 = vpack.c.bf16 %v1831, %v1831
  %v1838 = vpack.c.bf16 %v1832, %v1832
  %v1839 = vpack.c.bf16 %v1833, %v1833
  %v1840 = vpack.c.bf16 %v1834, %v1834
  %1841 = vst [vmem:[#allocation2 + $0x8] sm:$0xf] %v1835
  %1842 = vst [vmem:[#allocation2 + $0x10] sm:$0xf] %v1836
  %1843 = vst [vmem:[#allocation2 + $0x18] sm:$0xf] %v1837
  %1844 = vst [vmem:[#allocation2 + $0x20] sm:$0xf] %v1838
  %1845 = vst [vmem:[#allocation2 + $0x28] sm:$0xf] %v1839
  %vm1846 = vcmask 60416
  %1847 = vst.msk [vmem:[#allocation2 + $0x30] sm:$0xf] %vm1846, %v1840
  %v1848 = vld [vmem:[%s1] sm:$0xff]
  %v1849 = vld [vmem:[%s1 + $0x8] sm:$0xff]
  %v1850 = vld [vmem:[%s1 + $0x10] sm:$0xff]
  %v1854 = vunpack.c.l.b16 %v1848
  %v1855 = vunpack.c.h.b16 %v1848
  %v1856 = vunpack.c.l.b16 %v1849
  %v1857 = vunpack.c.h.b16 %v1849
  %v1858 = vunpack.c.l.b16 %v1850
  %v1859 = vunpack.c.h.b16 %v1850
  %v1860 = vpack.c.b16 %v1854, %v1854
  %v1861 = vpack.c.b16 %v1855, %v1855
  %v1862 = vpack.c.b16 %v1856, %v1856
  %v1863 = vpack.c.b16 %v1857, %v1857
  %v1864 = vpack.c.b16 %v1858, %v1858
  %v1865 = vpack.c.b16 %v1859, %v1859
  %1872 = vst [vmem:[#allocation2 + $0x8] sm:$0xf0] %v1860
  %1873 = vst [vmem:[#allocation2 + $0x10] sm:$0xf0] %v1861
  %1874 = vst [vmem:[#allocation2 + $0x18] sm:$0xf0] %v1862
  %1875 = vst [vmem:[#allocation2 + $0x20] sm:$0xf0] %v1863
  %1876 = vst [vmem:[#allocation2 + $0x28] sm:$0xf0] %v1864
  %vm1877 = vcmask 64516
  %1878 = vst.msk [vmem:[#allocation2 + $0x30] sm:$0xf0] %vm1877, %v1865
  %v1879 = vld [vmem:[%s5] sm:$0x3]
  %v1880 = vld [vmem:[#allocation2] sm:$0xff]
  %v1881 = vld [vmem:[#allocation2 + $0x8] sm:$0xff]
  %v1882 = vld [vmem:[#allocation2 + $0x10] sm:$0xff]
  %v1883 = vld [vmem:[#allocation2 + $0x18] sm:$0xff]
  %v1884 = vld [vmem:[#allocation2 + $0x20] sm:$0xff]
  %v1885 = vld [vmem:[#allocation2 + $0x28] sm:$0xff]
  %s1886 = scalar_lea.vmem %s5, 2
  %v1887 = vld [vmem:[%s1886] sm:$0x3]
  %1894 = vrot.lane.b32.xlu0 %v1880, 18
  %v1895 = vpop.permute.xlu0 %1894
  %1896 = vrot.lane.b32.xlu0 %v1881, 18
  %v1897 = vpop.permute.xlu0 %1896
  %1898 = vrot.lane.b32.xlu0 %v1882, 18
  %v1899 = vpop.permute.xlu0 %1898
  %1900 = vrot.lane.b32.xlu0 %v1883, 18
  %v1901 = vpop.permute.xlu0 %1900
  %1902 = vrot.lane.b32.xlu0 %v1884, 18
  %v1903 = vpop.permute.xlu0 %1902
  %1904 = vrot.lane.b32.xlu0 %v1885, 18
  %v1905 = vpop.permute.xlu0 %1904
  %v1906 = vsel %vm76, %v1895, %v1897
  %v1907 = vsel %vm76, %v1897, %v1899
  %v1908 = vsel %vm76, %v1899, %v1901
  %v1909 = vsel %vm76, %v1901, %v1903
  %v1910 = vsel %vm76, %v1903, %v1905
  %vm1917 = vcmask 130048
  %v1919 = vsel %vm1917, %v1887, 0
  %1921 = vmatprep.subr.bf16.mxu0 %v1907
  %1922 = vmatpush1.bf16.msra.mxu0 %v1906
  %1923 = vmatprep.subr.bf16.mxu0 0
  %1924 = vmatpush1.bf16.msra.mxu0 0
  %1925 = vmatprep.subr.bf16.mxu0 0
  %1926 = vmatpush1.bf16.msra.mxu0 0
  %1927 = vmatprep.subr.bf16.mxu0 0
  %1928 = vmatpush1.bf16.msra.mxu0 0
  %1929 = vmatprep.subr.bf16.mxu0 0
  %1930 = vmatpush1.bf16.msra.mxu0 0
  %1931 = vmatprep.subr.bf16.mxu0 0
  %1932 = vmatpush1.bf16.msra.mxu0 0
  %1933 = vmatprep.subr.bf16.mxu0 0
  %1934 = vmatpush1.bf16.msra.mxu0 0
  %1935 = vmatprep.subr.bf16.mxu0 0
  %1936 = vmatpush1.bf16.msra.mxu0 0
  %1937 = vmatprep.subr.bf16.mxu0 0
  %1938 = vmatpush1.bf16.msra.mxu0 0
  %1939 = vmatprep.subr.bf16.mxu0 0
  %1940 = vmatpush1.bf16.msra.mxu0 0
  %1941 = vmatprep.subr.bf16.mxu0 0
  %1942 = vmatpush1.bf16.msra.mxu0 0
  %1943 = vmatprep.subr.bf16.mxu0 0
  %1944 = vmatpush1.bf16.msra.mxu0 0
  %1945 = vmatprep.subr.bf16.mxu0 0
  %1946 = vmatpush1.bf16.msra.mxu0 0
  %1947 = vmatprep.subr.bf16.mxu0 0
  %1948 = vmatpush1.bf16.msra.mxu0 0
  %1949 = vmatprep.subr.bf16.mxu0 0
  %1950 = vmatpush1.bf16.msra.mxu0 0
  %1951 = vmatprep.subr.bf16.mxu0 0
  %1952 = vmatpush1.bf16.msra.mxu0 0
  %1953 = vmatprep.mubr.bf16.mxu0 0
  %1954 = vmatmul.mubr.bf16.gmra.mrb[0].mxu0 %v1919
  %v1955 = vpop.f32.mrb[0].mxu0
  %v1956 = vadd.f32 0.0, %v1955
  %v1957 = vpop.f32.mrb[0].mxu0
  %v1958 = vadd.f32 0.0, %v1957
  %v1959 = vpop.f32.mrb[0].mxu0
  %v1960 = vpop.f32.mrb[0].mxu0
  %1961 = vdwg.mxu0
  %1962 = vmatprep.subr.bf16.mxu0 %v1909
  %1963 = vmatpush1.bf16.msra.mxu0 %v1908
  %1964 = vmatprep.subr.bf16.mxu0 0
  %1965 = vmatpush1.bf16.msra.mxu0 0
  %1966 = vmatprep.subr.bf16.mxu0 0
  %1967 = vmatpush1.bf16.msra.mxu0 0
  %1968 = vmatprep.subr.bf16.mxu0 0
  %1969 = vmatpush1.bf16.msra.mxu0 0
  %1970 = vmatprep.subr.bf16.mxu0 0
  %1971 = vmatpush1.bf16.msra.mxu0 0
  %1972 = vmatprep.subr.bf16.mxu0 0
  %1973 = vmatpush1.bf16.msra.mxu0 0
  %1974 = vmatprep.subr.bf16.mxu0 0
  %1975 = vmatpush1.bf16.msra.mxu0 0
  %1976 = vmatprep.subr.bf16.mxu0 0
  %1977 = vmatpush1.bf16.msra.mxu0 0
  %1978 = vmatprep.subr.bf16.mxu0 0
  %1979 = vmatpush1.bf16.msra.mxu0 0
  %1980 = vmatprep.subr.bf16.mxu0 0
  %1981 = vmatpush1.bf16.msra.mxu0 0
  %1982 = vmatprep.subr.bf16.mxu0 0
  %1983 = vmatpush1.bf16.msra.mxu0 0
  %1984 = vmatprep.subr.bf16.mxu0 0
  %1985 = vmatpush1.bf16.msra.mxu0 0
  %1986 = vmatprep.subr.bf16.mxu0 0
  %1987 = vmatpush1.bf16.msra.mxu0 0
  %1988 = vmatprep.subr.bf16.mxu0 0
  %1989 = vmatpush1.bf16.msra.mxu0 0
  %1990 = vmatprep.subr.bf16.mxu0 0
  %1991 = vmatpush1.bf16.msra.mxu0 0
  %1992 = vmatprep.subr.bf16.mxu0 0
  %1993 = vmatpush1.bf16.msra.mxu0 0
  %1994 = vmatprep.mubr.bf16.mxu0 0
  %1995 = vmatmul.mubr.bf16.gmra.mrb[0].mxu0 %v1919
  %v1996 = vpop.f32.mrb[0].mxu0
  %v1997 = vadd.f32 0.0, %v1996
  %v1998 = vpop.f32.mrb[0].mxu0
  %v1999 = vadd.f32 0.0, %v1998
  %v2000 = vpop.f32.mrb[0].mxu0
  %v2001 = vpop.f32.mrb[0].mxu0
  %2002 = vdwg.mxu0
  %2003 = vmatprep.subr.bf16.mxu0 %v1905
  %2004 = vmatpush1.bf16.msra.mxu0 %v1910
  %2005 = vmatprep.subr.bf16.mxu0 0
  %2006 = vmatpush1.bf16.msra.mxu0 0
  %2007 = vmatprep.subr.bf16.mxu0 0
  %2008 = vmatpush1.bf16.msra.mxu0 0
  %2009 = vmatprep.subr.bf16.mxu0 0
  %2010 = vmatpush1.bf16.msra.mxu0 0
  %2011 = vmatprep.subr.bf16.mxu0 0
  %2012 = vmatpush1.bf16.msra.mxu0 0
  %2013 = vmatprep.subr.bf16.mxu0 0
  %2014 = vmatpush1.bf16.msra.mxu0 0
  %2015 = vmatprep.subr.bf16.mxu0 0
  %2016 = vmatpush1.bf16.msra.mxu0 0
  %2017 = vmatprep.subr.bf16.mxu0 0
  %2018 = vmatpush1.bf16.msra.mxu0 0
  %2019 = vmatprep.subr.bf16.mxu0 0
  %2020 = vmatpush1.bf16.msra.mxu0 0
  %2021 = vmatprep.subr.bf16.mxu0 0
  %2022 = vmatpush1.bf16.msra.mxu0 0
  %2023 = vmatprep.subr.bf16.mxu0 0
  %2024 = vmatpush1.bf16.msra.mxu0 0
  %2025 = vmatprep.subr.bf16.mxu0 0
  %2026 = vmatpush1.bf16.msra.mxu0 0
  %2027 = vmatprep.subr.bf16.mxu0 0
  %2028 = vmatpush1.bf16.msra.mxu0 0
  %2029 = vmatprep.subr.bf16.mxu0 0
  %2030 = vmatpush1.bf16.msra.mxu0 0
  %2031 = vmatprep.subr.bf16.mxu0 0
  %2032 = vmatpush1.bf16.msra.mxu0 0
  %2033 = vmatprep.subr.bf16.mxu0 0
  %2034 = vmatpush1.bf16.msra.mxu0 0
  %2035 = vmatprep.mubr.bf16.mxu0 0
  %2036 = vmatmul.mubr.bf16.gmra.mrb[0].mxu0 %v1919
  %v2037 = vpop.f32.mrb[0].mxu0
  %v2038 = vadd.f32 0.0, %v2037
  %v2039 = vpop.f32.mrb[0].mxu0
  %v2040 = vadd.f32 0.0, %v2039
  %v2041 = vpop.f32.mrb[0].mxu0
  %v2042 = vpop.f32.mrb[0].mxu0
  %2043 = vdwg.mxu0
  %2044 = vrot.lane.b32.xlu0 %v1880, 19
  %v2045 = vpop.permute.xlu0 %2044
  %2046 = vrot.lane.b32.xlu0 %v1881, 19
  %v2047 = vpop.permute.xlu0 %2046
  %2048 = vrot.lane.b32.xlu0 %v1882, 19
  %v2049 = vpop.permute.xlu0 %2048
  %2050 = vrot.lane.b32.xlu0 %v1883, 19
  %v2051 = vpop.permute.xlu0 %2050
  %2052 = vrot.lane.b32.xlu0 %v1884, 19
  %v2053 = vpop.permute.xlu0 %2052
  %2054 = vrot.lane.b32.xlu0 %v1885, 19
  %v2055 = vpop.permute.xlu0 %2054
  %v2056 = vsel %vm243, %v2045, %v2047
  %v2057 = vsel %vm243, %v2047, %v2049
  %v2058 = vsel %vm243, %v2049, %v2051
  %v2059 = vsel %vm243, %v2051, %v2053
  %v2060 = vsel %vm243, %v2053, %v2055
  %v2068 = vsel %vm1917, %v1879, 0
  %2070 = vmatprep.subr.bf16.mxu0 %v2057
  %2071 = vmatpush1.bf16.msra.mxu0 %v2056
  %2072 = vmatprep.subr.bf16.mxu0 0
  %2073 = vmatpush1.bf16.msra.mxu0 0
  %2074 = vmatprep.subr.bf16.mxu0 0
  %2075 = vmatpush1.bf16.msra.mxu0 0
  %2076 = vmatprep.subr.bf16.mxu0 0
  %2077 = vmatpush1.bf16.msra.mxu0 0
  %2078 = vmatprep.subr.bf16.mxu0 0
  %2079 = vmatpush1.bf16.msra.mxu0 0
  %2080 = vmatprep.subr.bf16.mxu0 0
  %2081 = vmatpush1.bf16.msra.mxu0 0
  %2082 = vmatprep.subr.bf16.mxu0 0
  %2083 = vmatpush1.bf16.msra.mxu0 0
  %2084 = vmatprep.subr.bf16.mxu0 0
  %2085 = vmatpush1.bf16.msra.mxu0 0
  %2086 = vmatprep.subr.bf16.mxu0 0
  %2087 = vmatpush1.bf16.msra.mxu0 0
  %2088 = vmatprep.subr.bf16.mxu0 0
  %2089 = vmatpush1.bf16.msra.mxu0 0
  %2090 = vmatprep.subr.bf16.mxu0 0
  %2091 = vmatpush1.bf16.msra.mxu0 0
  %2092 = vmatprep.subr.bf16.mxu0 0
  %2093 = vmatpush1.bf16.msra.mxu0 0
  %2094 = vmatprep.subr.bf16.mxu0 0
  %2095 = vmatpush1.bf16.msra.mxu0 0
  %2096 = vmatprep.subr.bf16.mxu0 0
  %2097 = vmatpush1.bf16.msra.mxu0 0
  %2098 = vmatprep.subr.bf16.mxu0 0
  %2099 = vmatpush1.bf16.msra.mxu0 0
  %2100 = vmatprep.subr.bf16.mxu0 0
  %2101 = vmatpush1.bf16.msra.mxu0 0
  %2102 = vmatprep.mubr.bf16.mxu0 0
  %2103 = vmatmul.mubr.bf16.gmra.mrb[0].mxu0 %v2068
  %v2104 = vpop.f32.mrb[0].mxu0
  %v2105 = vadd.f32 %v1956, %v2104
  %v2106 = vpop.f32.mrb[0].mxu0
  %v2107 = vadd.f32 %v1958, %v2106
  %v2108 = vpop.f32.mrb[0].mxu0
  %v2109 = vpop.f32.mrb[0].mxu0
  %2110 = vdwg.mxu0
  %2111 = vmatprep.subr.bf16.mxu0 %v2059
  %2112 = vmatpush1.bf16.msra.mxu0 %v2058
  %2113 = vmatprep.subr.bf16.mxu0 0
  %2114 = vmatpush1.bf16.msra.mxu0 0
  %2115 = vmatprep.subr.bf16.mxu0 0
  %2116 = vmatpush1.bf16.msra.mxu0 0
  %2117 = vmatprep.subr.bf16.mxu0 0
  %2118 = vmatpush1.bf16.msra.mxu0 0
  %2119 = vmatprep.subr.bf16.mxu0 0
  %2120 = vmatpush1.bf16.msra.mxu0 0
  %2121 = vmatprep.subr.bf16.mxu0 0
  %2122 = vmatpush1.bf16.msra.mxu0 0
  %2123 = vmatprep.subr.bf16.mxu0 0
  %2124 = vmatpush1.bf16.msra.mxu0 0
  %2125 = vmatprep.subr.bf16.mxu0 0
  %2126 = vmatpush1.bf16.msra.mxu0 0
  %2127 = vmatprep.subr.bf16.mxu0 0
  %2128 = vmatpush1.bf16.msra.mxu0 0
  %2129 = vmatprep.subr.bf16.mxu0 0
  %2130 = vmatpush1.bf16.msra.mxu0 0
  %2131 = vmatprep.subr.bf16.mxu0 0
  %2132 = vmatpush1.bf16.msra.mxu0 0
  %2133 = vmatprep.subr.bf16.mxu0 0
  %2134 = vmatpush1.bf16.msra.mxu0 0
  %2135 = vmatprep.subr.bf16.mxu0 0
  %2136 = vmatpush1.bf16.msra.mxu0 0
  %2137 = vmatprep.subr.bf16.mxu0 0
  %2138 = vmatpush1.bf16.msra.mxu0 0
  %2139 = vmatprep.subr.bf16.mxu0 0
  %2140 = vmatpush1.bf16.msra.mxu0 0
  %2141 = vmatprep.subr.bf16.mxu0 0
  %2142 = vmatpush1.bf16.msra.mxu0 0
  %2143 = vmatprep.mubr.bf16.mxu0 0
  %2144 = vmatmul.mubr.bf16.gmra.mrb[0].mxu0 %v2068
  %v2145 = vpop.f32.mrb[0].mxu0
  %v2146 = vadd.f32 %v1997, %v2145
  %v2147 = vpop.f32.mrb[0].mxu0
  %v2148 = vadd.f32 %v1999, %v2147
  %v2149 = vpop.f32.mrb[0].mxu0
  %v2150 = vpop.f32.mrb[0].mxu0
  %2151 = vdwg.mxu0
  %2152 = vmatprep.subr.bf16.mxu0 %v2055
  %2153 = vmatpush1.bf16.msra.mxu0 %v2060
  %2154 = vmatprep.subr.bf16.mxu0 0
  %2155 = vmatpush1.bf16.msra.mxu0 0
  %2156 = vmatprep.subr.bf16.mxu0 0
  %2157 = vmatpush1.bf16.msra.mxu0 0
  %2158 = vmatprep.subr.bf16.mxu0 0
  %2159 = vmatpush1.bf16.msra.mxu0 0
  %2160 = vmatprep.subr.bf16.mxu0 0
  %2161 = vmatpush1.bf16.msra.mxu0 0
  %2162 = vmatprep.subr.bf16.mxu0 0
  %2163 = vmatpush1.bf16.msra.mxu0 0
  %2164 = vmatprep.subr.bf16.mxu0 0
  %2165 = vmatpush1.bf16.msra.mxu0 0
  %2166 = vmatprep.subr.bf16.mxu0 0
  %2167 = vmatpush1.bf16.msra.mxu0 0
  %2168 = vmatprep.subr.bf16.mxu0 0
  %2169 = vmatpush1.bf16.msra.mxu0 0
  %2170 = vmatprep.subr.bf16.mxu0 0
  %2171 = vmatpush1.bf16.msra.mxu0 0
  %2172 = vmatprep.subr.bf16.mxu0 0
  %2173 = vmatpush1.bf16.msra.mxu0 0
  %2174 = vmatprep.subr.bf16.mxu0 0
  %2175 = vmatpush1.bf16.msra.mxu0 0
  %2176 = vmatprep.subr.bf16.mxu0 0
  %2177 = vmatpush1.bf16.msra.mxu0 0
  %2178 = vmatprep.subr.bf16.mxu0 0
  %2179 = vmatpush1.bf16.msra.mxu0 0
  %2180 = vmatprep.subr.bf16.mxu0 0
  %2181 = vmatpush1.bf16.msra.mxu0 0
  %2182 = vmatprep.subr.bf16.mxu0 0
  %2183 = vmatpush1.bf16.msra.mxu0 0
  %2184 = vmatprep.mubr.bf16.mxu0 0
  %2185 = vmatmul.mubr.bf16.gmra.mrb[0].mxu0 %v2068
  %v2186 = vpop.f32.mrb[0].mxu0
  %v2187 = vadd.f32 %v2038, %v2186
  %v2188 = vpop.f32.mrb[0].mxu0
  %v2189 = vadd.f32 %v2040, %v2188
  %v2190 = vpop.f32.mrb[0].mxu0
  %v2191 = vpop.f32.mrb[0].mxu0
  %2192 = vdwg.mxu0
  %s2193 = scalar_lea.vmem %s5, 4
  %v2194 = vld [vmem:[%s2193] sm:$0x3]
  %2195 = vrot.lane.b32.xlu0 %v1880, 17
  %v2196 = vpop.permute.xlu0 %2195
  %2197 = vrot.lane.b32.xlu0 %v1881, 17
  %v2198 = vpop.permute.xlu0 %2197
  %2199 = vrot.lane.b32.xlu0 %v1882, 17
  %v2200 = vpop.permute.xlu0 %2199
  %2201 = vrot.lane.b32.xlu0 %v1883, 17
  %v2202 = vpop.permute.xlu0 %2201
  %2203 = vrot.lane.b32.xlu0 %v1884, 17
  %v2204 = vpop.permute.xlu0 %2203
  %2205 = vrot.lane.b32.xlu0 %v1885, 17
  %v2206 = vpop.permute.xlu0 %2205
  %v2207 = vsel %vm436, %v2196, %v2198
  %v2208 = vsel %vm436, %v2198, %v2200
  %v2209 = vsel %vm436, %v2200, %v2202
  %v2210 = vsel %vm436, %v2202, %v2204
  %v2211 = vsel %vm436, %v2204, %v2206
  %v2219 = vsel %vm1917, %v2194, 0
  %2221 = vmatprep.subr.bf16.mxu0 %v2208
  %2222 = vmatpush1.bf16.msra.mxu0 %v2207
  %2223 = vmatprep.subr.bf16.mxu0 0
  %2224 = vmatpush1.bf16.msra.mxu0 0
  %2225 = vmatprep.subr.bf16.mxu0 0
  %2226 = vmatpush1.bf16.msra.mxu0 0
  %2227 = vmatprep.subr.bf16.mxu0 0
  %2228 = vmatpush1.bf16.msra.mxu0 0
  %2229 = vmatprep.subr.bf16.mxu0 0
  %2230 = vmatpush1.bf16.msra.mxu0 0
  %2231 = vmatprep.subr.bf16.mxu0 0
  %2232 = vmatpush1.bf16.msra.mxu0 0
  %2233 = vmatprep.subr.bf16.mxu0 0
  %2234 = vmatpush1.bf16.msra.mxu0 0
  %2235 = vmatprep.subr.bf16.mxu0 0
  %2236 = vmatpush1.bf16.msra.mxu0 0
  %2237 = vmatprep.subr.bf16.mxu0 0
  %2238 = vmatpush1.bf16.msra.mxu0 0
  %2239 = vmatprep.subr.bf16.mxu0 0
  %2240 = vmatpush1.bf16.msra.mxu0 0
  %2241 = vmatprep.subr.bf16.mxu0 0
  %2242 = vmatpush1.bf16.msra.mxu0 0
  %2243 = vmatprep.subr.bf16.mxu0 0
  %2244 = vmatpush1.bf16.msra.mxu0 0
  %2245 = vmatprep.subr.bf16.mxu0 0
  %2246 = vmatpush1.bf16.msra.mxu0 0
  %2247 = vmatprep.subr.bf16.mxu0 0
  %2248 = vmatpush1.bf16.msra.mxu0 0
  %2249 = vmatprep.subr.bf16.mxu0 0
  %2250 = vmatpush1.bf16.msra.mxu0 0
  %2251 = vmatprep.subr.bf16.mxu0 0
  %2252 = vmatpush1.bf16.msra.mxu0 0
  %2253 = vmatprep.mubr.bf16.mxu0 0
  %2254 = vmatmul.mubr.bf16.gmra.mrb[0].mxu0 %v2219
  %v2255 = vpop.f32.mrb[0].mxu0
  %v2256 = vadd.f32 0.0, %v2255
  %v2257 = vpop.f32.mrb[0].mxu0
  %v2258 = vadd.f32 0.0, %v2257
  %v2259 = vpop.f32.mrb[0].mxu0
  %v2260 = vpop.f32.mrb[0].mxu0
  %2261 = vdwg.mxu0
  %2262 = vmatprep.subr.bf16.mxu0 %v2210
  %2263 = vmatpush1.bf16.msra.mxu0 %v2209
  %2264 = vmatprep.subr.bf16.mxu0 0
  %2265 = vmatpush1.bf16.msra.mxu0 0
  %2266 = vmatprep.subr.bf16.mxu0 0
  %2267 = vmatpush1.bf16.msra.mxu0 0
  %2268 = vmatprep.subr.bf16.mxu0 0
  %2269 = vmatpush1.bf16.msra.mxu0 0
  %2270 = vmatprep.subr.bf16.mxu0 0
  %2271 = vmatpush1.bf16.msra.mxu0 0
  %2272 = vmatprep.subr.bf16.mxu0 0
  %2273 = vmatpush1.bf16.msra.mxu0 0
  %2274 = vmatprep.subr.bf16.mxu0 0
  %2275 = vmatpush1.bf16.msra.mxu0 0
  %2276 = vmatprep.subr.bf16.mxu0 0
  %2277 = vmatpush1.bf16.msra.mxu0 0
  %2278 = vmatprep.subr.bf16.mxu0 0
  %2279 = vmatpush1.bf16.msra.mxu0 0
  %2280 = vmatprep.subr.bf16.mxu0 0
  %2281 = vmatpush1.bf16.msra.mxu0 0
  %2282 = vmatprep.subr.bf16.mxu0 0
  %2283 = vmatpush1.bf16.msra.mxu0 0
  %2284 = vmatprep.subr.bf16.mxu0 0
  %2285 = vmatpush1.bf16.msra.mxu0 0
  %2286 = vmatprep.subr.bf16.mxu0 0
  %2287 = vmatpush1.bf16.msra.mxu0 0
  %2288 = vmatprep.subr.bf16.mxu0 0
  %2289 = vmatpush1.bf16.msra.mxu0 0
  %2290 = vmatprep.subr.bf16.mxu0 0
  %2291 = vmatpush1.bf16.msra.mxu0 0
  %2292 = vmatprep.subr.bf16.mxu0 0
  %2293 = vmatpush1.bf16.msra.mxu0 0
  %2294 = vmatprep.mubr.bf16.mxu0 0
  %2295 = vmatmul.mubr.bf16.gmra.mrb[0].mxu0 %v2219
  %v2296 = vpop.f32.mrb[0].mxu0
  %v2297 = vadd.f32 0.0, %v2296
  %v2298 = vpop.f32.mrb[0].mxu0
  %v2299 = vadd.f32 0.0, %v2298
  %v2300 = vpop.f32.mrb[0].mxu0
  %v2301 = vpop.f32.mrb[0].mxu0
  %2302 = vdwg.mxu0
  %2303 = vmatprep.subr.bf16.mxu0 %v2206
  %2304 = vmatpush1.bf16.msra.mxu0 %v2211
  %2305 = vmatprep.subr.bf16.mxu0 0
  %2306 = vmatpush1.bf16.msra.mxu0 0
  %2307 = vmatprep.subr.bf16.mxu0 0
  %2308 = vmatpush1.bf16.msra.mxu0 0
  %2309 = vmatprep.subr.bf16.mxu0 0
  %2310 = vmatpush1.bf16.msra.mxu0 0
  %2311 = vmatprep.subr.bf16.mxu0 0
  %2312 = vmatpush1.bf16.msra.mxu0 0
  %2313 = vmatprep.subr.bf16.mxu0 0
  %2314 = vmatpush1.bf16.msra.mxu0 0
  %2315 = vmatprep.subr.bf16.mxu0 0
  %2316 = vmatpush1.bf16.msra.mxu0 0
  %2317 = vmatprep.subr.bf16.mxu0 0
  %2318 = vmatpush1.bf16.msra.mxu0 0
  %2319 = vmatprep.subr.bf16.mxu0 0
  %2320 = vmatpush1.bf16.msra.mxu0 0
  %2321 = vmatprep.subr.bf16.mxu0 0
  %2322 = vmatpush1.bf16.msra.mxu0 0
  %2323 = vmatprep.subr.bf16.mxu0 0
  %2324 = vmatpush1.bf16.msra.mxu0 0
  %2325 = vmatprep.subr.bf16.mxu0 0
  %2326 = vmatpush1.bf16.msra.mxu0 0
  %2327 = vmatprep.subr.bf16.mxu0 0
  %2328 = vmatpush1.bf16.msra.mxu0 0
  %2329 = vmatprep.subr.bf16.mxu0 0
  %2330 = vmatpush1.bf16.msra.mxu0 0
  %2331 = vmatprep.subr.bf16.mxu0 0
  %2332 = vmatpush1.bf16.msra.mxu0 0
  %2333 = vmatprep.subr.bf16.mxu0 0
  %2334 = vmatpush1.bf16.msra.mxu0 0
  %2335 = vmatprep.mubr.bf16.mxu0 0
  %2336 = vmatmul.mubr.bf16.gmra.mrb[0].mxu0 %v2219
  %v2337 = vpop.f32.mrb[0].mxu0
  %v2338 = vadd.f32 0.0, %v2337
  %v2339 = vpop.f32.mrb[0].mxu0
  %v2340 = vadd.f32 0.0, %v2339
  %v2341 = vpop.f32.mrb[0].mxu0
  %v2342 = vpop.f32.mrb[0].mxu0
  %2343 = vdwg.mxu0
  %v2344 = vadd.f32 %v2105, %v2256
  %v2345 = vadd.f32 %v2107, %v2258
  %v2346 = vadd.f32 %v2146, %v2297
  %v2347 = vadd.f32 %v2148, %v2299
  %v2348 = vadd.f32 %v2187, %v2338
  %v2349 = vadd.f32 %v2189, %v2340
  %s2350 = scalar_lea.vmem %s5, 6
  %v2351 = vld [vmem:[%s2350] sm:$0x3]
  %v2352 = vld [vmem:[#allocation2] sm:$0xff]
  %v2353 = vld [vmem:[#allocation2 + $0x8] sm:$0xff]
  %v2354 = vld [vmem:[#allocation2 + $0x10] sm:$0xff]
  %v2355 = vld [vmem:[#allocation2 + $0x18] sm:$0xff]
  %v2356 = vld [vmem:[#allocation2 + $0x20] sm:$0xff]
  %v2357 = vld [vmem:[#allocation2 + $0x28] sm:$0xff]
  %v2358 = vld [vmem:[#allocation2 + $0x30] sm:$0xff]
  %2366 = vrot.lane.b32.xlu0 %v2352, 1
  %v2367 = vpop.permute.xlu0 %2366
  %2368 = vrot.lane.b32.xlu0 %v2353, 1
  %v2369 = vpop.permute.xlu0 %2368
  %2370 = vrot.lane.b32.xlu0 %v2354, 1
  %v2371 = vpop.permute.xlu0 %2370
  %2372 = vrot.lane.b32.xlu0 %v2355, 1
  %v2373 = vpop.permute.xlu0 %2372
  %2374 = vrot.lane.b32.xlu0 %v2356, 1
  %v2375 = vpop.permute.xlu0 %2374
  %2376 = vrot.lane.b32.xlu0 %v2357, 1
  %v2377 = vpop.permute.xlu0 %2376
  %2378 = vrot.lane.b32.xlu0 %v2358, 1
  %v2379 = vpop.permute.xlu0 %2378
  %v2380 = vsel %vm645, %v2367, %v2369
  %v2381 = vsel %vm645, %v2369, %v2371
  %v2382 = vsel %vm645, %v2371, %v2373
  %v2383 = vsel %vm645, %v2373, %v2375
  %v2384 = vsel %vm645, %v2375, %v2377
  %v2385 = vsel %vm645, %v2377, %v2379
  %v2393 = vsel %vm1917, %v2351, 0
  %2395 = vmatprep.subr.bf16.mxu0 %v2381
  %2396 = vmatpush1.bf16.msra.mxu0 %v2380
  %2397 = vmatprep.subr.bf16.mxu0 0
  %2398 = vmatpush1.bf16.msra.mxu0 0
  %2399 = vmatprep.subr.bf16.mxu0 0
  %2400 = vmatpush1.bf16.msra.mxu0 0
  %2401 = vmatprep.subr.bf16.mxu0 0
  %2402 = vmatpush1.bf16.msra.mxu0 0
  %2403 = vmatprep.subr.bf16.mxu0 0
  %2404 = vmatpush1.bf16.msra.mxu0 0
  %2405 = vmatprep.subr.bf16.mxu0 0
  %2406 = vmatpush1.bf16.msra.mxu0 0
  %2407 = vmatprep.subr.bf16.mxu0 0
  %2408 = vmatpush1.bf16.msra.mxu0 0
  %2409 = vmatprep.subr.bf16.mxu0 0
  %2410 = vmatpush1.bf16.msra.mxu0 0
  %2411 = vmatprep.subr.bf16.mxu0 0
  %2412 = vmatpush1.bf16.msra.mxu0 0
  %2413 = vmatprep.subr.bf16.mxu0 0
  %2414 = vmatpush1.bf16.msra.mxu0 0
  %2415 = vmatprep.subr.bf16.mxu0 0
  %2416 = vmatpush1.bf16.msra.mxu0 0
  %2417 = vmatprep.subr.bf16.mxu0 0
  %2418 = vmatpush1.bf16.msra.mxu0 0
  %2419 = vmatprep.subr.bf16.mxu0 0
  %2420 = vmatpush1.bf16.msra.mxu0 0
  %2421 = vmatprep.subr.bf16.mxu0 0
  %2422 = vmatpush1.bf16.msra.mxu0 0
  %2423 = vmatprep.subr.bf16.mxu0 0
  %2424 = vmatpush1.bf16.msra.mxu0 0
  %2425 = vmatprep.subr.bf16.mxu0 0
  %2426 = vmatpush1.bf16.msra.mxu0 0
  %2427 = vmatprep.mubr.bf16.mxu0 0
  %2428 = vmatmul.mubr.bf16.gmra.mrb[0].mxu0 %v2393
  %v2429 = vpop.f32.mrb[0].mxu0
  %v2430 = vadd.f32 0.0, %v2429
  %v2431 = vpop.f32.mrb[0].mxu0
  %v2432 = vadd.f32 0.0, %v2431
  %v2433 = vpop.f32.mrb[0].mxu0
  %v2434 = vpop.f32.mrb[0].mxu0
  %2435 = vdwg.mxu0
  %2436 = vmatprep.subr.bf16.mxu0 %v2383
  %2437 = vmatpush1.bf16.msra.mxu0 %v2382
  %2438 = vmatprep.subr.bf16.mxu0 0
  %2439 = vmatpush1.bf16.msra.mxu0 0
  %2440 = vmatprep.subr.bf16.mxu0 0
  %2441 = vmatpush1.bf16.msra.mxu0 0
  %2442 = vmatprep.subr.bf16.mxu0 0
  %2443 = vmatpush1.bf16.msra.mxu0 0
  %2444 = vmatprep.subr.bf16.mxu0 0
  %2445 = vmatpush1.bf16.msra.mxu0 0
  %2446 = vmatprep.subr.bf16.mxu0 0
  %2447 = vmatpush1.bf16.msra.mxu0 0
  %2448 = vmatprep.subr.bf16.mxu0 0
  %2449 = vmatpush1.bf16.msra.mxu0 0
  %2450 = vmatprep.subr.bf16.mxu0 0
  %2451 = vmatpush1.bf16.msra.mxu0 0
  %2452 = vmatprep.subr.bf16.mxu0 0
  %2453 = vmatpush1.bf16.msra.mxu0 0
  %2454 = vmatprep.subr.bf16.mxu0 0
  %2455 = vmatpush1.bf16.msra.mxu0 0
  %2456 = vmatprep.subr.bf16.mxu0 0
  %2457 = vmatpush1.bf16.msra.mxu0 0
  %2458 = vmatprep.subr.bf16.mxu0 0
  %2459 = vmatpush1.bf16.msra.mxu0 0
  %2460 = vmatprep.subr.bf16.mxu0 0
  %2461 = vmatpush1.bf16.msra.mxu0 0
  %2462 = vmatprep.subr.bf16.mxu0 0
  %2463 = vmatpush1.bf16.msra.mxu0 0
  %2464 = vmatprep.subr.bf16.mxu0 0
  %2465 = vmatpush1.bf16.msra.mxu0 0
  %2466 = vmatprep.subr.bf16.mxu0 0
  %2467 = vmatpush1.bf16.msra.mxu0 0
  %2468 = vmatprep.mubr.bf16.mxu0 0
  %2469 = vmatmul.mubr.bf16.gmra.mrb[0].mxu0 %v2393
  %v2470 = vpop.f32.mrb[0].mxu0
  %v2471 = vadd.f32 0.0, %v2470
  %v2472 = vpop.f32.mrb[0].mxu0
  %v2473 = vadd.f32 0.0, %v2472
  %v2474 = vpop.f32.mrb[0].mxu0
  %v2475 = vpop.f32.mrb[0].mxu0
  %2476 = vdwg.mxu0
  %2477 = vmatprep.subr.bf16.mxu0 %v2385
  %2478 = vmatpush1.bf16.msra.mxu0 %v2384
  %2479 = vmatprep.subr.bf16.mxu0 0
  %2480 = vmatpush1.bf16.msra.mxu0 0
  %2481 = vmatprep.subr.bf16.mxu0 0
  %2482 = vmatpush1.bf16.msra.mxu0 0
  %2483 = vmatprep.subr.bf16.mxu0 0
  %2484 = vmatpush1.bf16.msra.mxu0 0
  %2485 = vmatprep.subr.bf16.mxu0 0
  %2486 = vmatpush1.bf16.msra.mxu0 0
  %2487 = vmatprep.subr.bf16.mxu0 0
  %2488 = vmatpush1.bf16.msra.mxu0 0
  %2489 = vmatprep.subr.bf16.mxu0 0
  %2490 = vmatpush1.bf16.msra.mxu0 0
  %2491 = vmatprep.subr.bf16.mxu0 0
  %2492 = vmatpush1.bf16.msra.mxu0 0
  %2493 = vmatprep.subr.bf16.mxu0 0
  %2494 = vmatpush1.bf16.msra.mxu0 0
  %2495 = vmatprep.subr.bf16.mxu0 0
  %2496 = vmatpush1.bf16.msra.mxu0 0
  %2497 = vmatprep.subr.bf16.mxu0 0
  %2498 = vmatpush1.bf16.msra.mxu0 0
  %2499 = vmatprep.subr.bf16.mxu0 0
  %2500 = vmatpush1.bf16.msra.mxu0 0
  %2501 = vmatprep.subr.bf16.mxu0 0
  %2502 = vmatpush1.bf16.msra.mxu0 0
  %2503 = vmatprep.subr.bf16.mxu0 0
  %2504 = vmatpush1.bf16.msra.mxu0 0
  %2505 = vmatprep.subr.bf16.mxu0 0
  %2506 = vmatpush1.bf16.msra.mxu0 0
  %2507 = vmatprep.subr.bf16.mxu0 0
  %2508 = vmatpush1.bf16.msra.mxu0 0
  %2509 = vmatprep.mubr.bf16.mxu0 0
  %2510 = vmatmul.mubr.bf16.gmra.mrb[0].mxu0 %v2393
  %v2511 = vpop.f32.mrb[0].mxu0
  %v2512 = vadd.f32 0.0, %v2511
  %v2513 = vpop.f32.mrb[0].mxu0
  %v2514 = vadd.f32 0.0, %v2513
  %v2515 = vpop.f32.mrb[0].mxu0
  %v2516 = vpop.f32.mrb[0].mxu0
  %2517 = vdwg.mxu0
  %v2518 = vadd.f32 %v2344, %v2430
  %v2519 = vadd.f32 %v2345, %v2432
  %v2520 = vadd.f32 %v2346, %v2471
  %v2521 = vadd.f32 %v2347, %v2473
  %v2522 = vadd.f32 %v2348, %v2512
  %v2523 = vadd.f32 %v2349, %v2514
  %s2524 = scalar_lea.vmem %s5, 8
  %v2525 = vld [vmem:[%s2524] sm:$0x3]
  %v2527 = vsel %vm1917, %v2525, 0
  %2529 = vmatprep.subr.bf16.mxu0 %v2354
  %2530 = vmatpush1.bf16.msra.mxu0 %v2353
  %2531 = vmatprep.subr.bf16.mxu0 0
  %2532 = vmatpush1.bf16.msra.mxu0 0
  %2533 = vmatprep.subr.bf16.mxu0 0
  %2534 = vmatpush1.bf16.msra.mxu0 0
  %2535 = vmatprep.subr.bf16.mxu0 0
  %2536 = vmatpush1.bf16.msra.mxu0 0
  %2537 = vmatprep.subr.bf16.mxu0 0
  %2538 = vmatpush1.bf16.msra.mxu0 0
  %2539 = vmatprep.subr.bf16.mxu0 0
  %2540 = vmatpush1.bf16.msra.mxu0 0
  %2541 = vmatprep.subr.bf16.mxu0 0
  %2542 = vmatpush1.bf16.msra.mxu0 0
  %2543 = vmatprep.subr.bf16.mxu0 0
  %2544 = vmatpush1.bf16.msra.mxu0 0
  %2545 = vmatprep.subr.bf16.mxu0 0
  %2546 = vmatpush1.bf16.msra.mxu0 0
  %2547 = vmatprep.subr.bf16.mxu0 0
  %2548 = vmatpush1.bf16.msra.mxu0 0
  %2549 = vmatprep.subr.bf16.mxu0 0
  %2550 = vmatpush1.bf16.msra.mxu0 0
  %2551 = vmatprep.subr.bf16.mxu0 0
  %2552 = vmatpush1.bf16.msra.mxu0 0
  %2553 = vmatprep.subr.bf16.mxu0 0
  %2554 = vmatpush1.bf16.msra.mxu0 0
  %2555 = vmatprep.subr.bf16.mxu0 0
  %2556 = vmatpush1.bf16.msra.mxu0 0
  %2557 = vmatprep.subr.bf16.mxu0 0
  %2558 = vmatpush1.bf16.msra.mxu0 0
  %2559 = vmatprep.subr.bf16.mxu0 0
  %2560 = vmatpush1.bf16.msra.mxu0 0
  %2561 = vmatprep.mubr.bf16.mxu0 0
  %2562 = vmatmul.mubr.bf16.gmra.mrb[0].mxu0 %v2527
  %v2563 = vpop.f32.mrb[0].mxu0
  %v2564 = vadd.f32 0.0, %v2563
  %v2565 = vpop.f32.mrb[0].mxu0
  %v2566 = vadd.f32 0.0, %v2565
  %v2567 = vpop.f32.mrb[0].mxu0
  %v2568 = vpop.f32.mrb[0].mxu0
  %2569 = vdwg.mxu0
  %2570 = vmatprep.subr.bf16.mxu0 %v2356
  %2571 = vmatpush1.bf16.msra.mxu0 %v2355
  %2572 = vmatprep.subr.bf16.mxu0 0
  %2573 = vmatpush1.bf16.msra.mxu0 0
  %2574 = vmatprep.subr.bf16.mxu0 0
  %2575 = vmatpush1.bf16.msra.mxu0 0
  %2576 = vmatprep.subr.bf16.mxu0 0
  %2577 = vmatpush1.bf16.msra.mxu0 0
  %2578 = vmatprep.subr.bf16.mxu0 0
  %2579 = vmatpush1.bf16.msra.mxu0 0
  %2580 = vmatprep.subr.bf16.mxu0 0
  %2581 = vmatpush1.bf16.msra.mxu0 0
  %2582 = vmatprep.subr.bf16.mxu0 0
  %2583 = vmatpush1.bf16.msra.mxu0 0
  %2584 = vmatprep.subr.bf16.mxu0 0
  %2585 = vmatpush1.bf16.msra.mxu0 0
  %2586 = vmatprep.subr.bf16.mxu0 0
  %2587 = vmatpush1.bf16.msra.mxu0 0
  %2588 = vmatprep.subr.bf16.mxu0 0
  %2589 = vmatpush1.bf16.msra.mxu0 0
  %2590 = vmatprep.subr.bf16.mxu0 0
  %2591 = vmatpush1.bf16.msra.mxu0 0
  %2592 = vmatprep.subr.bf16.mxu0 0
  %2593 = vmatpush1.bf16.msra.mxu0 0
  %2594 = vmatprep.subr.bf16.mxu0 0
  %2595 = vmatpush1.bf16.msra.mxu0 0
  %2596 = vmatprep.subr.bf16.mxu0 0
  %2597 = vmatpush1.bf16.msra.mxu0 0
  %2598 = vmatprep.subr.bf16.mxu0 0
  %2599 = vmatpush1.bf16.msra.mxu0 0
  %2600 = vmatprep.subr.bf16.mxu0 0
  %2601 = vmatpush1.bf16.msra.mxu0 0
  %2602 = vmatprep.mubr.bf16.mxu0 0
  %2603 = vmatmul.mubr.bf16.gmra.mrb[0].mxu0 %v2527
  %v2604 = vpop.f32.mrb[0].mxu0
  %v2605 = vadd.f32 0.0, %v2604
  %v2606 = vpop.f32.mrb[0].mxu0
  %v2607 = vadd.f32 0.0, %v2606
  %v2608 = vpop.f32.mrb[0].mxu0
  %v2609 = vpop.f32.mrb[0].mxu0
  %2610 = vdwg.mxu0
  %2611 = vmatprep.subr.bf16.mxu0 %v2358
  %2612 = vmatpush1.bf16.msra.mxu0 %v2357
  %2613 = vmatprep.subr.bf16.mxu0 0
  %2614 = vmatpush1.bf16.msra.mxu0 0
  %2615 = vmatprep.subr.bf16.mxu0 0
  %2616 = vmatpush1.bf16.msra.mxu0 0
  %2617 = vmatprep.subr.bf16.mxu0 0
  %2618 = vmatpush1.bf16.msra.mxu0 0
  %2619 = vmatprep.subr.bf16.mxu0 0
  %2620 = vmatpush1.bf16.msra.mxu0 0
  %2621 = vmatprep.subr.bf16.mxu0 0
  %2622 = vmatpush1.bf16.msra.mxu0 0
  %2623 = vmatprep.subr.bf16.mxu0 0
  %2624 = vmatpush1.bf16.msra.mxu0 0
  %2625 = vmatprep.subr.bf16.mxu0 0
  %2626 = vmatpush1.bf16.msra.mxu0 0
  %2627 = vmatprep.subr.bf16.mxu0 0
  %2628 = vmatpush1.bf16.msra.mxu0 0
  %2629 = vmatprep.subr.bf16.mxu0 0
  %2630 = vmatpush1.bf16.msra.mxu0 0
  %2631 = vmatprep.subr.bf16.mxu0 0
  %2632 = vmatpush1.bf16.msra.mxu0 0
  %2633 = vmatprep.subr.bf16.mxu0 0
  %2634 = vmatpush1.bf16.msra.mxu0 0
  %2635 = vmatprep.subr.bf16.mxu0 0
  %2636 = vmatpush1.bf16.msra.mxu0 0
  %2637 = vmatprep.subr.bf16.mxu0 0
  %2638 = vmatpush1.bf16.msra.mxu0 0
  %2639 = vmatprep.subr.bf16.mxu0 0
  %2640 = vmatpush1.bf16.msra.mxu0 0
  %2641 = vmatprep.subr.bf16.mxu0 0
  %2642 = vmatpush1.bf16.msra.mxu0 0
  %2643 = vmatprep.mubr.bf16.mxu0 0
  %2644 = vmatmul.mubr.bf16.gmra.mrb[0].mxu0 %v2527
  %v2645 = vpop.f32.mrb[0].mxu0
  %v2646 = vadd.f32 0.0, %v2645
  %v2647 = vpop.f32.mrb[0].mxu0
  %v2648 = vadd.f32 0.0, %v2647
  %v2649 = vpop.f32.mrb[0].mxu0
  %v2650 = vpop.f32.mrb[0].mxu0
  %2651 = vdwg.mxu0
  %v2652 = vadd.f32 %v2518, %v2564
  %v2653 = vadd.f32 %v2519, %v2566
  %v2654 = vadd.f32 %v2520, %v2605
  %v2655 = vadd.f32 %v2521, %v2607
  %v2656 = vadd.f32 %v2522, %v2646
  %v2657 = vadd.f32 %v2523, %v2648
  %s2658 = scalar_lea.vmem %s5, 10
  %v2659 = vld [vmem:[%s2658] sm:$0x3]
  %2660 = vrot.lane.b32.xlu0 %v2353, 127
  %v2661 = vpop.permute.xlu0 %2660
  %2662 = vrot.lane.b32.xlu0 %v2354, 127
  %v2663 = vpop.permute.xlu0 %2662
  %2664 = vrot.lane.b32.xlu0 %v2355, 127
  %v2665 = vpop.permute.xlu0 %2664
  %2666 = vrot.lane.b32.xlu0 %v2356, 127
  %v2667 = vpop.permute.xlu0 %2666
  %2668 = vrot.lane.b32.xlu0 %v2357, 127
  %v2669 = vpop.permute.xlu0 %2668
  %2670 = vrot.lane.b32.xlu0 %v2358, 127
  %v2671 = vpop.permute.xlu0 %2670
  %v2672 = vsel %vm1026, %v2661, %v2663
  %v2673 = vsel %vm1026, %v2663, %v2665
  %v2674 = vsel %vm1026, %v2665, %v2667
  %v2675 = vsel %vm1026, %v2667, %v2669
  %v2676 = vsel %vm1026, %v2669, %v2671
  %v2684 = vsel %vm1917, %v2659, 0
  %2686 = vmatprep.subr.bf16.mxu0 %v2673
  %2687 = vmatpush1.bf16.msra.mxu0 %v2672
  %2688 = vmatprep.subr.bf16.mxu0 0
  %2689 = vmatpush1.bf16.msra.mxu0 0
  %2690 = vmatprep.subr.bf16.mxu0 0
  %2691 = vmatpush1.bf16.msra.mxu0 0
  %2692 = vmatprep.subr.bf16.mxu0 0
  %2693 = vmatpush1.bf16.msra.mxu0 0
  %2694 = vmatprep.subr.bf16.mxu0 0
  %2695 = vmatpush1.bf16.msra.mxu0 0
  %2696 = vmatprep.subr.bf16.mxu0 0
  %2697 = vmatpush1.bf16.msra.mxu0 0
  %2698 = vmatprep.subr.bf16.mxu0 0
  %2699 = vmatpush1.bf16.msra.mxu0 0
  %2700 = vmatprep.subr.bf16.mxu0 0
  %2701 = vmatpush1.bf16.msra.mxu0 0
  %2702 = vmatprep.subr.bf16.mxu0 0
  %2703 = vmatpush1.bf16.msra.mxu0 0
  %2704 = vmatprep.subr.bf16.mxu0 0
  %2705 = vmatpush1.bf16.msra.mxu0 0
  %2706 = vmatprep.subr.bf16.mxu0 0
  %2707 = vmatpush1.bf16.msra.mxu0 0
  %2708 = vmatprep.subr.bf16.mxu0 0
  %2709 = vmatpush1.bf16.msra.mxu0 0
  %2710 = vmatprep.subr.bf16.mxu0 0
  %2711 = vmatpush1.bf16.msra.mxu0 0
  %2712 = vmatprep.subr.bf16.mxu0 0
  %2713 = vmatpush1.bf16.msra.mxu0 0
  %2714 = vmatprep.subr.bf16.mxu0 0
  %2715 = vmatpush1.bf16.msra.mxu0 0
  %2716 = vmatprep.subr.bf16.mxu0 0
  %2717 = vmatpush1.bf16.msra.mxu0 0
  %2718 = vmatprep.mubr.bf16.mxu0 0
  %2719 = vmatmul.mubr.bf16.gmra.mrb[0].mxu0 %v2684
  %v2720 = vpop.f32.mrb[0].mxu0
  %v2721 = vadd.f32 0.0, %v2720
  %v2722 = vpop.f32.mrb[0].mxu0
  %v2723 = vadd.f32 0.0, %v2722
  %v2724 = vpop.f32.mrb[0].mxu0
  %v2725 = vpop.f32.mrb[0].mxu0
  %2726 = vdwg.mxu0
  %2727 = vmatprep.subr.bf16.mxu0 %v2675
  %2728 = vmatpush1.bf16.msra.mxu0 %v2674
  %2729 = vmatprep.subr.bf16.mxu0 0
  %2730 = vmatpush1.bf16.msra.mxu0 0
  %2731 = vmatprep.subr.bf16.mxu0 0
  %2732 = vmatpush1.bf16.msra.mxu0 0
  %2733 = vmatprep.subr.bf16.mxu0 0
  %2734 = vmatpush1.bf16.msra.mxu0 0
  %2735 = vmatprep.subr.bf16.mxu0 0
  %2736 = vmatpush1.bf16.msra.mxu0 0
  %2737 = vmatprep.subr.bf16.mxu0 0
  %2738 = vmatpush1.bf16.msra.mxu0 0
  %2739 = vmatprep.subr.bf16.mxu0 0
  %2740 = vmatpush1.bf16.msra.mxu0 0
  %2741 = vmatprep.subr.bf16.mxu0 0
  %2742 = vmatpush1.bf16.msra.mxu0 0
  %2743 = vmatprep.subr.bf16.mxu0 0
  %2744 = vmatpush1.bf16.msra.mxu0 0
  %2745 = vmatprep.subr.bf16.mxu0 0
  %2746 = vmatpush1.bf16.msra.mxu0 0
  %2747 = vmatprep.subr.bf16.mxu0 0
  %2748 = vmatpush1.bf16.msra.mxu0 0
  %2749 = vmatprep.subr.bf16.mxu0 0
  %2750 = vmatpush1.bf16.msra.mxu0 0
  %2751 = vmatprep.subr.bf16.mxu0 0
  %2752 = vmatpush1.bf16.msra.mxu0 0
  %2753 = vmatprep.subr.bf16.mxu0 0
  %2754 = vmatpush1.bf16.msra.mxu0 0
  %2755 = vmatprep.subr.bf16.mxu0 0
  %2756 = vmatpush1.bf16.msra.mxu0 0
  %2757 = vmatprep.subr.bf16.mxu0 0
  %2758 = vmatpush1.bf16.msra.mxu0 0
  %2759 = vmatprep.mubr.bf16.mxu0 0
  %2760 = vmatmul.mubr.bf16.gmra.mrb[0].mxu0 %v2684
  %v2761 = vpop.f32.mrb[0].mxu0
  %v2762 = vadd.f32 0.0, %v2761
  %v2763 = vpop.f32.mrb[0].mxu0
  %v2764 = vadd.f32 0.0, %v2763
  %v2765 = vpop.f32.mrb[0].mxu0
  %v2766 = vpop.f32.mrb[0].mxu0
  %2767 = vdwg.mxu0
  %2768 = vmatprep.subr.bf16.mxu0 %v2671
  %2769 = vmatpush1.bf16.msra.mxu0 %v2676
  %2770 = vmatprep.subr.bf16.mxu0 0
  %2771 = vmatpush1.bf16.msra.mxu0 0
  %2772 = vmatprep.subr.bf16.mxu0 0
  %2773 = vmatpush1.bf16.msra.mxu0 0
  %2774 = vmatprep.subr.bf16.mxu0 0
  %2775 = vmatpush1.bf16.msra.mxu0 0
  %2776 = vmatprep.subr.bf16.mxu0 0
  %2777 = vmatpush1.bf16.msra.mxu0 0
  %2778 = vmatprep.subr.bf16.mxu0 0
  %2779 = vmatpush1.bf16.msra.mxu0 0
  %2780 = vmatprep.subr.bf16.mxu0 0
  %2781 = vmatpush1.bf16.msra.mxu0 0
  %2782 = vmatprep.subr.bf16.mxu0 0
  %2783 = vmatpush1.bf16.msra.mxu0 0
  %2784 = vmatprep.subr.bf16.mxu0 0
  %2785 = vmatpush1.bf16.msra.mxu0 0
  %2786 = vmatprep.subr.bf16.mxu0 0
  %2787 = vmatpush1.bf16.msra.mxu0 0
  %2788 = vmatprep.subr.bf16.mxu0 0
  %2789 = vmatpush1.bf16.msra.mxu0 0
  %2790 = vmatprep.subr.bf16.mxu0 0
  %2791 = vmatpush1.bf16.msra.mxu0 0
  %2792 = vmatprep.subr.bf16.mxu0 0
  %2793 = vmatpush1.bf16.msra.mxu0 0
  %2794 = vmatprep.subr.bf16.mxu0 0
  %2795 = vmatpush1.bf16.msra.mxu0 0
  %2796 = vmatprep.subr.bf16.mxu0 0
  %2797 = vmatpush1.bf16.msra.mxu0 0
  %2798 = vmatprep.subr.bf16.mxu0 0
  %2799 = vmatpush1.bf16.msra.mxu0 0
  %2800 = vmatprep.mubr.bf16.mxu0 0
  %2801 = vmatmul.mubr.bf16.gmra.mrb[0].mxu0 %v2684
  %v2802 = vpop.f32.mrb[0].mxu0
  %v2803 = vadd.f32 0.0, %v2802
  %v2804 = vpop.f32.mrb[0].mxu0
  %v2805 = vadd.f32 0.0, %v2804
  %v2806 = vpop.f32.mrb[0].mxu0
  %v2807 = vpop.f32.mrb[0].mxu0
  %2808 = vdwg.mxu0
  %v2809 = vadd.f32 %v2652, %v2721
  %v2810 = vadd.f32 %v2653, %v2723
  %v2811 = vadd.f32 %v2654, %v2762
  %v2812 = vadd.f32 %v2655, %v2764
  %v2813 = vadd.f32 %v2656, %v2803
  %v2814 = vadd.f32 %v2657, %v2805
  %s2815 = scalar_lea.vmem %s5, 12
  %v2816 = vld [vmem:[%s2815] sm:$0x3]
  %2817 = vrot.lane.b32.xlu0 %v2353, 111
  %v2818 = vpop.permute.xlu0 %2817
  %2819 = vrot.lane.b32.xlu0 %v2354, 111
  %v2820 = vpop.permute.xlu0 %2819
  %2821 = vrot.lane.b32.xlu0 %v2355, 111
  %v2822 = vpop.permute.xlu0 %2821
  %2823 = vrot.lane.b32.xlu0 %v2356, 111
  %v2824 = vpop.permute.xlu0 %2823
  %2825 = vrot.lane.b32.xlu0 %v2357, 111
  %v2826 = vpop.permute.xlu0 %2825
  %2827 = vrot.lane.b32.xlu0 %v2358, 111
  %v2828 = vpop.permute.xlu0 %2827
  %v2829 = vsel %vm1225, %v2818, %v2820
  %v2830 = vsel %vm1225, %v2820, %v2822
  %v2831 = vsel %vm1225, %v2822, %v2824
  %v2832 = vsel %vm1225, %v2824, %v2826
  %v2833 = vsel %vm1225, %v2826, %v2828
  %v2841 = vsel %vm1917, %v2816, 0
  %2843 = vmatprep.subr.bf16.mxu0 %v2830
  %2844 = vmatpush1.bf16.msra.mxu0 %v2829
  %2845 = vmatprep.subr.bf16.mxu0 0
  %2846 = vmatpush1.bf16.msra.mxu0 0
  %2847 = vmatprep.subr.bf16.mxu0 0
  %2848 = vmatpush1.bf16.msra.mxu0 0
  %2849 = vmatprep.subr.bf16.mxu0 0
  %2850 = vmatpush1.bf16.msra.mxu0 0
  %2851 = vmatprep.subr.bf16.mxu0 0
  %2852 = vmatpush1.bf16.msra.mxu0 0
  %2853 = vmatprep.subr.bf16.mxu0 0
  %2854 = vmatpush1.bf16.msra.mxu0 0
  %2855 = vmatprep.subr.bf16.mxu0 0
  %2856 = vmatpush1.bf16.msra.mxu0 0
  %2857 = vmatprep.subr.bf16.mxu0 0
  %2858 = vmatpush1.bf16.msra.mxu0 0
  %2859 = vmatprep.subr.bf16.mxu0 0
  %2860 = vmatpush1.bf16.msra.mxu0 0
  %2861 = vmatprep.subr.bf16.mxu0 0
  %2862 = vmatpush1.bf16.msra.mxu0 0
  %2863 = vmatprep.subr.bf16.mxu0 0
  %2864 = vmatpush1.bf16.msra.mxu0 0
  %2865 = vmatprep.subr.bf16.mxu0 0
  %2866 = vmatpush1.bf16.msra.mxu0 0
  %2867 = vmatprep.subr.bf16.mxu0 0
  %2868 = vmatpush1.bf16.msra.mxu0 0
  %2869 = vmatprep.subr.bf16.mxu0 0
  %2870 = vmatpush1.bf16.msra.mxu0 0
  %2871 = vmatprep.subr.bf16.mxu0 0
  %2872 = vmatpush1.bf16.msra.mxu0 0
  %2873 = vmatprep.subr.bf16.mxu0 0
  %2874 = vmatpush1.bf16.msra.mxu0 0
  %2875 = vmatprep.mubr.bf16.mxu0 0
  %2876 = vmatmul.mubr.bf16.gmra.mrb[0].mxu0 %v2841
  %v2877 = vpop.f32.mrb[0].mxu0
  %v2878 = vadd.f32 0.0, %v2877
  %v2879 = vpop.f32.mrb[0].mxu0
  %v2880 = vadd.f32 0.0, %v2879
  %v2881 = vpop.f32.mrb[0].mxu0
  %v2882 = vpop.f32.mrb[0].mxu0
  %2883 = vdwg.mxu0
  %2884 = vmatprep.subr.bf16.mxu0 %v2832
  %2885 = vmatpush1.bf16.msra.mxu0 %v2831
  %2886 = vmatprep.subr.bf16.mxu0 0
  %2887 = vmatpush1.bf16.msra.mxu0 0
  %2888 = vmatprep.subr.bf16.mxu0 0
  %2889 = vmatpush1.bf16.msra.mxu0 0
  %2890 = vmatprep.subr.bf16.mxu0 0
  %2891 = vmatpush1.bf16.msra.mxu0 0
  %2892 = vmatprep.subr.bf16.mxu0 0
  %2893 = vmatpush1.bf16.msra.mxu0 0
  %2894 = vmatprep.subr.bf16.mxu0 0
  %2895 = vmatpush1.bf16.msra.mxu0 0
  %2896 = vmatprep.subr.bf16.mxu0 0
  %2897 = vmatpush1.bf16.msra.mxu0 0
  %2898 = vmatprep.subr.bf16.mxu0 0
  %2899 = vmatpush1.bf16.msra.mxu0 0
  %2900 = vmatprep.subr.bf16.mxu0 0
  %2901 = vmatpush1.bf16.msra.mxu0 0
  %2902 = vmatprep.subr.bf16.mxu0 0
  %2903 = vmatpush1.bf16.msra.mxu0 0
  %2904 = vmatprep.subr.bf16.mxu0 0
  %2905 = vmatpush1.bf16.msra.mxu0 0
  %2906 = vmatprep.subr.bf16.mxu0 0
  %2907 = vmatpush1.bf16.msra.mxu0 0
  %2908 = vmatprep.subr.bf16.mxu0 0
  %2909 = vmatpush1.bf16.msra.mxu0 0
  %2910 = vmatprep.subr.bf16.mxu0 0
  %2911 = vmatpush1.bf16.msra.mxu0 0
  %2912 = vmatprep.subr.bf16.mxu0 0
  %2913 = vmatpush1.bf16.msra.mxu0 0
  %2914 = vmatprep.subr.bf16.mxu0 0
  %2915 = vmatpush1.bf16.msra.mxu0 0
  %2916 = vmatprep.mubr.bf16.mxu0 0
  %2917 = vmatmul.mubr.bf16.gmra.mrb[0].mxu0 %v2841
  %v2918 = vpop.f32.mrb[0].mxu0
  %v2919 = vadd.f32 0.0, %v2918
  %v2920 = vpop.f32.mrb[0].mxu0
  %v2921 = vadd.f32 0.0, %v2920
  %v2922 = vpop.f32.mrb[0].mxu0
  %v2923 = vpop.f32.mrb[0].mxu0
  %2924 = vdwg.mxu0
  %2925 = vmatprep.subr.bf16.mxu0 %v2828
  %2926 = vmatpush1.bf16.msra.mxu0 %v2833
  %2927 = vmatprep.subr.bf16.mxu0 0
  %2928 = vmatpush1.bf16.msra.mxu0 0
  %2929 = vmatprep.subr.bf16.mxu0 0
  %2930 = vmatpush1.bf16.msra.mxu0 0
  %2931 = vmatprep.subr.bf16.mxu0 0
  %2932 = vmatpush1.bf16.msra.mxu0 0
  %2933 = vmatprep.subr.bf16.mxu0 0
  %2934 = vmatpush1.bf16.msra.mxu0 0
  %2935 = vmatprep.subr.bf16.mxu0 0
  %2936 = vmatpush1.bf16.msra.mxu0 0
  %2937 = vmatprep.subr.bf16.mxu0 0
  %2938 = vmatpush1.bf16.msra.mxu0 0
  %2939 = vmatprep.subr.bf16.mxu0 0
  %2940 = vmatpush1.bf16.msra.mxu0 0
  %2941 = vmatprep.subr.bf16.mxu0 0
  %2942 = vmatpush1.bf16.msra.mxu0 0
  %2943 = vmatprep.subr.bf16.mxu0 0
  %2944 = vmatpush1.bf16.msra.mxu0 0
  %2945 = vmatprep.subr.bf16.mxu0 0
  %2946 = vmatpush1.bf16.msra.mxu0 0
  %2947 = vmatprep.subr.bf16.mxu0 0
  %2948 = vmatpush1.bf16.msra.mxu0 0
  %2949 = vmatprep.subr.bf16.mxu0 0
  %2950 = vmatpush1.bf16.msra.mxu0 0
  %2951 = vmatprep.subr.bf16.mxu0 0
  %2952 = vmatpush1.bf16.msra.mxu0 0
  %2953 = vmatprep.subr.bf16.mxu0 0
  %2954 = vmatpush1.bf16.msra.mxu0 0
  %2955 = vmatprep.subr.bf16.mxu0 0
  %2956 = vmatpush1.bf16.msra.mxu0 0
  %2957 = vmatprep.mubr.bf16.mxu0 0
  %2958 = vmatmul.mubr.bf16.gmra.mrb[0].mxu0 %v2841
  %v2959 = vpop.f32.mrb[0].mxu0
  %v2960 = vadd.f32 0.0, %v2959
  %v2961 = vpop.f32.mrb[0].mxu0
  %v2962 = vadd.f32 0.0, %v2961
  %v2963 = vpop.f32.mrb[0].mxu0
  %v2964 = vpop.f32.mrb[0].mxu0
  %2965 = vdwg.mxu0
  %v2966 = vadd.f32 %v2809, %v2878
  %v2967 = vadd.f32 %v2810, %v2880
  %v2968 = vadd.f32 %v2811, %v2919
  %v2969 = vadd.f32 %v2812, %v2921
  %v2970 = vadd.f32 %v2813, %v2960
  %v2971 = vadd.f32 %v2814, %v2962
  %s2972 = scalar_lea.vmem %s5, 14
  %v2973 = vld [vmem:[%s2972] sm:$0x3]
  %2974 = vrot.lane.b32.xlu0 %v2353, 110
  %v2975 = vpop.permute.xlu0 %2974
  %2976 = vrot.lane.b32.xlu0 %v2354, 110
  %v2977 = vpop.permute.xlu0 %2976
  %2978 = vrot.lane.b32.xlu0 %v2355, 110
  %v2979 = vpop.permute.xlu0 %2978
  %2980 = vrot.lane.b32.xlu0 %v2356, 110
  %v2981 = vpop.permute.xlu0 %2980
  %2982 = vrot.lane.b32.xlu0 %v2357, 110
  %v2983 = vpop.permute.xlu0 %2982
  %2984 = vrot.lane.b32.xlu0 %v2358, 110
  %v2985 = vpop.permute.xlu0 %2984
  %v2986 = vsel %vm1424, %v2975, %v2977
  %v2987 = vsel %vm1424, %v2977, %v2979
  %v2988 = vsel %vm1424, %v2979, %v2981
  %v2989 = vsel %vm1424, %v2981, %v2983
  %v2990 = vsel %vm1424, %v2983, %v2985
  %v2998 = vsel %vm1917, %v2973, 0
  %3000 = vmatprep.subr.bf16.mxu0 %v2987
  %3001 = vmatpush1.bf16.msra.mxu0 %v2986
  %3002 = vmatprep.subr.bf16.mxu0 0
  %3003 = vmatpush1.bf16.msra.mxu0 0
  %3004 = vmatprep.subr.bf16.mxu0 0
  %3005 = vmatpush1.bf16.msra.mxu0 0
  %3006 = vmatprep.subr.bf16.mxu0 0
  %3007 = vmatpush1.bf16.msra.mxu0 0
  %3008 = vmatprep.subr.bf16.mxu0 0
  %3009 = vmatpush1.bf16.msra.mxu0 0
  %3010 = vmatprep.subr.bf16.mxu0 0
  %3011 = vmatpush1.bf16.msra.mxu0 0
  %3012 = vmatprep.subr.bf16.mxu0 0
  %3013 = vmatpush1.bf16.msra.mxu0 0
  %3014 = vmatprep.subr.bf16.mxu0 0
  %3015 = vmatpush1.bf16.msra.mxu0 0
  %3016 = vmatprep.subr.bf16.mxu0 0
  %3017 = vmatpush1.bf16.msra.mxu0 0
  %3018 = vmatprep.subr.bf16.mxu0 0
  %3019 = vmatpush1.bf16.msra.mxu0 0
  %3020 = vmatprep.subr.bf16.mxu0 0
  %3021 = vmatpush1.bf16.msra.mxu0 0
  %3022 = vmatprep.subr.bf16.mxu0 0
  %3023 = vmatpush1.bf16.msra.mxu0 0
  %3024 = vmatprep.subr.bf16.mxu0 0
  %3025 = vmatpush1.bf16.msra.mxu0 0
  %3026 = vmatprep.subr.bf16.mxu0 0
  %3027 = vmatpush1.bf16.msra.mxu0 0
  %3028 = vmatprep.subr.bf16.mxu0 0
  %3029 = vmatpush1.bf16.msra.mxu0 0
  %3030 = vmatprep.subr.bf16.mxu0 0
  %3031 = vmatpush1.bf16.msra.mxu0 0
  %3032 = vmatprep.mubr.bf16.mxu0 0
  %3033 = vmatmul.mubr.bf16.gmra.mrb[0].mxu0 %v2998
  %v3034 = vpop.f32.mrb[0].mxu0
  %v3035 = vadd.f32 0.0, %v3034
  %v3036 = vpop.f32.mrb[0].mxu0
  %v3037 = vadd.f32 0.0, %v3036
  %v3038 = vpop.f32.mrb[0].mxu0
  %v3039 = vpop.f32.mrb[0].mxu0
  %3040 = vdwg.mxu0
  %3041 = vmatprep.subr.bf16.mxu0 %v2989
  %3042 = vmatpush1.bf16.msra.mxu0 %v2988
  %3043 = vmatprep.subr.bf16.mxu0 0
  %3044 = vmatpush1.bf16.msra.mxu0 0
  %3045 = vmatprep.subr.bf16.mxu0 0
  %3046 = vmatpush1.bf16.msra.mxu0 0
  %3047 = vmatprep.subr.bf16.mxu0 0
  %3048 = vmatpush1.bf16.msra.mxu0 0
  %3049 = vmatprep.subr.bf16.mxu0 0
  %3050 = vmatpush1.bf16.msra.mxu0 0
  %3051 = vmatprep.subr.bf16.mxu0 0
  %3052 = vmatpush1.bf16.msra.mxu0 0
  %3053 = vmatprep.subr.bf16.mxu0 0
  %3054 = vmatpush1.bf16.msra.mxu0 0
  %3055 = vmatprep.subr.bf16.mxu0 0
  %3056 = vmatpush1.bf16.msra.mxu0 0
  %3057 = vmatprep.subr.bf16.mxu0 0
  %3058 = vmatpush1.bf16.msra.mxu0 0
  %3059 = vmatprep.subr.bf16.mxu0 0
  %3060 = vmatpush1.bf16.msra.mxu0 0
  %3061 = vmatprep.subr.bf16.mxu0 0
  %3062 = vmatpush1.bf16.msra.mxu0 0
  %3063 = vmatprep.subr.bf16.mxu0 0
  %3064 = vmatpush1.bf16.msra.mxu0 0
  %3065 = vmatprep.subr.bf16.mxu0 0
  %3066 = vmatpush1.bf16.msra.mxu0 0
  %3067 = vmatprep.subr.bf16.mxu0 0
  %3068 = vmatpush1.bf16.msra.mxu0 0
  %3069 = vmatprep.subr.bf16.mxu0 0
  %3070 = vmatpush1.bf16.msra.mxu0 0
  %3071 = vmatprep.subr.bf16.mxu0 0
  %3072 = vmatpush1.bf16.msra.mxu0 0
  %3073 = vmatprep.mubr.bf16.mxu0 0
  %3074 = vmatmul.mubr.bf16.gmra.mrb[0].mxu0 %v2998
  %v3075 = vpop.f32.mrb[0].mxu0
  %v3076 = vadd.f32 0.0, %v3075
  %v3077 = vpop.f32.mrb[0].mxu0
  %v3078 = vadd.f32 0.0, %v3077
  %v3079 = vpop.f32.mrb[0].mxu0
  %v3080 = vpop.f32.mrb[0].mxu0
  %3081 = vdwg.mxu0
  %3082 = vmatprep.subr.bf16.mxu0 %v2985
  %3083 = vmatpush1.bf16.msra.mxu0 %v2990
  %3084 = vmatprep.subr.bf16.mxu0 0
  %3085 = vmatpush1.bf16.msra.mxu0 0
  %3086 = vmatprep.subr.bf16.mxu0 0
  %3087 = vmatpush1.bf16.msra.mxu0 0
  %3088 = vmatprep.subr.bf16.mxu0 0
  %3089 = vmatpush1.bf16.msra.mxu0 0
  %3090 = vmatprep.subr.bf16.mxu0 0
  %3091 = vmatpush1.bf16.msra.mxu0 0
  %3092 = vmatprep.subr.bf16.mxu0 0
  %3093 = vmatpush1.bf16.msra.mxu0 0
  %3094 = vmatprep.subr.bf16.mxu0 0
  %3095 = vmatpush1.bf16.msra.mxu0 0
  %3096 = vmatprep.subr.bf16.mxu0 0
  %3097 = vmatpush1.bf16.msra.mxu0 0
  %3098 = vmatprep.subr.bf16.mxu0 0
  %3099 = vmatpush1.bf16.msra.mxu0 0
  %3100 = vmatprep.subr.bf16.mxu0 0
  %3101 = vmatpush1.bf16.msra.mxu0 0
  %3102 = vmatprep.subr.bf16.mxu0 0
  %3103 = vmatpush1.bf16.msra.mxu0 0
  %3104 = vmatprep.subr.bf16.mxu0 0
  %3105 = vmatpush1.bf16.msra.mxu0 0
  %3106 = vmatprep.subr.bf16.mxu0 0
  %3107 = vmatpush1.bf16.msra.mxu0 0
  %3108 = vmatprep.subr.bf16.mxu0 0
  %3109 = vmatpush1.bf16.msra.mxu0 0
  %3110 = vmatprep.subr.bf16.mxu0 0
  %3111 = vmatpush1.bf16.msra.mxu0 0
  %3112 = vmatprep.subr.bf16.mxu0 0
  %3113 = vmatpush1.bf16.msra.mxu0 0
  %3114 = vmatprep.mubr.bf16.mxu0 0
  %3115 = vmatmul.mubr.bf16.gmra.mrb[0].mxu0 %v2998
  %v3116 = vpop.f32.mrb[0].mxu0
  %v3117 = vadd.f32 0.0, %v3116
  %v3118 = vpop.f32.mrb[0].mxu0
  %v3119 = vadd.f32 0.0, %v3118
  %v3120 = vpop.f32.mrb[0].mxu0
  %v3121 = vpop.f32.mrb[0].mxu0
  %3122 = vdwg.mxu0
  %v3123 = vadd.f32 %v2966, %v3035
  %v3124 = vadd.f32 %v2967, %v3037
  %v3125 = vadd.f32 %v2968, %v3076
  %v3126 = vadd.f32 %v2969, %v3078
  %v3127 = vadd.f32 %v2970, %v3117
  %v3128 = vadd.f32 %v2971, %v3119
  %s3129 = scalar_lea.vmem %s5, 16
  %v3130 = vld [vmem:[%s3129] sm:$0x3]
  %3131 = vrot.lane.b32.xlu0 %v2353, 109
  %v3132 = vpop.permute.xlu0 %3131
  %3133 = vrot.lane.b32.xlu0 %v2354, 109
  %v3134 = vpop.permute.xlu0 %3133
  %3135 = vrot.lane.b32.xlu0 %v2355, 109
  %v3136 = vpop.permute.xlu0 %3135
  %3137 = vrot.lane.b32.xlu0 %v2356, 109
  %v3138 = vpop.permute.xlu0 %3137
  %3139 = vrot.lane.b32.xlu0 %v2357, 109
  %v3140 = vpop.permute.xlu0 %3139
  %3141 = vrot.lane.b32.xlu0 %v2358, 109
  %v3142 = vpop.permute.xlu0 %3141
  %v3143 = vsel %vm1623, %v3132, %v3134
  %v3144 = vsel %vm1623, %v3134, %v3136
  %v3145 = vsel %vm1623, %v3136, %v3138
  %v3146 = vsel %vm1623, %v3138, %v3140
  %v3147 = vsel %vm1623, %v3140, %v3142
  %v3155 = vsel %vm1917, %v3130, 0
  %3157 = vmatprep.subr.bf16.mxu0 %v3144
  %3158 = vmatpush1.bf16.msra.mxu0 %v3143
  %3159 = vmatprep.subr.bf16.mxu0 0
  %3160 = vmatpush1.bf16.msra.mxu0 0
  %3161 = vmatprep.subr.bf16.mxu0 0
  %3162 = vmatpush1.bf16.msra.mxu0 0
  %3163 = vmatprep.subr.bf16.mxu0 0
  %3164 = vmatpush1.bf16.msra.mxu0 0
  %3165 = vmatprep.subr.bf16.mxu0 0
  %3166 = vmatpush1.bf16.msra.mxu0 0
  %3167 = vmatprep.subr.bf16.mxu0 0
  %3168 = vmatpush1.bf16.msra.mxu0 0
  %3169 = vmatprep.subr.bf16.mxu0 0
  %3170 = vmatpush1.bf16.msra.mxu0 0
  %3171 = vmatprep.subr.bf16.mxu0 0
  %3172 = vmatpush1.bf16.msra.mxu0 0
  %3173 = vmatprep.subr.bf16.mxu0 0
  %3174 = vmatpush1.bf16.msra.mxu0 0
  %3175 = vmatprep.subr.bf16.mxu0 0
  %3176 = vmatpush1.bf16.msra.mxu0 0
  %3177 = vmatprep.subr.bf16.mxu0 0
  %3178 = vmatpush1.bf16.msra.mxu0 0
  %3179 = vmatprep.subr.bf16.mxu0 0
  %3180 = vmatpush1.bf16.msra.mxu0 0
  %3181 = vmatprep.subr.bf16.mxu0 0
  %3182 = vmatpush1.bf16.msra.mxu0 0
  %3183 = vmatprep.subr.bf16.mxu0 0
  %3184 = vmatpush1.bf16.msra.mxu0 0
  %3185 = vmatprep.subr.bf16.mxu0 0
  %3186 = vmatpush1.bf16.msra.mxu0 0
  %3187 = vmatprep.subr.bf16.mxu0 0
  %3188 = vmatpush1.bf16.msra.mxu0 0
  %3189 = vmatprep.mubr.bf16.mxu0 0
  %3190 = vmatmul.mubr.bf16.gmra.mrb[0].mxu0 %v3155
  %v3191 = vpop.f32.mrb[0].mxu0
  %v3192 = vadd.f32 0.0, %v3191
  %v3193 = vpop.f32.mrb[0].mxu0
  %v3194 = vadd.f32 0.0, %v3193
  %v3195 = vpop.f32.mrb[0].mxu0
  %v3196 = vpop.f32.mrb[0].mxu0
  %3197 = vdwg.mxu0
  %3198 = vmatprep.subr.bf16.mxu0 %v3146
  %3199 = vmatpush1.bf16.msra.mxu0 %v3145
  %3200 = vmatprep.subr.bf16.mxu0 0
  %3201 = vmatpush1.bf16.msra.mxu0 0
  %3202 = vmatprep.subr.bf16.mxu0 0
  %3203 = vmatpush1.bf16.msra.mxu0 0
  %3204 = vmatprep.subr.bf16.mxu0 0
  %3205 = vmatpush1.bf16.msra.mxu0 0
  %3206 = vmatprep.subr.bf16.mxu0 0
  %3207 = vmatpush1.bf16.msra.mxu0 0
  %3208 = vmatprep.subr.bf16.mxu0 0
  %3209 = vmatpush1.bf16.msra.mxu0 0
  %3210 = vmatprep.subr.bf16.mxu0 0
  %3211 = vmatpush1.bf16.msra.mxu0 0
  %3212 = vmatprep.subr.bf16.mxu0 0
  %3213 = vmatpush1.bf16.msra.mxu0 0
  %3214 = vmatprep.subr.bf16.mxu0 0
  %3215 = vmatpush1.bf16.msra.mxu0 0
  %3216 = vmatprep.subr.bf16.mxu0 0
  %3217 = vmatpush1.bf16.msra.mxu0 0
  %3218 = vmatprep.subr.bf16.mxu0 0
  %3219 = vmatpush1.bf16.msra.mxu0 0
  %3220 = vmatprep.subr.bf16.mxu0 0
  %3221 = vmatpush1.bf16.msra.mxu0 0
  %3222 = vmatprep.subr.bf16.mxu0 0
  %3223 = vmatpush1.bf16.msra.mxu0 0
  %3224 = vmatprep.subr.bf16.mxu0 0
  %3225 = vmatpush1.bf16.msra.mxu0 0
  %3226 = vmatprep.subr.bf16.mxu0 0
  %3227 = vmatpush1.bf16.msra.mxu0 0
  %3228 = vmatprep.subr.bf16.mxu0 0
  %3229 = vmatpush1.bf16.msra.mxu0 0
  %3230 = vmatprep.mubr.bf16.mxu0 0
  %3231 = vmatmul.mubr.bf16.gmra.mrb[0].mxu0 %v3155
  %v3232 = vpop.f32.mrb[0].mxu0
  %v3233 = vadd.f32 0.0, %v3232
  %v3234 = vpop.f32.mrb[0].mxu0
  %v3235 = vadd.f32 0.0, %v3234
  %v3236 = vpop.f32.mrb[0].mxu0
  %v3237 = vpop.f32.mrb[0].mxu0
  %3238 = vdwg.mxu0
  %3239 = vmatprep.subr.bf16.mxu0 %v3142
  %3240 = vmatpush1.bf16.msra.mxu0 %v3147
  %3241 = vmatprep.subr.bf16.mxu0 0
  %3242 = vmatpush1.bf16.msra.mxu0 0
  %3243 = vmatprep.subr.bf16.mxu0 0
  %3244 = vmatpush1.bf16.msra.mxu0 0
  %3245 = vmatprep.subr.bf16.mxu0 0
  %3246 = vmatpush1.bf16.msra.mxu0 0
  %3247 = vmatprep.subr.bf16.mxu0 0
  %3248 = vmatpush1.bf16.msra.mxu0 0
  %3249 = vmatprep.subr.bf16.mxu0 0
  %3250 = vmatpush1.bf16.msra.mxu0 0
  %3251 = vmatprep.subr.bf16.mxu0 0
  %3252 = vmatpush1.bf16.msra.mxu0 0
  %3253 = vmatprep.subr.bf16.mxu0 0
  %3254 = vmatpush1.bf16.msra.mxu0 0
  %3255 = vmatprep.subr.bf16.mxu0 0
  %3256 = vmatpush1.bf16.msra.mxu0 0
  %3257 = vmatprep.subr.bf16.mxu0 0
  %3258 = vmatpush1.bf16.msra.mxu0 0
  %3259 = vmatprep.subr.bf16.mxu0 0
  %3260 = vmatpush1.bf16.msra.mxu0 0
  %3261 = vmatprep.subr.bf16.mxu0 0
  %3262 = vmatpush1.bf16.msra.mxu0 0
  %3263 = vmatprep.subr.bf16.mxu0 0
  %3264 = vmatpush1.bf16.msra.mxu0 0
  %3265 = vmatprep.subr.bf16.mxu0 0
  %3266 = vmatpush1.bf16.msra.mxu0 0
  %3267 = vmatprep.subr.bf16.mxu0 0
  %3268 = vmatpush1.bf16.msra.mxu0 0
  %3269 = vmatprep.subr.bf16.mxu0 0
  %3270 = vmatpush1.bf16.msra.mxu0 0
  %3271 = vmatprep.mubr.bf16.mxu0 0
  %3272 = vmatmul.mubr.bf16.gmra.mrb[0].mxu0 %v3155
  %v3273 = vpop.f32.mrb[0].mxu0
  %v3274 = vadd.f32 0.0, %v3273
  %v3275 = vpop.f32.mrb[0].mxu0
  %v3276 = vadd.f32 0.0, %v3275
  %v3277 = vpop.f32.mrb[0].mxu0
  %v3278 = vpop.f32.mrb[0].mxu0
  %3279 = vdwg.mxu0
  %v3280 = vadd.f32 %v3123, %v3192
  %v3281 = vadd.f32 %v3124, %v3194
  %v3282 = vadd.f32 %v3125, %v3233
  %v3283 = vadd.f32 %v3126, %v3235
  %v3284 = vadd.f32 %v3127, %v3274
  %v3285 = vadd.f32 %v3128, %v3276
  %v3286 = vld [vmem:[%s6] sm:$0xf]
  %3288 = vset.pattern.permute.xlu0 0
  %3289 = vperm.xlu0 %3288, %v3286
  %v3290 = vpop.permute.xlu0 %3289
  %v3292 = vadd.f32 %v3280, %v3290
  %v3293 = vadd.f32 %v3281, %v3290
  %v3294 = vadd.f32 %v3282, %v3290
  %v3295 = vadd.f32 %v3283, %v3290
  %v3296 = vadd.f32 %v3284, %v3290
  %v3297 = vadd.f32 %v3285, %v3290
  %v3304 = vcombine.low %v3292, %v3293
  %v3305 = vcombine.low %v3294, %v3295
  %v3306 = vcombine.low %v3296, %v3297
  %3310 = vst [vmem:[%s7] sm:$0xff] %v3304
  %3311 = vst [vmem:[%s7 + $0x8] sm:$0xff] %v3305
  %vm3312 = vcmask 1043456
  %vm3313 = vmor %vm1877, %vm3312
  %3314 = vst.msk [vmem:[%s7 + $0x10] sm:$0xff] %vm3313, %v3306
  // Predicated region
  $region30: #{sd_utnet_forward.3} parent=0 // pred_check
    _
  $region31: #{sd_utnet_forward.3} parent=0 // pred_check_branch
    %3316 = sbr.rel (0) target = $region33
  $region32: #{sd_utnet_forward.3} parent=0 // pred_region
    _
  $region33: #{sd_utnet_forward.3} parent=0 // pred_fallthru
    _
  // Predicated region
  $region34: #{sd_utnet_forward.3} parent=0 // pred_check
    _
  $region35: #{sd_utnet_forward.3} parent=0 // pred_check_branch
    %3318 = sbr.rel (0) target = $region37
  $region36: #{sd_utnet_forward.3} parent=0 // pred_region
    _
  $region37: #{sd_utnet_forward.3} parent=0 // pred_fallthru
    _

// kernel: sd_utnet_forward.2
$region0: #{sd_utnet_forward.2}
  #allocation0 [shape = 'u32[]', space=smem, size = 0x4, offset = 0x4, fixed_abs, tag = 'smem constant byte address 0x4 - core index']
  #allocation1 [shape = 'u32[144,128]{1,0:T(1,128)}', space=vmem, size = 0x12000, scoped, tag = 'internal scratch']
  #allocation2 [shape = 'bf16[16,122]{1,0:T(16,128)(2,1)}', space=vmem, size = 0x1000, scoped, tag = 'scratch operand']
  #allocation3 [shape = 'bf16[32,50]{1,0:T(16,128)(2,1)}', space=vmem, size = 0x2000, scoped, tag = 'scratch operand']
  #allocation4 [shape = 'bf16[64,26]{1,0:T(16,128)(2,1)}', space=vmem, size = 0x4000, scoped, tag = 'scratch operand']
  %s0 = inlined_call_operand.vmem [shape: bf16[2,3,362], index: 0, kind: input, shape index: {}]
  %s1 = inlined_call_operand.vmem [shape: bf16[9,16,3], index: 1, kind: input, shape index: {}]
  %s2 = inlined_call_operand.vmem [shape: f32[16,1], index: 2, kind: input, shape index: {}]
  %s3 = inlined_call_operand.vmem [shape: bf16[324,100], index: 3, kind: input, shape index: {}]
  %s4 = inlined_call_operand.vmem [shape: bf16[9,32,16], index: 4, kind: input, shape index: {}]
  %s5 = inlined_call_operand.vmem [shape: f32[32,1], index: 5, kind: input, shape index: {}]
  %s6 = inlined_call_operand.vmem [shape: bf16[100,36], index: 6, kind: input, shape index: {}]
  %s7 = inlined_call_operand.vmem [shape: bf16[9,64,32], index: 7, kind: input, shape index: {}]
  %s8 = inlined_call_operand.vmem [shape: f32[64,1], index: 8, kind: input, shape index: {}]
  %s9 = inlined_call_operand.vmem [shape: bf16[36,16], index: 9, kind: input, shape index: {}]
  %s10 = inlined_call_operand.vmem [shape: bf16[9,128,64], index: 10, kind: input, shape index: {}]
  %s11 = inlined_call_operand.vmem [shape: f32[128,1], index: 11, kind: input, shape index: {}]
  %s12 = inlined_call_operand.vmem [shape: bf16[16,1], index: 12, kind: input, shape index: {}]
  %s13 = inlined_call_operand.vmem [shape: bf16[32,128], index: 13, kind: input, shape index: {}]
  %s14 = inlined_call_operand.vmem [shape: f32[32,1], index: 14, kind: input, shape index: {}]
  %s15 = inlined_call_operand.vmem [shape: bf16[16,32], index: 15, kind: input, shape index: {}]
  %s16 = inlined_call_operand.vmem [shape: f32[16,1], index: 16, kind: input, shape index: {}]
  %s17 = inlined_call_operand.vmem [shape: f32[2,8,1], index: 17, kind: input, shape index: {}]
  %s18 = inlined_call_operand.vmem [shape: f32[2,8,1], index: 18, kind: output, shape index: {0}]
  %s19 = inlined_call_operand.vmem [shape: f32[2,8,1], index: 19, kind: output, shape index: {1}]
  %s20 = inlined_call_operand.vmem [shape: f32[2,8,1], index: 20, kind: output, shape index: {2}]
  %21 = xla_tuple %s18, %s19, %s20
  %s22 = sld [smem:[#allocation0]]
  $region121: #{sd_utnet_forward.2} parent=0
    _
  %s24 = ssub.s32 1, %s22
  %s25 = scalar_select 0, %s24, %s22
  loop: start=0, step=1, limit=4
  $region2: #{sd_utnet_forward.2} parent=0 // loop_pre_header
    _
  $region3: #{sd_utnet_forward.2} parent=0 // loop_header
    %s27 = sphi 0, %s31
    %p28 = scmp.ge.s32.totalorder %s27, 4
    %s37 = sphi 0, %s39
    %s40 = sphi 0, %s37
    %s41 = sphi 0, %s40
    %s57 = sphi 0, %s41
    %s61 = sphi 0, %s61
    %s63 = sphi 0, %s61
    %s64 = sphi 0, %s63
    %s78 = sphi 0, %s64
    %s82 = sphi 0, %s82
    %s84 = sphi 0, %s82
    %s85 = sphi 0, %s84
    %s99 = sphi 0, %s85
    %s103 = sphi 0, %s103
    %s105 = sphi 0, %s103
    %s106 = sphi 0, %s105
    %s120 = sphi 0, %s106
    %s124 = sphi 0, %s124
    %s126 = sphi 0, %s124
    %s127 = sphi 0, %s126
    %s141 = sphi 0, %s127
    %s145 = sphi 0, %s145
    %s147 = sphi 0, %s145
    %s148 = sphi 0, %s147
    %s162 = sphi 0, %s148
    %s166 = sphi 0, %s166
    %s168 = sphi 0, %s166
    %s169 = sphi 0, %s168
    %s183 = sphi 0, %s169
    %s187 = sphi 0, %s187
    %s189 = sphi 0, %s187
    %s190 = sphi 0, %s189
    %s204 = sphi 0, %s190
    %s208 = sphi 0, %s208
    %s210 = sphi 0, %s208
    %s211 = sphi 0, %s210
    %s225 = sphi 0, %s211
    %s229 = sphi 0, %s229
    %s231 = sphi 0, %s229
    %s232 = sphi 0, %s231
    %s246 = sphi 0, %s232
    %s250 = sphi 0, %s250
    %s252 = sphi 0, %s250
    %s253 = sphi 0, %s252
    %s267 = sphi 0, %s253
    %s271 = sphi 0, %s271
    %s273 = sphi 0, %s271
    %s274 = sphi 0, %s273
    %s288 = sphi 0, %s274
    %s292 = sphi 0, %s292
    %s294 = sphi 0, %s292
    %s295 = sphi 0, %s294
    %s309 = sphi 0, %s295
    %s313 = sphi 0, %s313
    %s315 = sphi 0, %s313
    %s316 = sphi 0, %s315
    %s330 = sphi 0, %s316
    %s334 = sphi 0, %s334
    %s336 = sphi 0, %s334
    %s337 = sphi 0, %s336
    %s351 = sphi 0, %s337
    %s355 = sphi 0, %s355
    %s357 = sphi 0, %s355
    %s358 = sphi 0, %s357
    %s372 = sphi 0, %s358
    %s376 = sphi 0, %s376
    %s378 = sphi 0, %s376
    %s379 = sphi 0, %s378
    %s393 = sphi 0, %s379
    %s399 = sphi 0, %s401
    %s402 = sphi 0, %s399
    %s403 = sphi 0, %s402
    %s419 = sphi 0, %s403
    %s425 = sphi 0, %s427
    %s428 = sphi 0, %s425
    %s429 = sphi 0, %s428
    %s445 = sphi 0, %s429
    %s451 = sphi 0, %s453
    %s454 = sphi 0, %s451
    %s455 = sphi 0, %s454
    %s471 = sphi 0, %s455
    %s477 = sphi 0, %s479
    %s480 = sphi 0, %s477
    %s481 = sphi 0, %s480
    %s497 = sphi 0, %s481
  $region4: #{sd_utnet_forward.2} parent=0 // loop_header_branch
    %30 = sbr.rel (%p28) target = $region8
  $region5: #{sd_utnet_forward.2} parent=0 // loop_body
    %s32 = ssub.s32 %s27, 1
    %s33 = ssub.s32 %s27, 2
    %s34 = sadd.s32 %s27, 1
    %s35 = ssub.s32 %s27, %s34
    %p36 = scmp.eq.s32.totalorder %s35, 0
    %s38 = sadd.s32 %s37, 1
    %s39 = scalar_select %p36, %s37, %s38
    %p42 = pneg %p36
    %p43 = scmp.eq.s32.totalorder %s27, 1
    %p44 = por %p42, %p43
    %p45 = scmp.ne.s32.totalorder %s37, %s40
    %p46 = scmp.eq.s32.totalorder %s27, 0
    %p47 = por %p45, %p46
    %p48 = scmp.ne.s32.totalorder %s37, %s40
    %p49 = scmp.eq.s32.totalorder %s32, 1
    %p50 = por %p48, %p49
    %p51 = scmp.ne.s32.totalorder %s40, %s41
    %p52 = scmp.eq.s32.totalorder %s32, 0
    %p53 = por %p51, %p52
    %p54 = scmp.ne.s32.totalorder %s40, %s41
    %p55 = scmp.eq.s32.totalorder %s33, 1
    %p56 = por %p54, %p55
    %p58 = scmp.ne.s32.totalorder %s41, %s57
    %p59 = scmp.eq.s32.totalorder %s33, 0
    %p60 = por %p58, %p59
    %s62 = sadd.s32 %s61, 1
    %p65 = scmp.eq.s32.totalorder %s27, 1
    %p66 = scmp.ne.s32.totalorder %s61, %s63
    %p67 = scmp.eq.s32.totalorder %s27, 0
    %p68 = por %p66, %p67
    %p69 = scmp.ne.s32.totalorder %s61, %s63
    %p70 = scmp.eq.s32.totalorder %s32, 1
    %p71 = por %p69, %p70
    %p72 = scmp.ne.s32.totalorder %s63, %s64
    %p73 = scmp.eq.s32.totalorder %s32, 0
    %p74 = por %p72, %p73
    %p75 = scmp.ne.s32.totalorder %s63, %s64
    %p76 = scmp.eq.s32.totalorder %s33, 1
    %p77 = por %p75, %p76
    %p79 = scmp.ne.s32.totalorder %s64, %s78
    %p80 = scmp.eq.s32.totalorder %s33, 0
    %p81 = por %p79, %p80
    %s83 = sadd.s32 %s82, 1
    %p86 = scmp.eq.s32.totalorder %s27, 1
    %p87 = scmp.ne.s32.totalorder %s82, %s84
    %p88 = scmp.eq.s32.totalorder %s27, 0
    %p89 = por %p87, %p88
    %p90 = scmp.ne.s32.totalorder %s82, %s84
    %p91 = scmp.eq.s32.totalorder %s32, 1
    %p92 = por %p90, %p91
    %p93 = scmp.ne.s32.totalorder %s84, %s85
    %p94 = scmp.eq.s32.totalorder %s32, 0
    %p95 = por %p93, %p94
    %p96 = scmp.ne.s32.totalorder %s84, %s85
    %p97 = scmp.eq.s32.totalorder %s33, 1
    %p98 = por %p96, %p97
    %p100 = scmp.ne.s32.totalorder %s85, %s99
    %p101 = scmp.eq.s32.totalorder %s33, 0
    %p102 = por %p100, %p101
    %s104 = sadd.s32 %s103, 1
    %p107 = scmp.eq.s32.totalorder %s27, 1
    %p108 = scmp.ne.s32.totalorder %s103, %s105
    %p109 = scmp.eq.s32.totalorder %s27, 0
    %p110 = por %p108, %p109
    %p111 = scmp.ne.s32.totalorder %s103, %s105
    %p112 = scmp.eq.s32.totalorder %s32, 1
    %p113 = por %p111, %p112
    %p114 = scmp.ne.s32.totalorder %s105, %s106
    %p115 = scmp.eq.s32.totalorder %s32, 0
    %p116 = por %p114, %p115
    %p117 = scmp.ne.s32.totalorder %s105, %s106
    %p118 = scmp.eq.s32.totalorder %s33, 1
    %p119 = por %p117, %p118
    %p121 = scmp.ne.s32.totalorder %s106, %s120
    %p122 = scmp.eq.s32.totalorder %s33, 0
    %p123 = por %p121, %p122
    %s125 = sadd.s32 %s124, 1
    %p128 = scmp.eq.s32.totalorder %s27, 1
    %p129 = scmp.ne.s32.totalorder %s124, %s126
    %p130 = scmp.eq.s32.totalorder %s27, 0
    %p131 = por %p129, %p130
    %p132 = scmp.ne.s32.totalorder %s124, %s126
    %p133 = scmp.eq.s32.totalorder %s32, 1
    %p134 = por %p132, %p133
    %p135 = scmp.ne.s32.totalorder %s126, %s127
    %p136 = scmp.eq.s32.totalorder %s32, 0
    %p137 = por %p135, %p136
    %p138 = scmp.ne.s32.totalorder %s126, %s127
    %p139 = scmp.eq.s32.totalorder %s33, 1
    %p140 = por %p138, %p139
    %p142 = scmp.ne.s32.totalorder %s127, %s141
    %p143 = scmp.eq.s32.totalorder %s33, 0
    %p144 = por %p142, %p143
    %s146 = sadd.s32 %s145, 1
    %p149 = scmp.eq.s32.totalorder %s27, 1
    %p150 = scmp.ne.s32.totalorder %s145, %s147
    %p151 = scmp.eq.s32.totalorder %s27, 0
    %p152 = por %p150, %p151
    %p153 = scmp.ne.s32.totalorder %s145, %s147
    %p154 = scmp.eq.s32.totalorder %s32, 1
    %p155 = por %p153, %p154
    %p156 = scmp.ne.s32.totalorder %s147, %s148
    %p157 = scmp.eq.s32.totalorder %s32, 0
    %p158 = por %p156, %p157
    %p159 = scmp.ne.s32.totalorder %s147, %s148
    %p160 = scmp.eq.s32.totalorder %s33, 1
    %p161 = por %p159, %p160
    %p163 = scmp.ne.s32.totalorder %s148, %s162
    %p164 = scmp.eq.s32.totalorder %s33, 0
    %p165 = por %p163, %p164
    %s167 = sadd.s32 %s166, 1
    %p170 = scmp.eq.s32.totalorder %s27, 1
    %p171 = scmp.ne.s32.totalorder %s166, %s168
    %p172 = scmp.eq.s32.totalorder %s27, 0
    %p173 = por %p171, %p172
    %p174 = scmp.ne.s32.totalorder %s166, %s168
    %p175 = scmp.eq.s32.totalorder %s32, 1
    %p176 = por %p174, %p175
    %p177 = scmp.ne.s32.totalorder %s168, %s169
    %p178 = scmp.eq.s32.totalorder %s32, 0
    %p179 = por %p177, %p178
    %p180 = scmp.ne.s32.totalorder %s168, %s169
    %p181 = scmp.eq.s32.totalorder %s33, 1
    %p182 = por %p180, %p181
    %p184 = scmp.ne.s32.totalorder %s169, %s183
    %p185 = scmp.eq.s32.totalorder %s33, 0
    %p186 = por %p184, %p185
    %s188 = sadd.s32 %s187, 1
    %p191 = scmp.eq.s32.totalorder %s27, 1
    %p192 = scmp.ne.s32.totalorder %s187, %s189
    %p193 = scmp.eq.s32.totalorder %s27, 0
    %p194 = por %p192, %p193
    %p195 = scmp.ne.s32.totalorder %s187, %s189
    %p196 = scmp.eq.s32.totalorder %s32, 1
    %p197 = por %p195, %p196
    %p198 = scmp.ne.s32.totalorder %s189, %s190
    %p199 = scmp.eq.s32.totalorder %s32, 0
    %p200 = por %p198, %p199
    %p201 = scmp.ne.s32.totalorder %s189, %s190
    %p202 = scmp.eq.s32.totalorder %s33, 1
    %p203 = por %p201, %p202
    %p205 = scmp.ne.s32.totalorder %s190, %s204
    %p206 = scmp.eq.s32.totalorder %s33, 0
    %p207 = por %p205, %p206
    %s209 = sadd.s32 %s208, 1
    %p212 = scmp.eq.s32.totalorder %s27, 1
    %p213 = scmp.ne.s32.totalorder %s208, %s210
    %p214 = scmp.eq.s32.totalorder %s27, 0
    %p215 = por %p213, %p214
    %p216 = scmp.ne.s32.totalorder %s208, %s210
    %p217 = scmp.eq.s32.totalorder %s32, 1
    %p218 = por %p216, %p217
    %p219 = scmp.ne.s32.totalorder %s210, %s211
    %p220 = scmp.eq.s32.totalorder %s32, 0
    %p221 = por %p219, %p220
    %p222 = scmp.ne.s32.totalorder %s210, %s211
    %p223 = scmp.eq.s32.totalorder %s33, 1
    %p224 = por %p222, %p223
    %p226 = scmp.ne.s32.totalorder %s211, %s225
    %p227 = scmp.eq.s32.totalorder %s33, 0
    %p228 = por %p226, %p227
    %s230 = sadd.s32 %s229, 1
    %p233 = scmp.eq.s32.totalorder %s27, 1
    %p234 = scmp.ne.s32.totalorder %s229, %s231
    %p235 = scmp.eq.s32.totalorder %s27, 0
    %p236 = por %p234, %p235
    %p237 = scmp.ne.s32.totalorder %s229, %s231
    %p238 = scmp.eq.s32.totalorder %s32, 1
    %p239 = por %p237, %p238
    %p240 = scmp.ne.s32.totalorder %s231, %s232
    %p241 = scmp.eq.s32.totalorder %s32, 0
    %p242 = por %p240, %p241
    %p243 = scmp.ne.s32.totalorder %s231, %s232
    %p244 = scmp.eq.s32.totalorder %s33, 1
    %p245 = por %p243, %p244
    %p247 = scmp.ne.s32.totalorder %s232, %s246
    %p248 = scmp.eq.s32.totalorder %s33, 0
    %p249 = por %p247, %p248
    %s251 = sadd.s32 %s250, 1
    %p254 = scmp.eq.s32.totalorder %s27, 1
    %p255 = scmp.ne.s32.totalorder %s250, %s252
    %p256 = scmp.eq.s32.totalorder %s27, 0
    %p257 = por %p255, %p256
    %p258 = scmp.ne.s32.totalorder %s250, %s252
    %p259 = scmp.eq.s32.totalorder %s32, 1
    %p260 = por %p258, %p259
    %p261 = scmp.ne.s32.totalorder %s252, %s253
    %p262 = scmp.eq.s32.totalorder %s32, 0
    %p263 = por %p261, %p262
    %p264 = scmp.ne.s32.totalorder %s252, %s253
    %p265 = scmp.eq.s32.totalorder %s33, 1
    %p266 = por %p264, %p265
    %p268 = scmp.ne.s32.totalorder %s253, %s267
    %p269 = scmp.eq.s32.totalorder %s33, 0
    %p270 = por %p268, %p269
    %s272 = sadd.s32 %s271, 1
    %p275 = scmp.eq.s32.totalorder %s27, 1
    %p276 = scmp.ne.s32.totalorder %s271, %s273
    %p277 = scmp.eq.s32.totalorder %s27, 0
    %p278 = por %p276, %p277
    %p279 = scmp.ne.s32.totalorder %s271, %s273
    %p280 = scmp.eq.s32.totalorder %s32, 1
    %p281 = por %p279, %p280
    %p282 = scmp.ne.s32.totalorder %s273, %s274
    %p283 = scmp.eq.s32.totalorder %s32, 0
    %p284 = por %p282, %p283
    %p285 = scmp.ne.s32.totalorder %s273, %s274
    %p286 = scmp.eq.s32.totalorder %s33, 1
    %p287 = por %p285, %p286
    %p289 = scmp.ne.s32.totalorder %s274, %s288
    %p290 = scmp.eq.s32.totalorder %s33, 0
    %p291 = por %p289, %p290
    %s293 = sadd.s32 %s292, 1
    %p296 = scmp.eq.s32.totalorder %s27, 1
    %p297 = scmp.ne.s32.totalorder %s292, %s294
    %p298 = scmp.eq.s32.totalorder %s27, 0
    %p299 = por %p297, %p298
    %p300 = scmp.ne.s32.totalorder %s292, %s294
    %p301 = scmp.eq.s32.totalorder %s32, 1
    %p302 = por %p300, %p301
    %p303 = scmp.ne.s32.totalorder %s294, %s295
    %p304 = scmp.eq.s32.totalorder %s32, 0
    %p305 = por %p303, %p304
    %p306 = scmp.ne.s32.totalorder %s294, %s295
    %p307 = scmp.eq.s32.totalorder %s33, 1
    %p308 = por %p306, %p307
    %p310 = scmp.ne.s32.totalorder %s295, %s309
    %p311 = scmp.eq.s32.totalorder %s33, 0
    %p312 = por %p310, %p311
    %s314 = sadd.s32 %s313, 1
    %p317 = scmp.eq.s32.totalorder %s27, 1
    %p318 = scmp.ne.s32.totalorder %s313, %s315
    %p319 = scmp.eq.s32.totalorder %s27, 0
    %p320 = por %p318, %p319
    %p321 = scmp.ne.s32.totalorder %s313, %s315
    %p322 = scmp.eq.s32.totalorder %s32, 1
    %p323 = por %p321, %p322
    %p324 = scmp.ne.s32.totalorder %s315, %s316
    %p325 = scmp.eq.s32.totalorder %s32, 0
    %p326 = por %p324, %p325
    %p327 = scmp.ne.s32.totalorder %s315, %s316
    %p328 = scmp.eq.s32.totalorder %s33, 1
    %p329 = por %p327, %p328
    %p331 = scmp.ne.s32.totalorder %s316, %s330
    %p332 = scmp.eq.s32.totalorder %s33, 0
    %p333 = por %p331, %p332
    %s335 = sadd.s32 %s334, 1
    %p338 = scmp.eq.s32.totalorder %s27, 1
    %p339 = scmp.ne.s32.totalorder %s334, %s336
    %p340 = scmp.eq.s32.totalorder %s27, 0
    %p341 = por %p339, %p340
    %p342 = scmp.ne.s32.totalorder %s334, %s336
    %p343 = scmp.eq.s32.totalorder %s32, 1
    %p344 = por %p342, %p343
    %p345 = scmp.ne.s32.totalorder %s336, %s337
    %p346 = scmp.eq.s32.totalorder %s32, 0
    %p347 = por %p345, %p346
    %p348 = scmp.ne.s32.totalorder %s336, %s337
    %p349 = scmp.eq.s32.totalorder %s33, 1
    %p350 = por %p348, %p349
    %p352 = scmp.ne.s32.totalorder %s337, %s351
    %p353 = scmp.eq.s32.totalorder %s33, 0
    %p354 = por %p352, %p353
    %s356 = sadd.s32 %s355, 1
    %p359 = scmp.eq.s32.totalorder %s27, 1
    %p360 = scmp.ne.s32.totalorder %s355, %s357
    %p361 = scmp.eq.s32.totalorder %s27, 0
    %p362 = por %p360, %p361
    %p363 = scmp.ne.s32.totalorder %s355, %s357
    %p364 = scmp.eq.s32.totalorder %s32, 1
    %p365 = por %p363, %p364
    %p366 = scmp.ne.s32.totalorder %s357, %s358
    %p367 = scmp.eq.s32.totalorder %s32, 0
    %p368 = por %p366, %p367
    %p369 = scmp.ne.s32.totalorder %s357, %s358
    %p370 = scmp.eq.s32.totalorder %s33, 1
    %p371 = por %p369, %p370
    %p373 = scmp.ne.s32.totalorder %s358, %s372
    %p374 = scmp.eq.s32.totalorder %s33, 0
    %p375 = por %p373, %p374
    %s377 = sadd.s32 %s376, 1
    %p380 = scmp.eq.s32.totalorder %s27, 1
    %p381 = scmp.ne.s32.totalorder %s376, %s378
    %p382 = scmp.eq.s32.totalorder %s27, 0
    %p383 = por %p381, %p382
    %p384 = scmp.ne.s32.totalorder %s376, %s378
    %p385 = scmp.eq.s32.totalorder %s32, 1
    %p386 = por %p384, %p385
    %p387 = scmp.ne.s32.totalorder %s378, %s379
    %p388 = scmp.eq.s32.totalorder %s32, 0
    %p389 = por %p387, %p388
    %p390 = scmp.ne.s32.totalorder %s378, %s379
    %p391 = scmp.eq.s32.totalorder %s33, 1
    %p392 = por %p390, %p391
    %p394 = scmp.ne.s32.totalorder %s379, %s393
    %p395 = scmp.eq.s32.totalorder %s33, 0
    %p396 = por %p394, %p395
    %s397 = ssub.s32 %s27, %s34
    %p398 = scmp.eq.s32.totalorder %s397, 0
    %s400 = sadd.s32 %s399, 1
    %s401 = scalar_select %p398, %s399, %s400
    %p404 = pneg %p398
    %p405 = scmp.eq.s32.totalorder %s27, 1
    %p406 = por %p404, %p405
    %p407 = scmp.ne.s32.totalorder %s399, %s402
    %p408 = scmp.eq.s32.totalorder %s27, 0
    %p409 = por %p407, %p408
    %p410 = scmp.ne.s32.totalorder %s399, %s402
    %p411 = scmp.eq.s32.totalorder %s32, 1
    %p412 = por %p410, %p411
    %p413 = scmp.ne.s32.totalorder %s402, %s403
    %p414 = scmp.eq.s32.totalorder %s32, 0
    %p415 = por %p413, %p414
    %p416 = scmp.ne.s32.totalorder %s402, %s403
    %p417 = scmp.eq.s32.totalorder %s33, 1
    %p418 = por %p416, %p417
    %p420 = scmp.ne.s32.totalorder %s403, %s419
    %p421 = scmp.eq.s32.totalorder %s33, 0
    %p422 = por %p420, %p421
    %s423 = ssub.s32 %s27, %s34
    %p424 = scmp.eq.s32.totalorder %s423, 0
    %s426 = sadd.s32 %s425, 1
    %s427 = scalar_select %p424, %s425, %s426
    %p430 = pneg %p424
    %p431 = scmp.eq.s32.totalorder %s27, 1
    %p432 = por %p430, %p431
    %p433 = scmp.ne.s32.totalorder %s425, %s428
    %p434 = scmp.eq.s32.totalorder %s27, 0
    %p435 = por %p433, %p434
    %p436 = scmp.ne.s32.totalorder %s425, %s428
    %p437 = scmp.eq.s32.totalorder %s32, 1
    %p438 = por %p436, %p437
    %p439 = scmp.ne.s32.totalorder %s428, %s429
    %p440 = scmp.eq.s32.totalorder %s32, 0
    %p441 = por %p439, %p440
    %p442 = scmp.ne.s32.totalorder %s428, %s429
    %p443 = scmp.eq.s32.totalorder %s33, 1
    %p444 = por %p442, %p443
    %p446 = scmp.ne.s32.totalorder %s429, %s445
    %p447 = scmp.eq.s32.totalorder %s33, 0
    %p448 = por %p446, %p447
    %s449 = ssub.s32 %s27, %s34
    %p450 = scmp.eq.s32.totalorder %s449, 0
    %s452 = sadd.s32 %s451, 1
    %s453 = scalar_select %p450, %s451, %s452
    %p456 = pneg %p450
    %p457 = scmp.eq.s32.totalorder %s27, 1
    %p458 = por %p456, %p457
    %p459 = scmp.ne.s32.totalorder %s451, %s454
    %p460 = scmp.eq.s32.totalorder %s27, 0
    %p461 = por %p459, %p460
    %p462 = scmp.ne.s32.totalorder %s451, %s454
    %p463 = scmp.eq.s32.totalorder %s32, 1
    %p464 = por %p462, %p463
    %p465 = scmp.ne.s32.totalorder %s454, %s455
    %p466 = scmp.eq.s32.totalorder %s32, 0
    %p467 = por %p465, %p466
    %p468 = scmp.ne.s32.totalorder %s454, %s455
    %p469 = scmp.eq.s32.totalorder %s33, 1
    %p470 = por %p468, %p469
    %p472 = scmp.ne.s32.totalorder %s455, %s471
    %p473 = scmp.eq.s32.totalorder %s33, 0
    %p474 = por %p472, %p473
    %s475 = ssub.s32 %s27, %s34
    %p476 = scmp.eq.s32.totalorder %s475, 0
    %s478 = sadd.s32 %s477, 1
    %s479 = scalar_select %p476, %s477, %s478
    %p482 = pneg %p476
    %p483 = scmp.eq.s32.totalorder %s27, 1
    %p484 = por %p482, %p483
    %p485 = scmp.ne.s32.totalorder %s477, %s480
    %p486 = scmp.eq.s32.totalorder %s27, 0
    %p487 = por %p485, %p486
    %p488 = scmp.ne.s32.totalorder %s477, %s480
    %p489 = scmp.eq.s32.totalorder %s32, 1
    %p490 = por %p488, %p489
    %p491 = scmp.ne.s32.totalorder %s480, %s481
    %p492 = scmp.eq.s32.totalorder %s32, 0
    %p493 = por %p491, %p492
    %p494 = scmp.ne.s32.totalorder %s480, %s481
    %p495 = scmp.eq.s32.totalorder %s33, 1
    %p496 = por %p494, %p495
    %p498 = scmp.ne.s32.totalorder %s481, %s497
    %p499 = scmp.eq.s32.totalorder %s33, 0
    %p500 = por %p498, %p499
    %p501 = scmp.le.s32.totalorder 1, %s27
    %p502 = scmp.lt.s32.totalorder %s27, 3
    %p503 = pnand %p501, %p502
    %p504 = pneg %p503
    // Predicated region
    $region9: #{sd_utnet_forward.2} parent=5 // pred_check
      _
    $region10: #{sd_utnet_forward.2} parent=5 // pred_check_branch
      %506 = sbr.rel (%p503) target = $region12
    $region11: #{sd_utnet_forward.2} parent=5 // pred_region
      %s507 = ssub.s32 %s27, 1
      // Predicated region
      $region13: #{sd_utnet_forward.2} parent=11 // pred_check
        %p508 = pneg %p74
      $region14: #{sd_utnet_forward.2} parent=11 // pred_check_branch
        %510 = sbr.rel (%p508) target = $region16
      $region15: #{sd_utnet_forward.2} parent=11 // pred_region
        _
      $region16: #{sd_utnet_forward.2} parent=11 // pred_fallthru
        _
      // Predicated region
      $region17: #{sd_utnet_forward.2} parent=11 // pred_check
        %p511 = pneg %p95
      $region18: #{sd_utnet_forward.2} parent=11 // pred_check_branch
        %513 = sbr.rel (%p511) target = $region20
      $region19: #{sd_utnet_forward.2} parent=11 // pred_region
        _
      $region20: #{sd_utnet_forward.2} parent=11 // pred_fallthru
        _
      // Predicated region
      $region21: #{sd_utnet_forward.2} parent=11 // pred_check
        %p514 = pneg %p116
      $region22: #{sd_utnet_forward.2} parent=11 // pred_check_branch
        %516 = sbr.rel (%p514) target = $region24
      $region23: #{sd_utnet_forward.2} parent=11 // pred_region
        _
      $region24: #{sd_utnet_forward.2} parent=11 // pred_fallthru
        _
      // Predicated region
      $region25: #{sd_utnet_forward.2} parent=11 // pred_check
        %p517 = pneg %p137
      $region26: #{sd_utnet_forward.2} parent=11 // pred_check_branch
        %519 = sbr.rel (%p517) target = $region28
      $region27: #{sd_utnet_forward.2} parent=11 // pred_region
        _
      $region28: #{sd_utnet_forward.2} parent=11 // pred_fallthru
        _
      // Predicated region
      $region29: #{sd_utnet_forward.2} parent=11 // pred_check
        %p520 = pneg %p158
      $region30: #{sd_utnet_forward.2} parent=11 // pred_check_branch
        %522 = sbr.rel (%p520) target = $region32
      $region31: #{sd_utnet_forward.2} parent=11 // pred_region
        _
      $region32: #{sd_utnet_forward.2} parent=11 // pred_fallthru
        _
      // Predicated region
      $region33: #{sd_utnet_forward.2} parent=11 // pred_check
        %p523 = pneg %p179
      $region34: #{sd_utnet_forward.2} parent=11 // pred_check_branch
        %525 = sbr.rel (%p523) target = $region36
      $region35: #{sd_utnet_forward.2} parent=11 // pred_region
        _
      $region36: #{sd_utnet_forward.2} parent=11 // pred_fallthru
        _
      // Predicated region
      $region37: #{sd_utnet_forward.2} parent=11 // pred_check
        %p526 = pneg %p200
      $region38: #{sd_utnet_forward.2} parent=11 // pred_check_branch
        %528 = sbr.rel (%p526) target = $region40
      $region39: #{sd_utnet_forward.2} parent=11 // pred_region
        _
      $region40: #{sd_utnet_forward.2} parent=11 // pred_fallthru
        _
      // Predicated region
      $region41: #{sd_utnet_forward.2} parent=11 // pred_check
        %p529 = pneg %p221
      $region42: #{sd_utnet_forward.2} parent=11 // pred_check_branch
        %531 = sbr.rel (%p529) target = $region44
      $region43: #{sd_utnet_forward.2} parent=11 // pred_region
        _
      $region44: #{sd_utnet_forward.2} parent=11 // pred_fallthru
        _
      // Predicated region
      $region45: #{sd_utnet_forward.2} parent=11 // pred_check
        %p532 = pneg %p242
      $region46: #{sd_utnet_forward.2} parent=11 // pred_check_branch
        %534 = sbr.rel (%p532) target = $region48
      $region47: #{sd_utnet_forward.2} parent=11 // pred_region
        _
      $region48: #{sd_utnet_forward.2} parent=11 // pred_fallthru
        _
      // Predicated region
      $region49: #{sd_utnet_forward.2} parent=11 // pred_check
        %p535 = pneg %p263
      $region50: #{sd_utnet_forward.2} parent=11 // pred_check_branch
        %537 = sbr.rel (%p535) target = $region52
      $region51: #{sd_utnet_forward.2} parent=11 // pred_region
        _
      $region52: #{sd_utnet_forward.2} parent=11 // pred_fallthru
        _
      // Predicated region
      $region53: #{sd_utnet_forward.2} parent=11 // pred_check
        %p538 = pneg %p284
      $region54: #{sd_utnet_forward.2} parent=11 // pred_check_branch
        %540 = sbr.rel (%p538) target = $region56
      $region55: #{sd_utnet_forward.2} parent=11 // pred_region
        _
      $region56: #{sd_utnet_forward.2} parent=11 // pred_fallthru
        _
      // Predicated region
      $region57: #{sd_utnet_forward.2} parent=11 // pred_check
        %p541 = pneg %p305
      $region58: #{sd_utnet_forward.2} parent=11 // pred_check_branch
        %543 = sbr.rel (%p541) target = $region60
      $region59: #{sd_utnet_forward.2} parent=11 // pred_region
        _
      $region60: #{sd_utnet_forward.2} parent=11 // pred_fallthru
        _
      // Predicated region
      $region61: #{sd_utnet_forward.2} parent=11 // pred_check
        %p544 = pneg %p326
      $region62: #{sd_utnet_forward.2} parent=11 // pred_check_branch
        %546 = sbr.rel (%p544) target = $region64
      $region63: #{sd_utnet_forward.2} parent=11 // pred_region
        _
      $region64: #{sd_utnet_forward.2} parent=11 // pred_fallthru
        _
      // Predicated region
      $region65: #{sd_utnet_forward.2} parent=11 // pred_check
        %p547 = pneg %p347
      $region66: #{sd_utnet_forward.2} parent=11 // pred_check_branch
        %549 = sbr.rel (%p547) target = $region68
      $region67: #{sd_utnet_forward.2} parent=11 // pred_region
        _
      $region68: #{sd_utnet_forward.2} parent=11 // pred_fallthru
        _
      // Predicated region
      $region69: #{sd_utnet_forward.2} parent=11 // pred_check
        %p550 = pneg %p368
      $region70: #{sd_utnet_forward.2} parent=11 // pred_check_branch
        %552 = sbr.rel (%p550) target = $region72
      $region71: #{sd_utnet_forward.2} parent=11 // pred_region
        _
      $region72: #{sd_utnet_forward.2} parent=11 // pred_fallthru
        _
      // Predicated region
      $region73: #{sd_utnet_forward.2} parent=11 // pred_check
        %p553 = pneg %p389
      $region74: #{sd_utnet_forward.2} parent=11 // pred_check_branch
        %555 = sbr.rel (%p553) target = $region76
      $region75: #{sd_utnet_forward.2} parent=11 // pred_region
        _
      $region76: #{sd_utnet_forward.2} parent=11 // pred_fallthru
        _
    $region12: #{sd_utnet_forward.2} parent=5 // pred_fallthru
      _
    %p556 = scmp.lt.s32.totalorder %s27, 2
    // Predicated region
    $region77: #{sd_utnet_forward.2} parent=5 // pred_check
      %p557 = pneg %p556
    $region78: #{sd_utnet_forward.2} parent=5 // pred_check_branch
      %559 = sbr.rel (%p557) target = $region80
    $region79: #{sd_utnet_forward.2} parent=5 // pred_region
      // Predicated region
      $region81: #{sd_utnet_forward.2} parent=79 // pred_check
        %p560 = pneg %p47
      $region82: #{sd_utnet_forward.2} parent=79 // pred_check_branch
        %562 = sbr.rel (%p560) target = $region84
      $region83: #{sd_utnet_forward.2} parent=79 // pred_region
        %p563 = scmp.lt.s32.totalorder %s27, 1
        %s564 = scalar_select %p563, %s27, 1
        %s565 = smul.addr %s564, 3
        %s566 = smul.addr %s565, 2
        %s567 = scalar_lea.vmem %s0, %s566
      $region84: #{sd_utnet_forward.2} parent=79 // pred_fallthru
        _
      // Predicated region
      $region85: #{sd_utnet_forward.2} parent=79 // pred_check
        %p568 = pneg %p409
      $region86: #{sd_utnet_forward.2} parent=79 // pred_check_branch
        %570 = sbr.rel (%p568) target = $region88
      $region87: #{sd_utnet_forward.2} parent=79 // pred_region
        %p571 = scmp.lt.s32.totalorder %s27, 1
        %s572 = scalar_select %p571, %s27, 1
        %s573 = smul.addr %s572, 8
        %s574 = scalar_lea.vmem %s17, %s573
      $region88: #{sd_utnet_forward.2} parent=79 // pred_fallthru
        _
    $region80: #{sd_utnet_forward.2} parent=5 // pred_fallthru
      _
    %p575 = scmp.le.s32.totalorder 1, %s27
    %p576 = scmp.lt.s32.totalorder %s27, 3
    %p577 = pnand %p575, %p576
    %p578 = pneg %p577
    // Predicated region
    $region89: #{sd_utnet_forward.2} parent=5 // pred_check
      _
    $region90: #{sd_utnet_forward.2} parent=5 // pred_check_branch
      %580 = sbr.rel (%p577) target = $region92
    $region91: #{sd_utnet_forward.2} parent=5 // pred_region
      %s581 = ssub.s32 %s27, 1
      %p582 = scmp.lt.s32.totalorder %s32, 1
      %s583 = scalar_select %p582, %s32, 1
      %s584 = smul.addr %s583, 3
      %s585 = smul.addr %s584, 2
      %s586 = scalar_lea.vmem %s0, %s585
      %p587 = pneg %p53
      %p588 = pneg %p50
      %p589 = pneg %p74
      %p590 = pneg %p71
      %p591 = pneg %p95
      %p592 = pneg %p92
      %p593 = pneg %p116
      %p594 = pneg %p113
      %p595 = pneg %p137
      %p596 = pneg %p134
      %p597 = pneg %p158
      %p598 = pneg %p155
      %p599 = pneg %p179
      %p600 = pneg %p176
      %p601 = pneg %p200
      %p602 = pneg %p197
      %p603 = pneg %p221
      %p604 = pneg %p218
      %p605 = pneg %p242
      %p606 = pneg %p239
      %p607 = pneg %p263
      %p608 = pneg %p260
      %p609 = pneg %p284
      %p610 = pneg %p281
      %p611 = pneg %p305
      %p612 = pneg %p302
      %p613 = pneg %p326
      %p614 = pneg %p323
      %p615 = pneg %p347
      %p616 = pneg %p344
      %p617 = pneg %p368
      %p618 = pneg %p365
      %p619 = pneg %p389
      %p620 = pneg %p386
      %p621 = scmp.lt.s32.totalorder %s32, 1
      %s622 = scalar_select %p621, %s32, 1
      %s623 = smul.addr %s622, 8
      %s624 = scalar_lea.vmem %s17, %s623
      %p625 = pneg %p415
      %p626 = pneg %p412
      %p627 = pneg %p441
      %p628 = pneg %p438
      %p629 = scmp.lt.s32.totalorder %s32, 1
      %s630 = scalar_select %p629, %s32, 1
      %s631 = smul.addr %s630, 8
      %s632 = scalar_lea.vmem %s18, %s631
      %p633 = pneg %p467
      %p634 = pneg %p464
      %p635 = scmp.lt.s32.totalorder %s32, 1
      %s636 = scalar_select %p635, %s32, 1
      %s637 = smul.addr %s636, 8
      %s638 = scalar_lea.vmem %s19, %s637
      %p639 = pneg %p493
      %p640 = pneg %p490
      %p641 = scmp.lt.s32.totalorder %s32, 1
      %s642 = scalar_select %p641, %s32, 1
      %s643 = smul.addr %s642, 8
      %s644 = scalar_lea.vmem %s20, %s643
      %p645 = scmp.lt.s32.totalorder %s32, 1
      %s646 = scalar_select %p645, %s32, 1
      %s647 = smul.addr %s646, 3
      %s648 = smul.addr %s647, 2
      %s649 = scalar_lea.vmem %s0, %s648
      %p650 = scmp.lt.s32.totalorder %s32, 1
      %s651 = scalar_select %p650, %s32, 1
      %s652 = smul.addr %s651, 8
      %s653 = scalar_lea.vmem %s17, %s652
      %p654 = scmp.lt.s32.totalorder %s32, 1
      %s655 = scalar_select %p654, %s32, 1
      %s656 = smul.addr %s655, 8
      %s657 = scalar_lea.vmem %s18, %s656
      %p658 = scmp.lt.s32.totalorder %s32, 1
      %s659 = scalar_select %p658, %s32, 1
      %s660 = smul.addr %s659, 8
      %s661 = scalar_lea.vmem %s19, %s660
      %p662 = scmp.lt.s32.totalorder %s32, 1
      %s663 = scalar_select %p662, %s32, 1
      %s664 = smul.addr %s663, 8
      %s665 = scalar_lea.vmem %s20, %s664
      %vm667 = vcmask 89088
      %668 = vst.msk [vmem:[#allocation2] sm:$0xff] %vm667, 0
      %vm669 = vcmask 999288
      %670 = vst.msk [vmem:[#allocation2] sm:$0xff] %vm669, 0
      %vm671 = vcmask 56320
      %672 = vst.msk [vmem:[#allocation3] sm:$0xff] %vm671, 0
      %673 = vst.msk [vmem:[#allocation3 + $0x8] sm:$0xff] %vm671, 0
      %vm674 = vcmask 408920
      %675 = vst.msk [vmem:[#allocation3] sm:$0xff] %vm674, 0
      %676 = vst.msk [vmem:[#allocation3 + $0x8] sm:$0xff] %vm674, 0
      %vm677 = vcmask 39936
      %678 = vst.msk [vmem:[#allocation4] sm:$0xff] %vm677, 0
      %679 = vst.msk [vmem:[#allocation4 + $0x8] sm:$0xff] %vm677, 0
      %680 = vst.msk [vmem:[#allocation4 + $0x10] sm:$0xff] %vm677, 0
      %681 = vst.msk [vmem:[#allocation4 + $0x18] sm:$0xff] %vm677, 0
      %vm682 = vcmask 212136
      %683 = vst.msk [vmem:[#allocation4] sm:$0xff] %vm682, 0
      %684 = vst.msk [vmem:[#allocation4 + $0x8] sm:$0xff] %vm682, 0
      %685 = vst.msk [vmem:[#allocation4 + $0x10] sm:$0xff] %vm682, 0
      %686 = vst.msk [vmem:[#allocation4 + $0x18] sm:$0xff] %vm682, 0
      %v687 = vld [vmem:[%s1] sm:$0xf]
      %v688 = vld [vmem:[%s1 + $0x4] sm:$0xf]
      %v689 = vld [vmem:[%s649] sm:$0x3f]
      %s690 = scalar_lea.vmem %s1, 8
      %v691 = vld [vmem:[%s690] sm:$0xf]
      %v692 = vld [vmem:[%s690 + $0x4] sm:$0xf]
      %v695 = vunpack.c.l.b16 %v691
      %v696 = vunpack.c.l.b16 %v692
      %v697 = vpack.c.b16 %v696, %v695
      %v699 = vcombine.high %v689, %v689
      %v701 = vunpack.c.l.s4 1983009808
      %v702 = vunpack.c.0.s8 %v701
      %v703 = vlaneseq
      %v704 = vshrl.u32 %v703, 7
      %v705 = vsub.s32 %v702, %v704
      %v706 = vrot.slane %v689, %v705
      %v708 = vunpack.c.l.s4 1983009808
      %v709 = vunpack.c.0.s8 %v708
      %v710 = vlaneseq
      %v711 = vshrl.u32 %v710, 7
      %v712 = vsub.s32 %v709, %v711
      %v713 = vrot.slane %v699, %v712
      %v714 = vcombine.high %v706, %v706
      %715 = vrot.lane.b32.xlu0 %v706, 127
      %v716 = vpop.permute.xlu0 %715
      %717 = vrot.lane.b32.xlu0 %v714, 127
      %v718 = vpop.permute.xlu0 %717
      %719 = vrot.lane.b32.xlu0 %v713, 127
      %v720 = vpop.permute.xlu0 %719
      %vm721 = vcmask 1039360
      %v722 = vsel %vm721, %v716, %v718
      %v723 = vsel %vm721, %v718, %v720
      %vm724 = vcmask 23552
      %v726 = vsel %vm724, %v697, 0
      %vm728 = vcmask 1040384
      %vm729 = vcmask 1041408
      %v730 = vsel %vm728, 4294967295, 65535
      %v731 = vsel %vm729, %v730, 0
      %v733 = vand.u32 %v722, %v731
      %v736 = vand.u32 %v723, %v731
      %v739 = vand.u32 %v720, %v731
      %741 = vmatprep.subr.bf16.mxu0 %v736
      %742 = vmatpush1.bf16.msra.mxu0 %v733
      %743 = vmatprep.subr.bf16.mxu0 0
      %744 = vmatpush1.bf16.msra.mxu0 0
      %745 = vmatprep.subr.bf16.mxu0 0
      %746 = vmatpush1.bf16.msra.mxu0 0
      %747 = vmatprep.subr.bf16.mxu0 0
      %748 = vmatpush1.bf16.msra.mxu0 0
      %749 = vmatprep.subr.bf16.mxu0 0
      %750 = vmatpush1.bf16.msra.mxu0 0
      %751 = vmatprep.subr.bf16.mxu0 0
      %752 = vmatpush1.bf16.msra.mxu0 0
      %753 = vmatprep.subr.bf16.mxu0 0
      %754 = vmatpush1.bf16.msra.mxu0 0
      %755 = vmatprep.subr.bf16.mxu0 0
      %756 = vmatpush1.bf16.msra.mxu0 0
      %757 = vmatprep.subr.bf16.mxu0 0
      %758 = vmatpush1.bf16.msra.mxu0 0
      %759 = vmatprep.subr.bf16.mxu0 0
      %760 = vmatpush1.bf16.msra.mxu0 0
      %761 = vmatprep.subr.bf16.mxu0 0
      %762 = vmatpush1.bf16.msra.mxu0 0
      %763 = vmatprep.subr.bf16.mxu0 0
      %764 = vmatpush1.bf16.msra.mxu0 0
      %765 = vmatprep.subr.bf16.mxu0 0
      %766 = vmatpush1.bf16.msra.mxu0 0
      %767 = vmatprep.subr.bf16.mxu0 0
      %768 = vmatpush1.bf16.msra.mxu0 0
      %769 = vmatprep.subr.bf16.mxu0 0
      %770 = vmatpush1.bf16.msra.mxu0 0
      %771 = vmatprep.subr.bf16.mxu0 0
      %772 = vmatpush1.bf16.msra.mxu0 0
      %773 = vmatprep.mubr.bf16.mxu0 0
      %774 = vmatmul.mubr.bf16.gmra.mrb[0].mxu0 %v726
      %v775 = vpop.f32.mrb[0].mxu0
      %v776 = vadd.f32 0.0, %v775
      %v777 = vpop.f32.mrb[0].mxu0
      %v778 = vadd.f32 0.0, %v777
      %v779 = vpop.f32.mrb[0].mxu0
      %v780 = vadd.f32 0.0, %v779
      %v781 = vpop.f32.mrb[0].mxu0
      %v782 = vadd.f32 0.0, %v781
      %783 = vdwg.mxu0
      %784 = vmatprep.subr.bf16.mxu0 0
      %785 = vmatpush1.bf16.msra.mxu0 %v739
      %786 = vmatprep.subr.bf16.mxu0 0
      %787 = vmatpush1.bf16.msra.mxu0 0
      %788 = vmatprep.subr.bf16.mxu0 0
      %789 = vmatpush1.bf16.msra.mxu0 0
      %790 = vmatprep.subr.bf16.mxu0 0
      %791 = vmatpush1.bf16.msra.mxu0 0
      %792 = vmatprep.subr.bf16.mxu0 0
      %793 = vmatpush1.bf16.msra.mxu0 0
      %794 = vmatprep.subr.bf16.mxu0 0
      %795 = vmatpush1.bf16.msra.mxu0 0
      %796 = vmatprep.subr.bf16.mxu0 0
      %797 = vmatpush1.bf16.msra.mxu0 0
      %798 = vmatprep.subr.bf16.mxu0 0
      %799 = vmatpush1.bf16.msra.mxu0 0
      %800 = vmatprep.subr.bf16.mxu0 0
      %801 = vmatpush1.bf16.msra.mxu0 0
      %802 = vmatprep.subr.bf16.mxu0 0
      %803 = vmatpush1.bf16.msra.mxu0 0
      %804 = vmatprep.subr.bf16.mxu0 0
      %805 = vmatpush1.bf16.msra.mxu0 0
      %806 = vmatprep.subr.bf16.mxu0 0
      %807 = vmatpush1.bf16.msra.mxu0 0
      %808 = vmatprep.subr.bf16.mxu0 0
      %809 = vmatpush1.bf16.msra.mxu0 0
      %810 = vmatprep.subr.bf16.mxu0 0
      %811 = vmatpush1.bf16.msra.mxu0 0
      %812 = vmatprep.subr.bf16.mxu0 0
      %813 = vmatpush1.bf16.msra.mxu0 0
      %814 = vmatprep.subr.bf16.mxu0 0
      %815 = vmatpush1.bf16.msra.mxu0 0
      %816 = vmatprep.mubr.bf16.mxu0 0
      %817 = vmatmul.mubr.bf16.gmra.mrb[0].mxu0 %v726
      %v818 = vpop.f32.mrb[0].mxu0
      %v819 = vadd.f32 0.0, %v818
      %v820 = vpop.f32.mrb[0].mxu0
      %v821 = vpop.f32.mrb[0].mxu0
      %v822 = vadd.f32 0.0, %v821
      %v823 = vpop.f32.mrb[0].mxu0
      %824 = vdwg.mxu0
      %v827 = vunpack.c.l.b16 %v687
      %v828 = vunpack.c.l.b16 %v688
      %v829 = vpack.c.b16 %v828, %v827
      %v831 = vsel %vm724, %v829, 0
      %v834 = vand.u32 %v706, %v731
      %v837 = vand.u32 %v714, %v731
      %v840 = vand.u32 %v713, %v731
      %842 = vmatprep.subr.bf16.mxu0 %v837
      %843 = vmatpush1.bf16.msra.mxu0 %v834
      %844 = vmatprep.subr.bf16.mxu0 0
      %845 = vmatpush1.bf16.msra.mxu0 0
      %846 = vmatprep.subr.bf16.mxu0 0
      %847 = vmatpush1.bf16.msra.mxu0 0
      %848 = vmatprep.subr.bf16.mxu0 0
      %849 = vmatpush1.bf16.msra.mxu0 0
      %850 = vmatprep.subr.bf16.mxu0 0
      %851 = vmatpush1.bf16.msra.mxu0 0
      %852 = vmatprep.subr.bf16.mxu0 0
      %853 = vmatpush1.bf16.msra.mxu0 0
      %854 = vmatprep.subr.bf16.mxu0 0
      %855 = vmatpush1.bf16.msra.mxu0 0
      %856 = vmatprep.subr.bf16.mxu0 0
      %857 = vmatpush1.bf16.msra.mxu0 0
      %858 = vmatprep.subr.bf16.mxu0 0
      %859 = vmatpush1.bf16.msra.mxu0 0
      %860 = vmatprep.subr.bf16.mxu0 0
      %861 = vmatpush1.bf16.msra.mxu0 0
      %862 = vmatprep.subr.bf16.mxu0 0
      %863 = vmatpush1.bf16.msra.mxu0 0
      %864 = vmatprep.subr.bf16.mxu0 0
      %865 = vmatpush1.bf16.msra.mxu0 0
      %866 = vmatprep.subr.bf16.mxu0 0
      %867 = vmatpush1.bf16.msra.mxu0 0
      %868 = vmatprep.subr.bf16.mxu0 0
      %869 = vmatpush1.bf16.msra.mxu0 0
      %870 = vmatprep.subr.bf16.mxu0 0
      %871 = vmatpush1.bf16.msra.mxu0 0
      %872 = vmatprep.subr.bf16.mxu0 0
      %873 = vmatpush1.bf16.msra.mxu0 0
      %874 = vmatprep.mubr.bf16.mxu0 0
      %875 = vmatmul.mubr.bf16.gmra.mrb[0].mxu0 %v831
      %v876 = vpop.f32.mrb[0].mxu0
      %v877 = vadd.f32 %v776, %v876
      %v878 = vpop.f32.mrb[0].mxu0
      %v879 = vadd.f32 %v778, %v878
      %v880 = vpop.f32.mrb[0].mxu0
      %v881 = vadd.f32 %v780, %v880
      %v882 = vpop.f32.mrb[0].mxu0
      %v883 = vadd.f32 %v782, %v882
      %884 = vdwg.mxu0
      %885 = vmatprep.subr.bf16.mxu0 0
      %886 = vmatpush1.bf16.msra.mxu0 %v840
      %887 = vmatprep.subr.bf16.mxu0 0
      %888 = vmatpush1.bf16.msra.mxu0 0
      %889 = vmatprep.subr.bf16.mxu0 0
      %890 = vmatpush1.bf16.msra.mxu0 0
      %891 = vmatprep.subr.bf16.mxu0 0
      %892 = vmatpush1.bf16.msra.mxu0 0
      %893 = vmatprep.subr.bf16.mxu0 0
      %894 = vmatpush1.bf16.msra.mxu0 0
      %895 = vmatprep.subr.bf16.mxu0 0
      %896 = vmatpush1.bf16.msra.mxu0 0
      %897 = vmatprep.subr.bf16.mxu0 0
      %898 = vmatpush1.bf16.msra.mxu0 0
      %899 = vmatprep.subr.bf16.mxu0 0
      %900 = vmatpush1.bf16.msra.mxu0 0
      %901 = vmatprep.subr.bf16.mxu0 0
      %902 = vmatpush1.bf16.msra.mxu0 0
      %903 = vmatprep.subr.bf16.mxu0 0
      %904 = vmatpush1.bf16.msra.mxu0 0
      %905 = vmatprep.subr.bf16.mxu0 0
      %906 = vmatpush1.bf16.msra.mxu0 0
      %907 = vmatprep.subr.bf16.mxu0 0
      %908 = vmatpush1.bf16.msra.mxu0 0
      %909 = vmatprep.subr.bf16.mxu0 0
      %910 = vmatpush1.bf16.msra.mxu0 0
      %911 = vmatprep.subr.bf16.mxu0 0
      %912 = vmatpush1.bf16.msra.mxu0 0
      %913 = vmatprep.subr.bf16.mxu0 0
      %914 = vmatpush1.bf16.msra.mxu0 0
      %915 = vmatprep.subr.bf16.mxu0 0
      %916 = vmatpush1.bf16.msra.mxu0 0
      %917 = vmatprep.mubr.bf16.mxu0 0
      %918 = vmatmul.mubr.bf16.gmra.mrb[0].mxu0 %v831
      %v919 = vpop.f32.mrb[0].mxu0
      %v920 = vadd.f32 %v819, %v919
      %v921 = vpop.f32.mrb[0].mxu0
      %v922 = vpop.f32.mrb[0].mxu0
      %v923 = vadd.f32 %v822, %v922
      %v924 = vpop.f32.mrb[0].mxu0
      %925 = vdwg.mxu0
      %s926 = scalar_lea.vmem %s1, 16
      %v927 = vld [vmem:[%s926] sm:$0xf]
      %v928 = vld [vmem:[%s926 + $0x4] sm:$0xf]
      %v929 = vld [vmem:[%s649] sm:$0x3f]
      %v932 = vunpack.c.l.b16 %v927
      %v933 = vunpack.c.l.b16 %v928
      %v934 = vpack.c.b16 %v933, %v932
      %v936 = vcombine.high %v929, %v929
      %v938 = vunpack.c.l.s4 1983009808
      %v939 = vunpack.c.0.s8 %v938
      %v940 = vlaneseq
      %v941 = vshrl.u32 %v940, 7
      %v942 = vsub.s32 %v939, %v941
      %v943 = vrot.slane %v929, %v942
      %v945 = vunpack.c.l.s4 1983009808
      %v946 = vunpack.c.0.s8 %v945
      %v947 = vlaneseq
      %v948 = vshrl.u32 %v947, 7
      %v949 = vsub.s32 %v946, %v948
      %v950 = vrot.slane %v936, %v949
      %v951 = vcombine.high %v943, %v943
      %952 = vrot.lane.b32.xlu0 %v943, 126
      %v953 = vpop.permute.xlu0 %952
      %954 = vrot.lane.b32.xlu0 %v951, 126
      %v955 = vpop.permute.xlu0 %954
      %956 = vrot.lane.b32.xlu0 %v950, 126
      %v957 = vpop.permute.xlu0 %956
      %vm958 = vcmask 1031168
      %v959 = vsel %vm958, %v953, %v955
      %v960 = vsel %vm958, %v955, %v957
      %v962 = vsel %vm724, %v934, 0
      %v965 = vand.u32 %v959, %v731
      %v968 = vand.u32 %v960, %v731
      %v971 = vand.u32 %v957, %v731
      %973 = vmatprep.subr.bf16.mxu0 %v968
      %974 = vmatpush1.bf16.msra.mxu0 %v965
      %975 = vmatprep.subr.bf16.mxu0 0
      %976 = vmatpush1.bf16.msra.mxu0 0
      %977 = vmatprep.subr.bf16.mxu0 0
      %978 = vmatpush1.bf16.msra.mxu0 0
      %979 = vmatprep.subr.bf16.mxu0 0
      %980 = vmatpush1.bf16.msra.mxu0 0
      %981 = vmatprep.subr.bf16.mxu0 0
      %982 = vmatpush1.bf16.msra.mxu0 0
      %983 = vmatprep.subr.bf16.mxu0 0
      %984 = vmatpush1.bf16.msra.mxu0 0
      %985 = vmatprep.subr.bf16.mxu0 0
      %986 = vmatpush1.bf16.msra.mxu0 0
      %987 = vmatprep.subr.bf16.mxu0 0
      %988 = vmatpush1.bf16.msra.mxu0 0
      %989 = vmatprep.subr.bf16.mxu0 0
      %990 = vmatpush1.bf16.msra.mxu0 0
      %991 = vmatprep.subr.bf16.mxu0 0
      %992 = vmatpush1.bf16.msra.mxu0 0
      %993 = vmatprep.subr.bf16.mxu0 0
      %994 = vmatpush1.bf16.msra.mxu0 0
      %995 = vmatprep.subr.bf16.mxu0 0
      %996 = vmatpush1.bf16.msra.mxu0 0
      %997 = vmatprep.subr.bf16.mxu0 0
      %998 = vmatpush1.bf16.msra.mxu0 0
      %999 = vmatprep.subr.bf16.mxu0 0
      %1000 = vmatpush1.bf16.msra.mxu0 0
      %1001 = vmatprep.subr.bf16.mxu0 0
      %1002 = vmatpush1.bf16.msra.mxu0 0
      %1003 = vmatprep.subr.bf16.mxu0 0
      %1004 = vmatpush1.bf16.msra.mxu0 0
      %1005 = vmatprep.mubr.bf16.mxu0 0
      %1006 = vmatmul.mubr.bf16.gmra.mrb[0].mxu0 %v962
      %v1007 = vpop.f32.mrb[0].mxu0
      %v1008 = vadd.f32 0.0, %v1007
      %v1009 = vpop.f32.mrb[0].mxu0
      %v1010 = vadd.f32 0.0, %v1009
      %v1011 = vpop.f32.mrb[0].mxu0
      %v1012 = vadd.f32 0.0, %v1011
      %v1013 = vpop.f32.mrb[0].mxu0
      %v1014 = vadd.f32 0.0, %v1013
      %1015 = vdwg.mxu0
      %1016 = vmatprep.subr.bf16.mxu0 0
      %1017 = vmatpush1.bf16.msra.mxu0 %v971
      %1018 = vmatprep.subr.bf16.mxu0 0
      %1019 = vmatpush1.bf16.msra.mxu0 0
      %1020 = vmatprep.subr.bf16.mxu0 0
      %1021 = vmatpush1.bf16.msra.mxu0 0
      %1022 = vmatprep.subr.bf16.mxu0 0
      %1023 = vmatpush1.bf16.msra.mxu0 0
      %1024 = vmatprep.subr.bf16.mxu0 0
      %1025 = vmatpush1.bf16.msra.mxu0 0
      %1026 = vmatprep.subr.bf16.mxu0 0
      %1027 = vmatpush1.bf16.msra.mxu0 0
      %1028 = vmatprep.subr.bf16.mxu0 0
      %1029 = vmatpush1.bf16.msra.mxu0 0
      %1030 = vmatprep.subr.bf16.mxu0 0
      %1031 = vmatpush1.bf16.msra.mxu0 0
      %1032 = vmatprep.subr.bf16.mxu0 0
      %1033 = vmatpush1.bf16.msra.mxu0 0
      %1034 = vmatprep.subr.bf16.mxu0 0
      %1035 = vmatpush1.bf16.msra.mxu0 0
      %1036 = vmatprep.subr.bf16.mxu0 0
      %1037 = vmatpush1.bf16.msra.mxu0 0
      %1038 = vmatprep.subr.bf16.mxu0 0
      %1039 = vmatpush1.bf16.msra.mxu0 0
      %1040 = vmatprep.subr.bf16.mxu0 0
      %1041 = vmatpush1.bf16.msra.mxu0 0
      %1042 = vmatprep.subr.bf16.mxu0 0
      %1043 = vmatpush1.bf16.msra.mxu0 0
      %1044 = vmatprep.subr.bf16.mxu0 0
      %1045 = vmatpush1.bf16.msra.mxu0 0
      %1046 = vmatprep.subr.bf16.mxu0 0
      %1047 = vmatpush1.bf16.msra.mxu0 0
      %1048 = vmatprep.mubr.bf16.mxu0 0
      %1049 = vmatmul.mubr.bf16.gmra.mrb[0].mxu0 %v962
      %v1050 = vpop.f32.mrb[0].mxu0
      %v1051 = vadd.f32 0.0, %v1050
      %v1052 = vpop.f32.mrb[0].mxu0
      %v1053 = vpop.f32.mrb[0].mxu0
      %v1054 = vadd.f32 0.0, %v1053
      %v1055 = vpop.f32.mrb[0].mxu0
      %1056 = vdwg.mxu0
      %v1057 = vadd.f32 %v877, %v1008
      %v1058 = vadd.f32 %v879, %v1010
      %v1059 = vadd.f32 %v920, %v1051
      %v1060 = vadd.f32 %v881, %v1012
      %v1061 = vadd.f32 %v883, %v1014
      %v1062 = vadd.f32 %v923, %v1054
      %s1063 = scalar_lea.vmem %s1, 24
      %v1064 = vld [vmem:[%s1063] sm:$0xf]
      %v1065 = vld [vmem:[%s1063 + $0x4] sm:$0xf]
      %v1066 = vld [vmem:[%s649] sm:$0x3f]
      %v1069 = vunpack.c.l.b16 %v1064
      %v1070 = vunpack.c.l.b16 %v1065
      %v1071 = vpack.c.b16 %v1070, %v1069
      %v1073 = vcombine.high %v1066, %v1066
      %v1075 = vunpack.c.l.s4 1983009808
      %v1076 = vunpack.c.0.s8 %v1075
      %v1077 = vlaneseq
      %v1078 = vshrl.u32 %v1077, 7
      %v1079 = vsub.s32 %v1076, %v1078
      %v1080 = vrot.slane %v1066, %v1079
      %v1082 = vunpack.c.l.s4 1983009808
      %v1083 = vunpack.c.0.s8 %v1082
      %v1084 = vlaneseq
      %v1085 = vshrl.u32 %v1084, 7
      %v1086 = vsub.s32 %v1083, %v1085
      %v1087 = vrot.slane %v1073, %v1086
      %v1088 = vcombine.high %v1080, %v1080
      %1089 = vrot.lane.b32.xlu0 %v1080, 110
      %v1090 = vpop.permute.xlu0 %1089
      %1091 = vrot.lane.b32.xlu0 %v1088, 110
      %v1092 = vpop.permute.xlu0 %1091
      %1093 = vrot.lane.b32.xlu0 %v1087, 110
      %v1094 = vpop.permute.xlu0 %1093
      %vm1095 = vcmask 900096
      %v1096 = vsel %vm1095, %v1090, %v1092
      %v1097 = vsel %vm1095, %v1092, %v1094
      %v1099 = vsel %vm724, %v1071, 0
      %v1102 = vand.u32 %v1096, %v731
      %v1105 = vand.u32 %v1097, %v731
      %v1108 = vand.u32 %v1094, %v731
      %1110 = vmatprep.subr.bf16.mxu0 %v1105
      %1111 = vmatpush1.bf16.msra.mxu0 %v1102
      %1112 = vmatprep.subr.bf16.mxu0 0
      %1113 = vmatpush1.bf16.msra.mxu0 0
      %1114 = vmatprep.subr.bf16.mxu0 0
      %1115 = vmatpush1.bf16.msra.mxu0 0
      %1116 = vmatprep.subr.bf16.mxu0 0
      %1117 = vmatpush1.bf16.msra.mxu0 0
      %1118 = vmatprep.subr.bf16.mxu0 0
      %1119 = vmatpush1.bf16.msra.mxu0 0
      %1120 = vmatprep.subr.bf16.mxu0 0
      %1121 = vmatpush1.bf16.msra.mxu0 0
      %1122 = vmatprep.subr.bf16.mxu0 0
      %1123 = vmatpush1.bf16.msra.mxu0 0
      %1124 = vmatprep.subr.bf16.mxu0 0
      %1125 = vmatpush1.bf16.msra.mxu0 0
      %1126 = vmatprep.subr.bf16.mxu0 0
      %1127 = vmatpush1.bf16.msra.mxu0 0
      %1128 = vmatprep.subr.bf16.mxu0 0
      %1129 = vmatpush1.bf16.msra.mxu0 0
      %1130 = vmatprep.subr.bf16.mxu0 0
      %1131 = vmatpush1.bf16.msra.mxu0 0
      %1132 = vmatprep.subr.bf16.mxu0 0
      %1133 = vmatpush1.bf16.msra.mxu0 0
      %1134 = vmatprep.subr.bf16.mxu0 0
      %1135 = vmatpush1.bf16.msra.mxu0 0
      %1136 = vmatprep.subr.bf16.mxu0 0
      %1137 = vmatpush1.bf16.msra.mxu0 0
      %1138 = vmatprep.subr.bf16.mxu0 0
      %1139 = vmatpush1.bf16.msra.mxu0 0
      %1140 = vmatprep.subr.bf16.mxu0 0
      %1141 = vmatpush1.bf16.msra.mxu0 0
      %1142 = vmatprep.mubr.bf16.mxu0 0
      %1143 = vmatmul.mubr.bf16.gmra.mrb[0].mxu0 %v1099
      %v1144 = vpop.f32.mrb[0].mxu0
      %v1145 = vadd.f32 0.0, %v1144
      %v1146 = vpop.f32.mrb[0].mxu0
      %v1147 = vadd.f32 0.0, %v1146
      %v1148 = vpop.f32.mrb[0].mxu0
      %v1149 = vadd.f32 0.0, %v1148
      %v1150 = vpop.f32.mrb[0].mxu0
      %v1151 = vadd.f32 0.0, %v1150
      %1152 = vdwg.mxu0
      %1153 = vmatprep.subr.bf16.mxu0 0
      %1154 = vmatpush1.bf16.msra.mxu0 %v1108
      %1155 = vmatprep.subr.bf16.mxu0 0
      %1156 = vmatpush1.bf16.msra.mxu0 0
      %1157 = vmatprep.subr.bf16.mxu0 0
      %1158 = vmatpush1.bf16.msra.mxu0 0
      %1159 = vmatprep.subr.bf16.mxu0 0
      %1160 = vmatpush1.bf16.msra.mxu0 0
      %1161 = vmatprep.subr.bf16.mxu0 0
      %1162 = vmatpush1.bf16.msra.mxu0 0
      %1163 = vmatprep.subr.bf16.mxu0 0
      %1164 = vmatpush1.bf16.msra.mxu0 0
      %1165 = vmatprep.subr.bf16.mxu0 0
      %1166 = vmatpush1.bf16.msra.mxu0 0
      %1167 = vmatprep.subr.bf16.mxu0 0
      %1168 = vmatpush1.bf16.msra.mxu0 0
      %1169 = vmatprep.subr.bf16.mxu0 0
      %1170 = vmatpush1.bf16.msra.mxu0 0
      %1171 = vmatprep.subr.bf16.mxu0 0
      %1172 = vmatpush1.bf16.msra.mxu0 0
      %1173 = vmatprep.subr.bf16.mxu0 0
      %1174 = vmatpush1.bf16.msra.mxu0 0
      %1175 = vmatprep.subr.bf16.mxu0 0
      %1176 = vmatpush1.bf16.msra.mxu0 0
      %1177 = vmatprep.subr.bf16.mxu0 0
      %1178 = vmatpush1.bf16.msra.mxu0 0
      %1179 = vmatprep.subr.bf16.mxu0 0
      %1180 = vmatpush1.bf16.msra.mxu0 0
      %1181 = vmatprep.subr.bf16.mxu0 0
      %1182 = vmatpush1.bf16.msra.mxu0 0
      %1183 = vmatprep.subr.bf16.mxu0 0
      %1184 = vmatpush1.bf16.msra.mxu0 0
      %1185 = vmatprep.mubr.bf16.mxu0 0
      %1186 = vmatmul.mubr.bf16.gmra.mrb[0].mxu0 %v1099
      %v1187 = vpop.f32.mrb[0].mxu0
      %v1188 = vadd.f32 0.0, %v1187
      %v1189 = vpop.f32.mrb[0].mxu0
      %v1190 = vpop.f32.mrb[0].mxu0
      %v1191 = vadd.f32 0.0, %v1190
      %v1192 = vpop.f32.mrb[0].mxu0
      %1193 = vdwg.mxu0
      %v1194 = vadd.f32 %v1057, %v1145
      %v1195 = vadd.f32 %v1058, %v1147
      %v1196 = vadd.f32 %v1059, %v1188
      %v1197 = vadd.f32 %v1060, %v1149
      %v1198 = vadd.f32 %v1061, %v1151
      %v1199 = vadd.f32 %v1062, %v1191
      %s1200 = scalar_lea.vmem %s1, 32
      %v1201 = vld [vmem:[%s1200] sm:$0xf]
      %v1202 = vld [vmem:[%s1200 + $0x4] sm:$0xf]
      %v1203 = vld [vmem:[%s649] sm:$0x3f]
      %v1206 = vunpack.c.l.b16 %v1201
      %v1207 = vunpack.c.l.b16 %v1202
      %v1208 = vpack.c.b16 %v1207, %v1206
      %v1210 = vcombine.high %v1203, %v1203
      %v1212 = vunpack.c.l.s4 1983009808
      %v1213 = vunpack.c.0.s8 %v1212
      %v1214 = vlaneseq
      %v1215 = vshrl.u32 %v1214, 7
      %v1216 = vsub.s32 %v1213, %v1215
      %v1217 = vrot.slane %v1203, %v1216
      %v1219 = vunpack.c.l.s4 1983009808
      %v1220 = vunpack.c.0.s8 %v1219
      %v1221 = vlaneseq
      %v1222 = vshrl.u32 %v1221, 7
      %v1223 = vsub.s32 %v1220, %v1222
      %v1224 = vrot.slane %v1210, %v1223
      %v1225 = vcombine.high %v1217, %v1217
      %1226 = vrot.lane.b32.xlu0 %v1217, 109
      %v1227 = vpop.permute.xlu0 %1226
      %1228 = vrot.lane.b32.xlu0 %v1225, 109
      %v1229 = vpop.permute.xlu0 %1228
      %1230 = vrot.lane.b32.xlu0 %v1224, 109
      %v1231 = vpop.permute.xlu0 %1230
      %vm1232 = vcmask 891904
      %v1233 = vsel %vm1232, %v1227, %v1229
      %v1234 = vsel %vm1232, %v1229, %v1231
      %v1236 = vsel %vm724, %v1208, 0
      %v1239 = vand.u32 %v1233, %v731
      %v1242 = vand.u32 %v1234, %v731
      %v1245 = vand.u32 %v1231, %v731
      %1247 = vmatprep.subr.bf16.mxu0 %v1242
      %1248 = vmatpush1.bf16.msra.mxu0 %v1239
      %1249 = vmatprep.subr.bf16.mxu0 0
      %1250 = vmatpush1.bf16.msra.mxu0 0
      %1251 = vmatprep.subr.bf16.mxu0 0
      %1252 = vmatpush1.bf16.msra.mxu0 0
      %1253 = vmatprep.subr.bf16.mxu0 0
      %1254 = vmatpush1.bf16.msra.mxu0 0
      %1255 = vmatprep.subr.bf16.mxu0 0
      %1256 = vmatpush1.bf16.msra.mxu0 0
      %1257 = vmatprep.subr.bf16.mxu0 0
      %1258 = vmatpush1.bf16.msra.mxu0 0
      %1259 = vmatprep.subr.bf16.mxu0 0
      %1260 = vmatpush1.bf16.msra.mxu0 0
      %1261 = vmatprep.subr.bf16.mxu0 0
      %1262 = vmatpush1.bf16.msra.mxu0 0
      %1263 = vmatprep.subr.bf16.mxu0 0
      %1264 = vmatpush1.bf16.msra.mxu0 0
      %1265 = vmatprep.subr.bf16.mxu0 0
      %1266 = vmatpush1.bf16.msra.mxu0 0
      %1267 = vmatprep.subr.bf16.mxu0 0
      %1268 = vmatpush1.bf16.msra.mxu0 0
      %1269 = vmatprep.subr.bf16.mxu0 0
      %1270 = vmatpush1.bf16.msra.mxu0 0
      %1271 = vmatprep.subr.bf16.mxu0 0
      %1272 = vmatpush1.bf16.msra.mxu0 0
      %1273 = vmatprep.subr.bf16.mxu0 0
      %1274 = vmatpush1.bf16.msra.mxu0 0
      %1275 = vmatprep.subr.bf16.mxu0 0
      %1276 = vmatpush1.bf16.msra.mxu0 0
      %1277 = vmatprep.subr.bf16.mxu0 0
      %1278 = vmatpush1.bf16.msra.mxu0 0
      %1279 = vmatprep.mubr.bf16.mxu0 0
      %1280 = vmatmul.mubr.bf16.gmra.mrb[0].mxu0 %v1236
      %v1281 = vpop.f32.mrb[0].mxu0
      %v1282 = vadd.f32 0.0, %v1281
      %v1283 = vpop.f32.mrb[0].mxu0
      %v1284 = vadd.f32 0.0, %v1283
      %v1285 = vpop.f32.mrb[0].mxu0
      %v1286 = vadd.f32 0.0, %v1285
      %v1287 = vpop.f32.mrb[0].mxu0
      %v1288 = vadd.f32 0.0, %v1287
      %1289 = vdwg.mxu0
      %1290 = vmatprep.subr.bf16.mxu0 0
      %1291 = vmatpush1.bf16.msra.mxu0 %v1245
      %1292 = vmatprep.subr.bf16.mxu0 0
      %1293 = vmatpush1.bf16.msra.mxu0 0
      %1294 = vmatprep.subr.bf16.mxu0 0
      %1295 = vmatpush1.bf16.msra.mxu0 0
      %1296 = vmatprep.subr.bf16.mxu0 0
      %1297 = vmatpush1.bf16.msra.mxu0 0
      %1298 = vmatprep.subr.bf16.mxu0 0
      %1299 = vmatpush1.bf16.msra.mxu0 0
      %1300 = vmatprep.subr.bf16.mxu0 0
      %1301 = vmatpush1.bf16.msra.mxu0 0
      %1302 = vmatprep.subr.bf16.mxu0 0
      %1303 = vmatpush1.bf16.msra.mxu0 0
      %1304 = vmatprep.subr.bf16.mxu0 0
      %1305 = vmatpush1.bf16.msra.mxu0 0
      %1306 = vmatprep.subr.bf16.mxu0 0
      %1307 = vmatpush1.bf16.msra.mxu0 0
      %1308 = vmatprep.subr.bf16.mxu0 0
      %1309 = vmatpush1.bf16.msra.mxu0 0
      %1310 = vmatprep.subr.bf16.mxu0 0
      %1311 = vmatpush1.bf16.msra.mxu0 0
      %1312 = vmatprep.subr.bf16.mxu0 0
      %1313 = vmatpush1.bf16.msra.mxu0 0
      %1314 = vmatprep.subr.bf16.mxu0 0
      %1315 = vmatpush1.bf16.msra.mxu0 0
      %1316 = vmatprep.subr.bf16.mxu0 0
      %1317 = vmatpush1.bf16.msra.mxu0 0
      %1318 = vmatprep.subr.bf16.mxu0 0
      %1319 = vmatpush1.bf16.msra.mxu0 0
      %1320 = vmatprep.subr.bf16.mxu0 0
      %1321 = vmatpush1.bf16.msra.mxu0 0
      %1322 = vmatprep.mubr.bf16.mxu0 0
      %1323 = vmatmul.mubr.bf16.gmra.mrb[0].mxu0 %v1236
      %v1324 = vpop.f32.mrb[0].mxu0
      %v1325 = vadd.f32 0.0, %v1324
      %v1326 = vpop.f32.mrb[0].mxu0
      %v1327 = vpop.f32.mrb[0].mxu0
      %v1328 = vadd.f32 0.0, %v1327
      %v1329 = vpop.f32.mrb[0].mxu0
      %1330 = vdwg.mxu0
      %v1331 = vadd.f32 %v1194, %v1282
      %v1332 = vadd.f32 %v1195, %v1284
      %v1333 = vadd.f32 %v1196, %v1325
      %v1334 = vadd.f32 %v1197, %v1286
      %v1335 = vadd.f32 %v1198, %v1288
      %v1336 = vadd.f32 %v1199, %v1328
      %s1337 = scalar_lea.vmem %s1, 40
      %v1338 = vld [vmem:[%s1337] sm:$0xf]
      %v1339 = vld [vmem:[%s1337 + $0x4] sm:$0xf]
      %v1340 = vld [vmem:[%s649] sm:$0x3f]
      %v1343 = vunpack.c.l.b16 %v1338
      %v1344 = vunpack.c.l.b16 %v1339
      %v1345 = vpack.c.b16 %v1344, %v1343
      %v1347 = vcombine.high %v1340, %v1340
      %v1349 = vunpack.c.l.s4 1983009808
      %v1350 = vunpack.c.0.s8 %v1349
      %v1351 = vlaneseq
      %v1352 = vshrl.u32 %v1351, 7
      %v1353 = vsub.s32 %v1350, %v1352
      %v1354 = vrot.slane %v1340, %v1353
      %v1356 = vunpack.c.l.s4 1983009808
      %v1357 = vunpack.c.0.s8 %v1356
      %v1358 = vlaneseq
      %v1359 = vshrl.u32 %v1358, 7
      %v1360 = vsub.s32 %v1357, %v1359
      %v1361 = vrot.slane %v1347, %v1360
      %v1362 = vcombine.high %v1354, %v1354
      %1363 = vrot.lane.b32.xlu0 %v1354, 108
      %v1364 = vpop.permute.xlu0 %1363
      %1365 = vrot.lane.b32.xlu0 %v1362, 108
      %v1366 = vpop.permute.xlu0 %1365
      %1367 = vrot.lane.b32.xlu0 %v1361, 108
      %v1368 = vpop.permute.xlu0 %1367
      %vm1369 = vcmask 883712
      %v1370 = vsel %vm1369, %v1364, %v1366
      %v1371 = vsel %vm1369, %v1366, %v1368
      %v1373 = vsel %vm724, %v1345, 0
      %v1376 = vand.u32 %v1370, %v731
      %v1379 = vand.u32 %v1371, %v731
      %v1382 = vand.u32 %v1368, %v731
      %1384 = vmatprep.subr.bf16.mxu0 %v1379
      %1385 = vmatpush1.bf16.msra.mxu0 %v1376
      %1386 = vmatprep.subr.bf16.mxu0 0
      %1387 = vmatpush1.bf16.msra.mxu0 0
      %1388 = vmatprep.subr.bf16.mxu0 0
      %1389 = vmatpush1.bf16.msra.mxu0 0
      %1390 = vmatprep.subr.bf16.mxu0 0
      %1391 = vmatpush1.bf16.msra.mxu0 0
      %1392 = vmatprep.subr.bf16.mxu0 0
      %1393 = vmatpush1.bf16.msra.mxu0 0
      %1394 = vmatprep.subr.bf16.mxu0 0
      %1395 = vmatpush1.bf16.msra.mxu0 0
      %1396 = vmatprep.subr.bf16.mxu0 0
      %1397 = vmatpush1.bf16.msra.mxu0 0
      %1398 = vmatprep.subr.bf16.mxu0 0
      %1399 = vmatpush1.bf16.msra.mxu0 0
      %1400 = vmatprep.subr.bf16.mxu0 0
      %1401 = vmatpush1.bf16.msra.mxu0 0
      %1402 = vmatprep.subr.bf16.mxu0 0
      %1403 = vmatpush1.bf16.msra.mxu0 0
      %1404 = vmatprep.subr.bf16.mxu0 0
      %1405 = vmatpush1.bf16.msra.mxu0 0
      %1406 = vmatprep.subr.bf16.mxu0 0
      %1407 = vmatpush1.bf16.msra.mxu0 0
      %1408 = vmatprep.subr.bf16.mxu0 0
      %1409 = vmatpush1.bf16.msra.mxu0 0
      %1410 = vmatprep.subr.bf16.mxu0 0
      %1411 = vmatpush1.bf16.msra.mxu0 0
      %1412 = vmatprep.subr.bf16.mxu0 0
      %1413 = vmatpush1.bf16.msra.mxu0 0
      %1414 = vmatprep.subr.bf16.mxu0 0
      %1415 = vmatpush1.bf16.msra.mxu0 0
      %1416 = vmatprep.mubr.bf16.mxu0 0
      %1417 = vmatmul.mubr.bf16.gmra.mrb[0].mxu0 %v1373
      %v1418 = vpop.f32.mrb[0].mxu0
      %v1419 = vadd.f32 0.0, %v1418
      %v1420 = vpop.f32.mrb[0].mxu0
      %v1421 = vadd.f32 0.0, %v1420
      %v1422 = vpop.f32.mrb[0].mxu0
      %v1423 = vadd.f32 0.0, %v1422
      %v1424 = vpop.f32.mrb[0].mxu0
      %v1425 = vadd.f32 0.0, %v1424
      %1426 = vdwg.mxu0
      %1427 = vmatprep.subr.bf16.mxu0 0
      %1428 = vmatpush1.bf16.msra.mxu0 %v1382
      %1429 = vmatprep.subr.bf16.mxu0 0
      %1430 = vmatpush1.bf16.msra.mxu0 0
      %1431 = vmatprep.subr.bf16.mxu0 0
      %1432 = vmatpush1.bf16.msra.mxu0 0
      %1433 = vmatprep.subr.bf16.mxu0 0
      %1434 = vmatpush1.bf16.msra.mxu0 0
      %1435 = vmatprep.subr.bf16.mxu0 0
      %1436 = vmatpush1.bf16.msra.mxu0 0
      %1437 = vmatprep.subr.bf16.mxu0 0
      %1438 = vmatpush1.bf16.msra.mxu0 0
      %1439 = vmatprep.subr.bf16.mxu0 0
      %1440 = vmatpush1.bf16.msra.mxu0 0
      %1441 = vmatprep.subr.bf16.mxu0 0
      %1442 = vmatpush1.bf16.msra.mxu0 0
      %1443 = vmatprep.subr.bf16.mxu0 0
      %1444 = vmatpush1.bf16.msra.mxu0 0
      %1445 = vmatprep.subr.bf16.mxu0 0
      %1446 = vmatpush1.bf16.msra.mxu0 0
      %1447 = vmatprep.subr.bf16.mxu0 0
      %1448 = vmatpush1.bf16.msra.mxu0 0
      %1449 = vmatprep.subr.bf16.mxu0 0
      %1450 = vmatpush1.bf16.msra.mxu0 0
      %1451 = vmatprep.subr.bf16.mxu0 0
      %1452 = vmatpush1.bf16.msra.mxu0 0
      %1453 = vmatprep.subr.bf16.mxu0 0
      %1454 = vmatpush1.bf16.msra.mxu0 0
      %1455 = vmatprep.subr.bf16.mxu0 0
      %1456 = vmatpush1.bf16.msra.mxu0 0
      %1457 = vmatprep.subr.bf16.mxu0 0
      %1458 = vmatpush1.bf16.msra.mxu0 0
      %1459 = vmatprep.mubr.bf16.mxu0 0
      %1460 = vmatmul.mubr.bf16.gmra.mrb[0].mxu0 %v1373
      %v1461 = vpop.f32.mrb[0].mxu0
      %v1462 = vadd.f32 0.0, %v1461
      %v1463 = vpop.f32.mrb[0].mxu0
      %v1464 = vpop.f32.mrb[0].mxu0
      %v1465 = vadd.f32 0.0, %v1464
      %v1466 = vpop.f32.mrb[0].mxu0
      %1467 = vdwg.mxu0
      %v1468 = vadd.f32 %v1331, %v1419
      %v1469 = vadd.f32 %v1332, %v1421
      %v1470 = vadd.f32 %v1333, %v1462
      %v1471 = vadd.f32 %v1334, %v1423
      %v1472 = vadd.f32 %v1335, %v1425
      %v1473 = vadd.f32 %v1336, %v1465
      %s1474 = scalar_lea.vmem %s1, 48
      %v1475 = vld [vmem:[%s1474] sm:$0xf]
      %v1476 = vld [vmem:[%s1474 + $0x4] sm:$0xf]
      %v1477 = vld [vmem:[%s649] sm:$0x3f]
      %v1480 = vunpack.c.l.b16 %v1475
      %v1481 = vunpack.c.l.b16 %v1476
      %v1482 = vpack.c.b16 %v1481, %v1480
      %v1484 = vcombine.high %v1477, %v1477
      %v1486 = vunpack.c.l.s4 1983009808
      %v1487 = vunpack.c.0.s8 %v1486
      %v1488 = vlaneseq
      %v1489 = vshrl.u32 %v1488, 7
      %v1490 = vsub.s32 %v1487, %v1489
      %v1491 = vrot.slane %v1477, %v1490
      %v1493 = vunpack.c.l.s4 1983009808
      %v1494 = vunpack.c.0.s8 %v1493
      %v1495 = vlaneseq
      %v1496 = vshrl.u32 %v1495, 7
      %v1497 = vsub.s32 %v1494, %v1496
      %v1498 = vrot.slane %v1484, %v1497
      %v1499 = vcombine.high %v1491, %v1491
      %1500 = vrot.lane.b32.xlu0 %v1491, 92
      %v1501 = vpop.permute.xlu0 %1500
      %1502 = vrot.lane.b32.xlu0 %v1499, 92
      %v1503 = vpop.permute.xlu0 %1502
      %1504 = vrot.lane.b32.xlu0 %v1498, 92
      %v1505 = vpop.permute.xlu0 %1504
      %vm1506 = vcmask 752640
      %v1507 = vsel %vm1506, %v1501, %v1503
      %v1508 = vsel %vm1506, %v1503, %v1505
      %v1510 = vsel %vm724, %v1482, 0
      %v1513 = vand.u32 %v1507, %v731
      %v1516 = vand.u32 %v1508, %v731
      %v1519 = vand.u32 %v1505, %v731
      %1521 = vmatprep.subr.bf16.mxu0 %v1516
      %1522 = vmatpush1.bf16.msra.mxu0 %v1513
      %1523 = vmatprep.subr.bf16.mxu0 0
      %1524 = vmatpush1.bf16.msra.mxu0 0
      %1525 = vmatprep.subr.bf16.mxu0 0
      %1526 = vmatpush1.bf16.msra.mxu0 0
      %1527 = vmatprep.subr.bf16.mxu0 0
      %1528 = vmatpush1.bf16.msra.mxu0 0
      %1529 = vmatprep.subr.bf16.mxu0 0
      %1530 = vmatpush1.bf16.msra.mxu0 0
      %1531 = vmatprep.subr.bf16.mxu0 0
      %1532 = vmatpush1.bf16.msra.mxu0 0
      %1533 = vmatprep.subr.bf16.mxu0 0
      %1534 = vmatpush1.bf16.msra.mxu0 0
      %1535 = vmatprep.subr.bf16.mxu0 0
      %1536 = vmatpush1.bf16.msra.mxu0 0
      %1537 = vmatprep.subr.bf16.mxu0 0
      %1538 = vmatpush1.bf16.msra.mxu0 0
      %1539 = vmatprep.subr.bf16.mxu0 0
      %1540 = vmatpush1.bf16.msra.mxu0 0
      %1541 = vmatprep.subr.bf16.mxu0 0
      %1542 = vmatpush1.bf16.msra.mxu0 0
      %1543 = vmatprep.subr.bf16.mxu0 0
      %1544 = vmatpush1.bf16.msra.mxu0 0
      %1545 = vmatprep.subr.bf16.mxu0 0
      %1546 = vmatpush1.bf16.msra.mxu0 0
      %1547 = vmatprep.subr.bf16.mxu0 0
      %1548 = vmatpush1.bf16.msra.mxu0 0
      %1549 = vmatprep.subr.bf16.mxu0 0
      %1550 = vmatpush1.bf16.msra.mxu0 0
      %1551 = vmatprep.subr.bf16.mxu0 0
      %1552 = vmatpush1.bf16.msra.mxu0 0
      %1553 = vmatprep.mubr.bf16.mxu0 0
      %1554 = vmatmul.mubr.bf16.gmra.mrb[0].mxu0 %v1510
      %v1555 = vpop.f32.mrb[0].mxu0
      %v1556 = vadd.f32 0.0, %v1555
      %v1557 = vpop.f32.mrb[0].mxu0
      %v1558 = vadd.f32 0.0, %v1557
      %v1559 = vpop.f32.mrb[0].mxu0
      %v1560 = vadd.f32 0.0, %v1559
      %v1561 = vpop.f32.mrb[0].mxu0
      %v1562 = vadd.f32 0.0, %v1561
      %1563 = vdwg.mxu0
      %1564 = vmatprep.subr.bf16.mxu0 0
      %1565 = vmatpush1.bf16.msra.mxu0 %v1519
      %1566 = vmatprep.subr.bf16.mxu0 0
      %1567 = vmatpush1.bf16.msra.mxu0 0
      %1568 = vmatprep.subr.bf16.mxu0 0
      %1569 = vmatpush1.bf16.msra.mxu0 0
      %1570 = vmatprep.subr.bf16.mxu0 0
      %1571 = vmatpush1.bf16.msra.mxu0 0
      %1572 = vmatprep.subr.bf16.mxu0 0
      %1573 = vmatpush1.bf16.msra.mxu0 0
      %1574 = vmatprep.subr.bf16.mxu0 0
      %1575 = vmatpush1.bf16.msra.mxu0 0
      %1576 = vmatprep.subr.bf16.mxu0 0
      %1577 = vmatpush1.bf16.msra.mxu0 0
      %1578 = vmatprep.subr.bf16.mxu0 0
      %1579 = vmatpush1.bf16.msra.mxu0 0
      %1580 = vmatprep.subr.bf16.mxu0 0
      %1581 = vmatpush1.bf16.msra.mxu0 0
      %1582 = vmatprep.subr.bf16.mxu0 0
      %1583 = vmatpush1.bf16.msra.mxu0 0
      %1584 = vmatprep.subr.bf16.mxu0 0
      %1585 = vmatpush1.bf16.msra.mxu0 0
      %1586 = vmatprep.subr.bf16.mxu0 0
      %1587 = vmatpush1.bf16.msra.mxu0 0
      %1588 = vmatprep.subr.bf16.mxu0 0
      %1589 = vmatpush1.bf16.msra.mxu0 0
      %1590 = vmatprep.subr.bf16.mxu0 0
      %1591 = vmatpush1.bf16.msra.mxu0 0
      %1592 = vmatprep.subr.bf16.mxu0 0
      %1593 = vmatpush1.bf16.msra.mxu0 0
      %1594 = vmatprep.subr.bf16.mxu0 0
      %1595 = vmatpush1.bf16.msra.mxu0 0
      %1596 = vmatprep.mubr.bf16.mxu0 0
      %1597 = vmatmul.mubr.bf16.gmra.mrb[0].mxu0 %v1510
      %v1598 = vpop.f32.mrb[0].mxu0
      %v1599 = vadd.f32 0.0, %v1598
      %v1600 = vpop.f32.mrb[0].mxu0
      %v1601 = vpop.f32.mrb[0].mxu0
      %v1602 = vadd.f32 0.0, %v1601
      %v1603 = vpop.f32.mrb[0].mxu0
      %1604 = vdwg.mxu0
      %v1605 = vadd.f32 %v1468, %v1556
      %v1606 = vadd.f32 %v1469, %v1558
      %v1607 = vadd.f32 %v1470, %v1599
      %v1608 = vadd.f32 %v1471, %v1560
      %v1609 = vadd.f32 %v1472, %v1562
      %v1610 = vadd.f32 %v1473, %v1602
      %s1611 = scalar_lea.vmem %s1, 56
      %v1612 = vld [vmem:[%s1611] sm:$0xf]
      %v1613 = vld [vmem:[%s1611 + $0x4] sm:$0xf]
      %v1614 = vld [vmem:[%s649] sm:$0x3f]
      %v1617 = vunpack.c.l.b16 %v1612
      %v1618 = vunpack.c.l.b16 %v1613
      %v1619 = vpack.c.b16 %v1618, %v1617
      %v1621 = vcombine.high %v1614, %v1614
      %v1623 = vunpack.c.l.s4 1983009808
      %v1624 = vunpack.c.0.s8 %v1623
      %v1625 = vlaneseq
      %v1626 = vshrl.u32 %v1625, 7
      %v1627 = vsub.s32 %v1624, %v1626
      %v1628 = vrot.slane %v1614, %v1627
      %v1630 = vunpack.c.l.s4 1983009808
      %v1631 = vunpack.c.0.s8 %v1630
      %v1632 = vlaneseq
      %v1633 = vshrl.u32 %v1632, 7
      %v1634 = vsub.s32 %v1631, %v1633
      %v1635 = vrot.slane %v1621, %v1634
      %v1636 = vcombine.high %v1628, %v1628
      %1637 = vrot.lane.b32.xlu0 %v1628, 91
      %v1638 = vpop.permute.xlu0 %1637
      %1639 = vrot.lane.b32.xlu0 %v1636, 91
      %v1640 = vpop.permute.xlu0 %1639
      %1641 = vrot.lane.b32.xlu0 %v1635, 91
      %v1642 = vpop.permute.xlu0 %1641
      %vm1643 = vcmask 744448
      %v1644 = vsel %vm1643, %v1638, %v1640
      %v1645 = vsel %vm1643, %v1640, %v1642
      %v1647 = vsel %vm724, %v1619, 0
      %v1650 = vand.u32 %v1644, %v731
      %v1653 = vand.u32 %v1645, %v731
      %v1656 = vand.u32 %v1642, %v731
      %1658 = vmatprep.subr.bf16.mxu0 %v1653
      %1659 = vmatpush1.bf16.msra.mxu0 %v1650
      %1660 = vmatprep.subr.bf16.mxu0 0
      %1661 = vmatpush1.bf16.msra.mxu0 0
      %1662 = vmatprep.subr.bf16.mxu0 0
      %1663 = vmatpush1.bf16.msra.mxu0 0
      %1664 = vmatprep.subr.bf16.mxu0 0
      %1665 = vmatpush1.bf16.msra.mxu0 0
      %1666 = vmatprep.subr.bf16.mxu0 0
      %1667 = vmatpush1.bf16.msra.mxu0 0
      %1668 = vmatprep.subr.bf16.mxu0 0
      %1669 = vmatpush1.bf16.msra.mxu0 0
      %1670 = vmatprep.subr.bf16.mxu0 0
      %1671 = vmatpush1.bf16.msra.mxu0 0
      %1672 = vmatprep.subr.bf16.mxu0 0
      %1673 = vmatpush1.bf16.msra.mxu0 0
      %1674 = vmatprep.subr.bf16.mxu0 0
      %1675 = vmatpush1.bf16.msra.mxu0 0
      %1676 = vmatprep.subr.bf16.mxu0 0
      %1677 = vmatpush1.bf16.msra.mxu0 0
      %1678 = vmatprep.subr.bf16.mxu0 0
      %1679 = vmatpush1.bf16.msra.mxu0 0
      %1680 = vmatprep.subr.bf16.mxu0 0
      %1681 = vmatpush1.bf16.msra.mxu0 0
      %1682 = vmatprep.subr.bf16.mxu0 0
      %1683 = vmatpush1.bf16.msra.mxu0 0
      %1684 = vmatprep.subr.bf16.mxu0 0
      %1685 = vmatpush1.bf16.msra.mxu0 0
      %1686 = vmatprep.subr.bf16.mxu0 0
      %1687 = vmatpush1.bf16.msra.mxu0 0
      %1688 = vmatprep.subr.bf16.mxu0 0
      %1689 = vmatpush1.bf16.msra.mxu0 0
      %1690 = vmatprep.mubr.bf16.mxu0 0
      %1691 = vmatmul.mubr.bf16.gmra.mrb[0].mxu0 %v1647
      %v1692 = vpop.f32.mrb[0].mxu0
      %v1693 = vadd.f32 0.0, %v1692
      %v1694 = vpop.f32.mrb[0].mxu0
      %v1695 = vadd.f32 0.0, %v1694
      %v1696 = vpop.f32.mrb[0].mxu0
      %v1697 = vadd.f32 0.0, %v1696
      %v1698 = vpop.f32.mrb[0].mxu0
      %v1699 = vadd.f32 0.0, %v1698
      %1700 = vdwg.mxu0
      %1701 = vmatprep.subr.bf16.mxu0 0
      %1702 = vmatpush1.bf16.msra.mxu0 %v1656
      %1703 = vmatprep.subr.bf16.mxu0 0
      %1704 = vmatpush1.bf16.msra.mxu0 0
      %1705 = vmatprep.subr.bf16.mxu0 0
      %1706 = vmatpush1.bf16.msra.mxu0 0
      %1707 = vmatprep.subr.bf16.mxu0 0
      %1708 = vmatpush1.bf16.msra.mxu0 0
      %1709 = vmatprep.subr.bf16.mxu0 0
      %1710 = vmatpush1.bf16.msra.mxu0 0
      %1711 = vmatprep.subr.bf16.mxu0 0
      %1712 = vmatpush1.bf16.msra.mxu0 0
      %1713 = vmatprep.subr.bf16.mxu0 0
      %1714 = vmatpush1.bf16.msra.mxu0 0
      %1715 = vmatprep.subr.bf16.mxu0 0
      %1716 = vmatpush1.bf16.msra.mxu0 0
      %1717 = vmatprep.subr.bf16.mxu0 0
      %1718 = vmatpush1.bf16.msra.mxu0 0
      %1719 = vmatprep.subr.bf16.mxu0 0
      %1720 = vmatpush1.bf16.msra.mxu0 0
      %1721 = vmatprep.subr.bf16.mxu0 0
      %1722 = vmatpush1.bf16.msra.mxu0 0
      %1723 = vmatprep.subr.bf16.mxu0 0
      %1724 = vmatpush1.bf16.msra.mxu0 0
      %1725 = vmatprep.subr.bf16.mxu0 0
      %1726 = vmatpush1.bf16.msra.mxu0 0
      %1727 = vmatprep.subr.bf16.mxu0 0
      %1728 = vmatpush1.bf16.msra.mxu0 0
      %1729 = vmatprep.subr.bf16.mxu0 0
      %1730 = vmatpush1.bf16.msra.mxu0 0
      %1731 = vmatprep.subr.bf16.mxu0 0
      %1732 = vmatpush1.bf16.msra.mxu0 0
      %1733 = vmatprep.mubr.bf16.mxu0 0
      %1734 = vmatmul.mubr.bf16.gmra.mrb[0].mxu0 %v1647
      %v1735 = vpop.f32.mrb[0].mxu0
      %v1736 = vadd.f32 0.0, %v1735
      %v1737 = vpop.f32.mrb[0].mxu0
      %v1738 = vpop.f32.mrb[0].mxu0
      %v1739 = vadd.f32 0.0, %v1738
      %v1740 = vpop.f32.mrb[0].mxu0
      %1741 = vdwg.mxu0
      %v1742 = vadd.f32 %v1605, %v1693
      %v1743 = vadd.f32 %v1606, %v1695
      %v1744 = vadd.f32 %v1607, %v1736
      %v1745 = vadd.f32 %v1608, %v1697
      %v1746 = vadd.f32 %v1609, %v1699
      %v1747 = vadd.f32 %v1610, %v1739
      %s1748 = scalar_lea.vmem %s1, 64
      %v1749 = vld [vmem:[%s1748] sm:$0xf]
      %v1750 = vld [vmem:[%s1748 + $0x4] sm:$0xf]
      %v1751 = vld [vmem:[%s649] sm:$0x3f]
      %v1754 = vunpack.c.l.b16 %v1749
      %v1755 = vunpack.c.l.b16 %v1750
      %v1756 = vpack.c.b16 %v1755, %v1754
      %v1758 = vcombine.high %v1751, %v1751
      %v1760 = vunpack.c.l.s4 1983009808
      %v1761 = vunpack.c.0.s8 %v1760
      %v1762 = vlaneseq
      %v1763 = vshrl.u32 %v1762, 7
      %v1764 = vsub.s32 %v1761, %v1763
      %v1765 = vrot.slane %v1751, %v1764
      %v1767 = vunpack.c.l.s4 1983009808
      %v1768 = vunpack.c.0.s8 %v1767
      %v1769 = vlaneseq
      %v1770 = vshrl.u32 %v1769, 7
      %v1771 = vsub.s32 %v1768, %v1770
      %v1772 = vrot.slane %v1758, %v1771
      %v1773 = vcombine.high %v1765, %v1765
      %1774 = vrot.lane.b32.xlu0 %v1765, 90
      %v1775 = vpop.permute.xlu0 %1774
      %1776 = vrot.lane.b32.xlu0 %v1773, 90
      %v1777 = vpop.permute.xlu0 %1776
      %1778 = vrot.lane.b32.xlu0 %v1772, 90
      %v1779 = vpop.permute.xlu0 %1778
      %vm1780 = vcmask 736256
      %v1781 = vsel %vm1780, %v1775, %v1777
      %v1782 = vsel %vm1780, %v1777, %v1779
      %v1784 = vsel %vm724, %v1756, 0
      %v1787 = vand.u32 %v1781, %v731
      %v1790 = vand.u32 %v1782, %v731
      %v1793 = vand.u32 %v1779, %v731
      %1795 = vmatprep.subr.bf16.mxu0 %v1790
      %1796 = vmatpush1.bf16.msra.mxu0 %v1787
      %1797 = vmatprep.subr.bf16.mxu0 0
      %1798 = vmatpush1.bf16.msra.mxu0 0
      %1799 = vmatprep.subr.bf16.mxu0 0
      %1800 = vmatpush1.bf16.msra.mxu0 0
      %1801 = vmatprep.subr.bf16.mxu0 0
      %1802 = vmatpush1.bf16.msra.mxu0 0
      %1803 = vmatprep.subr.bf16.mxu0 0
      %1804 = vmatpush1.bf16.msra.mxu0 0
      %1805 = vmatprep.subr.bf16.mxu0 0
      %1806 = vmatpush1.bf16.msra.mxu0 0
      %1807 = vmatprep.subr.bf16.mxu0 0
      %1808 = vmatpush1.bf16.msra.mxu0 0
      %1809 = vmatprep.subr.bf16.mxu0 0
      %1810 = vmatpush1.bf16.msra.mxu0 0
      %1811 = vmatprep.subr.bf16.mxu0 0
      %1812 = vmatpush1.bf16.msra.mxu0 0
      %1813 = vmatprep.subr.bf16.mxu0 0
      %1814 = vmatpush1.bf16.msra.mxu0 0
      %1815 = vmatprep.subr.bf16.mxu0 0
      %1816 = vmatpush1.bf16.msra.mxu0 0
      %1817 = vmatprep.subr.bf16.mxu0 0
      %1818 = vmatpush1.bf16.msra.mxu0 0
      %1819 = vmatprep.subr.bf16.mxu0 0
      %1820 = vmatpush1.bf16.msra.mxu0 0
      %1821 = vmatprep.subr.bf16.mxu0 0
      %1822 = vmatpush1.bf16.msra.mxu0 0
      %1823 = vmatprep.subr.bf16.mxu0 0
      %1824 = vmatpush1.bf16.msra.mxu0 0
      %1825 = vmatprep.subr.bf16.mxu0 0
      %1826 = vmatpush1.bf16.msra.mxu0 0
      %1827 = vmatprep.mubr.bf16.mxu0 0
      %1828 = vmatmul.mubr.bf16.gmra.mrb[0].mxu0 %v1784
      %v1829 = vpop.f32.mrb[0].mxu0
      %v1830 = vadd.f32 0.0, %v1829
      %v1831 = vpop.f32.mrb[0].mxu0
      %v1832 = vadd.f32 0.0, %v1831
      %v1833 = vpop.f32.mrb[0].mxu0
      %v1834 = vadd.f32 0.0, %v1833
      %v1835 = vpop.f32.mrb[0].mxu0
      %v1836 = vadd.f32 0.0, %v1835
      %1837 = vdwg.mxu0
      %1838 = vmatprep.subr.bf16.mxu0 0
      %1839 = vmatpush1.bf16.msra.mxu0 %v1793
      %1840 = vmatprep.subr.bf16.mxu0 0
      %1841 = vmatpush1.bf16.msra.mxu0 0
      %1842 = vmatprep.subr.bf16.mxu0 0
      %1843 = vmatpush1.bf16.msra.mxu0 0
      %1844 = vmatprep.subr.bf16.mxu0 0
      %1845 = vmatpush1.bf16.msra.mxu0 0
      %1846 = vmatprep.subr.bf16.mxu0 0
      %1847 = vmatpush1.bf16.msra.mxu0 0
      %1848 = vmatprep.subr.bf16.mxu0 0
      %1849 = vmatpush1.bf16.msra.mxu0 0
      %1850 = vmatprep.subr.bf16.mxu0 0
      %1851 = vmatpush1.bf16.msra.mxu0 0
      %1852 = vmatprep.subr.bf16.mxu0 0
      %1853 = vmatpush1.bf16.msra.mxu0 0
      %1854 = vmatprep.subr.bf16.mxu0 0
      %1855 = vmatpush1.bf16.msra.mxu0 0
      %1856 = vmatprep.subr.bf16.mxu0 0
      %1857 = vmatpush1.bf16.msra.mxu0 0
      %1858 = vmatprep.subr.bf16.mxu0 0
      %1859 = vmatpush1.bf16.msra.mxu0 0
      %1860 = vmatprep.subr.bf16.mxu0 0
      %1861 = vmatpush1.bf16.msra.mxu0 0
      %1862 = vmatprep.subr.bf16.mxu0 0
      %1863 = vmatpush1.bf16.msra.mxu0 0
      %1864 = vmatprep.subr.bf16.mxu0 0
      %1865 = vmatpush1.bf16.msra.mxu0 0
      %1866 = vmatprep.subr.bf16.mxu0 0
      %1867 = vmatpush1.bf16.msra.mxu0 0
      %1868 = vmatprep.subr.bf16.mxu0 0
      %1869 = vmatpush1.bf16.msra.mxu0 0
      %1870 = vmatprep.mubr.bf16.mxu0 0
      %1871 = vmatmul.mubr.bf16.gmra.mrb[0].mxu0 %v1784
      %v1872 = vpop.f32.mrb[0].mxu0
      %v1873 = vadd.f32 0.0, %v1872
      %v1874 = vpop.f32.mrb[0].mxu0
      %v1875 = vpop.f32.mrb[0].mxu0
      %v1876 = vadd.f32 0.0, %v1875
      %v1877 = vpop.f32.mrb[0].mxu0
      %1878 = vdwg.mxu0
      %v1879 = vadd.f32 %v1742, %v1830
      %v1880 = vadd.f32 %v1743, %v1832
      %v1881 = vadd.f32 %v1744, %v1873
      %v1882 = vadd.f32 %v1745, %v1834
      %v1883 = vadd.f32 %v1746, %v1836
      %v1884 = vadd.f32 %v1747, %v1876
      %v1885 = vld [vmem:[%s2] sm:$0xff]
      %v1886 = vld [vmem:[%s2 + $0x8] sm:$0xff]
      %1888 = vset.pattern.permute.xlu0 0
      %1889 = vperm.xlu0 %1888, %v1885
      %v1890 = vpop.permute.xlu0 %1889
      %1893 = vset.pattern.permute.xlu0 0
      %1894 = vperm.xlu0 %1893, %v1886
      %v1895 = vpop.permute.xlu0 %1894
      %v1897 = vadd.f32 %v1879, %v1890
      %v1898 = vadd.f32 %v1880, %v1890
      %v1899 = vadd.f32 %v1881, %v1890
      %v1900 = vadd.f32 %v1882, %v1895
      %v1901 = vadd.f32 %v1883, %v1895
      %v1902 = vadd.f32 %v1884, %v1895
      %vm1903 = vcmp.ge.f32.partialorder %v1897, 0.0
      %vm1904 = vcmp.ge.f32.partialorder %v1898, 0.0
      %vm1905 = vcmp.ge.f32.partialorder %v1899, 0.0
      %vm1906 = vcmp.ge.f32.partialorder %v1900, 0.0
      %vm1907 = vcmp.ge.f32.partialorder %v1901, 0.0
      %vm1908 = vcmp.ge.f32.partialorder %v1902, 0.0
      %v1909 = vmul.f32 %v1897, 0.03
      %v1910 = vmul.f32 %v1898, 0.03
      %v1911 = vmul.f32 %v1899, 0.03
      %v1912 = vmul.f32 %v1900, 0.03
      %v1913 = vmul.f32 %v1901, 0.03
      %v1914 = vmul.f32 %v1902, 0.03
      %v1915 = vsel %vm1903, %v1897, %v1909
      %v1916 = vsel %vm1904, %v1898, %v1910
      %v1917 = vsel %vm1905, %v1899, %v1911
      %v1918 = vsel %vm1906, %v1900, %v1912
      %v1919 = vsel %vm1907, %v1901, %v1913
      %v1920 = vsel %vm1908, %v1902, %v1914
      %v1921 = vpack.c.bf16 %v1918, %v1915
      %v1922 = vpack.c.bf16 %v1919, %v1916
      %v1923 = vpack.c.bf16 %v1920, %v1917
      %v1924 = vld [vmem:[%s3] sm:$0xf]
      %v1925 = vld [vmem:[%s3 + $0x4] sm:$0xf]
      %v1926 = vld [vmem:[%s3 + $0x8] sm:$0xf]
      %v1927 = vld [vmem:[%s3 + $0xc] sm:$0xf]
      %v1928 = vld [vmem:[%s3 + $0x10] sm:$0xf]
      %v1929 = vld [vmem:[%s3 + $0x14] sm:$0xf]
      %v1930 = vld [vmem:[%s3 + $0x18] sm:$0xf]
      %v1931 = vld [vmem:[%s3 + $0x1c] sm:$0xf]
      %v1932 = vld [vmem:[%s3 + $0x20] sm:$0xf]
      %v1933 = vld [vmem:[%s3 + $0x24] sm:$0xf]
      %v1934 = vld [vmem:[%s3 + $0x28] sm:$0xf]
      %v1935 = vld [vmem:[%s3 + $0x2c] sm:$0xf]
      %v1936 = vld [vmem:[%s3 + $0x30] sm:$0xf]
      %v1937 = vld [vmem:[%s3 + $0x34] sm:$0xf]
      %v1938 = vld [vmem:[%s3 + $0x38] sm:$0xf]
      %v1939 = vld [vmem:[%s3 + $0x3c] sm:$0xf]
      %v1940 = vld [vmem:[%s3 + $0x40] sm:$0xf]
      %v1941 = vld [vmem:[%s3 + $0x44] sm:$0xf]
      %v1942 = vld [vmem:[%s3 + $0x48] sm:$0xf]
      %v1943 = vld [vmem:[%s3 + $0x4c] sm:$0xf]
      %v1944 = vld [vmem:[%s3 + $0x50] sm:$0xf]
      %v1945 = vld [vmem:[%s3 + $0x54] sm:$0xf]
      %v1946 = vld [vmem:[%s3 + $0x58] sm:$0xf]
      %v1947 = vld [vmem:[%s3 + $0x5c] sm:$0xf]
      %v1948 = vld [vmem:[%s3 + $0x60] sm:$0xf]
      %v1949 = vld [vmem:[%s3 + $0x64] sm:$0xf]
      %v1950 = vld [vmem:[%s3 + $0x68] sm:$0xf]
      %v1951 = vld [vmem:[%s3 + $0x6c] sm:$0xf]
      %v1952 = vld [vmem:[%s3 + $0x70] sm:$0xf]
      %v1953 = vld [vmem:[%s3 + $0x74] sm:$0xf]
      %v1954 = vld [vmem:[%s3 + $0x78] sm:$0xf]
      %v1955 = vld [vmem:[%s3 + $0x7c] sm:$0xf]
      %v1956 = vld [vmem:[%s3 + $0x80] sm:$0xf]
      %v1957 = vld [vmem:[%s3 + $0x84] sm:$0xf]
      %v1958 = vld [vmem:[%s3 + $0x88] sm:$0xf]
      %v1959 = vld [vmem:[%s3 + $0x8c] sm:$0xf]
      %v1960 = vld [vmem:[%s3 + $0x90] sm:$0xf]
      %v1961 = vld [vmem:[%s3 + $0x94] sm:$0xf]
      %v1962 = vld [vmem:[%s3 + $0x98] sm:$0xf]
      %v1963 = vld [vmem:[%s3 + $0x9c] sm:$0xf]
      %v1964 = vld [vmem:[%s3 + $0xa0] sm:$0x3]
      %v2006 = vunpack.c.l.b16 %v1924
      %v2007 = vunpack.c.l.b16 %v1925
      %v2008 = vunpack.c.l.b16 %v1926
      %v2009 = vunpack.c.l.b16 %v1927
      %v2010 = vunpack.c.l.b16 %v1928
      %v2011 = vunpack.c.l.b16 %v1929
      %v2012 = vunpack.c.l.b16 %v1930
      %v2013 = vunpack.c.l.b16 %v1931
      %v2014 = vunpack.c.l.b16 %v1932
      %v2015 = vunpack.c.l.b16 %v1933
      %v2016 = vunpack.c.l.b16 %v1934
      %v2017 = vunpack.c.l.b16 %v1935
      %v2018 = vunpack.c.l.b16 %v1936
      %v2019 = vunpack.c.l.b16 %v1937
      %v2020 = vunpack.c.l.b16 %v1938
      %v2021 = vunpack.c.l.b16 %v1939
      %v2022 = vunpack.c.l.b16 %v1940
      %v2023 = vunpack.c.l.b16 %v1941
      %v2024 = vunpack.c.l.b16 %v1942
      %v2025 = vunpack.c.l.b16 %v1943
      %v2026 = vunpack.c.l.b16 %v1944
      %v2027 = vunpack.c.l.b16 %v1945
      %v2028 = vunpack.c.l.b16 %v1946
      %v2029 = vunpack.c.l.b16 %v1947
      %v2030 = vunpack.c.l.b16 %v1948
      %v2031 = vunpack.c.l.b16 %v1949
      %v2032 = vunpack.c.l.b16 %v1950
      %v2033 = vunpack.c.l.b16 %v1951
      %v2034 = vunpack.c.l.b16 %v1952
      %v2035 = vunpack.c.l.b16 %v1953
      %v2036 = vunpack.c.l.b16 %v1954
      %v2037 = vunpack.c.l.b16 %v1955
      %v2038 = vunpack.c.l.b16 %v1956
      %v2039 = vunpack.c.l.b16 %v1957
      %v2040 = vunpack.c.l.b16 %v1958
      %v2041 = vunpack.c.l.b16 %v1959
      %v2042 = vunpack.c.l.b16 %v1960
      %v2043 = vunpack.c.l.b16 %v1961
      %v2044 = vunpack.c.l.b16 %v1962
      %v2045 = vunpack.c.l.b16 %v1963
      %v2046 = vunpack.c.l.b16 %v1964
      %v2047 = vpack.c.b16 %v2007, %v2006
      %v2048 = vpack.c.b16 %v2009, %v2008
      %v2049 = vpack.c.b16 %v2011, %v2010
      %v2050 = vpack.c.b16 %v2013, %v2012
      %v2051 = vpack.c.b16 %v2015, %v2014
      %v2052 = vpack.c.b16 %v2017, %v2016
      %v2053 = vpack.c.b16 %v2019, %v2018
      %v2054 = vpack.c.b16 %v2021, %v2020
      %v2055 = vpack.c.b16 %v2023, %v2022
      %v2056 = vpack.c.b16 %v2025, %v2024
      %v2057 = vpack.c.b16 %v2027, %v2026
      %v2058 = vpack.c.b16 %v2029, %v2028
      %v2059 = vpack.c.b16 %v2031, %v2030
      %v2060 = vpack.c.b16 %v2033, %v2032
      %v2061 = vpack.c.b16 %v2035, %v2034
      %v2062 = vpack.c.b16 %v2037, %v2036
      %v2063 = vpack.c.b16 %v2039, %v2038
      %v2064 = vpack.c.b16 %v2041, %v2040
      %v2065 = vpack.c.b16 %v2043, %v2042
      %v2066 = vpack.c.b16 %v2045, %v2044
      %v2067 = vpack.c.b16 %v2046, %v2046
      %vm2088 = vcmask 556032
      %v2090 = vsel %vm2088, %v1923, 0
      %v2093 = vsel %vm729, %v2067, 0
      %2095 = vmatprep.subr.bf16.mxu0 0
      %2096 = vmatpush1.bf16.msra.mxu0 %v2047
      %2097 = vmatprep.subr.bf16.mxu0 0
      %2098 = vmatpush1.bf16.msra.mxu0 %v2048
      %2099 = vmatprep.subr.bf16.mxu0 0
      %2100 = vmatpush1.bf16.msra.mxu0 %v2049
      %2101 = vmatprep.subr.bf16.mxu0 0
      %2102 = vmatpush1.bf16.msra.mxu0 %v2050
      %2103 = vmatprep.subr.bf16.mxu0 0
      %2104 = vmatpush1.bf16.msra.mxu0 %v2051
      %2105 = vmatprep.subr.bf16.mxu0 0
      %2106 = vmatpush1.bf16.msra.mxu0 %v2052
      %2107 = vmatprep.subr.bf16.mxu0 0
      %2108 = vmatpush1.bf16.msra.mxu0 %v2053
      %2109 = vmatprep.subr.bf16.mxu0 0
      %2110 = vmatpush1.bf16.msra.mxu0 %v2054
      %2111 = vmatprep.subr.bf16.mxu0 0
      %2112 = vmatpush1.bf16.msra.mxu0 %v2055
      %2113 = vmatprep.subr.bf16.mxu0 0
      %2114 = vmatpush1.bf16.msra.mxu0 %v2056
      %2115 = vmatprep.subr.bf16.mxu0 0
      %2116 = vmatpush1.bf16.msra.mxu0 %v2057
      %2117 = vmatprep.subr.bf16.mxu0 0
      %2118 = vmatpush1.bf16.msra.mxu0 %v2058
      %2119 = vmatprep.subr.bf16.mxu0 0
      %2120 = vmatpush1.bf16.msra.mxu0 %v2059
      %2121 = vmatprep.subr.bf16.mxu0 0
      %2122 = vmatpush1.bf16.msra.mxu0 %v2060
      %2123 = vmatprep.subr.bf16.mxu0 0
      %2124 = vmatpush1.bf16.msra.mxu0 %v2061
      %2125 = vmatprep.subr.bf16.mxu0 0
      %2126 = vmatpush1.bf16.msra.mxu0 %v2062
      %2127 = vmatprep.mubr.bf16.mxu0 %v1922
      %2128 = vmatmul.mubr.bf16.gmra.mrb[0].mxu0 %v1921
      %v2129 = vpop.f32.mrb[0].mxu0
      %v2130 = vadd.f32 0.0, %v2129
      %v2131 = vpop.f32.mrb[0].mxu0
      %v2132 = vpop.f32.mrb[0].mxu0
      %v2133 = vadd.f32 0.0, %v2132
      %v2134 = vpop.f32.mrb[0].mxu0
      %2135 = vdwg.mxu0
      %2136 = vmatprep.subr.bf16.mxu0 0
      %2137 = vmatpush1.bf16.msra.mxu0 %v2063
      %2138 = vmatprep.subr.bf16.mxu0 0
      %2139 = vmatpush1.bf16.msra.mxu0 %v2064
      %2140 = vmatprep.subr.bf16.mxu0 0
      %2141 = vmatpush1.bf16.msra.mxu0 %v2065
      %2142 = vmatprep.subr.bf16.mxu0 0
      %2143 = vmatpush1.bf16.msra.mxu0 %v2066
      %2144 = vmatprep.subr.bf16.mxu0 0
      %2145 = vmatpush1.bf16.msra.mxu0 %v2093
      %2146 = vmatprep.subr.bf16.mxu0 0
      %2147 = vmatpush1.bf16.msra.mxu0 0
      %2148 = vmatprep.subr.bf16.mxu0 0
      %2149 = vmatpush1.bf16.msra.mxu0 0
      %2150 = vmatprep.subr.bf16.mxu0 0
      %2151 = vmatpush1.bf16.msra.mxu0 0
      %2152 = vmatprep.subr.bf16.mxu0 0
      %2153 = vmatpush1.bf16.msra.mxu0 0
      %2154 = vmatprep.subr.bf16.mxu0 0
      %2155 = vmatpush1.bf16.msra.mxu0 0
      %2156 = vmatprep.subr.bf16.mxu0 0
      %2157 = vmatpush1.bf16.msra.mxu0 0
      %2158 = vmatprep.subr.bf16.mxu0 0
      %2159 = vmatpush1.bf16.msra.mxu0 0
      %2160 = vmatprep.subr.bf16.mxu0 0
      %2161 = vmatpush1.bf16.msra.mxu0 0
      %2162 = vmatprep.subr.bf16.mxu0 0
      %2163 = vmatpush1.bf16.msra.mxu0 0
      %2164 = vmatprep.subr.bf16.mxu0 0
      %2165 = vmatpush1.bf16.msra.mxu0 0
      %2166 = vmatprep.subr.bf16.mxu0 0
      %2167 = vmatpush1.bf16.msra.mxu0 0
      %2168 = vmatprep.mubr.bf16.mxu0 0
      %2169 = vmatmul.mubr.bf16.gmra.mrb[0].mxu0 %v2090
      %v2170 = vpop.f32.mrb[0].mxu0
      %v2171 = vadd.f32 %v2130, %v2170
      %v2172 = vpop.f32.mrb[0].mxu0
      %v2173 = vpop.f32.mrb[0].mxu0
      %v2174 = vadd.f32 %v2133, %v2173
      %v2175 = vpop.f32.mrb[0].mxu0
      %2176 = vdwg.mxu0
      %v2177 = vpack.c.bf16 %v2174, %v2171
      %2179 = vrot.lane.b32.xlu0 %v2177, 11
      %v2180 = vpop.permute.xlu0 %2179
      %vm2182 = vcmask 908376
      %2183 = vst.msk [vmem:[#allocation2] sm:$0xff] %vm2182, %v2180
      %v2184 = vld [vmem:[%s4] sm:$0xf]
      %v2185 = vld [vmem:[%s4 + $0x4] sm:$0xf]
      %v2186 = vld [vmem:[%s4 + $0x8] sm:$0xf]
      %v2187 = vld [vmem:[%s4 + $0xc] sm:$0xf]
      %v2188 = vld [vmem:[#allocation2] sm:$0xff]
      %s2189 = scalar_lea.vmem %s4, 16
      %v2190 = vld [vmem:[%s2189] sm:$0xf]
      %v2191 = vld [vmem:[%s2189 + $0x4] sm:$0xf]
      %v2192 = vld [vmem:[%s2189 + $0x8] sm:$0xf]
      %v2193 = vld [vmem:[%s2189 + $0xc] sm:$0xf]
      %v2198 = vunpack.c.l.b16 %v2190
      %v2199 = vunpack.c.l.b16 %v2191
      %v2200 = vunpack.c.l.b16 %v2192
      %v2201 = vunpack.c.l.b16 %v2193
      %v2202 = vpack.c.b16 %v2199, %v2198
      %v2203 = vpack.c.b16 %v2201, %v2200
      %2205 = vrot.lane.b32.xlu0 %v2188, 127
      %v2206 = vpop.permute.xlu0 %2205
      %vm2208 = vcmask 130048
      %v2210 = vsel %vm2208, %v2202, 0
      %v2213 = vsel %vm2208, %v2203, 0
      %2215 = vmatprep.subr.bf16.mxu0 0
      %2216 = vmatpush1.bf16.msra.mxu0 %v2206
      %2217 = vmatprep.subr.bf16.mxu0 0
      %2218 = vmatpush1.bf16.msra.mxu0 0
      %2219 = vmatprep.subr.bf16.mxu0 0
      %2220 = vmatpush1.bf16.msra.mxu0 0
      %2221 = vmatprep.subr.bf16.mxu0 0
      %2222 = vmatpush1.bf16.msra.mxu0 0
      %2223 = vmatprep.subr.bf16.mxu0 0
      %2224 = vmatpush1.bf16.msra.mxu0 0
      %2225 = vmatprep.subr.bf16.mxu0 0
      %2226 = vmatpush1.bf16.msra.mxu0 0
      %2227 = vmatprep.subr.bf16.mxu0 0
      %2228 = vmatpush1.bf16.msra.mxu0 0
      %2229 = vmatprep.subr.bf16.mxu0 0
      %2230 = vmatpush1.bf16.msra.mxu0 0
      %2231 = vmatprep.subr.bf16.mxu0 0
      %2232 = vmatpush1.bf16.msra.mxu0 0
      %2233 = vmatprep.subr.bf16.mxu0 0
      %2234 = vmatpush1.bf16.msra.mxu0 0
      %2235 = vmatprep.subr.bf16.mxu0 0
      %2236 = vmatpush1.bf16.msra.mxu0 0
      %2237 = vmatprep.subr.bf16.mxu0 0
      %2238 = vmatpush1.bf16.msra.mxu0 0
      %2239 = vmatprep.subr.bf16.mxu0 0
      %2240 = vmatpush1.bf16.msra.mxu0 0
      %2241 = vmatprep.subr.bf16.mxu0 0
      %2242 = vmatpush1.bf16.msra.mxu0 0
      %2243 = vmatprep.subr.bf16.mxu0 0
      %2244 = vmatpush1.bf16.msra.mxu0 0
      %2245 = vmatprep.subr.bf16.mxu0 0
      %2246 = vmatpush1.bf16.msra.mxu0 0
      %2247 = vmatprep.mubr.bf16.mxu0 0
      %2248 = vmatmul.mubr.bf16.gmra.mrb[0].mxu0 %v2210
      %v2249 = vpop.f32.mrb[0].mxu0
      %v2250 = vadd.f32 0.0, %v2249
      %v2251 = vpop.f32.mrb[0].mxu0
      %v2252 = vpop.f32.mrb[0].mxu0
      %v2253 = vadd.f32 0.0, %v2252
      %v2254 = vpop.f32.mrb[0].mxu0
      %2255 = vmatprep.mubr.bf16.mxu0 0
      %2256 = vmatmul.mubr.bf16.gmra.mrb[0].mxu0 %v2213
      %v2257 = vpop.f32.mrb[0].mxu0
      %v2258 = vadd.f32 0.0, %v2257
      %v2259 = vpop.f32.mrb[0].mxu0
      %v2260 = vpop.f32.mrb[0].mxu0
      %v2261 = vadd.f32 0.0, %v2260
      %v2262 = vpop.f32.mrb[0].mxu0
      %2263 = vdwg.mxu0
      %v2268 = vunpack.c.l.b16 %v2184
      %v2269 = vunpack.c.l.b16 %v2185
      %v2270 = vunpack.c.l.b16 %v2186
      %v2271 = vunpack.c.l.b16 %v2187
      %v2272 = vpack.c.b16 %v2269, %v2268
      %v2273 = vpack.c.b16 %v2271, %v2270
      %v2275 = vsel %vm2208, %v2272, 0
      %v2278 = vsel %vm2208, %v2273, 0
      %2280 = vmatprep.subr.bf16.mxu0 0
      %2281 = vmatpush1.bf16.msra.mxu0 %v2188
      %2282 = vmatprep.subr.bf16.mxu0 0
      %2283 = vmatpush1.bf16.msra.mxu0 0
      %2284 = vmatprep.subr.bf16.mxu0 0
      %2285 = vmatpush1.bf16.msra.mxu0 0
      %2286 = vmatprep.subr.bf16.mxu0 0
      %2287 = vmatpush1.bf16.msra.mxu0 0
      %2288 = vmatprep.subr.bf16.mxu0 0
      %2289 = vmatpush1.bf16.msra.mxu0 0
      %2290 = vmatprep.subr.bf16.mxu0 0
      %2291 = vmatpush1.bf16.msra.mxu0 0
      %2292 = vmatprep.subr.bf16.mxu0 0
      %2293 = vmatpush1.bf16.msra.mxu0 0
      %2294 = vmatprep.subr.bf16.mxu0 0
      %2295 = vmatpush1.bf16.msra.mxu0 0
      %2296 = vmatprep.subr.bf16.mxu0 0
      %2297 = vmatpush1.bf16.msra.mxu0 0
      %2298 = vmatprep.subr.bf16.mxu0 0
      %2299 = vmatpush1.bf16.msra.mxu0 0
      %2300 = vmatprep.subr.bf16.mxu0 0
      %2301 = vmatpush1.bf16.msra.mxu0 0
      %2302 = vmatprep.subr.bf16.mxu0 0
      %2303 = vmatpush1.bf16.msra.mxu0 0
      %2304 = vmatprep.subr.bf16.mxu0 0
      %2305 = vmatpush1.bf16.msra.mxu0 0
      %2306 = vmatprep.subr.bf16.mxu0 0
      %2307 = vmatpush1.bf16.msra.mxu0 0
      %2308 = vmatprep.subr.bf16.mxu0 0
      %2309 = vmatpush1.bf16.msra.mxu0 0
      %2310 = vmatprep.subr.bf16.mxu0 0
      %2311 = vmatpush1.bf16.msra.mxu0 0
      %2312 = vmatprep.mubr.bf16.mxu0 0
      %2313 = vmatmul.mubr.bf16.gmra.mrb[0].mxu0 %v2275
      %v2314 = vpop.f32.mrb[0].mxu0
      %v2315 = vadd.f32 %v2250, %v2314
      %v2316 = vpop.f32.mrb[0].mxu0
      %v2317 = vpop.f32.mrb[0].mxu0
      %v2318 = vadd.f32 %v2253, %v2317
      %v2319 = vpop.f32.mrb[0].mxu0
      %2320 = vmatprep.mubr.bf16.mxu0 0
      %2321 = vmatmul.mubr.bf16.gmra.mrb[0].mxu0 %v2278
      %v2322 = vpop.f32.mrb[0].mxu0
      %v2323 = vadd.f32 %v2258, %v2322
      %v2324 = vpop.f32.mrb[0].mxu0
      %v2325 = vpop.f32.mrb[0].mxu0
      %v2326 = vadd.f32 %v2261, %v2325
      %v2327 = vpop.f32.mrb[0].mxu0
      %2328 = vdwg.mxu0
      %s2329 = scalar_lea.vmem %s4, 32
      %v2330 = vld [vmem:[%s2329] sm:$0xf]
      %v2331 = vld [vmem:[%s2329 + $0x4] sm:$0xf]
      %v2332 = vld [vmem:[%s2329 + $0x8] sm:$0xf]
      %v2333 = vld [vmem:[%s2329 + $0xc] sm:$0xf]
      %v2338 = vunpack.c.l.b16 %v2330
      %v2339 = vunpack.c.l.b16 %v2331
      %v2340 = vunpack.c.l.b16 %v2332
      %v2341 = vunpack.c.l.b16 %v2333
      %v2342 = vpack.c.b16 %v2339, %v2338
      %v2343 = vpack.c.b16 %v2341, %v2340
      %2344 = vrot.lane.b32.xlu0 %v2188, 126
      %v2345 = vpop.permute.xlu0 %2344
      %v2348 = vsel %vm2208, %v2342, 0
      %v2351 = vsel %vm2208, %v2343, 0
      %2353 = vmatprep.subr.bf16.mxu0 0
      %2354 = vmatpush1.bf16.msra.mxu0 %v2345
      %2355 = vmatprep.subr.bf16.mxu0 0
      %2356 = vmatpush1.bf16.msra.mxu0 0
      %2357 = vmatprep.subr.bf16.mxu0 0
      %2358 = vmatpush1.bf16.msra.mxu0 0
      %2359 = vmatprep.subr.bf16.mxu0 0
      %2360 = vmatpush1.bf16.msra.mxu0 0
      %2361 = vmatprep.subr.bf16.mxu0 0
      %2362 = vmatpush1.bf16.msra.mxu0 0
      %2363 = vmatprep.subr.bf16.mxu0 0
      %2364 = vmatpush1.bf16.msra.mxu0 0
      %2365 = vmatprep.subr.bf16.mxu0 0
      %2366 = vmatpush1.bf16.msra.mxu0 0
      %2367 = vmatprep.subr.bf16.mxu0 0
      %2368 = vmatpush1.bf16.msra.mxu0 0
      %2369 = vmatprep.subr.bf16.mxu0 0
      %2370 = vmatpush1.bf16.msra.mxu0 0
      %2371 = vmatprep.subr.bf16.mxu0 0
      %2372 = vmatpush1.bf16.msra.mxu0 0
      %2373 = vmatprep.subr.bf16.mxu0 0
      %2374 = vmatpush1.bf16.msra.mxu0 0
      %2375 = vmatprep.subr.bf16.mxu0 0
      %2376 = vmatpush1.bf16.msra.mxu0 0
      %2377 = vmatprep.subr.bf16.mxu0 0
      %2378 = vmatpush1.bf16.msra.mxu0 0
      %2379 = vmatprep.subr.bf16.mxu0 0
      %2380 = vmatpush1.bf16.msra.mxu0 0
      %2381 = vmatprep.subr.bf16.mxu0 0
      %2382 = vmatpush1.bf16.msra.mxu0 0
      %2383 = vmatprep.subr.bf16.mxu0 0
      %2384 = vmatpush1.bf16.msra.mxu0 0
      %2385 = vmatprep.mubr.bf16.mxu0 0
      %2386 = vmatmul.mubr.bf16.gmra.mrb[0].mxu0 %v2348
      %v2387 = vpop.f32.mrb[0].mxu0
      %v2388 = vadd.f32 0.0, %v2387
      %v2389 = vpop.f32.mrb[0].mxu0
      %v2390 = vpop.f32.mrb[0].mxu0
      %v2391 = vadd.f32 0.0, %v2390
      %v2392 = vpop.f32.mrb[0].mxu0
      %2393 = vmatprep.mubr.bf16.mxu0 0
      %2394 = vmatmul.mubr.bf16.gmra.mrb[0].mxu0 %v2351
      %v2395 = vpop.f32.mrb[0].mxu0
      %v2396 = vadd.f32 0.0, %v2395
      %v2397 = vpop.f32.mrb[0].mxu0
      %v2398 = vpop.f32.mrb[0].mxu0
      %v2399 = vadd.f32 0.0, %v2398
      %v2400 = vpop.f32.mrb[0].mxu0
      %2401 = vdwg.mxu0
      %v2402 = vadd.f32 %v2315, %v2388
      %v2403 = vadd.f32 %v2318, %v2391
      %v2404 = vadd.f32 %v2323, %v2396
      %v2405 = vadd.f32 %v2326, %v2399
      %s2406 = scalar_lea.vmem %s4, 48
      %v2407 = vld [vmem:[%s2406] sm:$0xf]
      %v2408 = vld [vmem:[%s2406 + $0x4] sm:$0xf]
      %v2409 = vld [vmem:[%s2406 + $0x8] sm:$0xf]
      %v2410 = vld [vmem:[%s2406 + $0xc] sm:$0xf]
      %v2415 = vunpack.c.l.b16 %v2407
      %v2416 = vunpack.c.l.b16 %v2408
      %v2417 = vunpack.c.l.b16 %v2409
      %v2418 = vunpack.c.l.b16 %v2410
      %v2419 = vpack.c.b16 %v2416, %v2415
      %v2420 = vpack.c.b16 %v2418, %v2417
      %2421 = vrot.lane.b32.xlu0 %v2188, 118
      %v2422 = vpop.permute.xlu0 %2421
      %v2425 = vsel %vm2208, %v2419, 0
      %v2428 = vsel %vm2208, %v2420, 0
      %2430 = vmatprep.subr.bf16.mxu0 0
      %2431 = vmatpush1.bf16.msra.mxu0 %v2422
      %2432 = vmatprep.subr.bf16.mxu0 0
      %2433 = vmatpush1.bf16.msra.mxu0 0
      %2434 = vmatprep.subr.bf16.mxu0 0
      %2435 = vmatpush1.bf16.msra.mxu0 0
      %2436 = vmatprep.subr.bf16.mxu0 0
      %2437 = vmatpush1.bf16.msra.mxu0 0
      %2438 = vmatprep.subr.bf16.mxu0 0
      %2439 = vmatpush1.bf16.msra.mxu0 0
      %2440 = vmatprep.subr.bf16.mxu0 0
      %2441 = vmatpush1.bf16.msra.mxu0 0
      %2442 = vmatprep.subr.bf16.mxu0 0
      %2443 = vmatpush1.bf16.msra.mxu0 0
      %2444 = vmatprep.subr.bf16.mxu0 0
      %2445 = vmatpush1.bf16.msra.mxu0 0
      %2446 = vmatprep.subr.bf16.mxu0 0
      %2447 = vmatpush1.bf16.msra.mxu0 0
      %2448 = vmatprep.subr.bf16.mxu0 0
      %2449 = vmatpush1.bf16.msra.mxu0 0
      %2450 = vmatprep.subr.bf16.mxu0 0
      %2451 = vmatpush1.bf16.msra.mxu0 0
      %2452 = vmatprep.subr.bf16.mxu0 0
      %2453 = vmatpush1.bf16.msra.mxu0 0
      %2454 = vmatprep.subr.bf16.mxu0 0
      %2455 = vmatpush1.bf16.msra.mxu0 0
      %2456 = vmatprep.subr.bf16.mxu0 0
      %2457 = vmatpush1.bf16.msra.mxu0 0
      %2458 = vmatprep.subr.bf16.mxu0 0
      %2459 = vmatpush1.bf16.msra.mxu0 0
      %2460 = vmatprep.subr.bf16.mxu0 0
      %2461 = vmatpush1.bf16.msra.mxu0 0
      %2462 = vmatprep.mubr.bf16.mxu0 0
      %2463 = vmatmul.mubr.bf16.gmra.mrb[0].mxu0 %v2425
      %v2464 = vpop.f32.mrb[0].mxu0
      %v2465 = vadd.f32 0.0, %v2464
      %v2466 = vpop.f32.mrb[0].mxu0
      %v2467 = vpop.f32.mrb[0].mxu0
      %v2468 = vadd.f32 0.0, %v2467
      %v2469 = vpop.f32.mrb[0].mxu0
      %2470 = vmatprep.mubr.bf16.mxu0 0
      %2471 = vmatmul.mubr.bf16.gmra.mrb[0].mxu0 %v2428
      %v2472 = vpop.f32.mrb[0].mxu0
      %v2473 = vadd.f32 0.0, %v2472
      %v2474 = vpop.f32.mrb[0].mxu0
      %v2475 = vpop.f32.mrb[0].mxu0
      %v2476 = vadd.f32 0.0, %v2475
      %v2477 = vpop.f32.mrb[0].mxu0
      %2478 = vdwg.mxu0
      %v2479 = vadd.f32 %v2402, %v2465
      %v2480 = vadd.f32 %v2403, %v2468
      %v2481 = vadd.f32 %v2404, %v2473
      %v2482 = vadd.f32 %v2405, %v2476
      %s2483 = scalar_lea.vmem %s4, 64
      %v2484 = vld [vmem:[%s2483] sm:$0xf]
      %v2485 = vld [vmem:[%s2483 + $0x4] sm:$0xf]
      %v2486 = vld [vmem:[%s2483 + $0x8] sm:$0xf]
      %v2487 = vld [vmem:[%s2483 + $0xc] sm:$0xf]
      %v2492 = vunpack.c.l.b16 %v2484
      %v2493 = vunpack.c.l.b16 %v2485
      %v2494 = vunpack.c.l.b16 %v2486
      %v2495 = vunpack.c.l.b16 %v2487
      %v2496 = vpack.c.b16 %v2493, %v2492
      %v2497 = vpack.c.b16 %v2495, %v2494
      %2498 = vrot.lane.b32.xlu0 %v2188, 117
      %v2499 = vpop.permute.xlu0 %2498
      %v2502 = vsel %vm2208, %v2496, 0
      %v2505 = vsel %vm2208, %v2497, 0
      %2507 = vmatprep.subr.bf16.mxu0 0
      %2508 = vmatpush1.bf16.msra.mxu0 %v2499
      %2509 = vmatprep.subr.bf16.mxu0 0
      %2510 = vmatpush1.bf16.msra.mxu0 0
      %2511 = vmatprep.subr.bf16.mxu0 0
      %2512 = vmatpush1.bf16.msra.mxu0 0
      %2513 = vmatprep.subr.bf16.mxu0 0
      %2514 = vmatpush1.bf16.msra.mxu0 0
      %2515 = vmatprep.subr.bf16.mxu0 0
      %2516 = vmatpush1.bf16.msra.mxu0 0
      %2517 = vmatprep.subr.bf16.mxu0 0
      %2518 = vmatpush1.bf16.msra.mxu0 0
      %2519 = vmatprep.subr.bf16.mxu0 0
      %2520 = vmatpush1.bf16.msra.mxu0 0
      %2521 = vmatprep.subr.bf16.mxu0 0
      %2522 = vmatpush1.bf16.msra.mxu0 0
      %2523 = vmatprep.subr.bf16.mxu0 0
      %2524 = vmatpush1.bf16.msra.mxu0 0
      %2525 = vmatprep.subr.bf16.mxu0 0
      %2526 = vmatpush1.bf16.msra.mxu0 0
      %2527 = vmatprep.subr.bf16.mxu0 0
      %2528 = vmatpush1.bf16.msra.mxu0 0
      %2529 = vmatprep.subr.bf16.mxu0 0
      %2530 = vmatpush1.bf16.msra.mxu0 0
      %2531 = vmatprep.subr.bf16.mxu0 0
      %2532 = vmatpush1.bf16.msra.mxu0 0
      %2533 = vmatprep.subr.bf16.mxu0 0
      %2534 = vmatpush1.bf16.msra.mxu0 0
      %2535 = vmatprep.subr.bf16.mxu0 0
      %2536 = vmatpush1.bf16.msra.mxu0 0
      %2537 = vmatprep.subr.bf16.mxu0 0
      %2538 = vmatpush1.bf16.msra.mxu0 0
      %2539 = vmatprep.mubr.bf16.mxu0 0
      %2540 = vmatmul.mubr.bf16.gmra.mrb[0].mxu0 %v2502
      %v2541 = vpop.f32.mrb[0].mxu0
      %v2542 = vadd.f32 0.0, %v2541
      %v2543 = vpop.f32.mrb[0].mxu0
      %v2544 = vpop.f32.mrb[0].mxu0
      %v2545 = vadd.f32 0.0, %v2544
      %v2546 = vpop.f32.mrb[0].mxu0
      %2547 = vmatprep.mubr.bf16.mxu0 0
      %2548 = vmatmul.mubr.bf16.gmra.mrb[0].mxu0 %v2505
      %v2549 = vpop.f32.mrb[0].mxu0
      %v2550 = vadd.f32 0.0, %v2549
      %v2551 = vpop.f32.mrb[0].mxu0
      %v2552 = vpop.f32.mrb[0].mxu0
      %v2553 = vadd.f32 0.0, %v2552
      %v2554 = vpop.f32.mrb[0].mxu0
      %2555 = vdwg.mxu0
      %v2556 = vadd.f32 %v2479, %v2542
      %v2557 = vadd.f32 %v2480, %v2545
      %v2558 = vadd.f32 %v2481, %v2550
      %v2559 = vadd.f32 %v2482, %v2553
      %s2560 = scalar_lea.vmem %s4, 80
      %v2561 = vld [vmem:[%s2560] sm:$0xf]
      %v2562 = vld [vmem:[%s2560 + $0x4] sm:$0xf]
      %v2563 = vld [vmem:[%s2560 + $0x8] sm:$0xf]
      %v2564 = vld [vmem:[%s2560 + $0xc] sm:$0xf]
      %v2569 = vunpack.c.l.b16 %v2561
      %v2570 = vunpack.c.l.b16 %v2562
      %v2571 = vunpack.c.l.b16 %v2563
      %v2572 = vunpack.c.l.b16 %v2564
      %v2573 = vpack.c.b16 %v2570, %v2569
      %v2574 = vpack.c.b16 %v2572, %v2571
      %2575 = vrot.lane.b32.xlu0 %v2188, 116
      %v2576 = vpop.permute.xlu0 %2575
      %v2579 = vsel %vm2208, %v2573, 0
      %v2582 = vsel %vm2208, %v2574, 0
      %2584 = vmatprep.subr.bf16.mxu0 0
      %2585 = vmatpush1.bf16.msra.mxu0 %v2576
      %2586 = vmatprep.subr.bf16.mxu0 0
      %2587 = vmatpush1.bf16.msra.mxu0 0
      %2588 = vmatprep.subr.bf16.mxu0 0
      %2589 = vmatpush1.bf16.msra.mxu0 0
      %2590 = vmatprep.subr.bf16.mxu0 0
      %2591 = vmatpush1.bf16.msra.mxu0 0
      %2592 = vmatprep.subr.bf16.mxu0 0
      %2593 = vmatpush1.bf16.msra.mxu0 0
      %2594 = vmatprep.subr.bf16.mxu0 0
      %2595 = vmatpush1.bf16.msra.mxu0 0
      %2596 = vmatprep.subr.bf16.mxu0 0
      %2597 = vmatpush1.bf16.msra.mxu0 0
      %2598 = vmatprep.subr.bf16.mxu0 0
      %2599 = vmatpush1.bf16.msra.mxu0 0
      %2600 = vmatprep.subr.bf16.mxu0 0
      %2601 = vmatpush1.bf16.msra.mxu0 0
      %2602 = vmatprep.subr.bf16.mxu0 0
      %2603 = vmatpush1.bf16.msra.mxu0 0
      %2604 = vmatprep.subr.bf16.mxu0 0
      %2605 = vmatpush1.bf16.msra.mxu0 0
      %2606 = vmatprep.subr.bf16.mxu0 0
      %2607 = vmatpush1.bf16.msra.mxu0 0
      %2608 = vmatprep.subr.bf16.mxu0 0
      %2609 = vmatpush1.bf16.msra.mxu0 0
      %2610 = vmatprep.subr.bf16.mxu0 0
      %2611 = vmatpush1.bf16.msra.mxu0 0
      %2612 = vmatprep.subr.bf16.mxu0 0
      %2613 = vmatpush1.bf16.msra.mxu0 0
      %2614 = vmatprep.subr.bf16.mxu0 0
      %2615 = vmatpush1.bf16.msra.mxu0 0
      %2616 = vmatprep.mubr.bf16.mxu0 0
      %2617 = vmatmul.mubr.bf16.gmra.mrb[0].mxu0 %v2579
      %v2618 = vpop.f32.mrb[0].mxu0
      %v2619 = vadd.f32 0.0, %v2618
      %v2620 = vpop.f32.mrb[0].mxu0
      %v2621 = vpop.f32.mrb[0].mxu0
      %v2622 = vadd.f32 0.0, %v2621
      %v2623 = vpop.f32.mrb[0].mxu0
      %2624 = vmatprep.mubr.bf16.mxu0 0
      %2625 = vmatmul.mubr.bf16.gmra.mrb[0].mxu0 %v2582
      %v2626 = vpop.f32.mrb[0].mxu0
      %v2627 = vadd.f32 0.0, %v2626
      %v2628 = vpop.f32.mrb[0].mxu0
      %v2629 = vpop.f32.mrb[0].mxu0
      %v2630 = vadd.f32 0.0, %v2629
      %v2631 = vpop.f32.mrb[0].mxu0
      %2632 = vdwg.mxu0
      %v2633 = vadd.f32 %v2556, %v2619
      %v2634 = vadd.f32 %v2557, %v2622
      %v2635 = vadd.f32 %v2558, %v2627
      %v2636 = vadd.f32 %v2559, %v2630
      %s2637 = scalar_lea.vmem %s4, 96
      %v2638 = vld [vmem:[%s2637] sm:$0xf]
      %v2639 = vld [vmem:[%s2637 + $0x4] sm:$0xf]
      %v2640 = vld [vmem:[%s2637 + $0x8] sm:$0xf]
      %v2641 = vld [vmem:[%s2637 + $0xc] sm:$0xf]
      %v2646 = vunpack.c.l.b16 %v2638
      %v2647 = vunpack.c.l.b16 %v2639
      %v2648 = vunpack.c.l.b16 %v2640
      %v2649 = vunpack.c.l.b16 %v2641
      %v2650 = vpack.c.b16 %v2647, %v2646
      %v2651 = vpack.c.b16 %v2649, %v2648
      %2652 = vrot.lane.b32.xlu0 %v2188, 108
      %v2653 = vpop.permute.xlu0 %2652
      %v2656 = vsel %vm2208, %v2650, 0
      %v2659 = vsel %vm2208, %v2651, 0
      %2661 = vmatprep.subr.bf16.mxu0 0
      %2662 = vmatpush1.bf16.msra.mxu0 %v2653
      %2663 = vmatprep.subr.bf16.mxu0 0
      %2664 = vmatpush1.bf16.msra.mxu0 0
      %2665 = vmatprep.subr.bf16.mxu0 0
      %2666 = vmatpush1.bf16.msra.mxu0 0
      %2667 = vmatprep.subr.bf16.mxu0 0
      %2668 = vmatpush1.bf16.msra.mxu0 0
      %2669 = vmatprep.subr.bf16.mxu0 0
      %2670 = vmatpush1.bf16.msra.mxu0 0
      %2671 = vmatprep.subr.bf16.mxu0 0
      %2672 = vmatpush1.bf16.msra.mxu0 0
      %2673 = vmatprep.subr.bf16.mxu0 0
      %2674 = vmatpush1.bf16.msra.mxu0 0
      %2675 = vmatprep.subr.bf16.mxu0 0
      %2676 = vmatpush1.bf16.msra.mxu0 0
      %2677 = vmatprep.subr.bf16.mxu0 0
      %2678 = vmatpush1.bf16.msra.mxu0 0
      %2679 = vmatprep.subr.bf16.mxu0 0
      %2680 = vmatpush1.bf16.msra.mxu0 0
      %2681 = vmatprep.subr.bf16.mxu0 0
      %2682 = vmatpush1.bf16.msra.mxu0 0
      %2683 = vmatprep.subr.bf16.mxu0 0
      %2684 = vmatpush1.bf16.msra.mxu0 0
      %2685 = vmatprep.subr.bf16.mxu0 0
      %2686 = vmatpush1.bf16.msra.mxu0 0
      %2687 = vmatprep.subr.bf16.mxu0 0
      %2688 = vmatpush1.bf16.msra.mxu0 0
      %2689 = vmatprep.subr.bf16.mxu0 0
      %2690 = vmatpush1.bf16.msra.mxu0 0
      %2691 = vmatprep.subr.bf16.mxu0 0
      %2692 = vmatpush1.bf16.msra.mxu0 0
      %2693 = vmatprep.mubr.bf16.mxu0 0
      %2694 = vmatmul.mubr.bf16.gmra.mrb[0].mxu0 %v2656
      %v2695 = vpop.f32.mrb[0].mxu0
      %v2696 = vadd.f32 0.0, %v2695
      %v2697 = vpop.f32.mrb[0].mxu0
      %v2698 = vpop.f32.mrb[0].mxu0
      %v2699 = vadd.f32 0.0, %v2698
      %v2700 = vpop.f32.mrb[0].mxu0
      %2701 = vmatprep.mubr.bf16.mxu0 0
      %2702 = vmatmul.mubr.bf16.gmra.mrb[0].mxu0 %v2659
      %v2703 = vpop.f32.mrb[0].mxu0
      %v2704 = vadd.f32 0.0, %v2703
      %v2705 = vpop.f32.mrb[0].mxu0
      %v2706 = vpop.f32.mrb[0].mxu0
      %v2707 = vadd.f32 0.0, %v2706
      %v2708 = vpop.f32.mrb[0].mxu0
      %2709 = vdwg.mxu0
      %v2710 = vadd.f32 %v2633, %v2696
      %v2711 = vadd.f32 %v2634, %v2699
      %v2712 = vadd.f32 %v2635, %v2704
      %v2713 = vadd.f32 %v2636, %v2707
      %s2714 = scalar_lea.vmem %s4, 112
      %v2715 = vld [vmem:[%s2714] sm:$0xf]
      %v2716 = vld [vmem:[%s2714 + $0x4] sm:$0xf]
      %v2717 = vld [vmem:[%s2714 + $0x8] sm:$0xf]
      %v2718 = vld [vmem:[%s2714 + $0xc] sm:$0xf]
      %v2723 = vunpack.c.l.b16 %v2715
      %v2724 = vunpack.c.l.b16 %v2716
      %v2725 = vunpack.c.l.b16 %v2717
      %v2726 = vunpack.c.l.b16 %v2718
      %v2727 = vpack.c.b16 %v2724, %v2723
      %v2728 = vpack.c.b16 %v2726, %v2725
      %2729 = vrot.lane.b32.xlu0 %v2188, 107
      %v2730 = vpop.permute.xlu0 %2729
      %v2733 = vsel %vm2208, %v2727, 0
      %v2736 = vsel %vm2208, %v2728, 0
      %2738 = vmatprep.subr.bf16.mxu0 0
      %2739 = vmatpush1.bf16.msra.mxu0 %v2730
      %2740 = vmatprep.subr.bf16.mxu0 0
      %2741 = vmatpush1.bf16.msra.mxu0 0
      %2742 = vmatprep.subr.bf16.mxu0 0
      %2743 = vmatpush1.bf16.msra.mxu0 0
      %2744 = vmatprep.subr.bf16.mxu0 0
      %2745 = vmatpush1.bf16.msra.mxu0 0
      %2746 = vmatprep.subr.bf16.mxu0 0
      %2747 = vmatpush1.bf16.msra.mxu0 0
      %2748 = vmatprep.subr.bf16.mxu0 0
      %2749 = vmatpush1.bf16.msra.mxu0 0
      %2750 = vmatprep.subr.bf16.mxu0 0
      %2751 = vmatpush1.bf16.msra.mxu0 0
      %2752 = vmatprep.subr.bf16.mxu0 0
      %2753 = vmatpush1.bf16.msra.mxu0 0
      %2754 = vmatprep.subr.bf16.mxu0 0
      %2755 = vmatpush1.bf16.msra.mxu0 0
      %2756 = vmatprep.subr.bf16.mxu0 0
      %2757 = vmatpush1.bf16.msra.mxu0 0
      %2758 = vmatprep.subr.bf16.mxu0 0
      %2759 = vmatpush1.bf16.msra.mxu0 0
      %2760 = vmatprep.subr.bf16.mxu0 0
      %2761 = vmatpush1.bf16.msra.mxu0 0
      %2762 = vmatprep.subr.bf16.mxu0 0
      %2763 = vmatpush1.bf16.msra.mxu0 0
      %2764 = vmatprep.subr.bf16.mxu0 0
      %2765 = vmatpush1.bf16.msra.mxu0 0
      %2766 = vmatprep.subr.bf16.mxu0 0
      %2767 = vmatpush1.bf16.msra.mxu0 0
      %2768 = vmatprep.subr.bf16.mxu0 0
      %2769 = vmatpush1.bf16.msra.mxu0 0
      %2770 = vmatprep.mubr.bf16.mxu0 0
      %2771 = vmatmul.mubr.bf16.gmra.mrb[0].mxu0 %v2733
      %v2772 = vpop.f32.mrb[0].mxu0
      %v2773 = vadd.f32 0.0, %v2772
      %v2774 = vpop.f32.mrb[0].mxu0
      %v2775 = vpop.f32.mrb[0].mxu0
      %v2776 = vadd.f32 0.0, %v2775
      %v2777 = vpop.f32.mrb[0].mxu0
      %2778 = vmatprep.mubr.bf16.mxu0 0
      %2779 = vmatmul.mubr.bf16.gmra.mrb[0].mxu0 %v2736
      %v2780 = vpop.f32.mrb[0].mxu0
      %v2781 = vadd.f32 0.0, %v2780
      %v2782 = vpop.f32.mrb[0].mxu0
      %v2783 = vpop.f32.mrb[0].mxu0
      %v2784 = vadd.f32 0.0, %v2783
      %v2785 = vpop.f32.mrb[0].mxu0
      %2786 = vdwg.mxu0
      %v2787 = vadd.f32 %v2710, %v2773
      %v2788 = vadd.f32 %v2711, %v2776
      %v2789 = vadd.f32 %v2712, %v2781
      %v2790 = vadd.f32 %v2713, %v2784
      %s2791 = scalar_lea.vmem %s4, 128
      %v2792 = vld [vmem:[%s2791] sm:$0xf]
      %v2793 = vld [vmem:[%s2791 + $0x4] sm:$0xf]
      %v2794 = vld [vmem:[%s2791 + $0x8] sm:$0xf]
      %v2795 = vld [vmem:[%s2791 + $0xc] sm:$0xf]
      %v2800 = vunpack.c.l.b16 %v2792
      %v2801 = vunpack.c.l.b16 %v2793
      %v2802 = vunpack.c.l.b16 %v2794
      %v2803 = vunpack.c.l.b16 %v2795
      %v2804 = vpack.c.b16 %v2801, %v2800
      %v2805 = vpack.c.b16 %v2803, %v2802
      %2806 = vrot.lane.b32.xlu0 %v2188, 106
      %v2807 = vpop.permute.xlu0 %2806
      %v2810 = vsel %vm2208, %v2804, 0
      %v2813 = vsel %vm2208, %v2805, 0
      %2815 = vmatprep.subr.bf16.mxu0 0
      %2816 = vmatpush1.bf16.msra.mxu0 %v2807
      %2817 = vmatprep.subr.bf16.mxu0 0
      %2818 = vmatpush1.bf16.msra.mxu0 0
      %2819 = vmatprep.subr.bf16.mxu0 0
      %2820 = vmatpush1.bf16.msra.mxu0 0
      %2821 = vmatprep.subr.bf16.mxu0 0
      %2822 = vmatpush1.bf16.msra.mxu0 0
      %2823 = vmatprep.subr.bf16.mxu0 0
      %2824 = vmatpush1.bf16.msra.mxu0 0
      %2825 = vmatprep.subr.bf16.mxu0 0
      %2826 = vmatpush1.bf16.msra.mxu0 0
      %2827 = vmatprep.subr.bf16.mxu0 0
      %2828 = vmatpush1.bf16.msra.mxu0 0
      %2829 = vmatprep.subr.bf16.mxu0 0
      %2830 = vmatpush1.bf16.msra.mxu0 0
      %2831 = vmatprep.subr.bf16.mxu0 0
      %2832 = vmatpush1.bf16.msra.mxu0 0
      %2833 = vmatprep.subr.bf16.mxu0 0
      %2834 = vmatpush1.bf16.msra.mxu0 0
      %2835 = vmatprep.subr.bf16.mxu0 0
      %2836 = vmatpush1.bf16.msra.mxu0 0
      %2837 = vmatprep.subr.bf16.mxu0 0
      %2838 = vmatpush1.bf16.msra.mxu0 0
      %2839 = vmatprep.subr.bf16.mxu0 0
      %2840 = vmatpush1.bf16.msra.mxu0 0
      %2841 = vmatprep.subr.bf16.mxu0 0
      %2842 = vmatpush1.bf16.msra.mxu0 0
      %2843 = vmatprep.subr.bf16.mxu0 0
      %2844 = vmatpush1.bf16.msra.mxu0 0
      %2845 = vmatprep.subr.bf16.mxu0 0
      %2846 = vmatpush1.bf16.msra.mxu0 0
      %2847 = vmatprep.mubr.bf16.mxu0 0
      %2848 = vmatmul.mubr.bf16.gmra.mrb[0].mxu0 %v2810
      %v2849 = vpop.f32.mrb[0].mxu0
      %v2850 = vadd.f32 0.0, %v2849
      %v2851 = vpop.f32.mrb[0].mxu0
      %v2852 = vpop.f32.mrb[0].mxu0
      %v2853 = vadd.f32 0.0, %v2852
      %v2854 = vpop.f32.mrb[0].mxu0
      %2855 = vmatprep.mubr.bf16.mxu0 0
      %2856 = vmatmul.mubr.bf16.gmra.mrb[0].mxu0 %v2813
      %v2857 = vpop.f32.mrb[0].mxu0
      %v2858 = vadd.f32 0.0, %v2857
      %v2859 = vpop.f32.mrb[0].mxu0
      %v2860 = vpop.f32.mrb[0].mxu0
      %v2861 = vadd.f32 0.0, %v2860
      %v2862 = vpop.f32.mrb[0].mxu0
      %2863 = vdwg.mxu0
      %v2864 = vadd.f32 %v2787, %v2850
      %v2865 = vadd.f32 %v2788, %v2853
      %v2866 = vadd.f32 %v2789, %v2858
      %v2867 = vadd.f32 %v2790, %v2861
      %v2868 = vld [vmem:[%s5] sm:$0xff]
      %v2869 = vld [vmem:[%s5 + $0x8] sm:$0xff]
      %v2870 = vld [vmem:[%s5 + $0x10] sm:$0xff]
      %v2871 = vld [vmem:[%s5 + $0x18] sm:$0xff]
      %2873 = vset.pattern.permute.xlu0 0
      %2874 = vperm.xlu0 %2873, %v2868
      %v2875 = vpop.permute.xlu0 %2874
      %2878 = vset.pattern.permute.xlu0 0
      %2879 = vperm.xlu0 %2878, %v2869
      %v2880 = vpop.permute.xlu0 %2879
      %2883 = vset.pattern.permute.xlu0 0
      %2884 = vperm.xlu0 %2883, %v2870
      %v2885 = vpop.permute.xlu0 %2884
      %2888 = vset.pattern.permute.xlu0 0
      %2889 = vperm.xlu0 %2888, %v2871
      %v2890 = vpop.permute.xlu0 %2889
      %v2892 = vadd.f32 %v2864, %v2875
      %v2893 = vadd.f32 %v2865, %v2880
      %v2894 = vadd.f32 %v2866, %v2885
      %v2895 = vadd.f32 %v2867, %v2890
      %vm2896 = vcmp.ge.f32.partialorder %v2892, 0.0
      %vm2897 = vcmp.ge.f32.partialorder %v2893, 0.0
      %vm2898 = vcmp.ge.f32.partialorder %v2894, 0.0
      %vm2899 = vcmp.ge.f32.partialorder %v2895, 0.0
      %v2900 = vmul.f32 %v2892, 0.03
      %v2901 = vmul.f32 %v2893, 0.03
      %v2902 = vmul.f32 %v2894, 0.03
      %v2903 = vmul.f32 %v2895, 0.03
      %v2904 = vsel %vm2896, %v2892, %v2900
      %v2905 = vsel %vm2897, %v2893, %v2901
      %v2906 = vsel %vm2898, %v2894, %v2902
      %v2907 = vsel %vm2899, %v2895, %v2903
      %v2908 = vpack.c.bf16 %v2905, %v2904
      %v2909 = vpack.c.bf16 %v2907, %v2906
      %v2910 = vld [vmem:[%s6] sm:$0xf]
      %v2911 = vld [vmem:[%s6 + $0x4] sm:$0xf]
      %v2912 = vld [vmem:[%s6 + $0x8] sm:$0xf]
      %v2913 = vld [vmem:[%s6 + $0xc] sm:$0xf]
      %v2914 = vld [vmem:[%s6 + $0x10] sm:$0xf]
      %v2915 = vld [vmem:[%s6 + $0x14] sm:$0xf]
      %v2916 = vld [vmem:[%s6 + $0x18] sm:$0xf]
      %v2917 = vld [vmem:[%s6 + $0x1c] sm:$0xf]
      %v2918 = vld [vmem:[%s6 + $0x20] sm:$0xf]
      %v2919 = vld [vmem:[%s6 + $0x24] sm:$0xf]
      %v2920 = vld [vmem:[%s6 + $0x28] sm:$0xf]
      %v2921 = vld [vmem:[%s6 + $0x2c] sm:$0xf]
      %v2922 = vld [vmem:[%s6 + $0x30] sm:$0x3]
      %v2936 = vunpack.c.l.b16 %v2910
      %v2937 = vunpack.c.l.b16 %v2911
      %v2938 = vunpack.c.l.b16 %v2912
      %v2939 = vunpack.c.l.b16 %v2913
      %v2940 = vunpack.c.l.b16 %v2914
      %v2941 = vunpack.c.l.b16 %v2915
      %v2942 = vunpack.c.l.b16 %v2916
      %v2943 = vunpack.c.l.b16 %v2917
      %v2944 = vunpack.c.l.b16 %v2918
      %v2945 = vunpack.c.l.b16 %v2919
      %v2946 = vunpack.c.l.b16 %v2920
      %v2947 = vunpack.c.l.b16 %v2921
      %v2948 = vunpack.c.l.b16 %v2922
      %v2949 = vpack.c.b16 %v2937, %v2936
      %v2950 = vpack.c.b16 %v2939, %v2938
      %v2951 = vpack.c.b16 %v2941, %v2940
      %v2952 = vpack.c.b16 %v2943, %v2942
      %v2953 = vpack.c.b16 %v2945, %v2944
      %v2954 = vpack.c.b16 %v2947, %v2946
      %v2955 = vpack.c.b16 %v2948, %v2948
      %vm2962 = vcmask 818176
      %v2964 = vsel %vm2962, %v2908, 0
      %v2967 = vsel %vm2962, %v2909, 0
      %v2970 = vsel %vm729, %v2955, 0
      %2972 = vmatprep.subr.bf16.mxu0 0
      %2973 = vmatpush1.bf16.msra.mxu0 %v2949
      %2974 = vmatprep.subr.bf16.mxu0 0
      %2975 = vmatpush1.bf16.msra.mxu0 %v2950
      %2976 = vmatprep.subr.bf16.mxu0 0
      %2977 = vmatpush1.bf16.msra.mxu0 %v2951
      %2978 = vmatprep.subr.bf16.mxu0 0
      %2979 = vmatpush1.bf16.msra.mxu0 %v2952
      %2980 = vmatprep.subr.bf16.mxu0 0
      %2981 = vmatpush1.bf16.msra.mxu0 %v2953
      %2982 = vmatprep.subr.bf16.mxu0 0
      %2983 = vmatpush1.bf16.msra.mxu0 %v2954
      %2984 = vmatprep.subr.bf16.mxu0 0
      %2985 = vmatpush1.bf16.msra.mxu0 %v2970
      %2986 = vmatprep.subr.bf16.mxu0 0
      %2987 = vmatpush1.bf16.msra.mxu0 0
      %2988 = vmatprep.subr.bf16.mxu0 0
      %2989 = vmatpush1.bf16.msra.mxu0 0
      %2990 = vmatprep.subr.bf16.mxu0 0
      %2991 = vmatpush1.bf16.msra.mxu0 0
      %2992 = vmatprep.subr.bf16.mxu0 0
      %2993 = vmatpush1.bf16.msra.mxu0 0
      %2994 = vmatprep.subr.bf16.mxu0 0
      %2995 = vmatpush1.bf16.msra.mxu0 0
      %2996 = vmatprep.subr.bf16.mxu0 0
      %2997 = vmatpush1.bf16.msra.mxu0 0
      %2998 = vmatprep.subr.bf16.mxu0 0
      %2999 = vmatpush1.bf16.msra.mxu0 0
      %3000 = vmatprep.subr.bf16.mxu0 0
      %3001 = vmatpush1.bf16.msra.mxu0 0
      %3002 = vmatprep.subr.bf16.mxu0 0
      %3003 = vmatpush1.bf16.msra.mxu0 0
      %3004 = vmatprep.mubr.bf16.mxu0 0
      %3005 = vmatmul.mubr.bf16.gmra.mrb[0].mxu0 %v2964
      %v3006 = vpop.f32.mrb[0].mxu0
      %v3007 = vadd.f32 0.0, %v3006
      %v3008 = vpop.f32.mrb[0].mxu0
      %v3009 = vpop.f32.mrb[0].mxu0
      %v3010 = vadd.f32 0.0, %v3009
      %v3011 = vpop.f32.mrb[0].mxu0
      %3012 = vmatprep.mubr.bf16.mxu0 0
      %3013 = vmatmul.mubr.bf16.gmra.mrb[0].mxu0 %v2967
      %v3014 = vpop.f32.mrb[0].mxu0
      %v3015 = vadd.f32 0.0, %v3014
      %v3016 = vpop.f32.mrb[0].mxu0
      %v3017 = vpop.f32.mrb[0].mxu0
      %v3018 = vadd.f32 0.0, %v3017
      %v3019 = vpop.f32.mrb[0].mxu0
      %3020 = vdwg.mxu0
      %v3021 = vpack.c.bf16 %v3010, %v3007
      %v3022 = vpack.c.bf16 %v3018, %v3015
      %3025 = vrot.lane.b32.xlu0 %v3021, 7
      %v3026 = vpop.permute.xlu0 %3025
      %3027 = vrot.lane.b32.xlu0 %v3022, 7
      %v3028 = vpop.permute.xlu0 %3027
      %vm3031 = vcmask 351288
      %3032 = vst.msk [vmem:[#allocation3] sm:$0xff] %vm3031, %v3026
      %3033 = vst.msk [vmem:[#allocation3 + $0x8] sm:$0xff] %vm3031, %v3028
      %v3034 = vld [vmem:[%s7] sm:$0xf]
      %v3035 = vld [vmem:[%s7 + $0x4] sm:$0xf]
      %v3036 = vld [vmem:[%s7 + $0x8] sm:$0xf]
      %v3037 = vld [vmem:[%s7 + $0xc] sm:$0xf]
      %v3038 = vld [vmem:[%s7 + $0x10] sm:$0xf]
      %v3039 = vld [vmem:[%s7 + $0x14] sm:$0xf]
      %v3040 = vld [vmem:[%s7 + $0x18] sm:$0xf]
      %v3041 = vld [vmem:[%s7 + $0x1c] sm:$0xf]
      %v3042 = vld [vmem:[#allocation3] sm:$0xff]
      %v3043 = vld [vmem:[#allocation3 + $0x8] sm:$0xff]
      %s3044 = scalar_lea.vmem %s7, 32
      %v3045 = vld [vmem:[%s3044] sm:$0xf]
      %v3046 = vld [vmem:[%s3044 + $0x4] sm:$0xf]
      %v3047 = vld [vmem:[%s3044 + $0x8] sm:$0xf]
      %v3048 = vld [vmem:[%s3044 + $0xc] sm:$0xf]
      %v3049 = vld [vmem:[%s3044 + $0x10] sm:$0xf]
      %v3050 = vld [vmem:[%s3044 + $0x14] sm:$0xf]
      %v3051 = vld [vmem:[%s3044 + $0x18] sm:$0xf]
      %v3052 = vld [vmem:[%s3044 + $0x1c] sm:$0xf]
      %v3061 = vunpack.c.l.b16 %v3045
      %v3062 = vunpack.c.l.b16 %v3046
      %v3063 = vunpack.c.l.b16 %v3047
      %v3064 = vunpack.c.l.b16 %v3048
      %v3065 = vunpack.c.l.b16 %v3049
      %v3066 = vunpack.c.l.b16 %v3050
      %v3067 = vunpack.c.l.b16 %v3051
      %v3068 = vunpack.c.l.b16 %v3052
      %v3069 = vpack.c.b16 %v3062, %v3061
      %v3070 = vpack.c.b16 %v3064, %v3063
      %v3071 = vpack.c.b16 %v3066, %v3065
      %v3072 = vpack.c.b16 %v3068, %v3067
      %3075 = vrot.lane.b32.xlu0 %v3042, 127
      %v3076 = vpop.permute.xlu0 %3075
      %3077 = vrot.lane.b32.xlu0 %v3043, 127
      %v3078 = vpop.permute.xlu0 %3077
      %vm3081 = vcmask 261120
      %v3083 = vsel %vm3081, %v3069, 0
      %v3086 = vsel %vm3081, %v3070, 0
      %v3089 = vsel %vm3081, %v3071, 0
      %v3092 = vsel %vm3081, %v3072, 0
      %3094 = vmatprep.subr.bf16.mxu0 0
      %3095 = vmatpush1.bf16.msra.mxu0 %v3076
      %3096 = vmatprep.subr.bf16.mxu0 0
      %3097 = vmatpush1.bf16.msra.mxu0 %v3078
      %3098 = vmatprep.subr.bf16.mxu0 0
      %3099 = vmatpush1.bf16.msra.mxu0 0
      %3100 = vmatprep.subr.bf16.mxu0 0
      %3101 = vmatpush1.bf16.msra.mxu0 0
      %3102 = vmatprep.subr.bf16.mxu0 0
      %3103 = vmatpush1.bf16.msra.mxu0 0
      %3104 = vmatprep.subr.bf16.mxu0 0
      %3105 = vmatpush1.bf16.msra.mxu0 0
      %3106 = vmatprep.subr.bf16.mxu0 0
      %3107 = vmatpush1.bf16.msra.mxu0 0
      %3108 = vmatprep.subr.bf16.mxu0 0
      %3109 = vmatpush1.bf16.msra.mxu0 0
      %3110 = vmatprep.subr.bf16.mxu0 0
      %3111 = vmatpush1.bf16.msra.mxu0 0
      %3112 = vmatprep.subr.bf16.mxu0 0
      %3113 = vmatpush1.bf16.msra.mxu0 0
      %3114 = vmatprep.subr.bf16.mxu0 0
      %3115 = vmatpush1.bf16.msra.mxu0 0
      %3116 = vmatprep.subr.bf16.mxu0 0
      %3117 = vmatpush1.bf16.msra.mxu0 0
      %3118 = vmatprep.subr.bf16.mxu0 0
      %3119 = vmatpush1.bf16.msra.mxu0 0
      %3120 = vmatprep.subr.bf16.mxu0 0
      %3121 = vmatpush1.bf16.msra.mxu0 0
      %3122 = vmatprep.subr.bf16.mxu0 0
      %3123 = vmatpush1.bf16.msra.mxu0 0
      %3124 = vmatprep.subr.bf16.mxu0 0
      %3125 = vmatpush1.bf16.msra.mxu0 0
      %3126 = vmatprep.mubr.bf16.mxu0 0
      %3127 = vmatmul.mubr.bf16.gmra.mrb[0].mxu0 %v3083
      %v3128 = vpop.f32.mrb[0].mxu0
      %v3129 = vadd.f32 0.0, %v3128
      %v3130 = vpop.f32.mrb[0].mxu0
      %v3131 = vpop.f32.mrb[0].mxu0
      %v3132 = vadd.f32 0.0, %v3131
      %v3133 = vpop.f32.mrb[0].mxu0
      %3134 = vmatprep.mubr.bf16.mxu0 0
      %3135 = vmatmul.mubr.bf16.gmra.mrb[0].mxu0 %v3086
      %v3136 = vpop.f32.mrb[0].mxu0
      %v3137 = vadd.f32 0.0, %v3136
      %v3138 = vpop.f32.mrb[0].mxu0
      %v3139 = vpop.f32.mrb[0].mxu0
      %v3140 = vadd.f32 0.0, %v3139
      %v3141 = vpop.f32.mrb[0].mxu0
      %3142 = vmatprep.mubr.bf16.mxu0 0
      %3143 = vmatmul.mubr.bf16.gmra.mrb[0].mxu0 %v3089
      %v3144 = vpop.f32.mrb[0].mxu0
      %v3145 = vadd.f32 0.0, %v3144
      %v3146 = vpop.f32.mrb[0].mxu0
      %v3147 = vpop.f32.mrb[0].mxu0
      %v3148 = vadd.f32 0.0, %v3147
      %v3149 = vpop.f32.mrb[0].mxu0
      %3150 = vmatprep.mubr.bf16.mxu0 0
      %3151 = vmatmul.mubr.bf16.gmra.mrb[0].mxu0 %v3092
      %v3152 = vpop.f32.mrb[0].mxu0
      %v3153 = vadd.f32 0.0, %v3152
      %v3154 = vpop.f32.mrb[0].mxu0
      %v3155 = vpop.f32.mrb[0].mxu0
      %v3156 = vadd.f32 0.0, %v3155
      %v3157 = vpop.f32.mrb[0].mxu0
      %3158 = vdwg.mxu0
      %v3167 = vunpack.c.l.b16 %v3034
      %v3168 = vunpack.c.l.b16 %v3035
      %v3169 = vunpack.c.l.b16 %v3036
      %v3170 = vunpack.c.l.b16 %v3037
      %v3171 = vunpack.c.l.b16 %v3038
      %v3172 = vunpack.c.l.b16 %v3039
      %v3173 = vunpack.c.l.b16 %v3040
      %v3174 = vunpack.c.l.b16 %v3041
      %v3175 = vpack.c.b16 %v3168, %v3167
      %v3176 = vpack.c.b16 %v3170, %v3169
      %v3177 = vpack.c.b16 %v3172, %v3171
      %v3178 = vpack.c.b16 %v3174, %v3173
      %v3180 = vsel %vm3081, %v3175, 0
      %v3183 = vsel %vm3081, %v3176, 0
      %v3186 = vsel %vm3081, %v3177, 0
      %v3189 = vsel %vm3081, %v3178, 0
      %3191 = vmatprep.subr.bf16.mxu0 0
      %3192 = vmatpush1.bf16.msra.mxu0 %v3042
      %3193 = vmatprep.subr.bf16.mxu0 0
      %3194 = vmatpush1.bf16.msra.mxu0 %v3043
      %3195 = vmatprep.subr.bf16.mxu0 0
      %3196 = vmatpush1.bf16.msra.mxu0 0
      %3197 = vmatprep.subr.bf16.mxu0 0
      %3198 = vmatpush1.bf16.msra.mxu0 0
      %3199 = vmatprep.subr.bf16.mxu0 0
      %3200 = vmatpush1.bf16.msra.mxu0 0
      %3201 = vmatprep.subr.bf16.mxu0 0
      %3202 = vmatpush1.bf16.msra.mxu0 0
      %3203 = vmatprep.subr.bf16.mxu0 0
      %3204 = vmatpush1.bf16.msra.mxu0 0
      %3205 = vmatprep.subr.bf16.mxu0 0
      %3206 = vmatpush1.bf16.msra.mxu0 0
      %3207 = vmatprep.subr.bf16.mxu0 0
      %3208 = vmatpush1.bf16.msra.mxu0 0
      %3209 = vmatprep.subr.bf16.mxu0 0
      %3210 = vmatpush1.bf16.msra.mxu0 0
      %3211 = vmatprep.subr.bf16.mxu0 0
      %3212 = vmatpush1.bf16.msra.mxu0 0
      %3213 = vmatprep.subr.bf16.mxu0 0
      %3214 = vmatpush1.bf16.msra.mxu0 0
      %3215 = vmatprep.subr.bf16.mxu0 0
      %3216 = vmatpush1.bf16.msra.mxu0 0
      %3217 = vmatprep.subr.bf16.mxu0 0
      %3218 = vmatpush1.bf16.msra.mxu0 0
      %3219 = vmatprep.subr.bf16.mxu0 0
      %3220 = vmatpush1.bf16.msra.mxu0 0
      %3221 = vmatprep.subr.bf16.mxu0 0
      %3222 = vmatpush1.bf16.msra.mxu0 0
      %3223 = vmatprep.mubr.bf16.mxu0 0
      %3224 = vmatmul.mubr.bf16.gmra.mrb[0].mxu0 %v3180
      %v3225 = vpop.f32.mrb[0].mxu0
      %v3226 = vadd.f32 %v3129, %v3225
      %v3227 = vpop.f32.mrb[0].mxu0
      %v3228 = vpop.f32.mrb[0].mxu0
      %v3229 = vadd.f32 %v3132, %v3228
      %v3230 = vpop.f32.mrb[0].mxu0
      %3231 = vmatprep.mubr.bf16.mxu0 0
      %3232 = vmatmul.mubr.bf16.gmra.mrb[0].mxu0 %v3183
      %v3233 = vpop.f32.mrb[0].mxu0
      %v3234 = vadd.f32 %v3137, %v3233
      %v3235 = vpop.f32.mrb[0].mxu0
      %v3236 = vpop.f32.mrb[0].mxu0
      %v3237 = vadd.f32 %v3140, %v3236
      %v3238 = vpop.f32.mrb[0].mxu0
      %3239 = vmatprep.mubr.bf16.mxu0 0
      %3240 = vmatmul.mubr.bf16.gmra.mrb[0].mxu0 %v3186
      %v3241 = vpop.f32.mrb[0].mxu0
      %v3242 = vadd.f32 %v3145, %v3241
      %v3243 = vpop.f32.mrb[0].mxu0
      %v3244 = vpop.f32.mrb[0].mxu0
      %v3245 = vadd.f32 %v3148, %v3244
      %v3246 = vpop.f32.mrb[0].mxu0
      %3247 = vmatprep.mubr.bf16.mxu0 0
      %3248 = vmatmul.mubr.bf16.gmra.mrb[0].mxu0 %v3189
      %v3249 = vpop.f32.mrb[0].mxu0
      %v3250 = vadd.f32 %v3153, %v3249
      %v3251 = vpop.f32.mrb[0].mxu0
      %v3252 = vpop.f32.mrb[0].mxu0
      %v3253 = vadd.f32 %v3156, %v3252
      %v3254 = vpop.f32.mrb[0].mxu0
      %3255 = vdwg.mxu0
      %s3256 = scalar_lea.vmem %s7, 64
      %v3257 = vld [vmem:[%s3256] sm:$0xf]
      %v3258 = vld [vmem:[%s3256 + $0x4] sm:$0xf]
      %v3259 = vld [vmem:[%s3256 + $0x8] sm:$0xf]
      %v3260 = vld [vmem:[%s3256 + $0xc] sm:$0xf]
      %v3261 = vld [vmem:[%s3256 + $0x10] sm:$0xf]
      %v3262 = vld [vmem:[%s3256 + $0x14] sm:$0xf]
      %v3263 = vld [vmem:[%s3256 + $0x18] sm:$0xf]
      %v3264 = vld [vmem:[%s3256 + $0x1c] sm:$0xf]
      %v3273 = vunpack.c.l.b16 %v3257
      %v3274 = vunpack.c.l.b16 %v3258
      %v3275 = vunpack.c.l.b16 %v3259
      %v3276 = vunpack.c.l.b16 %v3260
      %v3277 = vunpack.c.l.b16 %v3261
      %v3278 = vunpack.c.l.b16 %v3262
      %v3279 = vunpack.c.l.b16 %v3263
      %v3280 = vunpack.c.l.b16 %v3264
      %v3281 = vpack.c.b16 %v3274, %v3273
      %v3282 = vpack.c.b16 %v3276, %v3275
      %v3283 = vpack.c.b16 %v3278, %v3277
      %v3284 = vpack.c.b16 %v3280, %v3279
      %3285 = vrot.lane.b32.xlu0 %v3042, 126
      %v3286 = vpop.permute.xlu0 %3285
      %3287 = vrot.lane.b32.xlu0 %v3043, 126
      %v3288 = vpop.permute.xlu0 %3287
      %v3292 = vsel %vm3081, %v3281, 0
      %v3295 = vsel %vm3081, %v3282, 0
      %v3298 = vsel %vm3081, %v3283, 0
      %v3301 = vsel %vm3081, %v3284, 0
      %3303 = vmatprep.subr.bf16.mxu0 0
      %3304 = vmatpush1.bf16.msra.mxu0 %v3286
      %3305 = vmatprep.subr.bf16.mxu0 0
      %3306 = vmatpush1.bf16.msra.mxu0 %v3288
      %3307 = vmatprep.subr.bf16.mxu0 0
      %3308 = vmatpush1.bf16.msra.mxu0 0
      %3309 = vmatprep.subr.bf16.mxu0 0
      %3310 = vmatpush1.bf16.msra.mxu0 0
      %3311 = vmatprep.subr.bf16.mxu0 0
      %3312 = vmatpush1.bf16.msra.mxu0 0
      %3313 = vmatprep.subr.bf16.mxu0 0
      %3314 = vmatpush1.bf16.msra.mxu0 0
      %3315 = vmatprep.subr.bf16.mxu0 0
      %3316 = vmatpush1.bf16.msra.mxu0 0
      %3317 = vmatprep.subr.bf16.mxu0 0
      %3318 = vmatpush1.bf16.msra.mxu0 0
      %3319 = vmatprep.subr.bf16.mxu0 0
      %3320 = vmatpush1.bf16.msra.mxu0 0
      %3321 = vmatprep.subr.bf16.mxu0 0
      %3322 = vmatpush1.bf16.msra.mxu0 0
      %3323 = vmatprep.subr.bf16.mxu0 0
      %3324 = vmatpush1.bf16.msra.mxu0 0
      %3325 = vmatprep.subr.bf16.mxu0 0
      %3326 = vmatpush1.bf16.msra.mxu0 0
      %3327 = vmatprep.subr.bf16.mxu0 0
      %3328 = vmatpush1.bf16.msra.mxu0 0
      %3329 = vmatprep.subr.bf16.mxu0 0
      %3330 = vmatpush1.bf16.msra.mxu0 0
      %3331 = vmatprep.subr.bf16.mxu0 0
      %3332 = vmatpush1.bf16.msra.mxu0 0
      %3333 = vmatprep.subr.bf16.mxu0 0
      %3334 = vmatpush1.bf16.msra.mxu0 0
      %3335 = vmatprep.mubr.bf16.mxu0 0
      %3336 = vmatmul.mubr.bf16.gmra.mrb[0].mxu0 %v3292
      %v3337 = vpop.f32.mrb[0].mxu0
      %v3338 = vadd.f32 0.0, %v3337
      %v3339 = vpop.f32.mrb[0].mxu0
      %v3340 = vpop.f32.mrb[0].mxu0
      %v3341 = vadd.f32 0.0, %v3340
      %v3342 = vpop.f32.mrb[0].mxu0
      %3343 = vmatprep.mubr.bf16.mxu0 0
      %3344 = vmatmul.mubr.bf16.gmra.mrb[0].mxu0 %v3295
      %v3345 = vpop.f32.mrb[0].mxu0
      %v3346 = vadd.f32 0.0, %v3345
      %v3347 = vpop.f32.mrb[0].mxu0
      %v3348 = vpop.f32.mrb[0].mxu0
      %v3349 = vadd.f32 0.0, %v3348
      %v3350 = vpop.f32.mrb[0].mxu0
      %3351 = vmatprep.mubr.bf16.mxu0 0
      %3352 = vmatmul.mubr.bf16.gmra.mrb[0].mxu0 %v3298
      %v3353 = vpop.f32.mrb[0].mxu0
      %v3354 = vadd.f32 0.0, %v3353
      %v3355 = vpop.f32.mrb[0].mxu0
      %v3356 = vpop.f32.mrb[0].mxu0
      %v3357 = vadd.f32 0.0, %v3356
      %v3358 = vpop.f32.mrb[0].mxu0
      %3359 = vmatprep.mubr.bf16.mxu0 0
      %3360 = vmatmul.mubr.bf16.gmra.mrb[0].mxu0 %v3301
      %v3361 = vpop.f32.mrb[0].mxu0
      %v3362 = vadd.f32 0.0, %v3361
      %v3363 = vpop.f32.mrb[0].mxu0
      %v3364 = vpop.f32.mrb[0].mxu0
      %v3365 = vadd.f32 0.0, %v3364
      %v3366 = vpop.f32.mrb[0].mxu0
      %3367 = vdwg.mxu0
      %v3368 = vadd.f32 %v3226, %v3338
      %v3369 = vadd.f32 %v3229, %v3341
      %v3370 = vadd.f32 %v3234, %v3346
      %v3371 = vadd.f32 %v3237, %v3349
      %v3372 = vadd.f32 %v3242, %v3354
      %v3373 = vadd.f32 %v3245, %v3357
      %v3374 = vadd.f32 %v3250, %v3362
      %v3375 = vadd.f32 %v3253, %v3365
      %s3376 = scalar_lea.vmem %s7, 96
      %v3377 = vld [vmem:[%s3376] sm:$0xf]
      %v3378 = vld [vmem:[%s3376 + $0x4] sm:$0xf]
      %v3379 = vld [vmem:[%s3376 + $0x8] sm:$0xf]
      %v3380 = vld [vmem:[%s3376 + $0xc] sm:$0xf]
      %v3381 = vld [vmem:[%s3376 + $0x10] sm:$0xf]
      %v3382 = vld [vmem:[%s3376 + $0x14] sm:$0xf]
      %v3383 = vld [vmem:[%s3376 + $0x18] sm:$0xf]
      %v3384 = vld [vmem:[%s3376 + $0x1c] sm:$0xf]
      %v3393 = vunpack.c.l.b16 %v3377
      %v3394 = vunpack.c.l.b16 %v3378
      %v3395 = vunpack.c.l.b16 %v3379
      %v3396 = vunpack.c.l.b16 %v3380
      %v3397 = vunpack.c.l.b16 %v3381
      %v3398 = vunpack.c.l.b16 %v3382
      %v3399 = vunpack.c.l.b16 %v3383
      %v3400 = vunpack.c.l.b16 %v3384
      %v3401 = vpack.c.b16 %v3394, %v3393
      %v3402 = vpack.c.b16 %v3396, %v3395
      %v3403 = vpack.c.b16 %v3398, %v3397
      %v3404 = vpack.c.b16 %v3400, %v3399
      %3405 = vrot.lane.b32.xlu0 %v3042, 122
      %v3406 = vpop.permute.xlu0 %3405
      %3407 = vrot.lane.b32.xlu0 %v3043, 122
      %v3408 = vpop.permute.xlu0 %3407
      %v3412 = vsel %vm3081, %v3401, 0
      %v3415 = vsel %vm3081, %v3402, 0
      %v3418 = vsel %vm3081, %v3403, 0
      %v3421 = vsel %vm3081, %v3404, 0
      %3423 = vmatprep.subr.bf16.mxu0 0
      %3424 = vmatpush1.bf16.msra.mxu0 %v3406
      %3425 = vmatprep.subr.bf16.mxu0 0
      %3426 = vmatpush1.bf16.msra.mxu0 %v3408
      %3427 = vmatprep.subr.bf16.mxu0 0
      %3428 = vmatpush1.bf16.msra.mxu0 0
      %3429 = vmatprep.subr.bf16.mxu0 0
      %3430 = vmatpush1.bf16.msra.mxu0 0
      %3431 = vmatprep.subr.bf16.mxu0 0
      %3432 = vmatpush1.bf16.msra.mxu0 0
      %3433 = vmatprep.subr.bf16.mxu0 0
      %3434 = vmatpush1.bf16.msra.mxu0 0
      %3435 = vmatprep.subr.bf16.mxu0 0
      %3436 = vmatpush1.bf16.msra.mxu0 0
      %3437 = vmatprep.subr.bf16.mxu0 0
      %3438 = vmatpush1.bf16.msra.mxu0 0
      %3439 = vmatprep.subr.bf16.mxu0 0
      %3440 = vmatpush1.bf16.msra.mxu0 0
      %3441 = vmatprep.subr.bf16.mxu0 0
      %3442 = vmatpush1.bf16.msra.mxu0 0
      %3443 = vmatprep.subr.bf16.mxu0 0
      %3444 = vmatpush1.bf16.msra.mxu0 0
      %3445 = vmatprep.subr.bf16.mxu0 0
      %3446 = vmatpush1.bf16.msra.mxu0 0
      %3447 = vmatprep.subr.bf16.mxu0 0
      %3448 = vmatpush1.bf16.msra.mxu0 0
      %3449 = vmatprep.subr.bf16.mxu0 0
      %3450 = vmatpush1.bf16.msra.mxu0 0
      %3451 = vmatprep.subr.bf16.mxu0 0
      %3452 = vmatpush1.bf16.msra.mxu0 0
      %3453 = vmatprep.subr.bf16.mxu0 0
      %3454 = vmatpush1.bf16.msra.mxu0 0
      %3455 = vmatprep.mubr.bf16.mxu0 0
      %3456 = vmatmul.mubr.bf16.gmra.mrb[0].mxu0 %v3412
      %v3457 = vpop.f32.mrb[0].mxu0
      %v3458 = vadd.f32 0.0, %v3457
      %v3459 = vpop.f32.mrb[0].mxu0
      %v3460 = vpop.f32.mrb[0].mxu0
      %v3461 = vadd.f32 0.0, %v3460
      %v3462 = vpop.f32.mrb[0].mxu0
      %3463 = vmatprep.mubr.bf16.mxu0 0
      %3464 = vmatmul.mubr.bf16.gmra.mrb[0].mxu0 %v3415
      %v3465 = vpop.f32.mrb[0].mxu0
      %v3466 = vadd.f32 0.0, %v3465
      %v3467 = vpop.f32.mrb[0].mxu0
      %v3468 = vpop.f32.mrb[0].mxu0
      %v3469 = vadd.f32 0.0, %v3468
      %v3470 = vpop.f32.mrb[0].mxu0
      %3471 = vmatprep.mubr.bf16.mxu0 0
      %3472 = vmatmul.mubr.bf16.gmra.mrb[0].mxu0 %v3418
      %v3473 = vpop.f32.mrb[0].mxu0
      %v3474 = vadd.f32 0.0, %v3473
      %v3475 = vpop.f32.mrb[0].mxu0
      %v3476 = vpop.f32.mrb[0].mxu0
      %v3477 = vadd.f32 0.0, %v3476
      %v3478 = vpop.f32.mrb[0].mxu0
      %3479 = vmatprep.mubr.bf16.mxu0 0
      %3480 = vmatmul.mubr.bf16.gmra.mrb[0].mxu0 %v3421
      %v3481 = vpop.f32.mrb[0].mxu0
      %v3482 = vadd.f32 0.0, %v3481
      %v3483 = vpop.f32.mrb[0].mxu0
      %v3484 = vpop.f32.mrb[0].mxu0
      %v3485 = vadd.f32 0.0, %v3484
      %v3486 = vpop.f32.mrb[0].mxu0
      %3487 = vdwg.mxu0
      %v3488 = vadd.f32 %v3368, %v3458
      %v3489 = vadd.f32 %v3369, %v3461
      %v3490 = vadd.f32 %v3370, %v3466
      %v3491 = vadd.f32 %v3371, %v3469
      %v3492 = vadd.f32 %v3372, %v3474
      %v3493 = vadd.f32 %v3373, %v3477
      %v3494 = vadd.f32 %v3374, %v3482
      %v3495 = vadd.f32 %v3375, %v3485
      %s3496 = scalar_lea.vmem %s7, 128
      %v3497 = vld [vmem:[%s3496] sm:$0xf]
      %v3498 = vld [vmem:[%s3496 + $0x4] sm:$0xf]
      %v3499 = vld [vmem:[%s3496 + $0x8] sm:$0xf]
      %v3500 = vld [vmem:[%s3496 + $0xc] sm:$0xf]
      %v3501 = vld [vmem:[%s3496 + $0x10] sm:$0xf]
      %v3502 = vld [vmem:[%s3496 + $0x14] sm:$0xf]
      %v3503 = vld [vmem:[%s3496 + $0x18] sm:$0xf]
      %v3504 = vld [vmem:[%s3496 + $0x1c] sm:$0xf]
      %v3513 = vunpack.c.l.b16 %v3497
      %v3514 = vunpack.c.l.b16 %v3498
      %v3515 = vunpack.c.l.b16 %v3499
      %v3516 = vunpack.c.l.b16 %v3500
      %v3517 = vunpack.c.l.b16 %v3501
      %v3518 = vunpack.c.l.b16 %v3502
      %v3519 = vunpack.c.l.b16 %v3503
      %v3520 = vunpack.c.l.b16 %v3504
      %v3521 = vpack.c.b16 %v3514, %v3513
      %v3522 = vpack.c.b16 %v3516, %v3515
      %v3523 = vpack.c.b16 %v3518, %v3517
      %v3524 = vpack.c.b16 %v3520, %v3519
      %3525 = vrot.lane.b32.xlu0 %v3042, 121
      %v3526 = vpop.permute.xlu0 %3525
      %3527 = vrot.lane.b32.xlu0 %v3043, 121
      %v3528 = vpop.permute.xlu0 %3527
      %v3532 = vsel %vm3081, %v3521, 0
      %v3535 = vsel %vm3081, %v3522, 0
      %v3538 = vsel %vm3081, %v3523, 0
      %v3541 = vsel %vm3081, %v3524, 0
      %3543 = vmatprep.subr.bf16.mxu0 0
      %3544 = vmatpush1.bf16.msra.mxu0 %v3526
      %3545 = vmatprep.subr.bf16.mxu0 0
      %3546 = vmatpush1.bf16.msra.mxu0 %v3528
      %3547 = vmatprep.subr.bf16.mxu0 0
      %3548 = vmatpush1.bf16.msra.mxu0 0
      %3549 = vmatprep.subr.bf16.mxu0 0
      %3550 = vmatpush1.bf16.msra.mxu0 0
      %3551 = vmatprep.subr.bf16.mxu0 0
      %3552 = vmatpush1.bf16.msra.mxu0 0
      %3553 = vmatprep.subr.bf16.mxu0 0
      %3554 = vmatpush1.bf16.msra.mxu0 0
      %3555 = vmatprep.subr.bf16.mxu0 0
      %3556 = vmatpush1.bf16.msra.mxu0 0
      %3557 = vmatprep.subr.bf16.mxu0 0
      %3558 = vmatpush1.bf16.msra.mxu0 0
      %3559 = vmatprep.subr.bf16.mxu0 0
      %3560 = vmatpush1.bf16.msra.mxu0 0
      %3561 = vmatprep.subr.bf16.mxu0 0
      %3562 = vmatpush1.bf16.msra.mxu0 0
      %3563 = vmatprep.subr.bf16.mxu0 0
      %3564 = vmatpush1.bf16.msra.mxu0 0
      %3565 = vmatprep.subr.bf16.mxu0 0
      %3566 = vmatpush1.bf16.msra.mxu0 0
      %3567 = vmatprep.subr.bf16.mxu0 0
      %3568 = vmatpush1.bf16.msra.mxu0 0
      %3569 = vmatprep.subr.bf16.mxu0 0
      %3570 = vmatpush1.bf16.msra.mxu0 0
      %3571 = vmatprep.subr.bf16.mxu0 0
      %3572 = vmatpush1.bf16.msra.mxu0 0
      %3573 = vmatprep.subr.bf16.mxu0 0
      %3574 = vmatpush1.bf16.msra.mxu0 0
      %3575 = vmatprep.mubr.bf16.mxu0 0
      %3576 = vmatmul.mubr.bf16.gmra.mrb[0].mxu0 %v3532
      %v3577 = vpop.f32.mrb[0].mxu0
      %v3578 = vadd.f32 0.0, %v3577
      %v3579 = vpop.f32.mrb[0].mxu0
      %v3580 = vpop.f32.mrb[0].mxu0
      %v3581 = vadd.f32 0.0, %v3580
      %v3582 = vpop.f32.mrb[0].mxu0
      %3583 = vmatprep.mubr.bf16.mxu0 0
      %3584 = vmatmul.mubr.bf16.gmra.mrb[0].mxu0 %v3535
      %v3585 = vpop.f32.mrb[0].mxu0
      %v3586 = vadd.f32 0.0, %v3585
      %v3587 = vpop.f32.mrb[0].mxu0
      %v3588 = vpop.f32.mrb[0].mxu0
      %v3589 = vadd.f32 0.0, %v3588
      %v3590 = vpop.f32.mrb[0].mxu0
      %3591 = vmatprep.mubr.bf16.mxu0 0
      %3592 = vmatmul.mubr.bf16.gmra.mrb[0].mxu0 %v3538
      %v3593 = vpop.f32.mrb[0].mxu0
      %v3594 = vadd.f32 0.0, %v3593
      %v3595 = vpop.f32.mrb[0].mxu0
      %v3596 = vpop.f32.mrb[0].mxu0
      %v3597 = vadd.f32 0.0, %v3596
      %v3598 = vpop.f32.mrb[0].mxu0
      %3599 = vmatprep.mubr.bf16.mxu0 0
      %3600 = vmatmul.mubr.bf16.gmra.mrb[0].mxu0 %v3541
      %v3601 = vpop.f32.mrb[0].mxu0
      %v3602 = vadd.f32 0.0, %v3601
      %v3603 = vpop.f32.mrb[0].mxu0
      %v3604 = vpop.f32.mrb[0].mxu0
      %v3605 = vadd.f32 0.0, %v3604
      %v3606 = vpop.f32.mrb[0].mxu0
      %3607 = vdwg.mxu0
      %v3608 = vadd.f32 %v3488, %v3578
      %v3609 = vadd.f32 %v3489, %v3581
      %v3610 = vadd.f32 %v3490, %v3586
      %v3611 = vadd.f32 %v3491, %v3589
      %v3612 = vadd.f32 %v3492, %v3594
      %v3613 = vadd.f32 %v3493, %v3597
      %v3614 = vadd.f32 %v3494, %v3602
      %v3615 = vadd.f32 %v3495, %v3605
      %s3616 = scalar_lea.vmem %s7, 160
      %v3617 = vld [vmem:[%s3616] sm:$0xf]
      %v3618 = vld [vmem:[%s3616 + $0x4] sm:$0xf]
      %v3619 = vld [vmem:[%s3616 + $0x8] sm:$0xf]
      %v3620 = vld [vmem:[%s3616 + $0xc] sm:$0xf]
      %v3621 = vld [vmem:[%s3616 + $0x10] sm:$0xf]
      %v3622 = vld [vmem:[%s3616 + $0x14] sm:$0xf]
      %v3623 = vld [vmem:[%s3616 + $0x18] sm:$0xf]
      %v3624 = vld [vmem:[%s3616 + $0x1c] sm:$0xf]
      %v3633 = vunpack.c.l.b16 %v3617
      %v3634 = vunpack.c.l.b16 %v3618
      %v3635 = vunpack.c.l.b16 %v3619
      %v3636 = vunpack.c.l.b16 %v3620
      %v3637 = vunpack.c.l.b16 %v3621
      %v3638 = vunpack.c.l.b16 %v3622
      %v3639 = vunpack.c.l.b16 %v3623
      %v3640 = vunpack.c.l.b16 %v3624
      %v3641 = vpack.c.b16 %v3634, %v3633
      %v3642 = vpack.c.b16 %v3636, %v3635
      %v3643 = vpack.c.b16 %v3638, %v3637
      %v3644 = vpack.c.b16 %v3640, %v3639
      %3645 = vrot.lane.b32.xlu0 %v3042, 120
      %v3646 = vpop.permute.xlu0 %3645
      %3647 = vrot.lane.b32.xlu0 %v3043, 120
      %v3648 = vpop.permute.xlu0 %3647
      %v3652 = vsel %vm3081, %v3641, 0
      %v3655 = vsel %vm3081, %v3642, 0
      %v3658 = vsel %vm3081, %v3643, 0
      %v3661 = vsel %vm3081, %v3644, 0
      %3663 = vmatprep.subr.bf16.mxu0 0
      %3664 = vmatpush1.bf16.msra.mxu0 %v3646
      %3665 = vmatprep.subr.bf16.mxu0 0
      %3666 = vmatpush1.bf16.msra.mxu0 %v3648
      %3667 = vmatprep.subr.bf16.mxu0 0
      %3668 = vmatpush1.bf16.msra.mxu0 0
      %3669 = vmatprep.subr.bf16.mxu0 0
      %3670 = vmatpush1.bf16.msra.mxu0 0
      %3671 = vmatprep.subr.bf16.mxu0 0
      %3672 = vmatpush1.bf16.msra.mxu0 0
      %3673 = vmatprep.subr.bf16.mxu0 0
      %3674 = vmatpush1.bf16.msra.mxu0 0
      %3675 = vmatprep.subr.bf16.mxu0 0
      %3676 = vmatpush1.bf16.msra.mxu0 0
      %3677 = vmatprep.subr.bf16.mxu0 0
      %3678 = vmatpush1.bf16.msra.mxu0 0
      %3679 = vmatprep.subr.bf16.mxu0 0
      %3680 = vmatpush1.bf16.msra.mxu0 0
      %3681 = vmatprep.subr.bf16.mxu0 0
      %3682 = vmatpush1.bf16.msra.mxu0 0
      %3683 = vmatprep.subr.bf16.mxu0 0
      %3684 = vmatpush1.bf16.msra.mxu0 0
      %3685 = vmatprep.subr.bf16.mxu0 0
      %3686 = vmatpush1.bf16.msra.mxu0 0
      %3687 = vmatprep.subr.bf16.mxu0 0
      %3688 = vmatpush1.bf16.msra.mxu0 0
      %3689 = vmatprep.subr.bf16.mxu0 0
      %3690 = vmatpush1.bf16.msra.mxu0 0
      %3691 = vmatprep.subr.bf16.mxu0 0
      %3692 = vmatpush1.bf16.msra.mxu0 0
      %3693 = vmatprep.subr.bf16.mxu0 0
      %3694 = vmatpush1.bf16.msra.mxu0 0
      %3695 = vmatprep.mubr.bf16.mxu0 0
      %3696 = vmatmul.mubr.bf16.gmra.mrb[0].mxu0 %v3652
      %v3697 = vpop.f32.mrb[0].mxu0
      %v3698 = vadd.f32 0.0, %v3697
      %v3699 = vpop.f32.mrb[0].mxu0
      %v3700 = vpop.f32.mrb[0].mxu0
      %v3701 = vadd.f32 0.0, %v3700
      %v3702 = vpop.f32.mrb[0].mxu0
      %3703 = vmatprep.mubr.bf16.mxu0 0
      %3704 = vmatmul.mubr.bf16.gmra.mrb[0].mxu0 %v3655
      %v3705 = vpop.f32.mrb[0].mxu0
      %v3706 = vadd.f32 0.0, %v3705
      %v3707 = vpop.f32.mrb[0].mxu0
      %v3708 = vpop.f32.mrb[0].mxu0
      %v3709 = vadd.f32 0.0, %v3708
      %v3710 = vpop.f32.mrb[0].mxu0
      %3711 = vmatprep.mubr.bf16.mxu0 0
      %3712 = vmatmul.mubr.bf16.gmra.mrb[0].mxu0 %v3658
      %v3713 = vpop.f32.mrb[0].mxu0
      %v3714 = vadd.f32 0.0, %v3713
      %v3715 = vpop.f32.mrb[0].mxu0
      %v3716 = vpop.f32.mrb[0].mxu0
      %v3717 = vadd.f32 0.0, %v3716
      %v3718 = vpop.f32.mrb[0].mxu0
      %3719 = vmatprep.mubr.bf16.mxu0 0
      %3720 = vmatmul.mubr.bf16.gmra.mrb[0].mxu0 %v3661
      %v3721 = vpop.f32.mrb[0].mxu0
      %v3722 = vadd.f32 0.0, %v3721
      %v3723 = vpop.f32.mrb[0].mxu0
      %v3724 = vpop.f32.mrb[0].mxu0
      %v3725 = vadd.f32 0.0, %v3724
      %v3726 = vpop.f32.mrb[0].mxu0
      %3727 = vdwg.mxu0
      %v3728 = vadd.f32 %v3608, %v3698
      %v3729 = vadd.f32 %v3609, %v3701
      %v3730 = vadd.f32 %v3610, %v3706
      %v3731 = vadd.f32 %v3611, %v3709
      %v3732 = vadd.f32 %v3612, %v3714
      %v3733 = vadd.f32 %v3613, %v3717
      %v3734 = vadd.f32 %v3614, %v3722
      %v3735 = vadd.f32 %v3615, %v3725
      %s3736 = scalar_lea.vmem %s7, 192
      %v3737 = vld [vmem:[%s3736] sm:$0xf]
      %v3738 = vld [vmem:[%s3736 + $0x4] sm:$0xf]
      %v3739 = vld [vmem:[%s3736 + $0x8] sm:$0xf]
      %v3740 = vld [vmem:[%s3736 + $0xc] sm:$0xf]
      %v3741 = vld [vmem:[%s3736 + $0x10] sm:$0xf]
      %v3742 = vld [vmem:[%s3736 + $0x14] sm:$0xf]
      %v3743 = vld [vmem:[%s3736 + $0x18] sm:$0xf]
      %v3744 = vld [vmem:[%s3736 + $0x1c] sm:$0xf]
      %v3753 = vunpack.c.l.b16 %v3737
      %v3754 = vunpack.c.l.b16 %v3738
      %v3755 = vunpack.c.l.b16 %v3739
      %v3756 = vunpack.c.l.b16 %v3740
      %v3757 = vunpack.c.l.b16 %v3741
      %v3758 = vunpack.c.l.b16 %v3742
      %v3759 = vunpack.c.l.b16 %v3743
      %v3760 = vunpack.c.l.b16 %v3744
      %v3761 = vpack.c.b16 %v3754, %v3753
      %v3762 = vpack.c.b16 %v3756, %v3755
      %v3763 = vpack.c.b16 %v3758, %v3757
      %v3764 = vpack.c.b16 %v3760, %v3759
      %3765 = vrot.lane.b32.xlu0 %v3042, 116
      %v3766 = vpop.permute.xlu0 %3765
      %3767 = vrot.lane.b32.xlu0 %v3043, 116
      %v3768 = vpop.permute.xlu0 %3767
      %v3772 = vsel %vm3081, %v3761, 0
      %v3775 = vsel %vm3081, %v3762, 0
      %v3778 = vsel %vm3081, %v3763, 0
      %v3781 = vsel %vm3081, %v3764, 0
      %3783 = vmatprep.subr.bf16.mxu0 0
      %3784 = vmatpush1.bf16.msra.mxu0 %v3766
      %3785 = vmatprep.subr.bf16.mxu0 0
      %3786 = vmatpush1.bf16.msra.mxu0 %v3768
      %3787 = vmatprep.subr.bf16.mxu0 0
      %3788 = vmatpush1.bf16.msra.mxu0 0
      %3789 = vmatprep.subr.bf16.mxu0 0
      %3790 = vmatpush1.bf16.msra.mxu0 0
      %3791 = vmatprep.subr.bf16.mxu0 0
      %3792 = vmatpush1.bf16.msra.mxu0 0
      %3793 = vmatprep.subr.bf16.mxu0 0
      %3794 = vmatpush1.bf16.msra.mxu0 0
      %3795 = vmatprep.subr.bf16.mxu0 0
      %3796 = vmatpush1.bf16.msra.mxu0 0
      %3797 = vmatprep.subr.bf16.mxu0 0
      %3798 = vmatpush1.bf16.msra.mxu0 0
      %3799 = vmatprep.subr.bf16.mxu0 0
      %3800 = vmatpush1.bf16.msra.mxu0 0
      %3801 = vmatprep.subr.bf16.mxu0 0
      %3802 = vmatpush1.bf16.msra.mxu0 0
      %3803 = vmatprep.subr.bf16.mxu0 0
      %3804 = vmatpush1.bf16.msra.mxu0 0
      %3805 = vmatprep.subr.bf16.mxu0 0
      %3806 = vmatpush1.bf16.msra.mxu0 0
      %3807 = vmatprep.subr.bf16.mxu0 0
      %3808 = vmatpush1.bf16.msra.mxu0 0
      %3809 = vmatprep.subr.bf16.mxu0 0
      %3810 = vmatpush1.bf16.msra.mxu0 0
      %3811 = vmatprep.subr.bf16.mxu0 0
      %3812 = vmatpush1.bf16.msra.mxu0 0
      %3813 = vmatprep.subr.bf16.mxu0 0
      %3814 = vmatpush1.bf16.msra.mxu0 0
      %3815 = vmatprep.mubr.bf16.mxu0 0
      %3816 = vmatmul.mubr.bf16.gmra.mrb[0].mxu0 %v3772
      %v3817 = vpop.f32.mrb[0].mxu0
      %v3818 = vadd.f32 0.0, %v3817
      %v3819 = vpop.f32.mrb[0].mxu0
      %v3820 = vpop.f32.mrb[0].mxu0
      %v3821 = vadd.f32 0.0, %v3820
      %v3822 = vpop.f32.mrb[0].mxu0
      %3823 = vmatprep.mubr.bf16.mxu0 0
      %3824 = vmatmul.mubr.bf16.gmra.mrb[0].mxu0 %v3775
      %v3825 = vpop.f32.mrb[0].mxu0
      %v3826 = vadd.f32 0.0, %v3825
      %v3827 = vpop.f32.mrb[0].mxu0
      %v3828 = vpop.f32.mrb[0].mxu0
      %v3829 = vadd.f32 0.0, %v3828
      %v3830 = vpop.f32.mrb[0].mxu0
      %3831 = vmatprep.mubr.bf16.mxu0 0
      %3832 = vmatmul.mubr.bf16.gmra.mrb[0].mxu0 %v3778
      %v3833 = vpop.f32.mrb[0].mxu0
      %v3834 = vadd.f32 0.0, %v3833
      %v3835 = vpop.f32.mrb[0].mxu0
      %v3836 = vpop.f32.mrb[0].mxu0
      %v3837 = vadd.f32 0.0, %v3836
      %v3838 = vpop.f32.mrb[0].mxu0
      %3839 = vmatprep.mubr.bf16.mxu0 0
      %3840 = vmatmul.mubr.bf16.gmra.mrb[0].mxu0 %v3781
      %v3841 = vpop.f32.mrb[0].mxu0
      %v3842 = vadd.f32 0.0, %v3841
      %v3843 = vpop.f32.mrb[0].mxu0
      %v3844 = vpop.f32.mrb[0].mxu0
      %v3845 = vadd.f32 0.0, %v3844
      %v3846 = vpop.f32.mrb[0].mxu0
      %3847 = vdwg.mxu0
      %v3848 = vadd.f32 %v3728, %v3818
      %v3849 = vadd.f32 %v3729, %v3821
      %v3850 = vadd.f32 %v3730, %v3826
      %v3851 = vadd.f32 %v3731, %v3829
      %v3852 = vadd.f32 %v3732, %v3834
      %v3853 = vadd.f32 %v3733, %v3837
      %v3854 = vadd.f32 %v3734, %v3842
      %v3855 = vadd.f32 %v3735, %v3845
      %s3856 = scalar_lea.vmem %s7, 224
      %v3857 = vld [vmem:[%s3856] sm:$0xf]
      %v3858 = vld [vmem:[%s3856 + $0x4] sm:$0xf]
      %v3859 = vld [vmem:[%s3856 + $0x8] sm:$0xf]
      %v3860 = vld [vmem:[%s3856 + $0xc] sm:$0xf]
      %v3861 = vld [vmem:[%s3856 + $0x10] sm:$0xf]
      %v3862 = vld [vmem:[%s3856 + $0x14] sm:$0xf]
      %v3863 = vld [vmem:[%s3856 + $0x18] sm:$0xf]
      %v3864 = vld [vmem:[%s3856 + $0x1c] sm:$0xf]
      %v3873 = vunpack.c.l.b16 %v3857
      %v3874 = vunpack.c.l.b16 %v3858
      %v3875 = vunpack.c.l.b16 %v3859
      %v3876 = vunpack.c.l.b16 %v3860
      %v3877 = vunpack.c.l.b16 %v3861
      %v3878 = vunpack.c.l.b16 %v3862
      %v3879 = vunpack.c.l.b16 %v3863
      %v3880 = vunpack.c.l.b16 %v3864
      %v3881 = vpack.c.b16 %v3874, %v3873
      %v3882 = vpack.c.b16 %v3876, %v3875
      %v3883 = vpack.c.b16 %v3878, %v3877
      %v3884 = vpack.c.b16 %v3880, %v3879
      %3885 = vrot.lane.b32.xlu0 %v3042, 115
      %v3886 = vpop.permute.xlu0 %3885
      %3887 = vrot.lane.b32.xlu0 %v3043, 115
      %v3888 = vpop.permute.xlu0 %3887
      %v3892 = vsel %vm3081, %v3881, 0
      %v3895 = vsel %vm3081, %v3882, 0
      %v3898 = vsel %vm3081, %v3883, 0
      %v3901 = vsel %vm3081, %v3884, 0
      %3903 = vmatprep.subr.bf16.mxu0 0
      %3904 = vmatpush1.bf16.msra.mxu0 %v3886
      %3905 = vmatprep.subr.bf16.mxu0 0
      %3906 = vmatpush1.bf16.msra.mxu0 %v3888
      %3907 = vmatprep.subr.bf16.mxu0 0
      %3908 = vmatpush1.bf16.msra.mxu0 0
      %3909 = vmatprep.subr.bf16.mxu0 0
      %3910 = vmatpush1.bf16.msra.mxu0 0
      %3911 = vmatprep.subr.bf16.mxu0 0
      %3912 = vmatpush1.bf16.msra.mxu0 0
      %3913 = vmatprep.subr.bf16.mxu0 0
      %3914 = vmatpush1.bf16.msra.mxu0 0
      %3915 = vmatprep.subr.bf16.mxu0 0
      %3916 = vmatpush1.bf16.msra.mxu0 0
      %3917 = vmatprep.subr.bf16.mxu0 0
      %3918 = vmatpush1.bf16.msra.mxu0 0
      %3919 = vmatprep.subr.bf16.mxu0 0
      %3920 = vmatpush1.bf16.msra.mxu0 0
      %3921 = vmatprep.subr.bf16.mxu0 0
      %3922 = vmatpush1.bf16.msra.mxu0 0
      %3923 = vmatprep.subr.bf16.mxu0 0
      %3924 = vmatpush1.bf16.msra.mxu0 0
      %3925 = vmatprep.subr.bf16.mxu0 0
      %3926 = vmatpush1.bf16.msra.mxu0 0
      %3927 = vmatprep.subr.bf16.mxu0 0
      %3928 = vmatpush1.bf16.msra.mxu0 0
      %3929 = vmatprep.subr.bf16.mxu0 0
      %3930 = vmatpush1.bf16.msra.mxu0 0
      %3931 = vmatprep.subr.bf16.mxu0 0
      %3932 = vmatpush1.bf16.msra.mxu0 0
      %3933 = vmatprep.subr.bf16.mxu0 0
      %3934 = vmatpush1.bf16.msra.mxu0 0
      %3935 = vmatprep.mubr.bf16.mxu0 0
      %3936 = vmatmul.mubr.bf16.gmra.mrb[0].mxu0 %v3892
      %v3937 = vpop.f32.mrb[0].mxu0
      %v3938 = vadd.f32 0.0, %v3937
      %v3939 = vpop.f32.mrb[0].mxu0
      %v3940 = vpop.f32.mrb[0].mxu0
      %v3941 = vadd.f32 0.0, %v3940
      %v3942 = vpop.f32.mrb[0].mxu0
      %3943 = vmatprep.mubr.bf16.mxu0 0
      %3944 = vmatmul.mubr.bf16.gmra.mrb[0].mxu0 %v3895
      %v3945 = vpop.f32.mrb[0].mxu0
      %v3946 = vadd.f32 0.0, %v3945
      %v3947 = vpop.f32.mrb[0].mxu0
      %v3948 = vpop.f32.mrb[0].mxu0
      %v3949 = vadd.f32 0.0, %v3948
      %v3950 = vpop.f32.mrb[0].mxu0
      %3951 = vmatprep.mubr.bf16.mxu0 0
      %3952 = vmatmul.mubr.bf16.gmra.mrb[0].mxu0 %v3898
      %v3953 = vpop.f32.mrb[0].mxu0
      %v3954 = vadd.f32 0.0, %v3953
      %v3955 = vpop.f32.mrb[0].mxu0
      %v3956 = vpop.f32.mrb[0].mxu0
      %v3957 = vadd.f32 0.0, %v3956
      %v3958 = vpop.f32.mrb[0].mxu0
      %3959 = vmatprep.mubr.bf16.mxu0 0
      %3960 = vmatmul.mubr.bf16.gmra.mrb[0].mxu0 %v3901
      %v3961 = vpop.f32.mrb[0].mxu0
      %v3962 = vadd.f32 0.0, %v3961
      %v3963 = vpop.f32.mrb[0].mxu0
      %v3964 = vpop.f32.mrb[0].mxu0
      %v3965 = vadd.f32 0.0, %v3964
      %v3966 = vpop.f32.mrb[0].mxu0
      %3967 = vdwg.mxu0
      %v3968 = vadd.f32 %v3848, %v3938
      %v3969 = vadd.f32 %v3849, %v3941
      %v3970 = vadd.f32 %v3850, %v3946
      %v3971 = vadd.f32 %v3851, %v3949
      %v3972 = vadd.f32 %v3852, %v3954
      %v3973 = vadd.f32 %v3853, %v3957
      %v3974 = vadd.f32 %v3854, %v3962
      %v3975 = vadd.f32 %v3855, %v3965
      %s3976 = scalar_lea.vmem %s7, 256
      %v3977 = vld [vmem:[%s3976] sm:$0xf]
      %v3978 = vld [vmem:[%s3976 + $0x4] sm:$0xf]
      %v3979 = vld [vmem:[%s3976 + $0x8] sm:$0xf]
      %v3980 = vld [vmem:[%s3976 + $0xc] sm:$0xf]
      %v3981 = vld [vmem:[%s3976 + $0x10] sm:$0xf]
      %v3982 = vld [vmem:[%s3976 + $0x14] sm:$0xf]
      %v3983 = vld [vmem:[%s3976 + $0x18] sm:$0xf]
      %v3984 = vld [vmem:[%s3976 + $0x1c] sm:$0xf]
      %v3993 = vunpack.c.l.b16 %v3977
      %v3994 = vunpack.c.l.b16 %v3978
      %v3995 = vunpack.c.l.b16 %v3979
      %v3996 = vunpack.c.l.b16 %v3980
      %v3997 = vunpack.c.l.b16 %v3981
      %v3998 = vunpack.c.l.b16 %v3982
      %v3999 = vunpack.c.l.b16 %v3983
      %v4000 = vunpack.c.l.b16 %v3984
      %v4001 = vpack.c.b16 %v3994, %v3993
      %v4002 = vpack.c.b16 %v3996, %v3995
      %v4003 = vpack.c.b16 %v3998, %v3997
      %v4004 = vpack.c.b16 %v4000, %v3999
      %4005 = vrot.lane.b32.xlu0 %v3042, 114
      %v4006 = vpop.permute.xlu0 %4005
      %4007 = vrot.lane.b32.xlu0 %v3043, 114
      %v4008 = vpop.permute.xlu0 %4007
      %v4012 = vsel %vm3081, %v4001, 0
      %v4015 = vsel %vm3081, %v4002, 0
      %v4018 = vsel %vm3081, %v4003, 0
      %v4021 = vsel %vm3081, %v4004, 0
      %4023 = vmatprep.subr.bf16.mxu0 0
      %4024 = vmatpush1.bf16.msra.mxu0 %v4006
      %4025 = vmatprep.subr.bf16.mxu0 0
      %4026 = vmatpush1.bf16.msra.mxu0 %v4008
      %4027 = vmatprep.subr.bf16.mxu0 0
      %4028 = vmatpush1.bf16.msra.mxu0 0
      %4029 = vmatprep.subr.bf16.mxu0 0
      %4030 = vmatpush1.bf16.msra.mxu0 0
      %4031 = vmatprep.subr.bf16.mxu0 0
      %4032 = vmatpush1.bf16.msra.mxu0 0
      %4033 = vmatprep.subr.bf16.mxu0 0
      %4034 = vmatpush1.bf16.msra.mxu0 0
      %4035 = vmatprep.subr.bf16.mxu0 0
      %4036 = vmatpush1.bf16.msra.mxu0 0
      %4037 = vmatprep.subr.bf16.mxu0 0
      %4038 = vmatpush1.bf16.msra.mxu0 0
      %4039 = vmatprep.subr.bf16.mxu0 0
      %4040 = vmatpush1.bf16.msra.mxu0 0
      %4041 = vmatprep.subr.bf16.mxu0 0
      %4042 = vmatpush1.bf16.msra.mxu0 0
      %4043 = vmatprep.subr.bf16.mxu0 0
      %4044 = vmatpush1.bf16.msra.mxu0 0
      %4045 = vmatprep.subr.bf16.mxu0 0
      %4046 = vmatpush1.bf16.msra.mxu0 0
      %4047 = vmatprep.subr.bf16.mxu0 0
      %4048 = vmatpush1.bf16.msra.mxu0 0
      %4049 = vmatprep.subr.bf16.mxu0 0
      %4050 = vmatpush1.bf16.msra.mxu0 0
      %4051 = vmatprep.subr.bf16.mxu0 0
      %4052 = vmatpush1.bf16.msra.mxu0 0
      %4053 = vmatprep.subr.bf16.mxu0 0
      %4054 = vmatpush1.bf16.msra.mxu0 0
      %4055 = vmatprep.mubr.bf16.mxu0 0
      %4056 = vmatmul.mubr.bf16.gmra.mrb[0].mxu0 %v4012
      %v4057 = vpop.f32.mrb[0].mxu0
      %v4058 = vadd.f32 0.0, %v4057
      %v4059 = vpop.f32.mrb[0].mxu0
      %v4060 = vpop.f32.mrb[0].mxu0
      %v4061 = vadd.f32 0.0, %v4060
      %v4062 = vpop.f32.mrb[0].mxu0
      %4063 = vmatprep.mubr.bf16.mxu0 0
      %4064 = vmatmul.mubr.bf16.gmra.mrb[0].mxu0 %v4015
      %v4065 = vpop.f32.mrb[0].mxu0
      %v4066 = vadd.f32 0.0, %v4065
      %v4067 = vpop.f32.mrb[0].mxu0
      %v4068 = vpop.f32.mrb[0].mxu0
      %v4069 = vadd.f32 0.0, %v4068
      %v4070 = vpop.f32.mrb[0].mxu0
      %4071 = vmatprep.mubr.bf16.mxu0 0
      %4072 = vmatmul.mubr.bf16.gmra.mrb[0].mxu0 %v4018
      %v4073 = vpop.f32.mrb[0].mxu0
      %v4074 = vadd.f32 0.0, %v4073
      %v4075 = vpop.f32.mrb[0].mxu0
      %v4076 = vpop.f32.mrb[0].mxu0
      %v4077 = vadd.f32 0.0, %v4076
      %v4078 = vpop.f32.mrb[0].mxu0
      %4079 = vmatprep.mubr.bf16.mxu0 0
      %4080 = vmatmul.mubr.bf16.gmra.mrb[0].mxu0 %v4021
      %v4081 = vpop.f32.mrb[0].mxu0
      %v4082 = vadd.f32 0.0, %v4081
      %v4083 = vpop.f32.mrb[0].mxu0
      %v4084 = vpop.f32.mrb[0].mxu0
      %v4085 = vadd.f32 0.0, %v4084
      %v4086 = vpop.f32.mrb[0].mxu0
      %4087 = vdwg.mxu0
      %v4088 = vadd.f32 %v3968, %v4058
      %v4089 = vadd.f32 %v3969, %v4061
      %v4090 = vadd.f32 %v3970, %v4066
      %v4091 = vadd.f32 %v3971, %v4069
      %v4092 = vadd.f32 %v3972, %v4074
      %v4093 = vadd.f32 %v3973, %v4077
      %v4094 = vadd.f32 %v3974, %v4082
      %v4095 = vadd.f32 %v3975, %v4085
      %v4096 = vld [vmem:[%s8] sm:$0xff]
      %v4097 = vld [vmem:[%s8 + $0x8] sm:$0xff]
      %v4098 = vld [vmem:[%s8 + $0x10] sm:$0xff]
      %v4099 = vld [vmem:[%s8 + $0x18] sm:$0xff]
      %v4100 = vld [vmem:[%s8 + $0x20] sm:$0xff]
      %v4101 = vld [vmem:[%s8 + $0x28] sm:$0xff]
      %v4102 = vld [vmem:[%s8 + $0x30] sm:$0xff]
      %v4103 = vld [vmem:[%s8 + $0x38] sm:$0xff]
      %4105 = vset.pattern.permute.xlu0 0
      %4106 = vperm.xlu0 %4105, %v4096
      %v4107 = vpop.permute.xlu0 %4106
      %4110 = vset.pattern.permute.xlu0 0
      %4111 = vperm.xlu0 %4110, %v4097
      %v4112 = vpop.permute.xlu0 %4111
      %4115 = vset.pattern.permute.xlu0 0
      %4116 = vperm.xlu0 %4115, %v4098
      %v4117 = vpop.permute.xlu0 %4116
      %4120 = vset.pattern.permute.xlu0 0
      %4121 = vperm.xlu0 %4120, %v4099
      %v4122 = vpop.permute.xlu0 %4121
      %4125 = vset.pattern.permute.xlu0 0
      %4126 = vperm.xlu0 %4125, %v4100
      %v4127 = vpop.permute.xlu0 %4126
      %4130 = vset.pattern.permute.xlu0 0
      %4131 = vperm.xlu0 %4130, %v4101
      %v4132 = vpop.permute.xlu0 %4131
      %4135 = vset.pattern.permute.xlu0 0
      %4136 = vperm.xlu0 %4135, %v4102
      %v4137 = vpop.permute.xlu0 %4136
      %4140 = vset.pattern.permute.xlu0 0
      %4141 = vperm.xlu0 %4140, %v4103
      %v4142 = vpop.permute.xlu0 %4141
      %v4144 = vadd.f32 %v4088, %v4107
      %v4145 = vadd.f32 %v4089, %v4112
      %v4146 = vadd.f32 %v4090, %v4117
      %v4147 = vadd.f32 %v4091, %v4122
      %v4148 = vadd.f32 %v4092, %v4127
      %v4149 = vadd.f32 %v4093, %v4132
      %v4150 = vadd.f32 %v4094, %v4137
      %v4151 = vadd.f32 %v4095, %v4142
      %vm4152 = vcmp.ge.f32.partialorder %v4144, 0.0
      %vm4153 = vcmp.ge.f32.partialorder %v4145, 0.0
      %vm4154 = vcmp.ge.f32.partialorder %v4146, 0.0
      %vm4155 = vcmp.ge.f32.partialorder %v4147, 0.0
      %vm4156 = vcmp.ge.f32.partialorder %v4148, 0.0
      %vm4157 = vcmp.ge.f32.partialorder %v4149, 0.0
      %vm4158 = vcmp.ge.f32.partialorder %v4150, 0.0
      %vm4159 = vcmp.ge.f32.partialorder %v4151, 0.0
      %v4160 = vmul.f32 %v4144, 0.03
      %v4161 = vmul.f32 %v4145, 0.03
      %v4162 = vmul.f32 %v4146, 0.03
      %v4163 = vmul.f32 %v4147, 0.03
      %v4164 = vmul.f32 %v4148, 0.03
      %v4165 = vmul.f32 %v4149, 0.03
      %v4166 = vmul.f32 %v4150, 0.03
      %v4167 = vmul.f32 %v4151, 0.03
      %v4168 = vsel %vm4152, %v4144, %v4160
      %v4169 = vsel %vm4153, %v4145, %v4161
      %v4170 = vsel %vm4154, %v4146, %v4162
      %v4171 = vsel %vm4155, %v4147, %v4163
      %v4172 = vsel %vm4156, %v4148, %v4164
      %v4173 = vsel %vm4157, %v4149, %v4165
      %v4174 = vsel %vm4158, %v4150, %v4166
      %v4175 = vsel %vm4159, %v4151, %v4167
      %v4176 = vpack.c.bf16 %v4169, %v4168
      %v4177 = vpack.c.bf16 %v4171, %v4170
      %v4178 = vpack.c.bf16 %v4173, %v4172
      %v4179 = vpack.c.bf16 %v4175, %v4174
      %v4180 = vld [vmem:[%s9] sm:$0xf]
      %v4181 = vld [vmem:[%s9 + $0x4] sm:$0xf]
      %v4182 = vld [vmem:[%s9 + $0x8] sm:$0xf]
      %v4183 = vld [vmem:[%s9 + $0xc] sm:$0xf]
      %v4184 = vld [vmem:[%s9 + $0x10] sm:$0x3]
      %v4190 = vunpack.c.l.b16 %v4180
      %v4191 = vunpack.c.l.b16 %v4181
      %v4192 = vunpack.c.l.b16 %v4182
      %v4193 = vunpack.c.l.b16 %v4183
      %v4194 = vunpack.c.l.b16 %v4184
      %v4195 = vpack.c.b16 %v4191, %v4190
      %v4196 = vpack.c.b16 %v4193, %v4192
      %v4197 = vpack.c.b16 %v4194, %v4194
      %vm4200 = vcmask 293888
      %v4202 = vsel %vm4200, %v4176, 0
      %v4205 = vsel %vm4200, %v4177, 0
      %v4208 = vsel %vm4200, %v4178, 0
      %v4211 = vsel %vm4200, %v4179, 0
      %v4214 = vsel %vm729, %v4197, 0
      %4216 = vmatprep.subr.bf16.mxu0 0
      %4217 = vmatpush1.bf16.msra.mxu0 %v4195
      %4218 = vmatprep.subr.bf16.mxu0 0
      %4219 = vmatpush1.bf16.msra.mxu0 %v4196
      %4220 = vmatprep.subr.bf16.mxu0 0
      %4221 = vmatpush1.bf16.msra.mxu0 %v4214
      %4222 = vmatprep.subr.bf16.mxu0 0
      %4223 = vmatpush1.bf16.msra.mxu0 0
      %4224 = vmatprep.subr.bf16.mxu0 0
      %4225 = vmatpush1.bf16.msra.mxu0 0
      %4226 = vmatprep.subr.bf16.mxu0 0
      %4227 = vmatpush1.bf16.msra.mxu0 0
      %4228 = vmatprep.subr.bf16.mxu0 0
      %4229 = vmatpush1.bf16.msra.mxu0 0
      %4230 = vmatprep.subr.bf16.mxu0 0
      %4231 = vmatpush1.bf16.msra.mxu0 0
      %4232 = vmatprep.subr.bf16.mxu0 0
      %4233 = vmatpush1.bf16.msra.mxu0 0
      %4234 = vmatprep.subr.bf16.mxu0 0
      %4235 = vmatpush1.bf16.msra.mxu0 0
      %4236 = vmatprep.subr.bf16.mxu0 0
      %4237 = vmatpush1.bf16.msra.mxu0 0
      %4238 = vmatprep.subr.bf16.mxu0 0
      %4239 = vmatpush1.bf16.msra.mxu0 0
      %4240 = vmatprep.subr.bf16.mxu0 0
      %4241 = vmatpush1.bf16.msra.mxu0 0
      %4242 = vmatprep.subr.bf16.mxu0 0
      %4243 = vmatpush1.bf16.msra.mxu0 0
      %4244 = vmatprep.subr.bf16.mxu0 0
      %4245 = vmatpush1.bf16.msra.mxu0 0
      %4246 = vmatprep.subr.bf16.mxu0 0
      %4247 = vmatpush1.bf16.msra.mxu0 0
      %4248 = vmatprep.mubr.bf16.mxu0 0
      %4249 = vmatmul.mubr.bf16.gmra.mrb[0].mxu0 %v4202
      %v4250 = vpop.f32.mrb[0].mxu0
      %v4251 = vadd.f32 0.0, %v4250
      %v4252 = vpop.f32.mrb[0].mxu0
      %v4253 = vpop.f32.mrb[0].mxu0
      %v4254 = vadd.f32 0.0, %v4253
      %v4255 = vpop.f32.mrb[0].mxu0
      %4256 = vmatprep.mubr.bf16.mxu0 0
      %4257 = vmatmul.mubr.bf16.gmra.mrb[0].mxu0 %v4205
      %v4258 = vpop.f32.mrb[0].mxu0
      %v4259 = vadd.f32 0.0, %v4258
      %v4260 = vpop.f32.mrb[0].mxu0
      %v4261 = vpop.f32.mrb[0].mxu0
      %v4262 = vadd.f32 0.0, %v4261
      %v4263 = vpop.f32.mrb[0].mxu0
      %4264 = vmatprep.mubr.bf16.mxu0 0
      %4265 = vmatmul.mubr.bf16.gmra.mrb[0].mxu0 %v4208
      %v4266 = vpop.f32.mrb[0].mxu0
      %v4267 = vadd.f32 0.0, %v4266
      %v4268 = vpop.f32.mrb[0].mxu0
      %v4269 = vpop.f32.mrb[0].mxu0
      %v4270 = vadd.f32 0.0, %v4269
      %v4271 = vpop.f32.mrb[0].mxu0
      %4272 = vmatprep.mubr.bf16.mxu0 0
      %4273 = vmatmul.mubr.bf16.gmra.mrb[0].mxu0 %v4211
      %v4274 = vpop.f32.mrb[0].mxu0
      %v4275 = vadd.f32 0.0, %v4274
      %v4276 = vpop.f32.mrb[0].mxu0
      %v4277 = vpop.f32.mrb[0].mxu0
      %v4278 = vadd.f32 0.0, %v4277
      %v4279 = vpop.f32.mrb[0].mxu0
      %4280 = vdwg.mxu0
      %v4281 = vpack.c.bf16 %v4254, %v4251
      %v4282 = vpack.c.bf16 %v4262, %v4259
      %v4283 = vpack.c.bf16 %v4270, %v4267
      %v4284 = vpack.c.bf16 %v4278, %v4275
      %4289 = vrot.lane.b32.xlu0 %v4281, 5
      %v4290 = vpop.permute.xlu0 %4289
      %4291 = vrot.lane.b32.xlu0 %v4282, 5
      %v4292 = vpop.permute.xlu0 %4291
      %4293 = vrot.lane.b32.xlu0 %v4283, 5
      %v4294 = vpop.permute.xlu0 %4293
      %4295 = vrot.lane.b32.xlu0 %v4284, 5
      %v4296 = vpop.permute.xlu0 %4295
      %vm4301 = vcmask 171048
      %4302 = vst.msk [vmem:[#allocation4] sm:$0xff] %vm4301, %v4290
      %4303 = vst.msk [vmem:[#allocation4 + $0x8] sm:$0xff] %vm4301, %v4292
      %4304 = vst.msk [vmem:[#allocation4 + $0x10] sm:$0xff] %vm4301, %v4294
      %4305 = vst.msk [vmem:[#allocation4 + $0x18] sm:$0xff] %vm4301, %v4296
      %v4306 = vld [vmem:[%s10] sm:$0xf]
      %v4307 = vld [vmem:[%s10 + $0x4] sm:$0xf]
      %v4308 = vld [vmem:[%s10 + $0x8] sm:$0xf]
      %v4309 = vld [vmem:[%s10 + $0xc] sm:$0xf]
      %v4310 = vld [vmem:[%s10 + $0x10] sm:$0xf]
      %v4311 = vld [vmem:[%s10 + $0x14] sm:$0xf]
      %v4312 = vld [vmem:[%s10 + $0x18] sm:$0xf]
      %v4313 = vld [vmem:[%s10 + $0x1c] sm:$0xf]
      %v4314 = vld [vmem:[%s10 + $0x20] sm:$0xf]
      %v4315 = vld [vmem:[%s10 + $0x24] sm:$0xf]
      %v4316 = vld [vmem:[%s10 + $0x28] sm:$0xf]
      %v4317 = vld [vmem:[%s10 + $0x2c] sm:$0xf]
      %v4318 = vld [vmem:[%s10 + $0x30] sm:$0xf]
      %v4319 = vld [vmem:[%s10 + $0x34] sm:$0xf]
      %v4320 = vld [vmem:[%s10 + $0x38] sm:$0xf]
      %v4321 = vld [vmem:[%s10 + $0x3c] sm:$0xf]
      %v4322 = vld [vmem:[#allocation4] sm:$0xff]
      %v4323 = vld [vmem:[#allocation4 + $0x8] sm:$0xff]
      %v4324 = vld [vmem:[#allocation4 + $0x10] sm:$0xff]
      %v4325 = vld [vmem:[#allocation4 + $0x18] sm:$0xff]
      %s4326 = scalar_lea.vmem %s10, 64
      %v4327 = vld [vmem:[%s4326] sm:$0xf]
      %v4328 = vld [vmem:[%s4326 + $0x4] sm:$0xf]
      %v4329 = vld [vmem:[%s4326 + $0x8] sm:$0xf]
      %v4330 = vld [vmem:[%s4326 + $0xc] sm:$0xf]
      %v4331 = vld [vmem:[%s4326 + $0x10] sm:$0xf]
      %v4332 = vld [vmem:[%s4326 + $0x14] sm:$0xf]
      %v4333 = vld [vmem:[%s4326 + $0x18] sm:$0xf]
      %v4334 = vld [vmem:[%s4326 + $0x1c] sm:$0xf]
      %v4335 = vld [vmem:[%s4326 + $0x20] sm:$0xf]
      %v4336 = vld [vmem:[%s4326 + $0x24] sm:$0xf]
      %v4337 = vld [vmem:[%s4326 + $0x28] sm:$0xf]
      %v4338 = vld [vmem:[%s4326 + $0x2c] sm:$0xf]
      %v4339 = vld [vmem:[%s4326 + $0x30] sm:$0xf]
      %v4340 = vld [vmem:[%s4326 + $0x34] sm:$0xf]
      %v4341 = vld [vmem:[%s4326 + $0x38] sm:$0xf]
      %v4342 = vld [vmem:[%s4326 + $0x3c] sm:$0xf]
      %v4359 = vunpack.c.l.b16 %v4327
      %v4360 = vunpack.c.l.b16 %v4328
      %v4361 = vunpack.c.l.b16 %v4329
      %v4362 = vunpack.c.l.b16 %v4330
      %v4363 = vunpack.c.l.b16 %v4331
      %v4364 = vunpack.c.l.b16 %v4332
      %v4365 = vunpack.c.l.b16 %v4333
      %v4366 = vunpack.c.l.b16 %v4334
      %v4367 = vunpack.c.l.b16 %v4335
      %v4368 = vunpack.c.l.b16 %v4336
      %v4369 = vunpack.c.l.b16 %v4337
      %v4370 = vunpack.c.l.b16 %v4338
      %v4371 = vunpack.c.l.b16 %v4339
      %v4372 = vunpack.c.l.b16 %v4340
      %v4373 = vunpack.c.l.b16 %v4341
      %v4374 = vunpack.c.l.b16 %v4342
      %v4375 = vpack.c.b16 %v4360, %v4359
      %v4376 = vpack.c.b16 %v4362, %v4361
      %v4377 = vpack.c.b16 %v4364, %v4363
      %v4378 = vpack.c.b16 %v4366, %v4365
      %v4379 = vpack.c.b16 %v4368, %v4367
      %v4380 = vpack.c.b16 %v4370, %v4369
      %v4381 = vpack.c.b16 %v4372, %v4371
      %v4382 = vpack.c.b16 %v4374, %v4373
      %4387 = vrot.lane.b32.xlu0 %v4322, 127
      %v4388 = vpop.permute.xlu0 %4387
      %4389 = vrot.lane.b32.xlu0 %v4323, 127
      %v4390 = vpop.permute.xlu0 %4389
      %4391 = vrot.lane.b32.xlu0 %v4324, 127
      %v4392 = vpop.permute.xlu0 %4391
      %4393 = vrot.lane.b32.xlu0 %v4325, 127
      %v4394 = vpop.permute.xlu0 %4393
      %vm4399 = vcmask 523264
      %v4401 = vsel %vm4399, %v4375, 0
      %v4404 = vsel %vm4399, %v4376, 0
      %v4407 = vsel %vm4399, %v4377, 0
      %v4410 = vsel %vm4399, %v4378, 0
      %v4413 = vsel %vm4399, %v4379, 0
      %v4416 = vsel %vm4399, %v4380, 0
      %v4419 = vsel %vm4399, %v4381, 0
      %v4422 = vsel %vm4399, %v4382, 0
      %4424 = vmatprep.subr.bf16.mxu0 0
      %4425 = vmatpush1.bf16.msra.mxu0 %v4388
      %4426 = vmatprep.subr.bf16.mxu0 0
      %4427 = vmatpush1.bf16.msra.mxu0 %v4390
      %4428 = vmatprep.subr.bf16.mxu0 0
      %4429 = vmatpush1.bf16.msra.mxu0 %v4392
      %4430 = vmatprep.subr.bf16.mxu0 0
      %4431 = vmatpush1.bf16.msra.mxu0 %v4394
      %4432 = vmatprep.subr.bf16.mxu0 0
      %4433 = vmatpush1.bf16.msra.mxu0 0
      %4434 = vmatprep.subr.bf16.mxu0 0
      %4435 = vmatpush1.bf16.msra.mxu0 0
      %4436 = vmatprep.subr.bf16.mxu0 0
      %4437 = vmatpush1.bf16.msra.mxu0 0
      %4438 = vmatprep.subr.bf16.mxu0 0
      %4439 = vmatpush1.bf16.msra.mxu0 0
      %4440 = vmatprep.subr.bf16.mxu0 0
      %4441 = vmatpush1.bf16.msra.mxu0 0
      %4442 = vmatprep.subr.bf16.mxu0 0
      %4443 = vmatpush1.bf16.msra.mxu0 0
      %4444 = vmatprep.subr.bf16.mxu0 0
      %4445 = vmatpush1.bf16.msra.mxu0 0
      %4446 = vmatprep.subr.bf16.mxu0 0
      %4447 = vmatpush1.bf16.msra.mxu0 0
      %4448 = vmatprep.subr.bf16.mxu0 0
      %4449 = vmatpush1.bf16.msra.mxu0 0
      %4450 = vmatprep.subr.bf16.mxu0 0
      %4451 = vmatpush1.bf16.msra.mxu0 0
      %4452 = vmatprep.subr.bf16.mxu0 0
      %4453 = vmatpush1.bf16.msra.mxu0 0
      %4454 = vmatprep.subr.bf16.mxu0 0
      %4455 = vmatpush1.bf16.msra.mxu0 0
      %4456 = vmatprep.mubr.bf16.mxu0 0
      %4457 = vmatmul.mubr.bf16.gmra.mrb[0].mxu0 %v4401
      %v4458 = vpop.f32.mrb[0].mxu0
      %v4459 = vadd.f32 0.0, %v4458
      %v4460 = vpop.f32.mrb[0].mxu0
      %v4461 = vpop.f32.mrb[0].mxu0
      %v4462 = vadd.f32 0.0, %v4461
      %v4463 = vpop.f32.mrb[0].mxu0
      %4464 = vmatprep.mubr.bf16.mxu0 0
      %4465 = vmatmul.mubr.bf16.gmra.mrb[0].mxu0 %v4404
      %v4466 = vpop.f32.mrb[0].mxu0
      %v4467 = vadd.f32 0.0, %v4466
      %v4468 = vpop.f32.mrb[0].mxu0
      %v4469 = vpop.f32.mrb[0].mxu0
      %v4470 = vadd.f32 0.0, %v4469
      %v4471 = vpop.f32.mrb[0].mxu0
      %4472 = vmatprep.mubr.bf16.mxu0 0
      %4473 = vmatmul.mubr.bf16.gmra.mrb[0].mxu0 %v4407
      %v4474 = vpop.f32.mrb[0].mxu0
      %v4475 = vadd.f32 0.0, %v4474
      %v4476 = vpop.f32.mrb[0].mxu0
      %v4477 = vpop.f32.mrb[0].mxu0
      %v4478 = vadd.f32 0.0, %v4477
      %v4479 = vpop.f32.mrb[0].mxu0
      %4480 = vmatprep.mubr.bf16.mxu0 0
      %4481 = vmatmul.mubr.bf16.gmra.mrb[0].mxu0 %v4410
      %v4482 = vpop.f32.mrb[0].mxu0
      %v4483 = vadd.f32 0.0, %v4482
      %v4484 = vpop.f32.mrb[0].mxu0
      %v4485 = vpop.f32.mrb[0].mxu0
      %v4486 = vadd.f32 0.0, %v4485
      %v4487 = vpop.f32.mrb[0].mxu0
      %4488 = vmatprep.mubr.bf16.mxu0 0
      %4489 = vmatmul.mubr.bf16.gmra.mrb[0].mxu0 %v4413
      %v4490 = vpop.f32.mrb[0].mxu0
      %v4491 = vadd.f32 0.0, %v4490
      %v4492 = vpop.f32.mrb[0].mxu0
      %v4493 = vpop.f32.mrb[0].mxu0
      %v4494 = vadd.f32 0.0, %v4493
      %v4495 = vpop.f32.mrb[0].mxu0
      %4496 = vmatprep.mubr.bf16.mxu0 0
      %4497 = vmatmul.mubr.bf16.gmra.mrb[0].mxu0 %v4416
      %v4498 = vpop.f32.mrb[0].mxu0
      %v4499 = vadd.f32 0.0, %v4498
      %v4500 = vpop.f32.mrb[0].mxu0
      %v4501 = vpop.f32.mrb[0].mxu0
      %v4502 = vadd.f32 0.0, %v4501
      %v4503 = vpop.f32.mrb[0].mxu0
      %4504 = vmatprep.mubr.bf16.mxu0 0
      %4505 = vmatmul.mubr.bf16.gmra.mrb[0].mxu0 %v4419
      %v4506 = vpop.f32.mrb[0].mxu0
      %v4507 = vadd.f32 0.0, %v4506
      %v4508 = vpop.f32.mrb[0].mxu0
      %v4509 = vpop.f32.mrb[0].mxu0
      %v4510 = vadd.f32 0.0, %v4509
      %v4511 = vpop.f32.mrb[0].mxu0
      %4512 = vmatprep.mubr.bf16.mxu0 0
      %4513 = vmatmul.mubr.bf16.gmra.mrb[0].mxu0 %v4422
      %v4514 = vpop.f32.mrb[0].mxu0
      %v4515 = vadd.f32 0.0, %v4514
      %v4516 = vpop.f32.mrb[0].mxu0
      %v4517 = vpop.f32.mrb[0].mxu0
      %v4518 = vadd.f32 0.0, %v4517
      %v4519 = vpop.f32.mrb[0].mxu0
      %4520 = vdwg.mxu0
      %v4537 = vunpack.c.l.b16 %v4306
      %v4538 = vunpack.c.l.b16 %v4307
      %v4539 = vunpack.c.l.b16 %v4308
      %v4540 = vunpack.c.l.b16 %v4309
      %v4541 = vunpack.c.l.b16 %v4310
      %v4542 = vunpack.c.l.b16 %v4311
      %v4543 = vunpack.c.l.b16 %v4312
      %v4544 = vunpack.c.l.b16 %v4313
      %v4545 = vunpack.c.l.b16 %v4314
      %v4546 = vunpack.c.l.b16 %v4315
      %v4547 = vunpack.c.l.b16 %v4316
      %v4548 = vunpack.c.l.b16 %v4317
      %v4549 = vunpack.c.l.b16 %v4318
      %v4550 = vunpack.c.l.b16 %v4319
      %v4551 = vunpack.c.l.b16 %v4320
      %v4552 = vunpack.c.l.b16 %v4321
      %v4553 = vpack.c.b16 %v4538, %v4537
      %v4554 = vpack.c.b16 %v4540, %v4539
      %v4555 = vpack.c.b16 %v4542, %v4541
      %v4556 = vpack.c.b16 %v4544, %v4543
      %v4557 = vpack.c.b16 %v4546, %v4545
      %v4558 = vpack.c.b16 %v4548, %v4547
      %v4559 = vpack.c.b16 %v4550, %v4549
      %v4560 = vpack.c.b16 %v4552, %v4551
      %v4562 = vsel %vm4399, %v4553, 0
      %v4565 = vsel %vm4399, %v4554, 0
      %v4568 = vsel %vm4399, %v4555, 0
      %v4571 = vsel %vm4399, %v4556, 0
      %v4574 = vsel %vm4399, %v4557, 0
      %v4577 = vsel %vm4399, %v4558, 0
      %v4580 = vsel %vm4399, %v4559, 0
      %v4583 = vsel %vm4399, %v4560, 0
      %4585 = vmatprep.subr.bf16.mxu0 0
      %4586 = vmatpush1.bf16.msra.mxu0 %v4322
      %4587 = vmatprep.subr.bf16.mxu0 0
      %4588 = vmatpush1.bf16.msra.mxu0 %v4323
      %4589 = vmatprep.subr.bf16.mxu0 0
      %4590 = vmatpush1.bf16.msra.mxu0 %v4324
      %4591 = vmatprep.subr.bf16.mxu0 0
      %4592 = vmatpush1.bf16.msra.mxu0 %v4325
      %4593 = vmatprep.subr.bf16.mxu0 0
      %4594 = vmatpush1.bf16.msra.mxu0 0
      %4595 = vmatprep.subr.bf16.mxu0 0
      %4596 = vmatpush1.bf16.msra.mxu0 0
      %4597 = vmatprep.subr.bf16.mxu0 0
      %4598 = vmatpush1.bf16.msra.mxu0 0
      %4599 = vmatprep.subr.bf16.mxu0 0
      %4600 = vmatpush1.bf16.msra.mxu0 0
      %4601 = vmatprep.subr.bf16.mxu0 0
      %4602 = vmatpush1.bf16.msra.mxu0 0
      %4603 = vmatprep.subr.bf16.mxu0 0
      %4604 = vmatpush1.bf16.msra.mxu0 0
      %4605 = vmatprep.subr.bf16.mxu0 0
      %4606 = vmatpush1.bf16.msra.mxu0 0
      %4607 = vmatprep.subr.bf16.mxu0 0
      %4608 = vmatpush1.bf16.msra.mxu0 0
      %4609 = vmatprep.subr.bf16.mxu0 0
      %4610 = vmatpush1.bf16.msra.mxu0 0
      %4611 = vmatprep.subr.bf16.mxu0 0
      %4612 = vmatpush1.bf16.msra.mxu0 0
      %4613 = vmatprep.subr.bf16.mxu0 0
      %4614 = vmatpush1.bf16.msra.mxu0 0
      %4615 = vmatprep.subr.bf16.mxu0 0
      %4616 = vmatpush1.bf16.msra.mxu0 0
      %4617 = vmatprep.mubr.bf16.mxu0 0
      %4618 = vmatmul.mubr.bf16.gmra.mrb[0].mxu0 %v4562
      %v4619 = vpop.f32.mrb[0].mxu0
      %v4620 = vadd.f32 %v4459, %v4619
      %v4621 = vpop.f32.mrb[0].mxu0
      %v4622 = vpop.f32.mrb[0].mxu0
      %v4623 = vadd.f32 %v4462, %v4622
      %v4624 = vpop.f32.mrb[0].mxu0
      %4625 = vmatprep.mubr.bf16.mxu0 0
      %4626 = vmatmul.mubr.bf16.gmra.mrb[0].mxu0 %v4565
      %v4627 = vpop.f32.mrb[0].mxu0
      %v4628 = vadd.f32 %v4467, %v4627
      %v4629 = vpop.f32.mrb[0].mxu0
      %v4630 = vpop.f32.mrb[0].mxu0
      %v4631 = vadd.f32 %v4470, %v4630
      %v4632 = vpop.f32.mrb[0].mxu0
      %4633 = vmatprep.mubr.bf16.mxu0 0
      %4634 = vmatmul.mubr.bf16.gmra.mrb[0].mxu0 %v4568
      %v4635 = vpop.f32.mrb[0].mxu0
      %v4636 = vadd.f32 %v4475, %v4635
      %v4637 = vpop.f32.mrb[0].mxu0
      %v4638 = vpop.f32.mrb[0].mxu0
      %v4639 = vadd.f32 %v4478, %v4638
      %v4640 = vpop.f32.mrb[0].mxu0
      %4641 = vmatprep.mubr.bf16.mxu0 0
      %4642 = vmatmul.mubr.bf16.gmra.mrb[0].mxu0 %v4571
      %v4643 = vpop.f32.mrb[0].mxu0
      %v4644 = vadd.f32 %v4483, %v4643
      %v4645 = vpop.f32.mrb[0].mxu0
      %v4646 = vpop.f32.mrb[0].mxu0
      %v4647 = vadd.f32 %v4486, %v4646
      %v4648 = vpop.f32.mrb[0].mxu0
      %4649 = vmatprep.mubr.bf16.mxu0 0
      %4650 = vmatmul.mubr.bf16.gmra.mrb[0].mxu0 %v4574
      %v4651 = vpop.f32.mrb[0].mxu0
      %v4652 = vadd.f32 %v4491, %v4651
      %v4653 = vpop.f32.mrb[0].mxu0
      %v4654 = vpop.f32.mrb[0].mxu0
      %v4655 = vadd.f32 %v4494, %v4654
      %v4656 = vpop.f32.mrb[0].mxu0
      %4657 = vmatprep.mubr.bf16.mxu0 0
      %4658 = vmatmul.mubr.bf16.gmra.mrb[0].mxu0 %v4577
      %v4659 = vpop.f32.mrb[0].mxu0
      %v4660 = vadd.f32 %v4499, %v4659
      %v4661 = vpop.f32.mrb[0].mxu0
      %v4662 = vpop.f32.mrb[0].mxu0
      %v4663 = vadd.f32 %v4502, %v4662
      %v4664 = vpop.f32.mrb[0].mxu0
      %4665 = vmatprep.mubr.bf16.mxu0 0
      %4666 = vmatmul.mubr.bf16.gmra.mrb[0].mxu0 %v4580
      %v4667 = vpop.f32.mrb[0].mxu0
      %v4668 = vadd.f32 %v4507, %v4667
      %v4669 = vpop.f32.mrb[0].mxu0
      %v4670 = vpop.f32.mrb[0].mxu0
      %v4671 = vadd.f32 %v4510, %v4670
      %v4672 = vpop.f32.mrb[0].mxu0
      %4673 = vmatprep.mubr.bf16.mxu0 0
      %4674 = vmatmul.mubr.bf16.gmra.mrb[0].mxu0 %v4583
      %v4675 = vpop.f32.mrb[0].mxu0
      %v4676 = vadd.f32 %v4515, %v4675
      %v4677 = vpop.f32.mrb[0].mxu0
      %v4678 = vpop.f32.mrb[0].mxu0
      %v4679 = vadd.f32 %v4518, %v4678
      %v4680 = vpop.f32.mrb[0].mxu0
      %4681 = vdwg.mxu0
      %s4682 = scalar_lea.vmem %s10, 128
      %v4683 = vld [vmem:[%s4682] sm:$0xf]
      %v4684 = vld [vmem:[%s4682 + $0x4] sm:$0xf]
      %v4685 = vld [vmem:[%s4682 + $0x8] sm:$0xf]
      %v4686 = vld [vmem:[%s4682 + $0xc] sm:$0xf]
      %v4687 = vld [vmem:[%s4682 + $0x10] sm:$0xf]
      %v4688 = vld [vmem:[%s4682 + $0x14] sm:$0xf]
      %v4689 = vld [vmem:[%s4682 + $0x18] sm:$0xf]
      %v4690 = vld [vmem:[%s4682 + $0x1c] sm:$0xf]
      %v4691 = vld [vmem:[%s4682 + $0x20] sm:$0xf]
      %v4692 = vld [vmem:[%s4682 + $0x24] sm:$0xf]
      %v4693 = vld [vmem:[%s4682 + $0x28] sm:$0xf]
      %v4694 = vld [vmem:[%s4682 + $0x2c] sm:$0xf]
      %v4695 = vld [vmem:[%s4682 + $0x30] sm:$0xf]
      %v4696 = vld [vmem:[%s4682 + $0x34] sm:$0xf]
      %v4697 = vld [vmem:[%s4682 + $0x38] sm:$0xf]
      %v4698 = vld [vmem:[%s4682 + $0x3c] sm:$0xf]
      %v4715 = vunpack.c.l.b16 %v4683
      %v4716 = vunpack.c.l.b16 %v4684
      %v4717 = vunpack.c.l.b16 %v4685
      %v4718 = vunpack.c.l.b16 %v4686
      %v4719 = vunpack.c.l.b16 %v4687
      %v4720 = vunpack.c.l.b16 %v4688
      %v4721 = vunpack.c.l.b16 %v4689
      %v4722 = vunpack.c.l.b16 %v4690
      %v4723 = vunpack.c.l.b16 %v4691
      %v4724 = vunpack.c.l.b16 %v4692
      %v4725 = vunpack.c.l.b16 %v4693
      %v4726 = vunpack.c.l.b16 %v4694
      %v4727 = vunpack.c.l.b16 %v4695
      %v4728 = vunpack.c.l.b16 %v4696
      %v4729 = vunpack.c.l.b16 %v4697
      %v4730 = vunpack.c.l.b16 %v4698
      %v4731 = vpack.c.b16 %v4716, %v4715
      %v4732 = vpack.c.b16 %v4718, %v4717
      %v4733 = vpack.c.b16 %v4720, %v4719
      %v4734 = vpack.c.b16 %v4722, %v4721
      %v4735 = vpack.c.b16 %v4724, %v4723
      %v4736 = vpack.c.b16 %v4726, %v4725
      %v4737 = vpack.c.b16 %v4728, %v4727
      %v4738 = vpack.c.b16 %v4730, %v4729
      %4739 = vrot.lane.b32.xlu0 %v4322, 126
      %v4740 = vpop.permute.xlu0 %4739
      %4741 = vrot.lane.b32.xlu0 %v4323, 126
      %v4742 = vpop.permute.xlu0 %4741
      %4743 = vrot.lane.b32.xlu0 %v4324, 126
      %v4744 = vpop.permute.xlu0 %4743
      %4745 = vrot.lane.b32.xlu0 %v4325, 126
      %v4746 = vpop.permute.xlu0 %4745
      %v4752 = vsel %vm4399, %v4731, 0
      %v4755 = vsel %vm4399, %v4732, 0
      %v4758 = vsel %vm4399, %v4733, 0
      %v4761 = vsel %vm4399, %v4734, 0
      %v4764 = vsel %vm4399, %v4735, 0
      %v4767 = vsel %vm4399, %v4736, 0
      %v4770 = vsel %vm4399, %v4737, 0
      %v4773 = vsel %vm4399, %v4738, 0
      %4775 = vmatprep.subr.bf16.mxu0 0
      %4776 = vmatpush1.bf16.msra.mxu0 %v4740
      %4777 = vmatprep.subr.bf16.mxu0 0
      %4778 = vmatpush1.bf16.msra.mxu0 %v4742
      %4779 = vmatprep.subr.bf16.mxu0 0
      %4780 = vmatpush1.bf16.msra.mxu0 %v4744
      %4781 = vmatprep.subr.bf16.mxu0 0
      %4782 = vmatpush1.bf16.msra.mxu0 %v4746
      %4783 = vmatprep.subr.bf16.mxu0 0
      %4784 = vmatpush1.bf16.msra.mxu0 0
      %4785 = vmatprep.subr.bf16.mxu0 0
      %4786 = vmatpush1.bf16.msra.mxu0 0
      %4787 = vmatprep.subr.bf16.mxu0 0
      %4788 = vmatpush1.bf16.msra.mxu0 0
      %4789 = vmatprep.subr.bf16.mxu0 0
      %4790 = vmatpush1.bf16.msra.mxu0 0
      %4791 = vmatprep.subr.bf16.mxu0 0
      %4792 = vmatpush1.bf16.msra.mxu0 0
      %4793 = vmatprep.subr.bf16.mxu0 0
      %4794 = vmatpush1.bf16.msra.mxu0 0
      %4795 = vmatprep.subr.bf16.mxu0 0
      %4796 = vmatpush1.bf16.msra.mxu0 0
      %4797 = vmatprep.subr.bf16.mxu0 0
      %4798 = vmatpush1.bf16.msra.mxu0 0
      %4799 = vmatprep.subr.bf16.mxu0 0
      %4800 = vmatpush1.bf16.msra.mxu0 0
      %4801 = vmatprep.subr.bf16.mxu0 0
      %4802 = vmatpush1.bf16.msra.mxu0 0
      %4803 = vmatprep.subr.bf16.mxu0 0
      %4804 = vmatpush1.bf16.msra.mxu0 0
      %4805 = vmatprep.subr.bf16.mxu0 0
      %4806 = vmatpush1.bf16.msra.mxu0 0
      %4807 = vmatprep.mubr.bf16.mxu0 0
      %4808 = vmatmul.mubr.bf16.gmra.mrb[0].mxu0 %v4752
      %v4809 = vpop.f32.mrb[0].mxu0
      %v4810 = vadd.f32 0.0, %v4809
      %v4811 = vpop.f32.mrb[0].mxu0
      %v4812 = vpop.f32.mrb[0].mxu0
      %v4813 = vadd.f32 0.0, %v4812
      %v4814 = vpop.f32.mrb[0].mxu0
      %4815 = vmatprep.mubr.bf16.mxu0 0
      %4816 = vmatmul.mubr.bf16.gmra.mrb[0].mxu0 %v4755
      %v4817 = vpop.f32.mrb[0].mxu0
      %v4818 = vadd.f32 0.0, %v4817
      %v4819 = vpop.f32.mrb[0].mxu0
      %v4820 = vpop.f32.mrb[0].mxu0
      %v4821 = vadd.f32 0.0, %v4820
      %v4822 = vpop.f32.mrb[0].mxu0
      %4823 = vmatprep.mubr.bf16.mxu0 0
      %4824 = vmatmul.mubr.bf16.gmra.mrb[0].mxu0 %v4758
      %v4825 = vpop.f32.mrb[0].mxu0
      %v4826 = vadd.f32 0.0, %v4825
      %v4827 = vpop.f32.mrb[0].mxu0
      %v4828 = vpop.f32.mrb[0].mxu0
      %v4829 = vadd.f32 0.0, %v4828
      %v4830 = vpop.f32.mrb[0].mxu0
      %4831 = vmatprep.mubr.bf16.mxu0 0
      %4832 = vmatmul.mubr.bf16.gmra.mrb[0].mxu0 %v4761
      %v4833 = vpop.f32.mrb[0].mxu0
      %v4834 = vadd.f32 0.0, %v4833
      %v4835 = vpop.f32.mrb[0].mxu0
      %v4836 = vpop.f32.mrb[0].mxu0
      %v4837 = vadd.f32 0.0, %v4836
      %v4838 = vpop.f32.mrb[0].mxu0
      %4839 = vmatprep.mubr.bf16.mxu0 0
      %4840 = vmatmul.mubr.bf16.gmra.mrb[0].mxu0 %v4764
      %v4841 = vpop.f32.mrb[0].mxu0
      %v4842 = vadd.f32 0.0, %v4841
      %v4843 = vpop.f32.mrb[0].mxu0
      %v4844 = vpop.f32.mrb[0].mxu0
      %v4845 = vadd.f32 0.0, %v4844
      %v4846 = vpop.f32.mrb[0].mxu0
      %4847 = vmatprep.mubr.bf16.mxu0 0
      %4848 = vmatmul.mubr.bf16.gmra.mrb[0].mxu0 %v4767
      %v4849 = vpop.f32.mrb[0].mxu0
      %v4850 = vadd.f32 0.0, %v4849
      %v4851 = vpop.f32.mrb[0].mxu0
      %v4852 = vpop.f32.mrb[0].mxu0
      %v4853 = vadd.f32 0.0, %v4852
      %v4854 = vpop.f32.mrb[0].mxu0
      %4855 = vmatprep.mubr.bf16.mxu0 0
      %4856 = vmatmul.mubr.bf16.gmra.mrb[0].mxu0 %v4770
      %v4857 = vpop.f32.mrb[0].mxu0
      %v4858 = vadd.f32 0.0, %v4857
      %v4859 = vpop.f32.mrb[0].mxu0
      %v4860 = vpop.f32.mrb[0].mxu0
      %v4861 = vadd.f32 0.0, %v4860
      %v4862 = vpop.f32.mrb[0].mxu0
      %4863 = vmatprep.mubr.bf16.mxu0 0
      %4864 = vmatmul.mubr.bf16.gmra.mrb[0].mxu0 %v4773
      %v4865 = vpop.f32.mrb[0].mxu0
      %v4866 = vadd.f32 0.0, %v4865
      %v4867 = vpop.f32.mrb[0].mxu0
      %v4868 = vpop.f32.mrb[0].mxu0
      %v4869 = vadd.f32 0.0, %v4868
      %v4870 = vpop.f32.mrb[0].mxu0
      %4871 = vdwg.mxu0
      %v4872 = vadd.f32 %v4620, %v4810
      %v4873 = vadd.f32 %v4623, %v4813
      %v4874 = vadd.f32 %v4628, %v4818
      %v4875 = vadd.f32 %v4631, %v4821
      %v4876 = vadd.f32 %v4636, %v4826
      %v4877 = vadd.f32 %v4639, %v4829
      %v4878 = vadd.f32 %v4644, %v4834
      %v4879 = vadd.f32 %v4647, %v4837
      %v4880 = vadd.f32 %v4652, %v4842
      %v4881 = vadd.f32 %v4655, %v4845
      %v4882 = vadd.f32 %v4660, %v4850
      %v4883 = vadd.f32 %v4663, %v4853
      %v4884 = vadd.f32 %v4668, %v4858
      %v4885 = vadd.f32 %v4671, %v4861
      %v4886 = vadd.f32 %v4676, %v4866
      %v4887 = vadd.f32 %v4679, %v4869
      %s4888 = scalar_lea.vmem %s10, 192
      %v4889 = vld [vmem:[%s4888] sm:$0xf]
      %v4890 = vld [vmem:[%s4888 + $0x4] sm:$0xf]
      %v4891 = vld [vmem:[%s4888 + $0x8] sm:$0xf]
      %v4892 = vld [vmem:[%s4888 + $0xc] sm:$0xf]
      %v4893 = vld [vmem:[%s4888 + $0x10] sm:$0xf]
      %v4894 = vld [vmem:[%s4888 + $0x14] sm:$0xf]
      %v4895 = vld [vmem:[%s4888 + $0x18] sm:$0xf]
      %v4896 = vld [vmem:[%s4888 + $0x1c] sm:$0xf]
      %v4897 = vld [vmem:[%s4888 + $0x20] sm:$0xf]
      %v4898 = vld [vmem:[%s4888 + $0x24] sm:$0xf]
      %v4899 = vld [vmem:[%s4888 + $0x28] sm:$0xf]
      %v4900 = vld [vmem:[%s4888 + $0x2c] sm:$0xf]
      %v4901 = vld [vmem:[%s4888 + $0x30] sm:$0xf]
      %v4902 = vld [vmem:[%s4888 + $0x34] sm:$0xf]
      %v4903 = vld [vmem:[%s4888 + $0x38] sm:$0xf]
      %v4904 = vld [vmem:[%s4888 + $0x3c] sm:$0xf]
      %v4921 = vunpack.c.l.b16 %v4889
      %v4922 = vunpack.c.l.b16 %v4890
      %v4923 = vunpack.c.l.b16 %v4891
      %v4924 = vunpack.c.l.b16 %v4892
      %v4925 = vunpack.c.l.b16 %v4893
      %v4926 = vunpack.c.l.b16 %v4894
      %v4927 = vunpack.c.l.b16 %v4895
      %v4928 = vunpack.c.l.b16 %v4896
      %v4929 = vunpack.c.l.b16 %v4897
      %v4930 = vunpack.c.l.b16 %v4898
      %v4931 = vunpack.c.l.b16 %v4899
      %v4932 = vunpack.c.l.b16 %v4900
      %v4933 = vunpack.c.l.b16 %v4901
      %v4934 = vunpack.c.l.b16 %v4902
      %v4935 = vunpack.c.l.b16 %v4903
      %v4936 = vunpack.c.l.b16 %v4904
      %v4937 = vpack.c.b16 %v4922, %v4921
      %v4938 = vpack.c.b16 %v4924, %v4923
      %v4939 = vpack.c.b16 %v4926, %v4925
      %v4940 = vpack.c.b16 %v4928, %v4927
      %v4941 = vpack.c.b16 %v4930, %v4929
      %v4942 = vpack.c.b16 %v4932, %v4931
      %v4943 = vpack.c.b16 %v4934, %v4933
      %v4944 = vpack.c.b16 %v4936, %v4935
      %4945 = vrot.lane.b32.xlu0 %v4322, 124
      %v4946 = vpop.permute.xlu0 %4945
      %4947 = vrot.lane.b32.xlu0 %v4323, 124
      %v4948 = vpop.permute.xlu0 %4947
      %4949 = vrot.lane.b32.xlu0 %v4324, 124
      %v4950 = vpop.permute.xlu0 %4949
      %4951 = vrot.lane.b32.xlu0 %v4325, 124
      %v4952 = vpop.permute.xlu0 %4951
      %v4958 = vsel %vm4399, %v4937, 0
      %v4961 = vsel %vm4399, %v4938, 0
      %v4964 = vsel %vm4399, %v4939, 0
      %v4967 = vsel %vm4399, %v4940, 0
      %v4970 = vsel %vm4399, %v4941, 0
      %v4973 = vsel %vm4399, %v4942, 0
      %v4976 = vsel %vm4399, %v4943, 0
      %v4979 = vsel %vm4399, %v4944, 0
      %4981 = vmatprep.subr.bf16.mxu0 0
      %4982 = vmatpush1.bf16.msra.mxu0 %v4946
      %4983 = vmatprep.subr.bf16.mxu0 0
      %4984 = vmatpush1.bf16.msra.mxu0 %v4948
      %4985 = vmatprep.subr.bf16.mxu0 0
      %4986 = vmatpush1.bf16.msra.mxu0 %v4950
      %4987 = vmatprep.subr.bf16.mxu0 0
      %4988 = vmatpush1.bf16.msra.mxu0 %v4952
      %4989 = vmatprep.subr.bf16.mxu0 0
      %4990 = vmatpush1.bf16.msra.mxu0 0
      %4991 = vmatprep.subr.bf16.mxu0 0
      %4992 = vmatpush1.bf16.msra.mxu0 0
      %4993 = vmatprep.subr.bf16.mxu0 0
      %4994 = vmatpush1.bf16.msra.mxu0 0
      %4995 = vmatprep.subr.bf16.mxu0 0
      %4996 = vmatpush1.bf16.msra.mxu0 0
      %4997 = vmatprep.subr.bf16.mxu0 0
      %4998 = vmatpush1.bf16.msra.mxu0 0
      %4999 = vmatprep.subr.bf16.mxu0 0
      %5000 = vmatpush1.bf16.msra.mxu0 0
      %5001 = vmatprep.subr.bf16.mxu0 0
      %5002 = vmatpush1.bf16.msra.mxu0 0
      %5003 = vmatprep.subr.bf16.mxu0 0
      %5004 = vmatpush1.bf16.msra.mxu0 0
      %5005 = vmatprep.subr.bf16.mxu0 0
      %5006 = vmatpush1.bf16.msra.mxu0 0
      %5007 = vmatprep.subr.bf16.mxu0 0
      %5008 = vmatpush1.bf16.msra.mxu0 0
      %5009 = vmatprep.subr.bf16.mxu0 0
      %5010 = vmatpush1.bf16.msra.mxu0 0
      %5011 = vmatprep.subr.bf16.mxu0 0
      %5012 = vmatpush1.bf16.msra.mxu0 0
      %5013 = vmatprep.mubr.bf16.mxu0 0
      %5014 = vmatmul.mubr.bf16.gmra.mrb[0].mxu0 %v4958
      %v5015 = vpop.f32.mrb[0].mxu0
      %v5016 = vadd.f32 0.0, %v5015
      %v5017 = vpop.f32.mrb[0].mxu0
      %v5018 = vpop.f32.mrb[0].mxu0
      %v5019 = vadd.f32 0.0, %v5018
      %v5020 = vpop.f32.mrb[0].mxu0
      %5021 = vmatprep.mubr.bf16.mxu0 0
      %5022 = vmatmul.mubr.bf16.gmra.mrb[0].mxu0 %v4961
      %v5023 = vpop.f32.mrb[0].mxu0
      %v5024 = vadd.f32 0.0, %v5023
      %v5025 = vpop.f32.mrb[0].mxu0
      %v5026 = vpop.f32.mrb[0].mxu0
      %v5027 = vadd.f32 0.0, %v5026
      %v5028 = vpop.f32.mrb[0].mxu0
      %5029 = vmatprep.mubr.bf16.mxu0 0
      %5030 = vmatmul.mubr.bf16.gmra.mrb[0].mxu0 %v4964
      %v5031 = vpop.f32.mrb[0].mxu0
      %v5032 = vadd.f32 0.0, %v5031
      %v5033 = vpop.f32.mrb[0].mxu0
      %v5034 = vpop.f32.mrb[0].mxu0
      %v5035 = vadd.f32 0.0, %v5034
      %v5036 = vpop.f32.mrb[0].mxu0
      %5037 = vmatprep.mubr.bf16.mxu0 0
      %5038 = vmatmul.mubr.bf16.gmra.mrb[0].mxu0 %v4967
      %v5039 = vpop.f32.mrb[0].mxu0
      %v5040 = vadd.f32 0.0, %v5039
      %v5041 = vpop.f32.mrb[0].mxu0
      %v5042 = vpop.f32.mrb[0].mxu0
      %v5043 = vadd.f32 0.0, %v5042
      %v5044 = vpop.f32.mrb[0].mxu0
      %5045 = vmatprep.mubr.bf16.mxu0 0
      %5046 = vmatmul.mubr.bf16.gmra.mrb[0].mxu0 %v4970
      %v5047 = vpop.f32.mrb[0].mxu0
      %v5048 = vadd.f32 0.0, %v5047
      %v5049 = vpop.f32.mrb[0].mxu0
      %v5050 = vpop.f32.mrb[0].mxu0
      %v5051 = vadd.f32 0.0, %v5050
      %v5052 = vpop.f32.mrb[0].mxu0
      %5053 = vmatprep.mubr.bf16.mxu0 0
      %5054 = vmatmul.mubr.bf16.gmra.mrb[0].mxu0 %v4973
      %v5055 = vpop.f32.mrb[0].mxu0
      %v5056 = vadd.f32 0.0, %v5055
      %v5057 = vpop.f32.mrb[0].mxu0
      %v5058 = vpop.f32.mrb[0].mxu0
      %v5059 = vadd.f32 0.0, %v5058
      %v5060 = vpop.f32.mrb[0].mxu0
      %5061 = vmatprep.mubr.bf16.mxu0 0
      %5062 = vmatmul.mubr.bf16.gmra.mrb[0].mxu0 %v4976
      %v5063 = vpop.f32.mrb[0].mxu0
      %v5064 = vadd.f32 0.0, %v5063
      %v5065 = vpop.f32.mrb[0].mxu0
      %v5066 = vpop.f32.mrb[0].mxu0
      %v5067 = vadd.f32 0.0, %v5066
      %v5068 = vpop.f32.mrb[0].mxu0
      %5069 = vmatprep.mubr.bf16.mxu0 0
      %5070 = vmatmul.mubr.bf16.gmra.mrb[0].mxu0 %v4979
      %v5071 = vpop.f32.mrb[0].mxu0
      %v5072 = vadd.f32 0.0, %v5071
      %v5073 = vpop.f32.mrb[0].mxu0
      %v5074 = vpop.f32.mrb[0].mxu0
      %v5075 = vadd.f32 0.0, %v5074
      %v5076 = vpop.f32.mrb[0].mxu0
      %5077 = vdwg.mxu0
      %v5078 = vadd.f32 %v4872, %v5016
      %v5079 = vadd.f32 %v4873, %v5019
      %v5080 = vadd.f32 %v4874, %v5024
      %v5081 = vadd.f32 %v4875, %v5027
      %v5082 = vadd.f32 %v4876, %v5032
      %v5083 = vadd.f32 %v4877, %v5035
      %v5084 = vadd.f32 %v4878, %v5040
      %v5085 = vadd.f32 %v4879, %v5043
      %v5086 = vadd.f32 %v4880, %v5048
      %v5087 = vadd.f32 %v4881, %v5051
      %v5088 = vadd.f32 %v4882, %v5056
      %v5089 = vadd.f32 %v4883, %v5059
      %v5090 = vadd.f32 %v4884, %v5064
      %v5091 = vadd.f32 %v4885, %v5067
      %v5092 = vadd.f32 %v4886, %v5072
      %v5093 = vadd.f32 %v4887, %v5075
      %s5094 = scalar_lea.vmem %s10, 256
      %v5095 = vld [vmem:[%s5094] sm:$0xf]
      %v5096 = vld [vmem:[%s5094 + $0x4] sm:$0xf]
      %v5097 = vld [vmem:[%s5094 + $0x8] sm:$0xf]
      %v5098 = vld [vmem:[%s5094 + $0xc] sm:$0xf]
      %v5099 = vld [vmem:[%s5094 + $0x10] sm:$0xf]
      %v5100 = vld [vmem:[%s5094 + $0x14] sm:$0xf]
      %v5101 = vld [vmem:[%s5094 + $0x18] sm:$0xf]
      %v5102 = vld [vmem:[%s5094 + $0x1c] sm:$0xf]
      %v5103 = vld [vmem:[%s5094 + $0x20] sm:$0xf]
      %v5104 = vld [vmem:[%s5094 + $0x24] sm:$0xf]
      %v5105 = vld [vmem:[%s5094 + $0x28] sm:$0xf]
      %v5106 = vld [vmem:[%s5094 + $0x2c] sm:$0xf]
      %v5107 = vld [vmem:[%s5094 + $0x30] sm:$0xf]
      %v5108 = vld [vmem:[%s5094 + $0x34] sm:$0xf]
      %v5109 = vld [vmem:[%s5094 + $0x38] sm:$0xf]
      %v5110 = vld [vmem:[%s5094 + $0x3c] sm:$0xf]
      %v5127 = vunpack.c.l.b16 %v5095
      %v5128 = vunpack.c.l.b16 %v5096
      %v5129 = vunpack.c.l.b16 %v5097
      %v5130 = vunpack.c.l.b16 %v5098
      %v5131 = vunpack.c.l.b16 %v5099
      %v5132 = vunpack.c.l.b16 %v5100
      %v5133 = vunpack.c.l.b16 %v5101
      %v5134 = vunpack.c.l.b16 %v5102
      %v5135 = vunpack.c.l.b16 %v5103
      %v5136 = vunpack.c.l.b16 %v5104
      %v5137 = vunpack.c.l.b16 %v5105
      %v5138 = vunpack.c.l.b16 %v5106
      %v5139 = vunpack.c.l.b16 %v5107
      %v5140 = vunpack.c.l.b16 %v5108
      %v5141 = vunpack.c.l.b16 %v5109
      %v5142 = vunpack.c.l.b16 %v5110
      %v5143 = vpack.c.b16 %v5128, %v5127
      %v5144 = vpack.c.b16 %v5130, %v5129
      %v5145 = vpack.c.b16 %v5132, %v5131
      %v5146 = vpack.c.b16 %v5134, %v5133
      %v5147 = vpack.c.b16 %v5136, %v5135
      %v5148 = vpack.c.b16 %v5138, %v5137
      %v5149 = vpack.c.b16 %v5140, %v5139
      %v5150 = vpack.c.b16 %v5142, %v5141
      %5151 = vrot.lane.b32.xlu0 %v4322, 123
      %v5152 = vpop.permute.xlu0 %5151
      %5153 = vrot.lane.b32.xlu0 %v4323, 123
      %v5154 = vpop.permute.xlu0 %5153
      %5155 = vrot.lane.b32.xlu0 %v4324, 123
      %v5156 = vpop.permute.xlu0 %5155
      %5157 = vrot.lane.b32.xlu0 %v4325, 123
      %v5158 = vpop.permute.xlu0 %5157
      %v5164 = vsel %vm4399, %v5143, 0
      %v5167 = vsel %vm4399, %v5144, 0
      %v5170 = vsel %vm4399, %v5145, 0
      %v5173 = vsel %vm4399, %v5146, 0
      %v5176 = vsel %vm4399, %v5147, 0
      %v5179 = vsel %vm4399, %v5148, 0
      %v5182 = vsel %vm4399, %v5149, 0
      %v5185 = vsel %vm4399, %v5150, 0
      %5187 = vmatprep.subr.bf16.mxu0 0
      %5188 = vmatpush1.bf16.msra.mxu0 %v5152
      %5189 = vmatprep.subr.bf16.mxu0 0
      %5190 = vmatpush1.bf16.msra.mxu0 %v5154
      %5191 = vmatprep.subr.bf16.mxu0 0
      %5192 = vmatpush1.bf16.msra.mxu0 %v5156
      %5193 = vmatprep.subr.bf16.mxu0 0
      %5194 = vmatpush1.bf16.msra.mxu0 %v5158
      %5195 = vmatprep.subr.bf16.mxu0 0
      %5196 = vmatpush1.bf16.msra.mxu0 0
      %5197 = vmatprep.subr.bf16.mxu0 0
      %5198 = vmatpush1.bf16.msra.mxu0 0
      %5199 = vmatprep.subr.bf16.mxu0 0
      %5200 = vmatpush1.bf16.msra.mxu0 0
      %5201 = vmatprep.subr.bf16.mxu0 0
      %5202 = vmatpush1.bf16.msra.mxu0 0
      %5203 = vmatprep.subr.bf16.mxu0 0
      %5204 = vmatpush1.bf16.msra.mxu0 0
      %5205 = vmatprep.subr.bf16.mxu0 0
      %5206 = vmatpush1.bf16.msra.mxu0 0
      %5207 = vmatprep.subr.bf16.mxu0 0
      %5208 = vmatpush1.bf16.msra.mxu0 0
      %5209 = vmatprep.subr.bf16.mxu0 0
      %5210 = vmatpush1.bf16.msra.mxu0 0
      %5211 = vmatprep.subr.bf16.mxu0 0
      %5212 = vmatpush1.bf16.msra.mxu0 0
      %5213 = vmatprep.subr.bf16.mxu0 0
      %5214 = vmatpush1.bf16.msra.mxu0 0
      %5215 = vmatprep.subr.bf16.mxu0 0
      %5216 = vmatpush1.bf16.msra.mxu0 0
      %5217 = vmatprep.subr.bf16.mxu0 0
      %5218 = vmatpush1.bf16.msra.mxu0 0
      %5219 = vmatprep.mubr.bf16.mxu0 0
      %5220 = vmatmul.mubr.bf16.gmra.mrb[0].mxu0 %v5164
      %v5221 = vpop.f32.mrb[0].mxu0
      %v5222 = vadd.f32 0.0, %v5221
      %v5223 = vpop.f32.mrb[0].mxu0
      %v5224 = vpop.f32.mrb[0].mxu0
      %v5225 = vadd.f32 0.0, %v5224
      %v5226 = vpop.f32.mrb[0].mxu0
      %5227 = vmatprep.mubr.bf16.mxu0 0
      %5228 = vmatmul.mubr.bf16.gmra.mrb[0].mxu0 %v5167
      %v5229 = vpop.f32.mrb[0].mxu0
      %v5230 = vadd.f32 0.0, %v5229
      %v5231 = vpop.f32.mrb[0].mxu0
      %v5232 = vpop.f32.mrb[0].mxu0
      %v5233 = vadd.f32 0.0, %v5232
      %v5234 = vpop.f32.mrb[0].mxu0
      %5235 = vmatprep.mubr.bf16.mxu0 0
      %5236 = vmatmul.mubr.bf16.gmra.mrb[0].mxu0 %v5170
      %v5237 = vpop.f32.mrb[0].mxu0
      %v5238 = vadd.f32 0.0, %v5237
      %v5239 = vpop.f32.mrb[0].mxu0
      %v5240 = vpop.f32.mrb[0].mxu0
      %v5241 = vadd.f32 0.0, %v5240
      %v5242 = vpop.f32.mrb[0].mxu0
      %5243 = vmatprep.mubr.bf16.mxu0 0
      %5244 = vmatmul.mubr.bf16.gmra.mrb[0].mxu0 %v5173
      %v5245 = vpop.f32.mrb[0].mxu0
      %v5246 = vadd.f32 0.0, %v5245
      %v5247 = vpop.f32.mrb[0].mxu0
      %v5248 = vpop.f32.mrb[0].mxu0
      %v5249 = vadd.f32 0.0, %v5248
      %v5250 = vpop.f32.mrb[0].mxu0
      %5251 = vmatprep.mubr.bf16.mxu0 0
      %5252 = vmatmul.mubr.bf16.gmra.mrb[0].mxu0 %v5176
      %v5253 = vpop.f32.mrb[0].mxu0
      %v5254 = vadd.f32 0.0, %v5253
      %v5255 = vpop.f32.mrb[0].mxu0
      %v5256 = vpop.f32.mrb[0].mxu0
      %v5257 = vadd.f32 0.0, %v5256
      %v5258 = vpop.f32.mrb[0].mxu0
      %5259 = vmatprep.mubr.bf16.mxu0 0
      %5260 = vmatmul.mubr.bf16.gmra.mrb[0].mxu0 %v5179
      %v5261 = vpop.f32.mrb[0].mxu0
      %v5262 = vadd.f32 0.0, %v5261
      %v5263 = vpop.f32.mrb[0].mxu0
      %v5264 = vpop.f32.mrb[0].mxu0
      %v5265 = vadd.f32 0.0, %v5264
      %v5266 = vpop.f32.mrb[0].mxu0
      %5267 = vmatprep.mubr.bf16.mxu0 0
      %5268 = vmatmul.mubr.bf16.gmra.mrb[0].mxu0 %v5182
      %v5269 = vpop.f32.mrb[0].mxu0
      %v5270 = vadd.f32 0.0, %v5269
      %v5271 = vpop.f32.mrb[0].mxu0
      %v5272 = vpop.f32.mrb[0].mxu0
      %v5273 = vadd.f32 0.0, %v5272
      %v5274 = vpop.f32.mrb[0].mxu0
      %5275 = vmatprep.mubr.bf16.mxu0 0
      %5276 = vmatmul.mubr.bf16.gmra.mrb[0].mxu0 %v5185
      %v5277 = vpop.f32.mrb[0].mxu0
      %v5278 = vadd.f32 0.0, %v5277
      %v5279 = vpop.f32.mrb[0].mxu0
      %v5280 = vpop.f32.mrb[0].mxu0
      %v5281 = vadd.f32 0.0, %v5280
      %v5282 = vpop.f32.mrb[0].mxu0
      %5283 = vdwg.mxu0
      %v5284 = vadd.f32 %v5078, %v5222
      %v5285 = vadd.f32 %v5079, %v5225
      %v5286 = vadd.f32 %v5080, %v5230
      %v5287 = vadd.f32 %v5081, %v5233
      %v5288 = vadd.f32 %v5082, %v5238
      %v5289 = vadd.f32 %v5083, %v5241
      %v5290 = vadd.f32 %v5084, %v5246
      %v5291 = vadd.f32 %v5085, %v5249
      %v5292 = vadd.f32 %v5086, %v5254
      %v5293 = vadd.f32 %v5087, %v5257
      %v5294 = vadd.f32 %v5088, %v5262
      %v5295 = vadd.f32 %v5089, %v5265
      %v5296 = vadd.f32 %v5090, %v5270
      %v5297 = vadd.f32 %v5091, %v5273
      %v5298 = vadd.f32 %v5092, %v5278
      %v5299 = vadd.f32 %v5093, %v5281
      %s5300 = scalar_lea.vmem %s10, 320
      %v5301 = vld [vmem:[%s5300] sm:$0xf]
      %v5302 = vld [vmem:[%s5300 + $0x4] sm:$0xf]
      %v5303 = vld [vmem:[%s5300 + $0x8] sm:$0xf]
      %v5304 = vld [vmem:[%s5300 + $0xc] sm:$0xf]
      %v5305 = vld [vmem:[%s5300 + $0x10] sm:$0xf]
      %v5306 = vld [vmem:[%s5300 + $0x14] sm:$0xf]
      %v5307 = vld [vmem:[%s5300 + $0x18] sm:$0xf]
      %v5308 = vld [vmem:[%s5300 + $0x1c] sm:$0xf]
      %v5309 = vld [vmem:[%s5300 + $0x20] sm:$0xf]
      %v5310 = vld [vmem:[%s5300 + $0x24] sm:$0xf]
      %v5311 = vld [vmem:[%s5300 + $0x28] sm:$0xf]
      %v5312 = vld [vmem:[%s5300 + $0x2c] sm:$0xf]
      %v5313 = vld [vmem:[%s5300 + $0x30] sm:$0xf]
      %v5314 = vld [vmem:[%s5300 + $0x34] sm:$0xf]
      %v5315 = vld [vmem:[%s5300 + $0x38] sm:$0xf]
      %v5316 = vld [vmem:[%s5300 + $0x3c] sm:$0xf]
      %v5333 = vunpack.c.l.b16 %v5301
      %v5334 = vunpack.c.l.b16 %v5302
      %v5335 = vunpack.c.l.b16 %v5303
      %v5336 = vunpack.c.l.b16 %v5304
      %v5337 = vunpack.c.l.b16 %v5305
      %v5338 = vunpack.c.l.b16 %v5306
      %v5339 = vunpack.c.l.b16 %v5307
      %v5340 = vunpack.c.l.b16 %v5308
      %v5341 = vunpack.c.l.b16 %v5309
      %v5342 = vunpack.c.l.b16 %v5310
      %v5343 = vunpack.c.l.b16 %v5311
      %v5344 = vunpack.c.l.b16 %v5312
      %v5345 = vunpack.c.l.b16 %v5313
      %v5346 = vunpack.c.l.b16 %v5314
      %v5347 = vunpack.c.l.b16 %v5315
      %v5348 = vunpack.c.l.b16 %v5316
      %v5349 = vpack.c.b16 %v5334, %v5333
      %v5350 = vpack.c.b16 %v5336, %v5335
      %v5351 = vpack.c.b16 %v5338, %v5337
      %v5352 = vpack.c.b16 %v5340, %v5339
      %v5353 = vpack.c.b16 %v5342, %v5341
      %v5354 = vpack.c.b16 %v5344, %v5343
      %v5355 = vpack.c.b16 %v5346, %v5345
      %v5356 = vpack.c.b16 %v5348, %v5347
      %5357 = vrot.lane.b32.xlu0 %v4322, 122
      %v5358 = vpop.permute.xlu0 %5357
      %5359 = vrot.lane.b32.xlu0 %v4323, 122
      %v5360 = vpop.permute.xlu0 %5359
      %5361 = vrot.lane.b32.xlu0 %v4324, 122
      %v5362 = vpop.permute.xlu0 %5361
      %5363 = vrot.lane.b32.xlu0 %v4325, 122
      %v5364 = vpop.permute.xlu0 %5363
      %v5370 = vsel %vm4399, %v5349, 0
      %v5373 = vsel %vm4399, %v5350, 0
      %v5376 = vsel %vm4399, %v5351, 0
      %v5379 = vsel %vm4399, %v5352, 0
      %v5382 = vsel %vm4399, %v5353, 0
      %v5385 = vsel %vm4399, %v5354, 0
      %v5388 = vsel %vm4399, %v5355, 0
      %v5391 = vsel %vm4399, %v5356, 0
      %5393 = vmatprep.subr.bf16.mxu0 0
      %5394 = vmatpush1.bf16.msra.mxu0 %v5358
      %5395 = vmatprep.subr.bf16.mxu0 0
      %5396 = vmatpush1.bf16.msra.mxu0 %v5360
      %5397 = vmatprep.subr.bf16.mxu0 0
      %5398 = vmatpush1.bf16.msra.mxu0 %v5362
      %5399 = vmatprep.subr.bf16.mxu0 0
      %5400 = vmatpush1.bf16.msra.mxu0 %v5364
      %5401 = vmatprep.subr.bf16.mxu0 0
      %5402 = vmatpush1.bf16.msra.mxu0 0
      %5403 = vmatprep.subr.bf16.mxu0 0
      %5404 = vmatpush1.bf16.msra.mxu0 0
      %5405 = vmatprep.subr.bf16.mxu0 0
      %5406 = vmatpush1.bf16.msra.mxu0 0
      %5407 = vmatprep.subr.bf16.mxu0 0
      %5408 = vmatpush1.bf16.msra.mxu0 0
      %5409 = vmatprep.subr.bf16.mxu0 0
      %5410 = vmatpush1.bf16.msra.mxu0 0
      %5411 = vmatprep.subr.bf16.mxu0 0
      %5412 = vmatpush1.bf16.msra.mxu0 0
      %5413 = vmatprep.subr.bf16.mxu0 0
      %5414 = vmatpush1.bf16.msra.mxu0 0
      %5415 = vmatprep.subr.bf16.mxu0 0
      %5416 = vmatpush1.bf16.msra.mxu0 0
      %5417 = vmatprep.subr.bf16.mxu0 0
      %5418 = vmatpush1.bf16.msra.mxu0 0
      %5419 = vmatprep.subr.bf16.mxu0 0
      %5420 = vmatpush1.bf16.msra.mxu0 0
      %5421 = vmatprep.subr.bf16.mxu0 0
      %5422 = vmatpush1.bf16.msra.mxu0 0
      %5423 = vmatprep.subr.bf16.mxu0 0
      %5424 = vmatpush1.bf16.msra.mxu0 0
      %5425 = vmatprep.mubr.bf16.mxu0 0
      %5426 = vmatmul.mubr.bf16.gmra.mrb[0].mxu0 %v5370
      %v5427 = vpop.f32.mrb[0].mxu0
      %v5428 = vadd.f32 0.0, %v5427
      %v5429 = vpop.f32.mrb[0].mxu0
      %v5430 = vpop.f32.mrb[0].mxu0
      %v5431 = vadd.f32 0.0, %v5430
      %v5432 = vpop.f32.mrb[0].mxu0
      %5433 = vmatprep.mubr.bf16.mxu0 0
      %5434 = vmatmul.mubr.bf16.gmra.mrb[0].mxu0 %v5373
      %v5435 = vpop.f32.mrb[0].mxu0
      %v5436 = vadd.f32 0.0, %v5435
      %v5437 = vpop.f32.mrb[0].mxu0
      %v5438 = vpop.f32.mrb[0].mxu0
      %v5439 = vadd.f32 0.0, %v5438
      %v5440 = vpop.f32.mrb[0].mxu0
      %5441 = vmatprep.mubr.bf16.mxu0 0
      %5442 = vmatmul.mubr.bf16.gmra.mrb[0].mxu0 %v5376
      %v5443 = vpop.f32.mrb[0].mxu0
      %v5444 = vadd.f32 0.0, %v5443
      %v5445 = vpop.f32.mrb[0].mxu0
      %v5446 = vpop.f32.mrb[0].mxu0
      %v5447 = vadd.f32 0.0, %v5446
      %v5448 = vpop.f32.mrb[0].mxu0
      %5449 = vmatprep.mubr.bf16.mxu0 0
      %5450 = vmatmul.mubr.bf16.gmra.mrb[0].mxu0 %v5379
      %v5451 = vpop.f32.mrb[0].mxu0
      %v5452 = vadd.f32 0.0, %v5451
      %v5453 = vpop.f32.mrb[0].mxu0
      %v5454 = vpop.f32.mrb[0].mxu0
      %v5455 = vadd.f32 0.0, %v5454
      %v5456 = vpop.f32.mrb[0].mxu0
      %5457 = vmatprep.mubr.bf16.mxu0 0
      %5458 = vmatmul.mubr.bf16.gmra.mrb[0].mxu0 %v5382
      %v5459 = vpop.f32.mrb[0].mxu0
      %v5460 = vadd.f32 0.0, %v5459
      %v5461 = vpop.f32.mrb[0].mxu0
      %v5462 = vpop.f32.mrb[0].mxu0
      %v5463 = vadd.f32 0.0, %v5462
      %v5464 = vpop.f32.mrb[0].mxu0
      %5465 = vmatprep.mubr.bf16.mxu0 0
      %5466 = vmatmul.mubr.bf16.gmra.mrb[0].mxu0 %v5385
      %v5467 = vpop.f32.mrb[0].mxu0
      %v5468 = vadd.f32 0.0, %v5467
      %v5469 = vpop.f32.mrb[0].mxu0
      %v5470 = vpop.f32.mrb[0].mxu0
      %v5471 = vadd.f32 0.0, %v5470
      %v5472 = vpop.f32.mrb[0].mxu0
      %5473 = vmatprep.mubr.bf16.mxu0 0
      %5474 = vmatmul.mubr.bf16.gmra.mrb[0].mxu0 %v5388
      %v5475 = vpop.f32.mrb[0].mxu0
      %v5476 = vadd.f32 0.0, %v5475
      %v5477 = vpop.f32.mrb[0].mxu0
      %v5478 = vpop.f32.mrb[0].mxu0
      %v5479 = vadd.f32 0.0, %v5478
      %v5480 = vpop.f32.mrb[0].mxu0
      %5481 = vmatprep.mubr.bf16.mxu0 0
      %5482 = vmatmul.mubr.bf16.gmra.mrb[0].mxu0 %v5391
      %v5483 = vpop.f32.mrb[0].mxu0
      %v5484 = vadd.f32 0.0, %v5483
      %v5485 = vpop.f32.mrb[0].mxu0
      %v5486 = vpop.f32.mrb[0].mxu0
      %v5487 = vadd.f32 0.0, %v5486
      %v5488 = vpop.f32.mrb[0].mxu0
      %5489 = vdwg.mxu0
      %v5490 = vadd.f32 %v5284, %v5428
      %v5491 = vadd.f32 %v5285, %v5431
      %v5492 = vadd.f32 %v5286, %v5436
      %v5493 = vadd.f32 %v5287, %v5439
      %v5494 = vadd.f32 %v5288, %v5444
      %v5495 = vadd.f32 %v5289, %v5447
      %v5496 = vadd.f32 %v5290, %v5452
      %v5497 = vadd.f32 %v5291, %v5455
      %v5498 = vadd.f32 %v5292, %v5460
      %v5499 = vadd.f32 %v5293, %v5463
      %v5500 = vadd.f32 %v5294, %v5468
      %v5501 = vadd.f32 %v5295, %v5471
      %v5502 = vadd.f32 %v5296, %v5476
      %v5503 = vadd.f32 %v5297, %v5479
      %v5504 = vadd.f32 %v5298, %v5484
      %v5505 = vadd.f32 %v5299, %v5487
      %s5506 = scalar_lea.vmem %s10, 384
      %v5507 = vld [vmem:[%s5506] sm:$0xf]
      %v5508 = vld [vmem:[%s5506 + $0x4] sm:$0xf]
      %v5509 = vld [vmem:[%s5506 + $0x8] sm:$0xf]
      %v5510 = vld [vmem:[%s5506 + $0xc] sm:$0xf]
      %v5511 = vld [vmem:[%s5506 + $0x10] sm:$0xf]
      %v5512 = vld [vmem:[%s5506 + $0x14] sm:$0xf]
      %v5513 = vld [vmem:[%s5506 + $0x18] sm:$0xf]
      %v5514 = vld [vmem:[%s5506 + $0x1c] sm:$0xf]
      %v5515 = vld [vmem:[%s5506 + $0x20] sm:$0xf]
      %v5516 = vld [vmem:[%s5506 + $0x24] sm:$0xf]
      %v5517 = vld [vmem:[%s5506 + $0x28] sm:$0xf]
      %v5518 = vld [vmem:[%s5506 + $0x2c] sm:$0xf]
      %v5519 = vld [vmem:[%s5506 + $0x30] sm:$0xf]
      %v5520 = vld [vmem:[%s5506 + $0x34] sm:$0xf]
      %v5521 = vld [vmem:[%s5506 + $0x38] sm:$0xf]
      %v5522 = vld [vmem:[%s5506 + $0x3c] sm:$0xf]
      %v5539 = vunpack.c.l.b16 %v5507
      %v5540 = vunpack.c.l.b16 %v5508
      %v5541 = vunpack.c.l.b16 %v5509
      %v5542 = vunpack.c.l.b16 %v5510
      %v5543 = vunpack.c.l.b16 %v5511
      %v5544 = vunpack.c.l.b16 %v5512
      %v5545 = vunpack.c.l.b16 %v5513
      %v5546 = vunpack.c.l.b16 %v5514
      %v5547 = vunpack.c.l.b16 %v5515
      %v5548 = vunpack.c.l.b16 %v5516
      %v5549 = vunpack.c.l.b16 %v5517
      %v5550 = vunpack.c.l.b16 %v5518
      %v5551 = vunpack.c.l.b16 %v5519
      %v5552 = vunpack.c.l.b16 %v5520
      %v5553 = vunpack.c.l.b16 %v5521
      %v5554 = vunpack.c.l.b16 %v5522
      %v5555 = vpack.c.b16 %v5540, %v5539
      %v5556 = vpack.c.b16 %v5542, %v5541
      %v5557 = vpack.c.b16 %v5544, %v5543
      %v5558 = vpack.c.b16 %v5546, %v5545
      %v5559 = vpack.c.b16 %v5548, %v5547
      %v5560 = vpack.c.b16 %v5550, %v5549
      %v5561 = vpack.c.b16 %v5552, %v5551
      %v5562 = vpack.c.b16 %v5554, %v5553
      %5563 = vrot.lane.b32.xlu0 %v4322, 120
      %v5564 = vpop.permute.xlu0 %5563
      %5565 = vrot.lane.b32.xlu0 %v4323, 120
      %v5566 = vpop.permute.xlu0 %5565
      %5567 = vrot.lane.b32.xlu0 %v4324, 120
      %v5568 = vpop.permute.xlu0 %5567
      %5569 = vrot.lane.b32.xlu0 %v4325, 120
      %v5570 = vpop.permute.xlu0 %5569
      %v5576 = vsel %vm4399, %v5555, 0
      %v5579 = vsel %vm4399, %v5556, 0
      %v5582 = vsel %vm4399, %v5557, 0
      %v5585 = vsel %vm4399, %v5558, 0
      %v5588 = vsel %vm4399, %v5559, 0
      %v5591 = vsel %vm4399, %v5560, 0
      %v5594 = vsel %vm4399, %v5561, 0
      %v5597 = vsel %vm4399, %v5562, 0
      %5599 = vmatprep.subr.bf16.mxu0 0
      %5600 = vmatpush1.bf16.msra.mxu0 %v5564
      %5601 = vmatprep.subr.bf16.mxu0 0
      %5602 = vmatpush1.bf16.msra.mxu0 %v5566
      %5603 = vmatprep.subr.bf16.mxu0 0
      %5604 = vmatpush1.bf16.msra.mxu0 %v5568
      %5605 = vmatprep.subr.bf16.mxu0 0
      %5606 = vmatpush1.bf16.msra.mxu0 %v5570
      %5607 = vmatprep.subr.bf16.mxu0 0
      %5608 = vmatpush1.bf16.msra.mxu0 0
      %5609 = vmatprep.subr.bf16.mxu0 0
      %5610 = vmatpush1.bf16.msra.mxu0 0
      %5611 = vmatprep.subr.bf16.mxu0 0
      %5612 = vmatpush1.bf16.msra.mxu0 0
      %5613 = vmatprep.subr.bf16.mxu0 0
      %5614 = vmatpush1.bf16.msra.mxu0 0
      %5615 = vmatprep.subr.bf16.mxu0 0
      %5616 = vmatpush1.bf16.msra.mxu0 0
      %5617 = vmatprep.subr.bf16.mxu0 0
      %5618 = vmatpush1.bf16.msra.mxu0 0
      %5619 = vmatprep.subr.bf16.mxu0 0
      %5620 = vmatpush1.bf16.msra.mxu0 0
      %5621 = vmatprep.subr.bf16.mxu0 0
      %5622 = vmatpush1.bf16.msra.mxu0 0
      %5623 = vmatprep.subr.bf16.mxu0 0
      %5624 = vmatpush1.bf16.msra.mxu0 0
      %5625 = vmatprep.subr.bf16.mxu0 0
      %5626 = vmatpush1.bf16.msra.mxu0 0
      %5627 = vmatprep.subr.bf16.mxu0 0
      %5628 = vmatpush1.bf16.msra.mxu0 0
      %5629 = vmatprep.subr.bf16.mxu0 0
      %5630 = vmatpush1.bf16.msra.mxu0 0
      %5631 = vmatprep.mubr.bf16.mxu0 0
      %5632 = vmatmul.mubr.bf16.gmra.mrb[0].mxu0 %v5576
      %v5633 = vpop.f32.mrb[0].mxu0
      %v5634 = vadd.f32 0.0, %v5633
      %v5635 = vpop.f32.mrb[0].mxu0
      %v5636 = vpop.f32.mrb[0].mxu0
      %v5637 = vadd.f32 0.0, %v5636
      %v5638 = vpop.f32.mrb[0].mxu0
      %5639 = vmatprep.mubr.bf16.mxu0 0
      %5640 = vmatmul.mubr.bf16.gmra.mrb[0].mxu0 %v5579
      %v5641 = vpop.f32.mrb[0].mxu0
      %v5642 = vadd.f32 0.0, %v5641
      %v5643 = vpop.f32.mrb[0].mxu0
      %v5644 = vpop.f32.mrb[0].mxu0
      %v5645 = vadd.f32 0.0, %v5644
      %v5646 = vpop.f32.mrb[0].mxu0
      %5647 = vmatprep.mubr.bf16.mxu0 0
      %5648 = vmatmul.mubr.bf16.gmra.mrb[0].mxu0 %v5582
      %v5649 = vpop.f32.mrb[0].mxu0
      %v5650 = vadd.f32 0.0, %v5649
      %v5651 = vpop.f32.mrb[0].mxu0
      %v5652 = vpop.f32.mrb[0].mxu0
      %v5653 = vadd.f32 0.0, %v5652
      %v5654 = vpop.f32.mrb[0].mxu0
      %5655 = vmatprep.mubr.bf16.mxu0 0
      %5656 = vmatmul.mubr.bf16.gmra.mrb[0].mxu0 %v5585
      %v5657 = vpop.f32.mrb[0].mxu0
      %v5658 = vadd.f32 0.0, %v5657
      %v5659 = vpop.f32.mrb[0].mxu0
      %v5660 = vpop.f32.mrb[0].mxu0
      %v5661 = vadd.f32 0.0, %v5660
      %v5662 = vpop.f32.mrb[0].mxu0
      %5663 = vmatprep.mubr.bf16.mxu0 0
      %5664 = vmatmul.mubr.bf16.gmra.mrb[0].mxu0 %v5588
      %v5665 = vpop.f32.mrb[0].mxu0
      %v5666 = vadd.f32 0.0, %v5665
      %v5667 = vpop.f32.mrb[0].mxu0
      %v5668 = vpop.f32.mrb[0].mxu0
      %v5669 = vadd.f32 0.0, %v5668
      %v5670 = vpop.f32.mrb[0].mxu0
      %5671 = vmatprep.mubr.bf16.mxu0 0
      %5672 = vmatmul.mubr.bf16.gmra.mrb[0].mxu0 %v5591
      %v5673 = vpop.f32.mrb[0].mxu0
      %v5674 = vadd.f32 0.0, %v5673
      %v5675 = vpop.f32.mrb[0].mxu0
      %v5676 = vpop.f32.mrb[0].mxu0
      %v5677 = vadd.f32 0.0, %v5676
      %v5678 = vpop.f32.mrb[0].mxu0
      %5679 = vmatprep.mubr.bf16.mxu0 0
      %5680 = vmatmul.mubr.bf16.gmra.mrb[0].mxu0 %v5594
      %v5681 = vpop.f32.mrb[0].mxu0
      %v5682 = vadd.f32 0.0, %v5681
      %v5683 = vpop.f32.mrb[0].mxu0
      %v5684 = vpop.f32.mrb[0].mxu0
      %v5685 = vadd.f32 0.0, %v5684
      %v5686 = vpop.f32.mrb[0].mxu0
      %5687 = vmatprep.mubr.bf16.mxu0 0
      %5688 = vmatmul.mubr.bf16.gmra.mrb[0].mxu0 %v5597
      %v5689 = vpop.f32.mrb[0].mxu0
      %v5690 = vadd.f32 0.0, %v5689
      %v5691 = vpop.f32.mrb[0].mxu0
      %v5692 = vpop.f32.mrb[0].mxu0
      %v5693 = vadd.f32 0.0, %v5692
      %v5694 = vpop.f32.mrb[0].mxu0
      %5695 = vdwg.mxu0
      %v5696 = vadd.f32 %v5490, %v5634
      %v5697 = vadd.f32 %v5491, %v5637
      %v5698 = vadd.f32 %v5492, %v5642
      %v5699 = vadd.f32 %v5493, %v5645
      %v5700 = vadd.f32 %v5494, %v5650
      %v5701 = vadd.f32 %v5495, %v5653
      %v5702 = vadd.f32 %v5496, %v5658
      %v5703 = vadd.f32 %v5497, %v5661
      %v5704 = vadd.f32 %v5498, %v5666
      %v5705 = vadd.f32 %v5499, %v5669
      %v5706 = vadd.f32 %v5500, %v5674
      %v5707 = vadd.f32 %v5501, %v5677
      %v5708 = vadd.f32 %v5502, %v5682
      %v5709 = vadd.f32 %v5503, %v5685
      %v5710 = vadd.f32 %v5504, %v5690
      %v5711 = vadd.f32 %v5505, %v5693
      %s5712 = scalar_lea.vmem %s10, 448
      %v5713 = vld [vmem:[%s5712] sm:$0xf]
      %v5714 = vld [vmem:[%s5712 + $0x4] sm:$0xf]
      %v5715 = vld [vmem:[%s5712 + $0x8] sm:$0xf]
      %v5716 = vld [vmem:[%s5712 + $0xc] sm:$0xf]
      %v5717 = vld [vmem:[%s5712 + $0x10] sm:$0xf]
      %v5718 = vld [vmem:[%s5712 + $0x14] sm:$0xf]
      %v5719 = vld [vmem:[%s5712 + $0x18] sm:$0xf]
      %v5720 = vld [vmem:[%s5712 + $0x1c] sm:$0xf]
      %v5721 = vld [vmem:[%s5712 + $0x20] sm:$0xf]
      %v5722 = vld [vmem:[%s5712 + $0x24] sm:$0xf]
      %v5723 = vld [vmem:[%s5712 + $0x28] sm:$0xf]
      %v5724 = vld [vmem:[%s5712 + $0x2c] sm:$0xf]
      %v5725 = vld [vmem:[%s5712 + $0x30] sm:$0xf]
      %v5726 = vld [vmem:[%s5712 + $0x34] sm:$0xf]
      %v5727 = vld [vmem:[%s5712 + $0x38] sm:$0xf]
      %v5728 = vld [vmem:[%s5712 + $0x3c] sm:$0xf]
      %v5745 = vunpack.c.l.b16 %v5713
      %v5746 = vunpack.c.l.b16 %v5714
      %v5747 = vunpack.c.l.b16 %v5715
      %v5748 = vunpack.c.l.b16 %v5716
      %v5749 = vunpack.c.l.b16 %v5717
      %v5750 = vunpack.c.l.b16 %v5718
      %v5751 = vunpack.c.l.b16 %v5719
      %v5752 = vunpack.c.l.b16 %v5720
      %v5753 = vunpack.c.l.b16 %v5721
      %v5754 = vunpack.c.l.b16 %v5722
      %v5755 = vunpack.c.l.b16 %v5723
      %v5756 = vunpack.c.l.b16 %v5724
      %v5757 = vunpack.c.l.b16 %v5725
      %v5758 = vunpack.c.l.b16 %v5726
      %v5759 = vunpack.c.l.b16 %v5727
      %v5760 = vunpack.c.l.b16 %v5728
      %v5761 = vpack.c.b16 %v5746, %v5745
      %v5762 = vpack.c.b16 %v5748, %v5747
      %v5763 = vpack.c.b16 %v5750, %v5749
      %v5764 = vpack.c.b16 %v5752, %v5751
      %v5765 = vpack.c.b16 %v5754, %v5753
      %v5766 = vpack.c.b16 %v5756, %v5755
      %v5767 = vpack.c.b16 %v5758, %v5757
      %v5768 = vpack.c.b16 %v5760, %v5759
      %5769 = vrot.lane.b32.xlu0 %v4322, 119
      %v5770 = vpop.permute.xlu0 %5769
      %5771 = vrot.lane.b32.xlu0 %v4323, 119
      %v5772 = vpop.permute.xlu0 %5771
      %5773 = vrot.lane.b32.xlu0 %v4324, 119
      %v5774 = vpop.permute.xlu0 %5773
      %5775 = vrot.lane.b32.xlu0 %v4325, 119
      %v5776 = vpop.permute.xlu0 %5775
      %v5782 = vsel %vm4399, %v5761, 0
      %v5785 = vsel %vm4399, %v5762, 0
      %v5788 = vsel %vm4399, %v5763, 0
      %v5791 = vsel %vm4399, %v5764, 0
      %v5794 = vsel %vm4399, %v5765, 0
      %v5797 = vsel %vm4399, %v5766, 0
      %v5800 = vsel %vm4399, %v5767, 0
      %v5803 = vsel %vm4399, %v5768, 0
      %5805 = vmatprep.subr.bf16.mxu0 0
      %5806 = vmatpush1.bf16.msra.mxu0 %v5770
      %5807 = vmatprep.subr.bf16.mxu0 0
      %5808 = vmatpush1.bf16.msra.mxu0 %v5772
      %5809 = vmatprep.subr.bf16.mxu0 0
      %5810 = vmatpush1.bf16.msra.mxu0 %v5774
      %5811 = vmatprep.subr.bf16.mxu0 0
      %5812 = vmatpush1.bf16.msra.mxu0 %v5776
      %5813 = vmatprep.subr.bf16.mxu0 0
      %5814 = vmatpush1.bf16.msra.mxu0 0
      %5815 = vmatprep.subr.bf16.mxu0 0
      %5816 = vmatpush1.bf16.msra.mxu0 0
      %5817 = vmatprep.subr.bf16.mxu0 0
      %5818 = vmatpush1.bf16.msra.mxu0 0
      %5819 = vmatprep.subr.bf16.mxu0 0
      %5820 = vmatpush1.bf16.msra.mxu0 0
      %5821 = vmatprep.subr.bf16.mxu0 0
      %5822 = vmatpush1.bf16.msra.mxu0 0
      %5823 = vmatprep.subr.bf16.mxu0 0
      %5824 = vmatpush1.bf16.msra.mxu0 0
      %5825 = vmatprep.subr.bf16.mxu0 0
      %5826 = vmatpush1.bf16.msra.mxu0 0
      %5827 = vmatprep.subr.bf16.mxu0 0
      %5828 = vmatpush1.bf16.msra.mxu0 0
      %5829 = vmatprep.subr.bf16.mxu0 0
      %5830 = vmatpush1.bf16.msra.mxu0 0
      %5831 = vmatprep.subr.bf16.mxu0 0
      %5832 = vmatpush1.bf16.msra.mxu0 0
      %5833 = vmatprep.subr.bf16.mxu0 0
      %5834 = vmatpush1.bf16.msra.mxu0 0
      %5835 = vmatprep.subr.bf16.mxu0 0
      %5836 = vmatpush1.bf16.msra.mxu0 0
      %5837 = vmatprep.mubr.bf16.mxu0 0
      %5838 = vmatmul.mubr.bf16.gmra.mrb[0].mxu0 %v5782
      %v5839 = vpop.f32.mrb[0].mxu0
      %v5840 = vadd.f32 0.0, %v5839
      %v5841 = vpop.f32.mrb[0].mxu0
      %v5842 = vpop.f32.mrb[0].mxu0
      %v5843 = vadd.f32 0.0, %v5842
      %v5844 = vpop.f32.mrb[0].mxu0
      %5845 = vmatprep.mubr.bf16.mxu0 0
      %5846 = vmatmul.mubr.bf16.gmra.mrb[0].mxu0 %v5785
      %v5847 = vpop.f32.mrb[0].mxu0
      %v5848 = vadd.f32 0.0, %v5847
      %v5849 = vpop.f32.mrb[0].mxu0
      %v5850 = vpop.f32.mrb[0].mxu0
      %v5851 = vadd.f32 0.0, %v5850
      %v5852 = vpop.f32.mrb[0].mxu0
      %5853 = vmatprep.mubr.bf16.mxu0 0
      %5854 = vmatmul.mubr.bf16.gmra.mrb[0].mxu0 %v5788
      %v5855 = vpop.f32.mrb[0].mxu0
      %v5856 = vadd.f32 0.0, %v5855
      %v5857 = vpop.f32.mrb[0].mxu0
      %v5858 = vpop.f32.mrb[0].mxu0
      %v5859 = vadd.f32 0.0, %v5858
      %v5860 = vpop.f32.mrb[0].mxu0
      %5861 = vmatprep.mubr.bf16.mxu0 0
      %5862 = vmatmul.mubr.bf16.gmra.mrb[0].mxu0 %v5791
      %v5863 = vpop.f32.mrb[0].mxu0
      %v5864 = vadd.f32 0.0, %v5863
      %v5865 = vpop.f32.mrb[0].mxu0
      %v5866 = vpop.f32.mrb[0].mxu0
      %v5867 = vadd.f32 0.0, %v5866
      %v5868 = vpop.f32.mrb[0].mxu0
      %5869 = vmatprep.mubr.bf16.mxu0 0
      %5870 = vmatmul.mubr.bf16.gmra.mrb[0].mxu0 %v5794
      %v5871 = vpop.f32.mrb[0].mxu0
      %v5872 = vadd.f32 0.0, %v5871
      %v5873 = vpop.f32.mrb[0].mxu0
      %v5874 = vpop.f32.mrb[0].mxu0
      %v5875 = vadd.f32 0.0, %v5874
      %v5876 = vpop.f32.mrb[0].mxu0
      %5877 = vmatprep.mubr.bf16.mxu0 0
      %5878 = vmatmul.mubr.bf16.gmra.mrb[0].mxu0 %v5797
      %v5879 = vpop.f32.mrb[0].mxu0
      %v5880 = vadd.f32 0.0, %v5879
      %v5881 = vpop.f32.mrb[0].mxu0
      %v5882 = vpop.f32.mrb[0].mxu0
      %v5883 = vadd.f32 0.0, %v5882
      %v5884 = vpop.f32.mrb[0].mxu0
      %5885 = vmatprep.mubr.bf16.mxu0 0
      %5886 = vmatmul.mubr.bf16.gmra.mrb[0].mxu0 %v5800
      %v5887 = vpop.f32.mrb[0].mxu0
      %v5888 = vadd.f32 0.0, %v5887
      %v5889 = vpop.f32.mrb[0].mxu0
      %v5890 = vpop.f32.mrb[0].mxu0
      %v5891 = vadd.f32 0.0, %v5890
      %v5892 = vpop.f32.mrb[0].mxu0
      %5893 = vmatprep.mubr.bf16.mxu0 0
      %5894 = vmatmul.mubr.bf16.gmra.mrb[0].mxu0 %v5803
      %v5895 = vpop.f32.mrb[0].mxu0
      %v5896 = vadd.f32 0.0, %v5895
      %v5897 = vpop.f32.mrb[0].mxu0
      %v5898 = vpop.f32.mrb[0].mxu0
      %v5899 = vadd.f32 0.0, %v5898
      %v5900 = vpop.f32.mrb[0].mxu0
      %5901 = vdwg.mxu0
      %v5902 = vadd.f32 %v5696, %v5840
      %v5903 = vadd.f32 %v5697, %v5843
      %v5904 = vadd.f32 %v5698, %v5848
      %v5905 = vadd.f32 %v5699, %v5851
      %v5906 = vadd.f32 %v5700, %v5856
      %v5907 = vadd.f32 %v5701, %v5859
      %v5908 = vadd.f32 %v5702, %v5864
      %v5909 = vadd.f32 %v5703, %v5867
      %v5910 = vadd.f32 %v5704, %v5872
      %v5911 = vadd.f32 %v5705, %v5875
      %v5912 = vadd.f32 %v5706, %v5880
      %v5913 = vadd.f32 %v5707, %v5883
      %v5914 = vadd.f32 %v5708, %v5888
      %v5915 = vadd.f32 %v5709, %v5891
      %v5916 = vadd.f32 %v5710, %v5896
      %v5917 = vadd.f32 %v5711, %v5899
      %s5918 = scalar_lea.vmem %s10, 512
      %v5919 = vld [vmem:[%s5918] sm:$0xf]
      %v5920 = vld [vmem:[%s5918 + $0x4] sm:$0xf]
      %v5921 = vld [vmem:[%s5918 + $0x8] sm:$0xf]
      %v5922 = vld [vmem:[%s5918 + $0xc] sm:$0xf]
      %v5923 = vld [vmem:[%s5918 + $0x10] sm:$0xf]
      %v5924 = vld [vmem:[%s5918 + $0x14] sm:$0xf]
      %v5925 = vld [vmem:[%s5918 + $0x18] sm:$0xf]
      %v5926 = vld [vmem:[%s5918 + $0x1c] sm:$0xf]
      %v5927 = vld [vmem:[%s5918 + $0x20] sm:$0xf]
      %v5928 = vld [vmem:[%s5918 + $0x24] sm:$0xf]
      %v5929 = vld [vmem:[%s5918 + $0x28] sm:$0xf]
      %v5930 = vld [vmem:[%s5918 + $0x2c] sm:$0xf]
      %v5931 = vld [vmem:[%s5918 + $0x30] sm:$0xf]
      %v5932 = vld [vmem:[%s5918 + $0x34] sm:$0xf]
      %v5933 = vld [vmem:[%s5918 + $0x38] sm:$0xf]
      %v5934 = vld [vmem:[%s5918 + $0x3c] sm:$0xf]
      %v5951 = vunpack.c.l.b16 %v5919
      %v5952 = vunpack.c.l.b16 %v5920
      %v5953 = vunpack.c.l.b16 %v5921
      %v5954 = vunpack.c.l.b16 %v5922
      %v5955 = vunpack.c.l.b16 %v5923
      %v5956 = vunpack.c.l.b16 %v5924
      %v5957 = vunpack.c.l.b16 %v5925
      %v5958 = vunpack.c.l.b16 %v5926
      %v5959 = vunpack.c.l.b16 %v5927
      %v5960 = vunpack.c.l.b16 %v5928
      %v5961 = vunpack.c.l.b16 %v5929
      %v5962 = vunpack.c.l.b16 %v5930
      %v5963 = vunpack.c.l.b16 %v5931
      %v5964 = vunpack.c.l.b16 %v5932
      %v5965 = vunpack.c.l.b16 %v5933
      %v5966 = vunpack.c.l.b16 %v5934
      %v5967 = vpack.c.b16 %v5952, %v5951
      %v5968 = vpack.c.b16 %v5954, %v5953
      %v5969 = vpack.c.b16 %v5956, %v5955
      %v5970 = vpack.c.b16 %v5958, %v5957
      %v5971 = vpack.c.b16 %v5960, %v5959
      %v5972 = vpack.c.b16 %v5962, %v5961
      %v5973 = vpack.c.b16 %v5964, %v5963
      %v5974 = vpack.c.b16 %v5966, %v5965
      %5975 = vrot.lane.b32.xlu0 %v4322, 118
      %v5976 = vpop.permute.xlu0 %5975
      %5977 = vrot.lane.b32.xlu0 %v4323, 118
      %v5978 = vpop.permute.xlu0 %5977
      %5979 = vrot.lane.b32.xlu0 %v4324, 118
      %v5980 = vpop.permute.xlu0 %5979
      %5981 = vrot.lane.b32.xlu0 %v4325, 118
      %v5982 = vpop.permute.xlu0 %5981
      %v5988 = vsel %vm4399, %v5967, 0
      %v5991 = vsel %vm4399, %v5968, 0
      %v5994 = vsel %vm4399, %v5969, 0
      %v5997 = vsel %vm4399, %v5970, 0
      %v6000 = vsel %vm4399, %v5971, 0
      %v6003 = vsel %vm4399, %v5972, 0
      %v6006 = vsel %vm4399, %v5973, 0
      %v6009 = vsel %vm4399, %v5974, 0
      %6011 = vmatprep.subr.bf16.mxu0 0
      %6012 = vmatpush1.bf16.msra.mxu0 %v5976
      %6013 = vmatprep.subr.bf16.mxu0 0
      %6014 = vmatpush1.bf16.msra.mxu0 %v5978
      %6015 = vmatprep.subr.bf16.mxu0 0
      %6016 = vmatpush1.bf16.msra.mxu0 %v5980
      %6017 = vmatprep.subr.bf16.mxu0 0
      %6018 = vmatpush1.bf16.msra.mxu0 %v5982
      %6019 = vmatprep.subr.bf16.mxu0 0
      %6020 = vmatpush1.bf16.msra.mxu0 0
      %6021 = vmatprep.subr.bf16.mxu0 0
      %6022 = vmatpush1.bf16.msra.mxu0 0
      %6023 = vmatprep.subr.bf16.mxu0 0
      %6024 = vmatpush1.bf16.msra.mxu0 0
      %6025 = vmatprep.subr.bf16.mxu0 0
      %6026 = vmatpush1.bf16.msra.mxu0 0
      %6027 = vmatprep.subr.bf16.mxu0 0
      %6028 = vmatpush1.bf16.msra.mxu0 0
      %6029 = vmatprep.subr.bf16.mxu0 0
      %6030 = vmatpush1.bf16.msra.mxu0 0
      %6031 = vmatprep.subr.bf16.mxu0 0
      %6032 = vmatpush1.bf16.msra.mxu0 0
      %6033 = vmatprep.subr.bf16.mxu0 0
      %6034 = vmatpush1.bf16.msra.mxu0 0
      %6035 = vmatprep.subr.bf16.mxu0 0
      %6036 = vmatpush1.bf16.msra.mxu0 0
      %6037 = vmatprep.subr.bf16.mxu0 0
      %6038 = vmatpush1.bf16.msra.mxu0 0
      %6039 = vmatprep.subr.bf16.mxu0 0
      %6040 = vmatpush1.bf16.msra.mxu0 0
      %6041 = vmatprep.subr.bf16.mxu0 0
      %6042 = vmatpush1.bf16.msra.mxu0 0
      %6043 = vmatprep.mubr.bf16.mxu0 0
      %6044 = vmatmul.mubr.bf16.gmra.mrb[0].mxu0 %v5988
      %v6045 = vpop.f32.mrb[0].mxu0
      %v6046 = vadd.f32 0.0, %v6045
      %v6047 = vpop.f32.mrb[0].mxu0
      %v6048 = vpop.f32.mrb[0].mxu0
      %v6049 = vadd.f32 0.0, %v6048
      %v6050 = vpop.f32.mrb[0].mxu0
      %6051 = vmatprep.mubr.bf16.mxu0 0
      %6052 = vmatmul.mubr.bf16.gmra.mrb[0].mxu0 %v5991
      %v6053 = vpop.f32.mrb[0].mxu0
      %v6054 = vadd.f32 0.0, %v6053
      %v6055 = vpop.f32.mrb[0].mxu0
      %v6056 = vpop.f32.mrb[0].mxu0
      %v6057 = vadd.f32 0.0, %v6056
      %v6058 = vpop.f32.mrb[0].mxu0
      %6059 = vmatprep.mubr.bf16.mxu0 0
      %6060 = vmatmul.mubr.bf16.gmra.mrb[0].mxu0 %v5994
      %v6061 = vpop.f32.mrb[0].mxu0
      %v6062 = vadd.f32 0.0, %v6061
      %v6063 = vpop.f32.mrb[0].mxu0
      %v6064 = vpop.f32.mrb[0].mxu0
      %v6065 = vadd.f32 0.0, %v6064
      %v6066 = vpop.f32.mrb[0].mxu0
      %6067 = vmatprep.mubr.bf16.mxu0 0
      %6068 = vmatmul.mubr.bf16.gmra.mrb[0].mxu0 %v5997
      %v6069 = vpop.f32.mrb[0].mxu0
      %v6070 = vadd.f32 0.0, %v6069
      %v6071 = vpop.f32.mrb[0].mxu0
      %v6072 = vpop.f32.mrb[0].mxu0
      %v6073 = vadd.f32 0.0, %v6072
      %v6074 = vpop.f32.mrb[0].mxu0
      %6075 = vmatprep.mubr.bf16.mxu0 0
      %6076 = vmatmul.mubr.bf16.gmra.mrb[0].mxu0 %v6000
      %v6077 = vpop.f32.mrb[0].mxu0
      %v6078 = vadd.f32 0.0, %v6077
      %v6079 = vpop.f32.mrb[0].mxu0
      %v6080 = vpop.f32.mrb[0].mxu0
      %v6081 = vadd.f32 0.0, %v6080
      %v6082 = vpop.f32.mrb[0].mxu0
      %6083 = vmatprep.mubr.bf16.mxu0 0
      %6084 = vmatmul.mubr.bf16.gmra.mrb[0].mxu0 %v6003
      %v6085 = vpop.f32.mrb[0].mxu0
      %v6086 = vadd.f32 0.0, %v6085
      %v6087 = vpop.f32.mrb[0].mxu0
      %v6088 = vpop.f32.mrb[0].mxu0
      %v6089 = vadd.f32 0.0, %v6088
      %v6090 = vpop.f32.mrb[0].mxu0
      %6091 = vmatprep.mubr.bf16.mxu0 0
      %6092 = vmatmul.mubr.bf16.gmra.mrb[0].mxu0 %v6006
      %v6093 = vpop.f32.mrb[0].mxu0
      %v6094 = vadd.f32 0.0, %v6093
      %v6095 = vpop.f32.mrb[0].mxu0
      %v6096 = vpop.f32.mrb[0].mxu0
      %v6097 = vadd.f32 0.0, %v6096
      %v6098 = vpop.f32.mrb[0].mxu0
      %6099 = vmatprep.mubr.bf16.mxu0 0
      %6100 = vmatmul.mubr.bf16.gmra.mrb[0].mxu0 %v6009
      %v6101 = vpop.f32.mrb[0].mxu0
      %v6102 = vadd.f32 0.0, %v6101
      %v6103 = vpop.f32.mrb[0].mxu0
      %v6104 = vpop.f32.mrb[0].mxu0
      %v6105 = vadd.f32 0.0, %v6104
      %v6106 = vpop.f32.mrb[0].mxu0
      %6107 = vdwg.mxu0
      %v6108 = vadd.f32 %v5902, %v6046
      %v6109 = vadd.f32 %v5903, %v6049
      %v6110 = vadd.f32 %v5904, %v6054
      %v6111 = vadd.f32 %v5905, %v6057
      %v6112 = vadd.f32 %v5906, %v6062
      %v6113 = vadd.f32 %v5907, %v6065
      %v6114 = vadd.f32 %v5908, %v6070
      %v6115 = vadd.f32 %v5909, %v6073
      %v6116 = vadd.f32 %v5910, %v6078
      %v6117 = vadd.f32 %v5911, %v6081
      %v6118 = vadd.f32 %v5912, %v6086
      %v6119 = vadd.f32 %v5913, %v6089
      %v6120 = vadd.f32 %v5914, %v6094
      %v6121 = vadd.f32 %v5915, %v6097
      %v6122 = vadd.f32 %v5916, %v6102
      %v6123 = vadd.f32 %v5917, %v6105
      %v6124 = vld [vmem:[%s11] sm:$0xff]
      %v6125 = vld [vmem:[%s11 + $0x8] sm:$0xff]
      %v6126 = vld [vmem:[%s11 + $0x10] sm:$0xff]
      %v6127 = vld [vmem:[%s11 + $0x18] sm:$0xff]
      %v6128 = vld [vmem:[%s11 + $0x20] sm:$0xff]
      %v6129 = vld [vmem:[%s11 + $0x28] sm:$0xff]
      %v6130 = vld [vmem:[%s11 + $0x30] sm:$0xff]
      %v6131 = vld [vmem:[%s11 + $0x38] sm:$0xff]
      %v6132 = vld [vmem:[%s11 + $0x40] sm:$0xff]
      %v6133 = vld [vmem:[%s11 + $0x48] sm:$0xff]
      %v6134 = vld [vmem:[%s11 + $0x50] sm:$0xff]
      %v6135 = vld [vmem:[%s11 + $0x58] sm:$0xff]
      %v6136 = vld [vmem:[%s11 + $0x60] sm:$0xff]
      %v6137 = vld [vmem:[%s11 + $0x68] sm:$0xff]
      %v6138 = vld [vmem:[%s11 + $0x70] sm:$0xff]
      %v6139 = vld [vmem:[%s11 + $0x78] sm:$0xff]
      %6141 = vset.pattern.permute.xlu0 0
      %6142 = vperm.xlu0 %6141, %v6124
      %v6143 = vpop.permute.xlu0 %6142
      %6146 = vset.pattern.permute.xlu0 0
      %6147 = vperm.xlu0 %6146, %v6125
      %v6148 = vpop.permute.xlu0 %6147
      %6151 = vset.pattern.permute.xlu0 0
      %6152 = vperm.xlu0 %6151, %v6126
      %v6153 = vpop.permute.xlu0 %6152
      %6156 = vset.pattern.permute.xlu0 0
      %6157 = vperm.xlu0 %6156, %v6127
      %v6158 = vpop.permute.xlu0 %6157
      %6161 = vset.pattern.permute.xlu0 0
      %6162 = vperm.xlu0 %6161, %v6128
      %v6163 = vpop.permute.xlu0 %6162
      %6166 = vset.pattern.permute.xlu0 0
      %6167 = vperm.xlu0 %6166, %v6129
      %v6168 = vpop.permute.xlu0 %6167
      %6171 = vset.pattern.permute.xlu0 0
      %6172 = vperm.xlu0 %6171, %v6130
      %v6173 = vpop.permute.xlu0 %6172
      %6176 = vset.pattern.permute.xlu0 0
      %6177 = vperm.xlu0 %6176, %v6131
      %v6178 = vpop.permute.xlu0 %6177
      %6181 = vset.pattern.permute.xlu0 0
      %6182 = vperm.xlu0 %6181, %v6132
      %v6183 = vpop.permute.xlu0 %6182
      %6186 = vset.pattern.permute.xlu0 0
      %6187 = vperm.xlu0 %6186, %v6133
      %v6188 = vpop.permute.xlu0 %6187
      %6191 = vset.pattern.permute.xlu0 0
      %6192 = vperm.xlu0 %6191, %v6134
      %v6193 = vpop.permute.xlu0 %6192
      %6196 = vset.pattern.permute.xlu0 0
      %6197 = vperm.xlu0 %6196, %v6135
      %v6198 = vpop.permute.xlu0 %6197
      %6201 = vset.pattern.permute.xlu0 0
      %6202 = vperm.xlu0 %6201, %v6136
      %v6203 = vpop.permute.xlu0 %6202
      %6206 = vset.pattern.permute.xlu0 0
      %6207 = vperm.xlu0 %6206, %v6137
      %v6208 = vpop.permute.xlu0 %6207
      %6211 = vset.pattern.permute.xlu0 0
      %6212 = vperm.xlu0 %6211, %v6138
      %v6213 = vpop.permute.xlu0 %6212
      %6216 = vset.pattern.permute.xlu0 0
      %6217 = vperm.xlu0 %6216, %v6139
      %v6218 = vpop.permute.xlu0 %6217
      %v6220 = vadd.f32 %v6108, %v6143
      %v6221 = vadd.f32 %v6109, %v6148
      %v6222 = vadd.f32 %v6110, %v6153
      %v6223 = vadd.f32 %v6111, %v6158
      %v6224 = vadd.f32 %v6112, %v6163
      %v6225 = vadd.f32 %v6113, %v6168
      %v6226 = vadd.f32 %v6114, %v6173
      %v6227 = vadd.f32 %v6115, %v6178
      %v6228 = vadd.f32 %v6116, %v6183
      %v6229 = vadd.f32 %v6117, %v6188
      %v6230 = vadd.f32 %v6118, %v6193
      %v6231 = vadd.f32 %v6119, %v6198
      %v6232 = vadd.f32 %v6120, %v6203
      %v6233 = vadd.f32 %v6121, %v6208
      %v6234 = vadd.f32 %v6122, %v6213
      %v6235 = vadd.f32 %v6123, %v6218
      %vm6236 = vcmp.ge.f32.partialorder %v6220, 0.0
      %vm6237 = vcmp.ge.f32.partialorder %v6221, 0.0
      %vm6238 = vcmp.ge.f32.partialorder %v6222, 0.0
      %vm6239 = vcmp.ge.f32.partialorder %v6223, 0.0
      %vm6240 = vcmp.ge.f32.partialorder %v6224, 0.0
      %vm6241 = vcmp.ge.f32.partialorder %v6225, 0.0
      %vm6242 = vcmp.ge.f32.partialorder %v6226, 0.0
      %vm6243 = vcmp.ge.f32.partialorder %v6227, 0.0
      %vm6244 = vcmp.ge.f32.partialorder %v6228, 0.0
      %vm6245 = vcmp.ge.f32.partialorder %v6229, 0.0
      %vm6246 = vcmp.ge.f32.partialorder %v6230, 0.0
      %vm6247 = vcmp.ge.f32.partialorder %v6231, 0.0
      %vm6248 = vcmp.ge.f32.partialorder %v6232, 0.0
      %vm6249 = vcmp.ge.f32.partialorder %v6233, 0.0
      %vm6250 = vcmp.ge.f32.partialorder %v6234, 0.0
      %vm6251 = vcmp.ge.f32.partialorder %v6235, 0.0
      %v6252 = vmul.f32 %v6220, 0.03
      %v6253 = vmul.f32 %v6221, 0.03
      %v6254 = vmul.f32 %v6222, 0.03
      %v6255 = vmul.f32 %v6223, 0.03
      %v6256 = vmul.f32 %v6224, 0.03
      %v6257 = vmul.f32 %v6225, 0.03
      %v6258 = vmul.f32 %v6226, 0.03
      %v6259 = vmul.f32 %v6227, 0.03
      %v6260 = vmul.f32 %v6228, 0.03
      %v6261 = vmul.f32 %v6229, 0.03
      %v6262 = vmul.f32 %v6230, 0.03
      %v6263 = vmul.f32 %v6231, 0.03
      %v6264 = vmul.f32 %v6232, 0.03
      %v6265 = vmul.f32 %v6233, 0.03
      %v6266 = vmul.f32 %v6234, 0.03
      %v6267 = vmul.f32 %v6235, 0.03
      %v6268 = vsel %vm6236, %v6220, %v6252
      %v6269 = vsel %vm6237, %v6221, %v6253
      %v6270 = vsel %vm6238, %v6222, %v6254
      %v6271 = vsel %vm6239, %v6223, %v6255
      %v6272 = vsel %vm6240, %v6224, %v6256
      %v6273 = vsel %vm6241, %v6225, %v6257
      %v6274 = vsel %vm6242, %v6226, %v6258
      %v6275 = vsel %vm6243, %v6227, %v6259
      %v6276 = vsel %vm6244, %v6228, %v6260
      %v6277 = vsel %vm6245, %v6229, %v6261
      %v6278 = vsel %vm6246, %v6230, %v6262
      %v6279 = vsel %vm6247, %v6231, %v6263
      %v6280 = vsel %vm6248, %v6232, %v6264
      %v6281 = vsel %vm6249, %v6233, %v6265
      %v6282 = vsel %vm6250, %v6234, %v6266
      %v6283 = vsel %vm6251, %v6235, %v6267
      %v6284 = vpack.c.bf16 %v6269, %v6268
      %v6285 = vpack.c.bf16 %v6271, %v6270
      %v6286 = vpack.c.bf16 %v6273, %v6272
      %v6287 = vpack.c.bf16 %v6275, %v6274
      %v6288 = vpack.c.bf16 %v6277, %v6276
      %v6289 = vpack.c.bf16 %v6279, %v6278
      %v6290 = vpack.c.bf16 %v6281, %v6280
      %v6291 = vpack.c.bf16 %v6283, %v6282
      %v6292 = vld [vmem:[%s12] sm:$0xf]
      %v6293 = vld [vmem:[%s12 + $0x4] sm:$0xf]
      %v6296 = vunpack.c.l.b16 %v6292
      %v6297 = vunpack.c.l.b16 %v6293
      %v6298 = vpack.c.b16 %v6297, %v6296
      %v6301 = vsel %vm2208, %v6284, 0
      %v6304 = vsel %vm2208, %v6285, 0
      %v6307 = vsel %vm2208, %v6286, 0
      %v6310 = vsel %vm2208, %v6287, 0
      %v6313 = vsel %vm2208, %v6288, 0
      %v6316 = vsel %vm2208, %v6289, 0
      %v6319 = vsel %vm2208, %v6290, 0
      %v6322 = vsel %vm2208, %v6291, 0
      %6324 = vmatprep.subr.bf16.mxu0 0
      %6325 = vmatpush1.bf16.msra.mxu0 %v6298
      %6326 = vmatprep.subr.bf16.mxu0 0
      %6327 = vmatpush1.bf16.msra.mxu0 0
      %6328 = vmatprep.subr.bf16.mxu0 0
      %6329 = vmatpush1.bf16.msra.mxu0 0
      %6330 = vmatprep.subr.bf16.mxu0 0
      %6331 = vmatpush1.bf16.msra.mxu0 0
      %6332 = vmatprep.subr.bf16.mxu0 0
      %6333 = vmatpush1.bf16.msra.mxu0 0
      %6334 = vmatprep.subr.bf16.mxu0 0
      %6335 = vmatpush1.bf16.msra.mxu0 0
      %6336 = vmatprep.subr.bf16.mxu0 0
      %6337 = vmatpush1.bf16.msra.mxu0 0
      %6338 = vmatprep.subr.bf16.mxu0 0
      %6339 = vmatpush1.bf16.msra.mxu0 0
      %6340 = vmatprep.subr.bf16.mxu0 0
      %6341 = vmatpush1.bf16.msra.mxu0 0
      %6342 = vmatprep.subr.bf16.mxu0 0
      %6343 = vmatpush1.bf16.msra.mxu0 0
      %6344 = vmatprep.subr.bf16.mxu0 0
      %6345 = vmatpush1.bf16.msra.mxu0 0
      %6346 = vmatprep.subr.bf16.mxu0 0
      %6347 = vmatpush1.bf16.msra.mxu0 0
      %6348 = vmatprep.subr.bf16.mxu0 0
      %6349 = vmatpush1.bf16.msra.mxu0 0
      %6350 = vmatprep.subr.bf16.mxu0 0
      %6351 = vmatpush1.bf16.msra.mxu0 0
      %6352 = vmatprep.subr.bf16.mxu0 0
      %6353 = vmatpush1.bf16.msra.mxu0 0
      %6354 = vmatprep.subr.bf16.mxu0 0
      %6355 = vmatpush1.bf16.msra.mxu0 0
      %6356 = vmatprep.mubr.bf16.mxu0 0
      %6357 = vmatmul.mubr.bf16.gmra.mrb[0].mxu0 %v6301
      %v6358 = vpop.f32.mrb[0].mxu0
      %v6359 = vadd.f32 0.0, %v6358
      %v6360 = vpop.f32.mrb[0].mxu0
      %v6361 = vpop.f32.mrb[0].mxu0
      %v6362 = vadd.f32 0.0, %v6361
      %v6363 = vpop.f32.mrb[0].mxu0
      %6364 = vmatprep.mubr.bf16.mxu0 0
      %6365 = vmatmul.mubr.bf16.gmra.mrb[0].mxu0 %v6304
      %v6366 = vpop.f32.mrb[0].mxu0
      %v6367 = vadd.f32 0.0, %v6366
      %v6368 = vpop.f32.mrb[0].mxu0
      %v6369 = vpop.f32.mrb[0].mxu0
      %v6370 = vadd.f32 0.0, %v6369
      %v6371 = vpop.f32.mrb[0].mxu0
      %6372 = vmatprep.mubr.bf16.mxu0 0
      %6373 = vmatmul.mubr.bf16.gmra.mrb[0].mxu0 %v6307
      %v6374 = vpop.f32.mrb[0].mxu0
      %v6375 = vadd.f32 0.0, %v6374
      %v6376 = vpop.f32.mrb[0].mxu0
      %v6377 = vpop.f32.mrb[0].mxu0
      %v6378 = vadd.f32 0.0, %v6377
      %v6379 = vpop.f32.mrb[0].mxu0
      %6380 = vmatprep.mubr.bf16.mxu0 0
      %6381 = vmatmul.mubr.bf16.gmra.mrb[0].mxu0 %v6310
      %v6382 = vpop.f32.mrb[0].mxu0
      %v6383 = vadd.f32 0.0, %v6382
      %v6384 = vpop.f32.mrb[0].mxu0
      %v6385 = vpop.f32.mrb[0].mxu0
      %v6386 = vadd.f32 0.0, %v6385
      %v6387 = vpop.f32.mrb[0].mxu0
      %6388 = vmatprep.mubr.bf16.mxu0 0
      %6389 = vmatmul.mubr.bf16.gmra.mrb[0].mxu0 %v6313
      %v6390 = vpop.f32.mrb[0].mxu0
      %v6391 = vadd.f32 0.0, %v6390
      %v6392 = vpop.f32.mrb[0].mxu0
      %v6393 = vpop.f32.mrb[0].mxu0
      %v6394 = vadd.f32 0.0, %v6393
      %v6395 = vpop.f32.mrb[0].mxu0
      %6396 = vmatprep.mubr.bf16.mxu0 0
      %6397 = vmatmul.mubr.bf16.gmra.mrb[0].mxu0 %v6316
      %v6398 = vpop.f32.mrb[0].mxu0
      %v6399 = vadd.f32 0.0, %v6398
      %v6400 = vpop.f32.mrb[0].mxu0
      %v6401 = vpop.f32.mrb[0].mxu0
      %v6402 = vadd.f32 0.0, %v6401
      %v6403 = vpop.f32.mrb[0].mxu0
      %6404 = vmatprep.mubr.bf16.mxu0 0
      %6405 = vmatmul.mubr.bf16.gmra.mrb[0].mxu0 %v6319
      %v6406 = vpop.f32.mrb[0].mxu0
      %v6407 = vadd.f32 0.0, %v6406
      %v6408 = vpop.f32.mrb[0].mxu0
      %v6409 = vpop.f32.mrb[0].mxu0
      %v6410 = vadd.f32 0.0, %v6409
      %v6411 = vpop.f32.mrb[0].mxu0
      %6412 = vmatprep.mubr.bf16.mxu0 0
      %6413 = vmatmul.mubr.bf16.gmra.mrb[0].mxu0 %v6322
      %v6414 = vpop.f32.mrb[0].mxu0
      %v6415 = vadd.f32 0.0, %v6414
      %v6416 = vpop.f32.mrb[0].mxu0
      %v6417 = vpop.f32.mrb[0].mxu0
      %v6418 = vadd.f32 0.0, %v6417
      %v6419 = vpop.f32.mrb[0].mxu0
      %6420 = vdwg.mxu0
      %v6421 = vpack.c.bf16 %v6362, %v6359
      %v6422 = vpack.c.bf16 %v6370, %v6367
      %v6423 = vpack.c.bf16 %v6378, %v6375
      %v6424 = vpack.c.bf16 %v6386, %v6383
      %v6425 = vpack.c.bf16 %v6394, %v6391
      %v6426 = vpack.c.bf16 %v6402, %v6399
      %v6427 = vpack.c.bf16 %v6410, %v6407
      %v6428 = vpack.c.bf16 %v6418, %v6415
      %v6429 = vld [vmem:[%s13] sm:$0xf]
      %v6430 = vld [vmem:[%s13 + $0x4] sm:$0xf]
      %v6431 = vld [vmem:[%s13 + $0x8] sm:$0xf]
      %v6432 = vld [vmem:[%s13 + $0xc] sm:$0xf]
      %v6433 = vld [vmem:[%s14] sm:$0xff]
      %v6434 = vld [vmem:[%s14 + $0x8] sm:$0xff]
      %v6435 = vld [vmem:[%s14 + $0x10] sm:$0xff]
      %v6436 = vld [vmem:[%s14 + $0x18] sm:$0xff]
      %v6441 = vunpack.c.l.b16 %v6429
      %v6442 = vunpack.c.l.b16 %v6430
      %v6443 = vunpack.c.l.b16 %v6431
      %v6444 = vunpack.c.l.b16 %v6432
      %v6445 = vpack.c.b16 %v6442, %v6441
      %v6446 = vpack.c.b16 %v6444, %v6443
      %6449 = vmatprep.subr.bf16.mxu0 0
      %6450 = vmatpush1.bf16.msra.mxu0 %v6421
      %6451 = vmatprep.subr.bf16.mxu0 0
      %6452 = vmatpush1.bf16.msra.mxu0 %v6422
      %6453 = vmatprep.subr.bf16.mxu0 0
      %6454 = vmatpush1.bf16.msra.mxu0 %v6423
      %6455 = vmatprep.subr.bf16.mxu0 0
      %6456 = vmatpush1.bf16.msra.mxu0 %v6424
      %6457 = vmatprep.subr.bf16.mxu0 0
      %6458 = vmatpush1.bf16.msra.mxu0 %v6425
      %6459 = vmatprep.subr.bf16.mxu0 0
      %6460 = vmatpush1.bf16.msra.mxu0 %v6426
      %6461 = vmatprep.subr.bf16.mxu0 0
      %6462 = vmatpush1.bf16.msra.mxu0 %v6427
      %6463 = vmatprep.subr.bf16.mxu0 0
      %6464 = vmatpush1.bf16.msra.mxu0 %v6428
      %6465 = vmatprep.subr.bf16.mxu0 0
      %6466 = vmatpush1.bf16.msra.mxu0 0
      %6467 = vmatprep.subr.bf16.mxu0 0
      %6468 = vmatpush1.bf16.msra.mxu0 0
      %6469 = vmatprep.subr.bf16.mxu0 0
      %6470 = vmatpush1.bf16.msra.mxu0 0
      %6471 = vmatprep.subr.bf16.mxu0 0
      %6472 = vmatpush1.bf16.msra.mxu0 0
      %6473 = vmatprep.subr.bf16.mxu0 0
      %6474 = vmatpush1.bf16.msra.mxu0 0
      %6475 = vmatprep.subr.bf16.mxu0 0
      %6476 = vmatpush1.bf16.msra.mxu0 0
      %6477 = vmatprep.subr.bf16.mxu0 0
      %6478 = vmatpush1.bf16.msra.mxu0 0
      %6479 = vmatprep.subr.bf16.mxu0 0
      %6480 = vmatpush1.bf16.msra.mxu0 0
      %6481 = vmatprep.mubr.bf16.mxu0 0
      %6482 = vmatmul.mubr.bf16.gmra.mrb[0].mxu0 %v6445
      %v6483 = vpop.f32.mrb[0].mxu0
      %v6484 = vadd.f32 %v6433, %v6483
      %v6485 = vpop.f32.mrb[0].mxu0
      %v6486 = vpop.f32.mrb[0].mxu0
      %v6487 = vadd.f32 %v6434, %v6486
      %v6488 = vpop.f32.mrb[0].mxu0
      %6489 = vmatprep.mubr.bf16.mxu0 0
      %6490 = vmatmul.mubr.bf16.gmra.mrb[0].mxu0 %v6446
      %v6491 = vpop.f32.mrb[0].mxu0
      %v6492 = vadd.f32 %v6435, %v6491
      %v6493 = vpop.f32.mrb[0].mxu0
      %v6494 = vpop.f32.mrb[0].mxu0
      %v6495 = vadd.f32 %v6436, %v6494
      %v6496 = vpop.f32.mrb[0].mxu0
      %6497 = vdwg.mxu0
      %vm6498 = vcmp.ge.f32.partialorder %v6484, 0.0
      %vm6499 = vcmp.ge.f32.partialorder %v6487, 0.0
      %vm6500 = vcmp.ge.f32.partialorder %v6492, 0.0
      %vm6501 = vcmp.ge.f32.partialorder %v6495, 0.0
      %v6502 = vmul.f32 %v6484, 0.03
      %v6503 = vmul.f32 %v6487, 0.03
      %v6504 = vmul.f32 %v6492, 0.03
      %v6505 = vmul.f32 %v6495, 0.03
      %v6506 = vsel %vm6498, %v6484, %v6502
      %v6507 = vsel %vm6499, %v6487, %v6503
      %v6508 = vsel %vm6500, %v6492, %v6504
      %v6509 = vsel %vm6501, %v6495, %v6505
      %v6510 = vpack.c.bf16 %v6507, %v6506
      %v6511 = vpack.c.bf16 %v6509, %v6508
      %v6512 = vld [vmem:[%s15] sm:$0xf]
      %v6513 = vld [vmem:[%s15 + $0x4] sm:$0xf]
      %v6514 = vld [vmem:[%s16] sm:$0xff]
      %v6515 = vld [vmem:[%s16 + $0x8] sm:$0xff]
      %v6518 = vunpack.c.l.b16 %v6512
      %v6519 = vunpack.c.l.b16 %v6513
      %v6520 = vpack.c.b16 %v6519, %v6518
      %v6522 = vsel %vm3081, %v6520, 0
      %6524 = vmatprep.subr.bf16.mxu0 0
      %6525 = vmatpush1.bf16.msra.mxu0 %v6510
      %6526 = vmatprep.subr.bf16.mxu0 0
      %6527 = vmatpush1.bf16.msra.mxu0 %v6511
      %6528 = vmatprep.subr.bf16.mxu0 0
      %6529 = vmatpush1.bf16.msra.mxu0 0
      %6530 = vmatprep.subr.bf16.mxu0 0
      %6531 = vmatpush1.bf16.msra.mxu0 0
      %6532 = vmatprep.subr.bf16.mxu0 0
      %6533 = vmatpush1.bf16.msra.mxu0 0
      %6534 = vmatprep.subr.bf16.mxu0 0
      %6535 = vmatpush1.bf16.msra.mxu0 0
      %6536 = vmatprep.subr.bf16.mxu0 0
      %6537 = vmatpush1.bf16.msra.mxu0 0
      %6538 = vmatprep.subr.bf16.mxu0 0
      %6539 = vmatpush1.bf16.msra.mxu0 0
      %6540 = vmatprep.subr.bf16.mxu0 0
      %6541 = vmatpush1.bf16.msra.mxu0 0
      %6542 = vmatprep.subr.bf16.mxu0 0
      %6543 = vmatpush1.bf16.msra.mxu0 0
      %6544 = vmatprep.subr.bf16.mxu0 0
      %6545 = vmatpush1.bf16.msra.mxu0 0
      %6546 = vmatprep.subr.bf16.mxu0 0
      %6547 = vmatpush1.bf16.msra.mxu0 0
      %6548 = vmatprep.subr.bf16.mxu0 0
      %6549 = vmatpush1.bf16.msra.mxu0 0
      %6550 = vmatprep.subr.bf16.mxu0 0
      %6551 = vmatpush1.bf16.msra.mxu0 0
      %6552 = vmatprep.subr.bf16.mxu0 0
      %6553 = vmatpush1.bf16.msra.mxu0 0
      %6554 = vmatprep.subr.bf16.mxu0 0
      %6555 = vmatpush1.bf16.msra.mxu0 0
      %6556 = vmatprep.mubr.bf16.mxu0 0
      %6557 = vmatmul.mubr.bf16.gmra.mrb[0].mxu0 %v6522
      %v6558 = vpop.f32.mrb[0].mxu0
      %v6559 = vadd.f32 %v6514, %v6558
      %v6560 = vpop.f32.mrb[0].mxu0
      %v6561 = vpop.f32.mrb[0].mxu0
      %v6562 = vadd.f32 %v6515, %v6561
      %v6563 = vpop.f32.mrb[0].mxu0
      %6564 = vdwg.mxu0
      %v6565 = vld [vmem:[%s653] sm:$0xff]
      %v6566 = vmul.f32 %v6562, 0.5
      %v6567 = vmul.f32 %v6566, 1.442695
      %v6568 = vpow.pop %v6567
      %v6569 = vmul.f32 %v6565, %v6568
      %v6570 = vadd.f32 %v6559, %v6569
      %vm6571 = vcmask 7168
      %6572 = vst.msk [vmem:[%s657] sm:$0xff] %vm6571, %v6570
      %6573 = vst.msk [vmem:[%s661] sm:$0xff] %vm6571, %v6559
      %6574 = vst.msk [vmem:[%s665] sm:$0xff] %vm6571, %v6562
      %p6575 = scmp.lt.s32.totalorder %s32, 1
      %s6576 = scalar_select %p6575, %s32, 1
      %s6577 = smul.addr %s6576, 8
      %s6578 = scalar_lea.vmem %s18, %s6577
      %p6579 = scmp.lt.s32.totalorder %s32, 1
      %s6580 = scalar_select %p6579, %s32, 1
      %s6581 = smul.addr %s6580, 8
      %s6582 = scalar_lea.vmem %s19, %s6581
      %p6583 = scmp.lt.s32.totalorder %s32, 1
      %s6584 = scalar_select %p6583, %s32, 1
      %s6585 = smul.addr %s6584, 8
      %s6586 = scalar_lea.vmem %s20, %s6585
      // Predicated region
      $region93: #{sd_utnet_forward.2} parent=91 // pred_check
        %p6587 = pneg %p438
      $region94: #{sd_utnet_forward.2} parent=91 // pred_check_branch
        %6589 = sbr.rel (%p6587) target = $region96
      $region95: #{sd_utnet_forward.2} parent=91 // pred_region
        _
      $region96: #{sd_utnet_forward.2} parent=91 // pred_fallthru
        _
      // Predicated region
      $region97: #{sd_utnet_forward.2} parent=91 // pred_check
        %p6590 = pneg %p464
      $region98: #{sd_utnet_forward.2} parent=91 // pred_check_branch
        %6592 = sbr.rel (%p6590) target = $region100
      $region99: #{sd_utnet_forward.2} parent=91 // pred_region
        _
      $region100: #{sd_utnet_forward.2} parent=91 // pred_fallthru
        _
      // Predicated region
      $region101: #{sd_utnet_forward.2} parent=91 // pred_check
        %p6593 = pneg %p490
      $region102: #{sd_utnet_forward.2} parent=91 // pred_check_branch
        %6595 = sbr.rel (%p6593) target = $region104
      $region103: #{sd_utnet_forward.2} parent=91 // pred_region
        _
      $region104: #{sd_utnet_forward.2} parent=91 // pred_fallthru
        _
    $region92: #{sd_utnet_forward.2} parent=5 // pred_fallthru
      _
    %p6596 = scmp.le.s32.totalorder 2, %s27
    // Predicated region
    $region105: #{sd_utnet_forward.2} parent=5 // pred_check
      %p6597 = pneg %p6596
    $region106: #{sd_utnet_forward.2} parent=5 // pred_check_branch
      %6599 = sbr.rel (%p6597) target = $region108
    $region107: #{sd_utnet_forward.2} parent=5 // pred_region
      %s6600 = ssub.s32 %s27, 2
      // Predicated region
      $region109: #{sd_utnet_forward.2} parent=107 // pred_check
        %p6601 = pneg %p444
      $region110: #{sd_utnet_forward.2} parent=107 // pred_check_branch
        %6603 = sbr.rel (%p6601) target = $region112
      $region111: #{sd_utnet_forward.2} parent=107 // pred_region
        %p6604 = scmp.lt.s32.totalorder %s33, 1
        %s6605 = scalar_select %p6604, %s33, 1
        %s6606 = smul.addr %s6605, 8
        %s6607 = scalar_lea.vmem %s18, %s6606
      $region112: #{sd_utnet_forward.2} parent=107 // pred_fallthru
        _
      // Predicated region
      $region113: #{sd_utnet_forward.2} parent=107 // pred_check
        %p6608 = pneg %p470
      $region114: #{sd_utnet_forward.2} parent=107 // pred_check_branch
        %6610 = sbr.rel (%p6608) target = $region116
      $region115: #{sd_utnet_forward.2} parent=107 // pred_region
        %p6611 = scmp.lt.s32.totalorder %s33, 1
        %s6612 = scalar_select %p6611, %s33, 1
        %s6613 = smul.addr %s6612, 8
        %s6614 = scalar_lea.vmem %s19, %s6613
      $region116: #{sd_utnet_forward.2} parent=107 // pred_fallthru
        _
      // Predicated region
      $region117: #{sd_utnet_forward.2} parent=107 // pred_check
        %p6615 = pneg %p496
      $region118: #{sd_utnet_forward.2} parent=107 // pred_check_branch
        %6617 = sbr.rel (%p6615) target = $region120
      $region119: #{sd_utnet_forward.2} parent=107 // pred_region
        %p6618 = scmp.lt.s32.totalorder %s33, 1
        %s6619 = scalar_select %p6618, %s33, 1
        %s6620 = smul.addr %s6619, 8
        %s6621 = scalar_lea.vmem %s20, %s6620
      $region120: #{sd_utnet_forward.2} parent=107 // pred_fallthru
        _
    $region108: #{sd_utnet_forward.2} parent=5 // pred_fallthru
      _
  $region6: #{sd_utnet_forward.2} parent=0 // loop_footer
    %s31 = sadd.s32 1, %s27
  $region7: #{sd_utnet_forward.2} parent=0 // loop_footer_branch
    %26 = sbr.rel target = $region3
  $region8: #{sd_utnet_forward.2} parent=0 // loop_exit
    _

</llo_original>
